<compile_context>
chip_gen: v6e
topology: v6e:2x2x1
jax: 0.10.0
libtpu: 0.0.40
codegen_flags: <defaults>
</compile_context>

<pallas_src>
import functools

import jax
import jax.numpy as jnp
from jax import lax
from jax.experimental import pallas as pl
from jax.experimental.pallas import tpu as pltpu

EPS = 1e-5  # PyTorch InstanceNorm2d default


def _resblock_kernel(x_ref, w1_ref, b1_ref, w2_ref, b2_ref, o_ref, *, H, W):
    """One grid step == one image.

    x_ref  : (1, H*W, Cp)  activations, channels lane-dense (zero-padded)
    w*_ref : (9, Cp, Cp)   bf16 per-tap (Cin, Cout) matrices, tap k = kh*3+kw
    b*_ref : (1, Cp)       f32 lane-dense bias rows
    o_ref  : (1, H*W, Cp)
    """
    HW, Cp = x_ref.shape[1], x_ref.shape[2]

    # Column-reflection masks, hoisted once per grid step (row shifts need no
    # masks at all -- see h_shift).  No widx input: one iota + mod.
    w_idx = lax.broadcasted_iota(jnp.int32, (HW, 1), 0) % W
    w_lo = w_idx == 0          # first image column
    w_hi = w_idx == W - 1      # last image column

    def w_shifts(z):
        # z[h, reflect(w+dw)] for dw in {-1, 0, +1}: two rolls shared by both
        # directions + one boundary select each (reflect(-1)=1, reflect(W)=W-2).
        up = jnp.roll(z, -1, axis=0)   # z[h, w+1] in the interior
        dn = jnp.roll(z, 1, axis=0)    # z[h, w-1] in the interior
        return {-1: jnp.where(w_lo, up, dn),
                0: z,
                1: jnp.where(w_hi, dn, up)}

    def h_shift(z, dh):
        # z[reflect(h+dh), w]: image rows are contiguous W-row blocks on the
        # flattened axis, so the shift is two aligned slices + concat with the
        # reflected boundary row substituted directly (no roll, no select).
        if dh == 0:
            return z
        if dh == 1:
            return jnp.concatenate([z[W:], z[(H - 2) * W:(H - 1) * W]], axis=0)
        return jnp.concatenate([z[W:2 * W], z[:(H - 1) * W]], axis=0)

    def conv3x3(z_bf16, w_ref, b_ref):
        # 9 taps as (HW, Cin) x (Cin, Cout) MXU matmuls: bf16 in, f32 accum.
        zw = w_shifts(z_bf16)
        acc = jnp.zeros((HW, Cp), jnp.float32)
        for dh in (-1, 0, 1):
            for dw in (-1, 0, 1):
                tap = (dh + 1) * 3 + (dw + 1)
                acc = acc + jnp.dot(h_shift(zw[dw], dh), w_ref[tap],
                                    preferred_element_type=jnp.float32)
        return acc + b_ref[...]                    # bias folded in, f32

    inv_hw = 1.0 / float(HW)

    def inorm(y):
        # Two-pass (centered) variance in f32; biased var + eps, matching
        # nn.InstanceNorm2d(affine=False).
        mean = jnp.sum(y, axis=0, keepdims=True) * inv_hw
        yc = y - mean
        var = jnp.sum(yc * yc, axis=0, keepdims=True) * inv_hw
        return yc * lax.rsqrt(var + EPS)

    x = x_ref[0]                                               # (HW, Cp)
    y = jnp.maximum(inorm(conv3x3(x.astype(jnp.bfloat16), w1_ref, b1_ref)), 0.0)
    y = inorm(conv3x3(y.astype(jnp.bfloat16), w2_ref, b2_ref))
    o_ref[0] = (x.astype(jnp.float32) + y).astype(o_ref.dtype)  # residual


def _round_up(n, m):
    return (n + m - 1) // m * m


def prepare_params(w1, b1, w2, b2):
    """Pre-pack conv params once (amortize over the whole resnet stage).

    w: (Cout, Cin, 3, 3) -> bf16 (9, Cin_p, Cout_p), tap k = kh*3 + kw,
       channels zero-padded to a lane-dense multiple of 128.
    b: (C,) -> f32 (1, Cp).
    """
    C = w1.shape[0]
    Cp = _round_up(C, 128)

    def prep_w(w):
        wt = jnp.transpose(w, (2, 3, 1, 0)).reshape(9, C, C)
        wt = jnp.pad(wt, ((0, 0), (0, Cp - C), (0, Cp - C)))
        return wt.astype(jnp.bfloat16)     # native MXU rate, f32 accumulation

    def prep_b(b):
        return jnp.pad(b, (0, Cp - C)).astype(jnp.float32).reshape(1, Cp)

    return prep_w(w1), prep_b(b1), prep_w(w2), prep_b(b2)


def pack_nchw(x):
    """(N, C, H, W) -> lane-dense (N, H*W, Cp).  Pack once per stage and chain
    residual_block_packed calls to avoid per-block HBM transpose passes."""
    N, C, H, W = x.shape
    Cp = _round_up(C, 128)
    xt = jnp.transpose(x, (0, 2, 3, 1)).reshape(N, H * W, C)
    return jnp.pad(xt, ((0, 0), (0, 0), (0, Cp - C)))


def unpack_nchw(xp, C, H, W):
    N = xp.shape[0]
    return jnp.transpose(xp[:, :, :C].reshape(N, H, W, C), (0, 3, 1, 2))


def residual_block_packed(xp, params, *, H, W):
    """One ResidualBlock on the packed (N, H*W, Cp) layout."""
    w1p, b1p, w2p, b2p = params
    N, HW, Cp = xp.shape
    assert HW == H * W and H >= 2 and W >= 2  # ReflectionPad2d(1) requirement

    # VMEM budget: double-buffered in/out activation blocks + double-buffered
    # bf16 weights/biases + in-kernel temporaries (bf16 shifted views, f32
    # accumulator / normalized / centered copies).
    act = HW * Cp * 4
    wgt = 9 * Cp * Cp * 2
    est = 4 * act + 2 * (2 * wgt + 2 * Cp * 4) + 6 * act
    vmem_limit = int(min(64 << 20, max(16 << 20, 2 * est)))

    kernel = functools.partial(_resblock_kernel, H=H, W=W)
    return pl.pallas_call(
        kernel,
        out_shape=jax.ShapeDtypeStruct((N, HW, Cp), xp.dtype),
        grid=(N,),                                   # block_n = 1 (see review)
        in_specs=[
            pl.BlockSpec((1, HW, Cp), lambda n: (n, 0, 0)),
            pl.BlockSpec((9, Cp, Cp), lambda n: (0, 0, 0)),
            pl.BlockSpec((1, Cp), lambda n: (0, 0)),
            pl.BlockSpec((9, Cp, Cp), lambda n: (0, 0, 0)),
            pl.BlockSpec((1, Cp), lambda n: (0, 0)),
        ],
        out_specs=pl.BlockSpec((1, HW, Cp), lambda n: (n, 0, 0)),
        compiler_params=pltpu.CompilerParams(
            dimension_semantics=("parallel",),
            vmem_limit_bytes=vmem_limit),
    )(xp, w1p, b1p, w2p, b2p)


def residual_block(x, w1, b1, w2, b2):
    """Drop-in NCHW forward of one pix2pixHD ResidualBlock."""
    N, C, H, W = x.shape
    params = prepare_params(w1, b1, w2, b2)
    yp = residual_block_packed(pack_nchw(x), params, H=H, W=W)
    return unpack_nchw(yp, C, H, W)


def _reference(x, w1, b1, w2, b2):
    """Pure-JAX reference with the kernel's numerics: reflection pad, conv with
    bf16 operands / f32 accumulation, f32 InstanceNorm (biased var, eps=1e-5)."""
    def conv(z, w, b):
        zp = jnp.pad(z, ((0, 0), (0, 0), (1, 1), (1, 1)), mode="reflect")
        y = lax.conv_general_dilated(
            zp.astype(jnp.bfloat16), w.astype(jnp.bfloat16),
            window_strides=(1, 1), padding="VALID",
            dimension_numbers=("NCHW", "OIHW", "NCHW"),
            preferred_element_type=jnp.float32)
        return y + b[None, :, None, None]

    def inorm(z):
        m = jnp.mean(z, axis=(2, 3), keepdims=True)
        v = jnp.mean((z - m) ** 2, axis=(2, 3), keepdims=True)
        return (z - m) * lax.rsqrt(v + EPS)

    y = jax.nn.relu(inorm(conv(x, w1, b1)))
    y = inorm(conv(y, w2, b2))
    return x + y


if __name__ == "__main__":
    N, C, H, W = 2, 4, 16, 16
    key = jax.random.PRNGKey(0)
    k1, k2, k3, k4, k5 = jax.random.split(key, 5)

    x = jax.random.normal(k1, (N, C, H, W), dtype=jnp.float32)
    w1 = jax.random.normal(k2, (C, C, 3, 3), dtype=jnp.float32) * 0.2
    b1 = jax.random.normal(k3, (C,), dtype=jnp.float32) * 0.1
    w2 = jax.random.normal(k4, (C, C, 3, 3), dtype=jnp.float32) * 0.2
    b2 = jax.random.normal(k5, (C,), dtype=jnp.float32) * 0.1

    out = residual_block(x, w1, b1, w2, b2)
    jax.block_until_ready(out)
    assert out.shape == (N, C, H, W) and out.dtype == jnp.float32

    # Both kernel and reference use bf16 matmul operands with f32 accumulation,
    # so only accumulation-order noise remains; a wrong tap / reflection / norm
    # bug would show up as O(0.1+).
    ref = _reference(x, w1, b1, w2, b2)
    err = float(jnp.max(jnp.abs(out - ref)))
    if err > 1e-2:
        raise AssertionError(f"single-block mismatch vs reference: {err}")

    # Chained use on the packed layout (how pix2pixHD's 9-block stage should
    # call it: pack activations + weights once, run all blocks, unpack once).
    params = prepare_params(w1, b1, w2, b2)
    yp = residual_block_packed(pack_nchw(x), params, H=H, W=W)
    yp = residual_block_packed(yp, params, H=H, W=W)
    out2 = unpack_nchw(yp, C, H, W)
    jax.block_until_ready(out2)
    err2 = float(jnp.max(jnp.abs(out2 - _reference(ref, w1, b1, w2, b2))))
    if err2 > 2e-2:
        raise AssertionError(f"chained-block mismatch vs reference: {err2}")

    print("KERNEL_OK")
</pallas_src>

<mosaic_0001>
module attributes {stable_mosaic.version = 11 : i64} {
  func.func @_resblock_kernel(%arg0: i32, %arg1: memref<1x256x128xf32, #tpu.memory_space<vmem>>, %arg2: memref<9x128x128xbf16, #tpu.memory_space<vmem>>, %arg3: memref<1x128xf32, #tpu.memory_space<vmem>>, %arg4: memref<9x128x128xbf16, #tpu.memory_space<vmem>>, %arg5: memref<1x128xf32, #tpu.memory_space<vmem>>, %arg6: memref<1x256x128xf32, #tpu.memory_space<vmem>>) attributes {dimension_semantics = [#tpu.dimension_semantics<parallel>], iteration_bounds = array<i64: 2>, scalar_prefetch = 0 : i64, scratch_operands = 0 : i64, tpu.core_type = #tpu.core_type<tc>, window_params = [{transform_indices = @transform_0, window_bounds = array<i64: 1, 256, 128>}, {pipeline_mode = #tpu.pipeline_mode<synchronous>, transform_indices = @transform_1, window_bounds = array<i64: 9, 128, 128>}, {pipeline_mode = #tpu.pipeline_mode<synchronous>, transform_indices = @transform_2, window_bounds = array<i64: 1, 128>}, {pipeline_mode = #tpu.pipeline_mode<synchronous>, transform_indices = @transform_3, window_bounds = array<i64: 9, 128, 128>}, {pipeline_mode = #tpu.pipeline_mode<synchronous>, transform_indices = @transform_4, window_bounds = array<i64: 1, 128>}, {transform_indices = @transform_5, window_bounds = array<i64: 1, 256, 128>}]} {
    %0 = tpu.iota {dimensions = array<i32: 0>} : vector<256x1xi32>
    %c16_i32 = arith.constant 16 : i32
    %c0_i32 = arith.constant 0 : i32
    %1 = arith.cmpi eq, %c16_i32, %c0_i32 : i32
    %c1_i32 = arith.constant 1 : i32
    %2 = arith.select %1, %c1_i32, %c16_i32 : i32
    %3 = vector.broadcast %2 : i32 to vector<256x1xi32>
    %4 = arith.remsi %0, %3 : vector<256x1xi32>
    %c0_i32_0 = arith.constant 0 : i32
    %5 = vector.broadcast %c0_i32_0 : i32 to vector<256x1xi32>
    %6 = arith.cmpi ne, %4, %5 : vector<256x1xi32>
    %c0_i32_1 = arith.constant 0 : i32
    %7 = vector.broadcast %c0_i32_1 : i32 to vector<256x1xi32>
    %8 = arith.cmpi slt, %4, %7 : vector<256x1xi32>
    %c0_i32_2 = arith.constant 0 : i32
    %9 = arith.cmpi slt, %2, %c0_i32_2 : i32
    %10 = vector.broadcast %9 : i1 to vector<256x1xi1>
    %11 = vector.broadcast %10 : vector<256x1xi1> to vector<256x1xi1>
    %12 = arith.xori %8, %11 : vector<256x1xi1>
    %13 = arith.andi %12, %6 : vector<256x1xi1>
    %14 = vector.broadcast %2 : i32 to vector<256x1xi32>
    %15 = arith.addi %4, %14 : vector<256x1xi32>
    %16 = arith.select %13, %15, %4 : vector<256x1xi1>, vector<256x1xi32>
    %c0_i32_3 = arith.constant 0 : i32
    %17 = vector.broadcast %c0_i32_3 : i32 to vector<256x1xi32>
    %18 = arith.cmpi eq, %16, %17 : vector<256x1xi32>
    %c15_i32 = arith.constant 15 : i32
    %19 = vector.broadcast %c15_i32 : i32 to vector<256x1xi32>
    %20 = arith.cmpi eq, %16, %19 : vector<256x1xi32>
    %c0 = arith.constant 0 : index
    %c0_4 = arith.constant 0 : index
    %c0_5 = arith.constant 0 : index
    %21 = vector.load %arg1[%c0, %c0_4, %c0_5] : memref<1x256x128xf32, #tpu.memory_space<vmem>>, vector<1x256x128xf32>
    %22 = vector.shape_cast %21 : vector<1x256x128xf32> to vector<256x128xf32>
    %23 = arith.truncf %22 : vector<256x128xf32> to vector<256x128xbf16>
    %24 = vector.extract_strided_slice %23 {offsets = [1, 0], sizes = [255, 128], strides = [1, 1]} : vector<256x128xbf16> to vector<255x128xbf16>
    %25 = vector.extract_strided_slice %23 {offsets = [0, 0], sizes = [1, 128], strides = [1, 1]} : vector<256x128xbf16> to vector<1x128xbf16>
    %26 = tpu.concatenate %24, %25 in 0 : vector<255x128xbf16>, vector<1x128xbf16> -> vector<256x128xbf16>
    %27 = vector.extract_strided_slice %23 {offsets = [255, 0], sizes = [1, 128], strides = [1, 1]} : vector<256x128xbf16> to vector<1x128xbf16>
    %28 = vector.extract_strided_slice %23 {offsets = [0, 0], sizes = [255, 128], strides = [1, 1]} : vector<256x128xbf16> to vector<255x128xbf16>
    %29 = tpu.concatenate %27, %28 in 0 : vector<1x128xbf16>, vector<255x128xbf16> -> vector<256x128xbf16>
    %30 = vector.shape_cast %18 : vector<256x1xi1> to vector<256x1xi1>
    %31 = vector.broadcast %30 : vector<256x1xi1> to vector<256x128xi1>
    %32 = arith.select %31, %26, %29 : vector<256x128xi1>, vector<256x128xbf16>
    %33 = vector.shape_cast %20 : vector<256x1xi1> to vector<256x1xi1>
    %34 = vector.broadcast %33 : vector<256x1xi1> to vector<256x128xi1>
    %35 = arith.select %34, %29, %26 : vector<256x128xi1>, vector<256x128xbf16>
    %cst = arith.constant 0.000000e+00 : f32
    %36 = vector.broadcast %cst : f32 to vector<256x128xf32>
    %37 = vector.extract_strided_slice %32 {offsets = [16, 0], sizes = [16, 128], strides = [1, 1]} : vector<256x128xbf16> to vector<16x128xbf16>
    %38 = vector.extract_strided_slice %32 {offsets = [0, 0], sizes = [240, 128], strides = [1, 1]} : vector<256x128xbf16> to vector<240x128xbf16>
    %39 = tpu.concatenate %37, %38 in 0 : vector<16x128xbf16>, vector<240x128xbf16> -> vector<256x128xbf16>
    %c0_6 = arith.constant 0 : index
    %c0_7 = arith.constant 0 : index
    %c0_8 = arith.constant 0 : index
    %40 = vector.load %arg2[%c0_6, %c0_7, %c0_8] : memref<9x128x128xbf16, #tpu.memory_space<vmem>>, vector<1x128x128xbf16>
    %41 = vector.shape_cast %40 : vector<1x128x128xbf16> to vector<128x128xbf16>
    %cst_9 = arith.constant dense<0.000000e+00> : vector<256x128xf32>
    %42 = tpu.matmul %39, %41, %cst_9 {dimension_numbers = #tpu.dot_dimension_numbers<[1], [0], [0], [1], [0, 0, 1, 1], [], []>} : vector<256x128xbf16>, vector<128x128xbf16>, vector<256x128xf32> -> vector<256x128xf32>
    %43 = arith.addf %36, %42 : vector<256x128xf32>
    %44 = vector.extract_strided_slice %23 {offsets = [16, 0], sizes = [16, 128], strides = [1, 1]} : vector<256x128xbf16> to vector<16x128xbf16>
    %45 = vector.extract_strided_slice %23 {offsets = [0, 0], sizes = [240, 128], strides = [1, 1]} : vector<256x128xbf16> to vector<240x128xbf16>
    %46 = tpu.concatenate %44, %45 in 0 : vector<16x128xbf16>, vector<240x128xbf16> -> vector<256x128xbf16>
    %c1 = arith.constant 1 : index
    %c0_10 = arith.constant 0 : index
    %c0_11 = arith.constant 0 : index
    %47 = vector.load %arg2[%c1, %c0_10, %c0_11] : memref<9x128x128xbf16, #tpu.memory_space<vmem>>, vector<1x128x128xbf16>
    %48 = vector.shape_cast %47 : vector<1x128x128xbf16> to vector<128x128xbf16>
    %cst_12 = arith.constant dense<0.000000e+00> : vector<256x128xf32>
    %49 = tpu.matmul %46, %48, %cst_12 {dimension_numbers = #tpu.dot_dimension_numbers<[1], [0], [0], [1], [0, 0, 1, 1], [], []>} : vector<256x128xbf16>, vector<128x128xbf16>, vector<256x128xf32> -> vector<256x128xf32>
    %50 = arith.addf %43, %49 : vector<256x128xf32>
    %51 = vector.extract_strided_slice %35 {offsets = [16, 0], sizes = [16, 128], strides = [1, 1]} : vector<256x128xbf16> to vector<16x128xbf16>
    %52 = vector.extract_strided_slice %35 {offsets = [0, 0], sizes = [240, 128], strides = [1, 1]} : vector<256x128xbf16> to vector<240x128xbf16>
    %53 = tpu.concatenate %51, %52 in 0 : vector<16x128xbf16>, vector<240x128xbf16> -> vector<256x128xbf16>
    %c2 = arith.constant 2 : index
    %c0_13 = arith.constant 0 : index
    %c0_14 = arith.constant 0 : index
    %54 = vector.load %arg2[%c2, %c0_13, %c0_14] : memref<9x128x128xbf16, #tpu.memory_space<vmem>>, vector<1x128x128xbf16>
    %55 = vector.shape_cast %54 : vector<1x128x128xbf16> to vector<128x128xbf16>
    %cst_15 = arith.constant dense<0.000000e+00> : vector<256x128xf32>
    %56 = tpu.matmul %53, %55, %cst_15 {dimension_numbers = #tpu.dot_dimension_numbers<[1], [0], [0], [1], [0, 0, 1, 1], [], []>} : vector<256x128xbf16>, vector<128x128xbf16>, vector<256x128xf32> -> vector<256x128xf32>
    %57 = arith.addf %50, %56 : vector<256x128xf32>
    %c3 = arith.constant 3 : index
    %c0_16 = arith.constant 0 : index
    %c0_17 = arith.constant 0 : index
    %58 = vector.load %arg2[%c3, %c0_16, %c0_17] : memref<9x128x128xbf16, #tpu.memory_space<vmem>>, vector<1x128x128xbf16>
    %59 = vector.shape_cast %58 : vector<1x128x128xbf16> to vector<128x128xbf16>
    %cst_18 = arith.constant dense<0.000000e+00> : vector<256x128xf32>
    %60 = tpu.matmul %32, %59, %cst_18 {dimension_numbers = #tpu.dot_dimension_numbers<[1], [0], [0], [1], [0, 0, 1, 1], [], []>} : vector<256x128xbf16>, vector<128x128xbf16>, vector<256x128xf32> -> vector<256x128xf32>
    %61 = arith.addf %57, %60 : vector<256x128xf32>
    %c4 = arith.constant 4 : index
    %c0_19 = arith.constant 0 : index
    %c0_20 = arith.constant 0 : index
    %62 = vector.load %arg2[%c4, %c0_19, %c0_20] : memref<9x128x128xbf16, #tpu.memory_space<vmem>>, vector<1x128x128xbf16>
    %63 = vector.shape_cast %62 : vector<1x128x128xbf16> to vector<128x128xbf16>
    %cst_21 = arith.constant dense<0.000000e+00> : vector<256x128xf32>
    %64 = tpu.matmul %23, %63, %cst_21 {dimension_numbers = #tpu.dot_dimension_numbers<[1], [0], [0], [1], [0, 0, 1, 1], [], []>} : vector<256x128xbf16>, vector<128x128xbf16>, vector<256x128xf32> -> vector<256x128xf32>
    %65 = arith.addf %61, %64 : vector<256x128xf32>
    %c5 = arith.constant 5 : index
    %c0_22 = arith.constant 0 : index
    %c0_23 = arith.constant 0 : index
    %66 = vector.load %arg2[%c5, %c0_22, %c0_23] : memref<9x128x128xbf16, #tpu.memory_space<vmem>>, vector<1x128x128xbf16>
    %67 = vector.shape_cast %66 : vector<1x128x128xbf16> to vector<128x128xbf16>
    %cst_24 = arith.constant dense<0.000000e+00> : vector<256x128xf32>
    %68 = tpu.matmul %35, %67, %cst_24 {dimension_numbers = #tpu.dot_dimension_numbers<[1], [0], [0], [1], [0, 0, 1, 1], [], []>} : vector<256x128xbf16>, vector<128x128xbf16>, vector<256x128xf32> -> vector<256x128xf32>
    %69 = arith.addf %65, %68 : vector<256x128xf32>
    %70 = vector.extract_strided_slice %32 {offsets = [16, 0], sizes = [240, 128], strides = [1, 1]} : vector<256x128xbf16> to vector<240x128xbf16>
    %71 = vector.extract_strided_slice %32 {offsets = [224, 0], sizes = [16, 128], strides = [1, 1]} : vector<256x128xbf16> to vector<16x128xbf16>
    %72 = tpu.concatenate %70, %71 in 0 : vector<240x128xbf16>, vector<16x128xbf16> -> vector<256x128xbf16>
    %c6 = arith.constant 6 : index
    %c0_25 = arith.constant 0 : index
    %c0_26 = arith.constant 0 : index
    %73 = vector.load %arg2[%c6, %c0_25, %c0_26] : memref<9x128x128xbf16, #tpu.memory_space<vmem>>, vector<1x128x128xbf16>
    %74 = vector.shape_cast %73 : vector<1x128x128xbf16> to vector<128x128xbf16>
    %cst_27 = arith.constant dense<0.000000e+00> : vector<256x128xf32>
    %75 = tpu.matmul %72, %74, %cst_27 {dimension_numbers = #tpu.dot_dimension_numbers<[1], [0], [0], [1], [0, 0, 1, 1], [], []>} : vector<256x128xbf16>, vector<128x128xbf16>, vector<256x128xf32> -> vector<256x128xf32>
    %76 = arith.addf %69, %75 : vector<256x128xf32>
    %77 = vector.extract_strided_slice %23 {offsets = [16, 0], sizes = [240, 128], strides = [1, 1]} : vector<256x128xbf16> to vector<240x128xbf16>
    %78 = vector.extract_strided_slice %23 {offsets = [224, 0], sizes = [16, 128], strides = [1, 1]} : vector<256x128xbf16> to vector<16x128xbf16>
    %79 = tpu.concatenate %77, %78 in 0 : vector<240x128xbf16>, vector<16x128xbf16> -> vector<256x128xbf16>
    %c7 = arith.constant 7 : index
    %c0_28 = arith.constant 0 : index
    %c0_29 = arith.constant 0 : index
    %80 = vector.load %arg2[%c7, %c0_28, %c0_29] : memref<9x128x128xbf16, #tpu.memory_space<vmem>>, vector<1x128x128xbf16>
    %81 = vector.shape_cast %80 : vector<1x128x128xbf16> to vector<128x128xbf16>
    %cst_30 = arith.constant dense<0.000000e+00> : vector<256x128xf32>
    %82 = tpu.matmul %79, %81, %cst_30 {dimension_numbers = #tpu.dot_dimension_numbers<[1], [0], [0], [1], [0, 0, 1, 1], [], []>} : vector<256x128xbf16>, vector<128x128xbf16>, vector<256x128xf32> -> vector<256x128xf32>
    %83 = arith.addf %76, %82 : vector<256x128xf32>
    %84 = vector.extract_strided_slice %35 {offsets = [16, 0], sizes = [240, 128], strides = [1, 1]} : vector<256x128xbf16> to vector<240x128xbf16>
    %85 = vector.extract_strided_slice %35 {offsets = [224, 0], sizes = [16, 128], strides = [1, 1]} : vector<256x128xbf16> to vector<16x128xbf16>
    %86 = tpu.concatenate %84, %85 in 0 : vector<240x128xbf16>, vector<16x128xbf16> -> vector<256x128xbf16>
    %c8 = arith.constant 8 : index
    %c0_31 = arith.constant 0 : index
    %c0_32 = arith.constant 0 : index
    %87 = vector.load %arg2[%c8, %c0_31, %c0_32] : memref<9x128x128xbf16, #tpu.memory_space<vmem>>, vector<1x128x128xbf16>
    %88 = vector.shape_cast %87 : vector<1x128x128xbf16> to vector<128x128xbf16>
    %cst_33 = arith.constant dense<0.000000e+00> : vector<256x128xf32>
    %89 = tpu.matmul %86, %88, %cst_33 {dimension_numbers = #tpu.dot_dimension_numbers<[1], [0], [0], [1], [0, 0, 1, 1], [], []>} : vector<256x128xbf16>, vector<128x128xbf16>, vector<256x128xf32> -> vector<256x128xf32>
    %90 = arith.addf %83, %89 : vector<256x128xf32>
    %c0_34 = arith.constant 0 : index
    %c0_35 = arith.constant 0 : index
    %91 = vector.load %arg3[%c0_34, %c0_35] : memref<1x128xf32, #tpu.memory_space<vmem>>, vector<1x128xf32>
    %92 = vector.broadcast %91 : vector<1x128xf32> to vector<256x128xf32>
    %93 = arith.addf %90, %92 : vector<256x128xf32>
    %cst_36 = arith.constant dense<0.000000e+00> : vector<128xf32>
    %94 = vector.multi_reduction <add>, %93, %cst_36 [0] : vector<256x128xf32> to vector<128xf32>
    %95 = vector.shape_cast %94 : vector<128xf32> to vector<1x128xf32>
    %cst_37 = arith.constant 3.906250e-03 : f32
    %96 = vector.broadcast %cst_37 : f32 to vector<1x128xf32>
    %97 = arith.mulf %95, %96 : vector<1x128xf32>
    %98 = vector.broadcast %97 : vector<1x128xf32> to vector<256x128xf32>
    %99 = arith.subf %93, %98 : vector<256x128xf32>
    %100 = arith.mulf %99, %99 : vector<256x128xf32>
    %cst_38 = arith.constant dense<0.000000e+00> : vector<128xf32>
    %101 = vector.multi_reduction <add>, %100, %cst_38 [0] : vector<256x128xf32> to vector<128xf32>
    %102 = vector.shape_cast %101 : vector<128xf32> to vector<1x128xf32>
    %cst_39 = arith.constant 3.906250e-03 : f32
    %103 = vector.broadcast %cst_39 : f32 to vector<1x128xf32>
    %104 = arith.mulf %102, %103 : vector<1x128xf32>
    %cst_40 = arith.constant 9.99999974E-6 : f32
    %105 = vector.broadcast %cst_40 : f32 to vector<1x128xf32>
    %106 = arith.addf %104, %105 : vector<1x128xf32>
    %107 = math.rsqrt %106 : vector<1x128xf32>
    %108 = vector.broadcast %107 : vector<1x128xf32> to vector<256x128xf32>
    %109 = arith.mulf %99, %108 : vector<256x128xf32>
    %cst_41 = arith.constant 0.000000e+00 : f32
    %110 = vector.broadcast %cst_41 : f32 to vector<256x128xf32>
    %111 = arith.maximumf %109, %110 : vector<256x128xf32>
    %112 = arith.truncf %111 : vector<256x128xf32> to vector<256x128xbf16>
    %113 = vector.extract_strided_slice %112 {offsets = [1, 0], sizes = [255, 128], strides = [1, 1]} : vector<256x128xbf16> to vector<255x128xbf16>
    %114 = vector.extract_strided_slice %112 {offsets = [0, 0], sizes = [1, 128], strides = [1, 1]} : vector<256x128xbf16> to vector<1x128xbf16>
    %115 = tpu.concatenate %113, %114 in 0 : vector<255x128xbf16>, vector<1x128xbf16> -> vector<256x128xbf16>
    %116 = vector.extract_strided_slice %112 {offsets = [255, 0], sizes = [1, 128], strides = [1, 1]} : vector<256x128xbf16> to vector<1x128xbf16>
    %117 = vector.extract_strided_slice %112 {offsets = [0, 0], sizes = [255, 128], strides = [1, 1]} : vector<256x128xbf16> to vector<255x128xbf16>
    %118 = tpu.concatenate %116, %117 in 0 : vector<1x128xbf16>, vector<255x128xbf16> -> vector<256x128xbf16>
    %119 = vector.shape_cast %18 : vector<256x1xi1> to vector<256x1xi1>
    %120 = vector.broadcast %119 : vector<256x1xi1> to vector<256x128xi1>
    %121 = arith.select %120, %115, %118 : vector<256x128xi1>, vector<256x128xbf16>
    %122 = vector.shape_cast %20 : vector<256x1xi1> to vector<256x1xi1>
    %123 = vector.broadcast %122 : vector<256x1xi1> to vector<256x128xi1>
    %124 = arith.select %123, %118, %115 : vector<256x128xi1>, vector<256x128xbf16>
    %cst_42 = arith.constant 0.000000e+00 : f32
    %125 = vector.broadcast %cst_42 : f32 to vector<256x128xf32>
    %126 = vector.extract_strided_slice %121 {offsets = [16, 0], sizes = [16, 128], strides = [1, 1]} : vector<256x128xbf16> to vector<16x128xbf16>
    %127 = vector.extract_strided_slice %121 {offsets = [0, 0], sizes = [240, 128], strides = [1, 1]} : vector<256x128xbf16> to vector<240x128xbf16>
    %128 = tpu.concatenate %126, %127 in 0 : vector<16x128xbf16>, vector<240x128xbf16> -> vector<256x128xbf16>
    %c0_43 = arith.constant 0 : index
    %c0_44 = arith.constant 0 : index
    %c0_45 = arith.constant 0 : index
    %129 = vector.load %arg4[%c0_43, %c0_44, %c0_45] : memref<9x128x128xbf16, #tpu.memory_space<vmem>>, vector<1x128x128xbf16>
    %130 = vector.shape_cast %129 : vector<1x128x128xbf16> to vector<128x128xbf16>
    %cst_46 = arith.constant dense<0.000000e+00> : vector<256x128xf32>
    %131 = tpu.matmul %128, %130, %cst_46 {dimension_numbers = #tpu.dot_dimension_numbers<[1], [0], [0], [1], [0, 0, 1, 1], [], []>} : vector<256x128xbf16>, vector<128x128xbf16>, vector<256x128xf32> -> vector<256x128xf32>
    %132 = arith.addf %125, %131 : vector<256x128xf32>
    %133 = vector.extract_strided_slice %112 {offsets = [16, 0], sizes = [16, 128], strides = [1, 1]} : vector<256x128xbf16> to vector<16x128xbf16>
    %134 = vector.extract_strided_slice %112 {offsets = [0, 0], sizes = [240, 128], strides = [1, 1]} : vector<256x128xbf16> to vector<240x128xbf16>
    %135 = tpu.concatenate %133, %134 in 0 : vector<16x128xbf16>, vector<240x128xbf16> -> vector<256x128xbf16>
    %c1_47 = arith.constant 1 : index
    %c0_48 = arith.constant 0 : index
    %c0_49 = arith.constant 0 : index
    %136 = vector.load %arg4[%c1_47, %c0_48, %c0_49] : memref<9x128x128xbf16, #tpu.memory_space<vmem>>, vector<1x128x128xbf16>
    %137 = vector.shape_cast %136 : vector<1x128x128xbf16> to vector<128x128xbf16>
    %cst_50 = arith.constant dense<0.000000e+00> : vector<256x128xf32>
    %138 = tpu.matmul %135, %137, %cst_50 {dimension_numbers = #tpu.dot_dimension_numbers<[1], [0], [0], [1], [0, 0, 1, 1], [], []>} : vector<256x128xbf16>, vector<128x128xbf16>, vector<256x128xf32> -> vector<256x128xf32>
    %139 = arith.addf %132, %138 : vector<256x128xf32>
    %140 = vector.extract_strided_slice %124 {offsets = [16, 0], sizes = [16, 128], strides = [1, 1]} : vector<256x128xbf16> to vector<16x128xbf16>
    %141 = vector.extract_strided_slice %124 {offsets = [0, 0], sizes = [240, 128], strides = [1, 1]} : vector<256x128xbf16> to vector<240x128xbf16>
    %142 = tpu.concatenate %140, %141 in 0 : vector<16x128xbf16>, vector<240x128xbf16> -> vector<256x128xbf16>
    %c2_51 = arith.constant 2 : index
    %c0_52 = arith.constant 0 : index
    %c0_53 = arith.constant 0 : index
    %143 = vector.load %arg4[%c2_51, %c0_52, %c0_53] : memref<9x128x128xbf16, #tpu.memory_space<vmem>>, vector<1x128x128xbf16>
    %144 = vector.shape_cast %143 : vector<1x128x128xbf16> to vector<128x128xbf16>
    %cst_54 = arith.constant dense<0.000000e+00> : vector<256x128xf32>
    %145 = tpu.matmul %142, %144, %cst_54 {dimension_numbers = #tpu.dot_dimension_numbers<[1], [0], [0], [1], [0, 0, 1, 1], [], []>} : vector<256x128xbf16>, vector<128x128xbf16>, vector<256x128xf32> -> vector<256x128xf32>
    %146 = arith.addf %139, %145 : vector<256x128xf32>
    %c3_55 = arith.constant 3 : index
    %c0_56 = arith.constant 0 : index
    %c0_57 = arith.constant 0 : index
    %147 = vector.load %arg4[%c3_55, %c0_56, %c0_57] : memref<9x128x128xbf16, #tpu.memory_space<vmem>>, vector<1x128x128xbf16>
    %148 = vector.shape_cast %147 : vector<1x128x128xbf16> to vector<128x128xbf16>
    %cst_58 = arith.constant dense<0.000000e+00> : vector<256x128xf32>
    %149 = tpu.matmul %121, %148, %cst_58 {dimension_numbers = #tpu.dot_dimension_numbers<[1], [0], [0], [1], [0, 0, 1, 1], [], []>} : vector<256x128xbf16>, vector<128x128xbf16>, vector<256x128xf32> -> vector<256x128xf32>
    %150 = arith.addf %146, %149 : vector<256x128xf32>
    %c4_59 = arith.constant 4 : index
    %c0_60 = arith.constant 0 : index
    %c0_61 = arith.constant 0 : index
    %151 = vector.load %arg4[%c4_59, %c0_60, %c0_61] : memref<9x128x128xbf16, #tpu.memory_space<vmem>>, vector<1x128x128xbf16>
    %152 = vector.shape_cast %151 : vector<1x128x128xbf16> to vector<128x128xbf16>
    %cst_62 = arith.constant dense<0.000000e+00> : vector<256x128xf32>
    %153 = tpu.matmul %112, %152, %cst_62 {dimension_numbers = #tpu.dot_dimension_numbers<[1], [0], [0], [1], [0, 0, 1, 1], [], []>} : vector<256x128xbf16>, vector<128x128xbf16>, vector<256x128xf32> -> vector<256x128xf32>
    %154 = arith.addf %150, %153 : vector<256x128xf32>
    %c5_63 = arith.constant 5 : index
    %c0_64 = arith.constant 0 : index
    %c0_65 = arith.constant 0 : index
    %155 = vector.load %arg4[%c5_63, %c0_64, %c0_65] : memref<9x128x128xbf16, #tpu.memory_space<vmem>>, vector<1x128x128xbf16>
    %156 = vector.shape_cast %155 : vector<1x128x128xbf16> to vector<128x128xbf16>
    %cst_66 = arith.constant dense<0.000000e+00> : vector<256x128xf32>
    %157 = tpu.matmul %124, %156, %cst_66 {dimension_numbers = #tpu.dot_dimension_numbers<[1], [0], [0], [1], [0, 0, 1, 1], [], []>} : vector<256x128xbf16>, vector<128x128xbf16>, vector<256x128xf32> -> vector<256x128xf32>
    %158 = arith.addf %154, %157 : vector<256x128xf32>
    %159 = vector.extract_strided_slice %121 {offsets = [16, 0], sizes = [240, 128], strides = [1, 1]} : vector<256x128xbf16> to vector<240x128xbf16>
    %160 = vector.extract_strided_slice %121 {offsets = [224, 0], sizes = [16, 128], strides = [1, 1]} : vector<256x128xbf16> to vector<16x128xbf16>
    %161 = tpu.concatenate %159, %160 in 0 : vector<240x128xbf16>, vector<16x128xbf16> -> vector<256x128xbf16>
    %c6_67 = arith.constant 6 : index
    %c0_68 = arith.constant 0 : index
    %c0_69 = arith.constant 0 : index
    %162 = vector.load %arg4[%c6_67, %c0_68, %c0_69] : memref<9x128x128xbf16, #tpu.memory_space<vmem>>, vector<1x128x128xbf16>
    %163 = vector.shape_cast %162 : vector<1x128x128xbf16> to vector<128x128xbf16>
    %cst_70 = arith.constant dense<0.000000e+00> : vector<256x128xf32>
    %164 = tpu.matmul %161, %163, %cst_70 {dimension_numbers = #tpu.dot_dimension_numbers<[1], [0], [0], [1], [0, 0, 1, 1], [], []>} : vector<256x128xbf16>, vector<128x128xbf16>, vector<256x128xf32> -> vector<256x128xf32>
    %165 = arith.addf %158, %164 : vector<256x128xf32>
    %166 = vector.extract_strided_slice %112 {offsets = [16, 0], sizes = [240, 128], strides = [1, 1]} : vector<256x128xbf16> to vector<240x128xbf16>
    %167 = vector.extract_strided_slice %112 {offsets = [224, 0], sizes = [16, 128], strides = [1, 1]} : vector<256x128xbf16> to vector<16x128xbf16>
    %168 = tpu.concatenate %166, %167 in 0 : vector<240x128xbf16>, vector<16x128xbf16> -> vector<256x128xbf16>
    %c7_71 = arith.constant 7 : index
    %c0_72 = arith.constant 0 : index
    %c0_73 = arith.constant 0 : index
    %169 = vector.load %arg4[%c7_71, %c0_72, %c0_73] : memref<9x128x128xbf16, #tpu.memory_space<vmem>>, vector<1x128x128xbf16>
    %170 = vector.shape_cast %169 : vector<1x128x128xbf16> to vector<128x128xbf16>
    %cst_74 = arith.constant dense<0.000000e+00> : vector<256x128xf32>
    %171 = tpu.matmul %168, %170, %cst_74 {dimension_numbers = #tpu.dot_dimension_numbers<[1], [0], [0], [1], [0, 0, 1, 1], [], []>} : vector<256x128xbf16>, vector<128x128xbf16>, vector<256x128xf32> -> vector<256x128xf32>
    %172 = arith.addf %165, %171 : vector<256x128xf32>
    %173 = vector.extract_strided_slice %124 {offsets = [16, 0], sizes = [240, 128], strides = [1, 1]} : vector<256x128xbf16> to vector<240x128xbf16>
    %174 = vector.extract_strided_slice %124 {offsets = [224, 0], sizes = [16, 128], strides = [1, 1]} : vector<256x128xbf16> to vector<16x128xbf16>
    %175 = tpu.concatenate %173, %174 in 0 : vector<240x128xbf16>, vector<16x128xbf16> -> vector<256x128xbf16>
    %c8_75 = arith.constant 8 : index
    %c0_76 = arith.constant 0 : index
    %c0_77 = arith.constant 0 : index
    %176 = vector.load %arg4[%c8_75, %c0_76, %c0_77] : memref<9x128x128xbf16, #tpu.memory_space<vmem>>, vector<1x128x128xbf16>
    %177 = vector.shape_cast %176 : vector<1x128x128xbf16> to vector<128x128xbf16>
    %cst_78 = arith.constant dense<0.000000e+00> : vector<256x128xf32>
    %178 = tpu.matmul %175, %177, %cst_78 {dimension_numbers = #tpu.dot_dimension_numbers<[1], [0], [0], [1], [0, 0, 1, 1], [], []>} : vector<256x128xbf16>, vector<128x128xbf16>, vector<256x128xf32> -> vector<256x128xf32>
    %179 = arith.addf %172, %178 : vector<256x128xf32>
    %c0_79 = arith.constant 0 : index
    %c0_80 = arith.constant 0 : index
    %180 = vector.load %arg5[%c0_79, %c0_80] : memref<1x128xf32, #tpu.memory_space<vmem>>, vector<1x128xf32>
    %181 = vector.broadcast %180 : vector<1x128xf32> to vector<256x128xf32>
    %182 = arith.addf %179, %181 : vector<256x128xf32>
    %cst_81 = arith.constant dense<0.000000e+00> : vector<128xf32>
    %183 = vector.multi_reduction <add>, %182, %cst_81 [0] : vector<256x128xf32> to vector<128xf32>
    %184 = vector.shape_cast %183 : vector<128xf32> to vector<1x128xf32>
    %cst_82 = arith.constant 3.906250e-03 : f32
    %185 = vector.broadcast %cst_82 : f32 to vector<1x128xf32>
    %186 = arith.mulf %184, %185 : vector<1x128xf32>
    %187 = vector.broadcast %186 : vector<1x128xf32> to vector<256x128xf32>
    %188 = arith.subf %182, %187 : vector<256x128xf32>
    %189 = arith.mulf %188, %188 : vector<256x128xf32>
    %cst_83 = arith.constant dense<0.000000e+00> : vector<128xf32>
    %190 = vector.multi_reduction <add>, %189, %cst_83 [0] : vector<256x128xf32> to vector<128xf32>
    %191 = vector.shape_cast %190 : vector<128xf32> to vector<1x128xf32>
    %cst_84 = arith.constant 3.906250e-03 : f32
    %192 = vector.broadcast %cst_84 : f32 to vector<1x128xf32>
    %193 = arith.mulf %191, %192 : vector<1x128xf32>
    %cst_85 = arith.constant 9.99999974E-6 : f32
    %194 = vector.broadcast %cst_85 : f32 to vector<1x128xf32>
    %195 = arith.addf %193, %194 : vector<1x128xf32>
    %196 = math.rsqrt %195 : vector<1x128xf32>
    %197 = vector.broadcast %196 : vector<1x128xf32> to vector<256x128xf32>
    %198 = arith.mulf %188, %197 : vector<256x128xf32>
    %199 = arith.addf %22, %198 : vector<256x128xf32>
    %c0_86 = arith.constant 0 : index
    %c0_87 = arith.constant 0 : index
    %c0_88 = arith.constant 0 : index
    %200 = vector.load %arg6[%c0_86, %c0_87, %c0_88] : memref<1x256x128xf32, #tpu.memory_space<vmem>>, vector<1x256x128xf32>
    %201 = vector.shape_cast %200 : vector<1x256x128xf32> to vector<256x128xf32>
    %202 = vector.shape_cast %199 : vector<256x128xf32> to vector<1x256x128xf32>
    tpu.vector_store %arg6[%c0_86, %c0_87, %c0_88], %202 {strides = array<i32>} : memref<1x256x128xf32, #tpu.memory_space<vmem>>, vector<1x256x128xf32>,
    return
  }
  func.func @transform_0(%arg0: i32) -> (i32, i32, i32) {
    %c0_i32 = arith.constant 0 : i32
    %c0_i32_0 = arith.constant 0 : i32
    %c0_i32_1 = arith.constant 0 : i32
    return %arg0, %c0_i32, %c0_i32_0 : i32, i32, i32
  }
  func.func @transform_1(%arg0: i32) -> (i32, i32, i32) {
    %c0_i32 = arith.constant 0 : i32
    %c0_i32_0 = arith.constant 0 : i32
    %c0_i32_1 = arith.constant 0 : i32
    %c0_i32_2 = arith.constant 0 : i32
    return %c0_i32, %c0_i32_0, %c0_i32_1 : i32, i32, i32
  }
  func.func @transform_2(%arg0: i32) -> (i32, i32) {
    %c0_i32 = arith.constant 0 : i32
    %c0_i32_0 = arith.constant 0 : i32
    %c0_i32_1 = arith.constant 0 : i32
    return %c0_i32, %c0_i32_0 : i32, i32
  }
  func.func @transform_3(%arg0: i32) -> (i32, i32, i32) {
    %c0_i32 = arith.constant 0 : i32
    %c0_i32_0 = arith.constant 0 : i32
    %c0_i32_1 = arith.constant 0 : i32
    %c0_i32_2 = arith.constant 0 : i32
    return %c0_i32, %c0_i32_0, %c0_i32_1 : i32, i32, i32
  }
  func.func @transform_4(%arg0: i32) -> (i32, i32) {
    %c0_i32 = arith.constant 0 : i32
    %c0_i32_0 = arith.constant 0 : i32
    %c0_i32_1 = arith.constant 0 : i32
    return %c0_i32, %c0_i32_0 : i32, i32
  }
  func.func @transform_5(%arg0: i32) -> (i32, i32, i32) {
    %c0_i32 = arith.constant 0 : i32
    %c0_i32_0 = arith.constant 0 : i32
    %c0_i32_1 = arith.constant 0 : i32
    return %arg0, %c0_i32, %c0_i32_0 : i32, i32, i32
  }
}

</mosaic_0001>

<llo_original>
// kernel: tpu_custom_call.1
$region0: #{tpu_custom_call.1}
  #allocation0 [shape = 'u32[]', space=smem, size = 0x4, offset = 0x4, fixed_abs, tag = 'smem constant byte address 0x4 - core index']
  #allocation1 [shape = 'u32[144,128]{1,0:T(1,128)}', space=vmem, size = 0x12000, scoped, tag = 'internal scratch']
  %s0 = inlined_call_operand.hbm [shape: f32[2,256,128], index: 0, kind: input, shape index: {}]
  %s1 = inlined_call_operand.hbm [shape: bf16[9,128,128], index: 1, kind: input, shape index: {}]
  %s2 = inlined_call_operand.vmem [shape: f32[1,128], index: 2, kind: input, shape index: {}]
  %s3 = inlined_call_operand.hbm [shape: bf16[9,128,128], index: 3, kind: input, shape index: {}]
  %s4 = inlined_call_operand.vmem [shape: f32[1,128], index: 4, kind: input, shape index: {}]
  %s5 = inlined_call_operand.hbm [shape: f32[2,256,128], index: 5, kind: output, shape index: {}]
  %s6 = sld [smem:[#allocation0]]
  $region65: #{tpu_custom_call.1} parent=0
    _
  %s8 = ssub.s32 1, %s6
  %s9 = scalar_select 0, %s8, %s6
  $region1: #{tpu_custom_call.1} parent=0
    #allocation2 [shape = 'u8[262144]{0}', space=vmem, size = 0x40000, scoped, tag = 'input window, operand 0']
    #allocation3 [shape = 's32[2]{0}', space=sflag, size = 0x8, scoped, tag = 'scoped memory for tpu_custom_call.1']
    #allocation4 [shape = 's32[2]{0}', space=sflag, size = 0x8, scoped, tag = 'scoped memory for tpu_custom_call.1']
    #allocation5 [shape = 'u8[294912]{0}', space=vmem, size = 0x48000, scoped, tag = 'input window, operand 1, single buffered']
    #allocation6 [shape = 's32[1]{0}', space=sflag, size = 0x4, scoped, tag = 'scoped memory for tpu_custom_call.1']
    #allocation7 [shape = 'u8[294912]{0}', space=vmem, size = 0x48000, scoped, tag = 'input window, operand 3, single buffered']
    #allocation8 [shape = 'u8[262144]{0}', space=vmem, size = 0x40000, scoped, tag = 'output window, operand 0']
    %10 = vsyncpa [#allocation3], 0
    %s11 = scalar_lea.sflag [#allocation3], 1
    %12 = vsyncpa %s11, 0
    %13 = vsyncpa [#allocation6], 0
    %14 = vsyncpa [#allocation4], 0
    %s15 = scalar_lea.sflag [#allocation4], 1
    %16 = vsyncpa %s15, 0
    loop: start=0, step=1, limit=4
    $region2: #{tpu_custom_call.1} parent=1 // loop_pre_header
      _
    $region3: #{tpu_custom_call.1} parent=1 // loop_header
      %s18 = sphi 0, %s22
      %p19 = scmp.ge.s32.totalorder %s18, 4
      %s28 = sphi 0, %s30
      %s31 = sphi 0, %s28
      %s32 = sphi 0, %s31
      %s48 = sphi 0, %s32
      %s52 = sphi 0, %s52
      %s54 = sphi 0, %s52
      %s55 = sphi 0, %s54
      %s69 = sphi 0, %s55
      %s73 = sphi 0, %s73
      %s75 = sphi 0, %s73
      %s76 = sphi 0, %s75
      %s90 = sphi 0, %s76
      %s94 = sphi 0, %s94
      %s96 = sphi 0, %s94
      %s97 = sphi 0, %s96
      %s111 = sphi 0, %s97
      %s115 = sphi 0, %s115
      %s117 = sphi 0, %s115
      %s118 = sphi 0, %s117
      %s132 = sphi 0, %s118
      %s138 = sphi 0, %s140
      %s141 = sphi 0, %s138
      %s142 = sphi 0, %s141
      %s158 = sphi 0, %s142
    $region4: #{tpu_custom_call.1} parent=1 // loop_header_branch
      %21 = sbr.rel (%p19) target = $region8
    $region5: #{tpu_custom_call.1} parent=1 // loop_body
      %s23 = ssub.s32 %s18, 1
      %s24 = ssub.s32 %s18, 2
      %s25 = sadd.s32 %s18, 1
      %s26 = ssub.s32 %s18, %s25
      %p27 = scmp.eq.s32.totalorder %s26, 0
      %s29 = sadd.s32 %s28, 1
      %s30 = scalar_select %p27, %s28, %s29
      %p33 = pneg %p27
      %p34 = scmp.eq.s32.totalorder %s18, 1
      %p35 = por %p33, %p34
      %p36 = scmp.ne.s32.totalorder %s28, %s31
      %p37 = scmp.eq.s32.totalorder %s18, 0
      %p38 = por %p36, %p37
      %p39 = scmp.ne.s32.totalorder %s28, %s31
      %p40 = scmp.eq.s32.totalorder %s23, 1
      %p41 = por %p39, %p40
      %p42 = scmp.ne.s32.totalorder %s31, %s32
      %p43 = scmp.eq.s32.totalorder %s23, 0
      %p44 = por %p42, %p43
      %p45 = scmp.ne.s32.totalorder %s31, %s32
      %p46 = scmp.eq.s32.totalorder %s24, 1
      %p47 = por %p45, %p46
      %p49 = scmp.ne.s32.totalorder %s32, %s48
      %p50 = scmp.eq.s32.totalorder %s24, 0
      %p51 = por %p49, %p50
      %s53 = sadd.s32 %s52, 1
      %p56 = scmp.eq.s32.totalorder %s18, 1
      %p57 = scmp.ne.s32.totalorder %s52, %s54
      %p58 = scmp.eq.s32.totalorder %s18, 0
      %p59 = por %p57, %p58
      %p60 = scmp.ne.s32.totalorder %s52, %s54
      %p61 = scmp.eq.s32.totalorder %s23, 1
      %p62 = por %p60, %p61
      %p63 = scmp.ne.s32.totalorder %s54, %s55
      %p64 = scmp.eq.s32.totalorder %s23, 0
      %p65 = por %p63, %p64
      %p66 = scmp.ne.s32.totalorder %s54, %s55
      %p67 = scmp.eq.s32.totalorder %s24, 1
      %p68 = por %p66, %p67
      %p70 = scmp.ne.s32.totalorder %s55, %s69
      %p71 = scmp.eq.s32.totalorder %s24, 0
      %p72 = por %p70, %p71
      %s74 = sadd.s32 %s73, 1
      %p77 = scmp.eq.s32.totalorder %s18, 1
      %p78 = scmp.ne.s32.totalorder %s73, %s75
      %p79 = scmp.eq.s32.totalorder %s18, 0
      %p80 = por %p78, %p79
      %p81 = scmp.ne.s32.totalorder %s73, %s75
      %p82 = scmp.eq.s32.totalorder %s23, 1
      %p83 = por %p81, %p82
      %p84 = scmp.ne.s32.totalorder %s75, %s76
      %p85 = scmp.eq.s32.totalorder %s23, 0
      %p86 = por %p84, %p85
      %p87 = scmp.ne.s32.totalorder %s75, %s76
      %p88 = scmp.eq.s32.totalorder %s24, 1
      %p89 = por %p87, %p88
      %p91 = scmp.ne.s32.totalorder %s76, %s90
      %p92 = scmp.eq.s32.totalorder %s24, 0
      %p93 = por %p91, %p92
      %s95 = sadd.s32 %s94, 1
      %p98 = scmp.eq.s32.totalorder %s18, 1
      %p99 = scmp.ne.s32.totalorder %s94, %s96
      %p100 = scmp.eq.s32.totalorder %s18, 0
      %p101 = por %p99, %p100
      %p102 = scmp.ne.s32.totalorder %s94, %s96
      %p103 = scmp.eq.s32.totalorder %s23, 1
      %p104 = por %p102, %p103
      %p105 = scmp.ne.s32.totalorder %s96, %s97
      %p106 = scmp.eq.s32.totalorder %s23, 0
      %p107 = por %p105, %p106
      %p108 = scmp.ne.s32.totalorder %s96, %s97
      %p109 = scmp.eq.s32.totalorder %s24, 1
      %p110 = por %p108, %p109
      %p112 = scmp.ne.s32.totalorder %s97, %s111
      %p113 = scmp.eq.s32.totalorder %s24, 0
      %p114 = por %p112, %p113
      %s116 = sadd.s32 %s115, 1
      %p119 = scmp.eq.s32.totalorder %s18, 1
      %p120 = scmp.ne.s32.totalorder %s115, %s117
      %p121 = scmp.eq.s32.totalorder %s18, 0
      %p122 = por %p120, %p121
      %p123 = scmp.ne.s32.totalorder %s115, %s117
      %p124 = scmp.eq.s32.totalorder %s23, 1
      %p125 = por %p123, %p124
      %p126 = scmp.ne.s32.totalorder %s117, %s118
      %p127 = scmp.eq.s32.totalorder %s23, 0
      %p128 = por %p126, %p127
      %p129 = scmp.ne.s32.totalorder %s117, %s118
      %p130 = scmp.eq.s32.totalorder %s24, 1
      %p131 = por %p129, %p130
      %p133 = scmp.ne.s32.totalorder %s118, %s132
      %p134 = scmp.eq.s32.totalorder %s24, 0
      %p135 = por %p133, %p134
      %s136 = ssub.s32 %s18, %s25
      %p137 = scmp.eq.s32.totalorder %s136, 0
      %s139 = sadd.s32 %s138, 1
      %s140 = scalar_select %p137, %s138, %s139
      %p143 = pneg %p137
      %p144 = scmp.eq.s32.totalorder %s18, 1
      %p145 = por %p143, %p144
      %p146 = scmp.ne.s32.totalorder %s138, %s141
      %p147 = scmp.eq.s32.totalorder %s18, 0
      %p148 = por %p146, %p147
      %p149 = scmp.ne.s32.totalorder %s138, %s141
      %p150 = scmp.eq.s32.totalorder %s23, 1
      %p151 = por %p149, %p150
      %p152 = scmp.ne.s32.totalorder %s141, %s142
      %p153 = scmp.eq.s32.totalorder %s23, 0
      %p154 = por %p152, %p153
      %p155 = scmp.ne.s32.totalorder %s141, %s142
      %p156 = scmp.eq.s32.totalorder %s24, 1
      %p157 = por %p155, %p156
      %p159 = scmp.ne.s32.totalorder %s142, %s158
      %p160 = scmp.eq.s32.totalorder %s24, 0
      %p161 = por %p159, %p160
      %p162 = scmp.le.s32.totalorder 1, %s18
      %p163 = scmp.lt.s32.totalorder %s18, 3
      %p164 = pnand %p162, %p163
      %p165 = pneg %p164
      // Predicated region
      $region9: #{tpu_custom_call.1} parent=5 // pred_check
        _
      $region10: #{tpu_custom_call.1} parent=5 // pred_check_branch
        %167 = sbr.rel (%p164) target = $region12
      $region11: #{tpu_custom_call.1} parent=5 // pred_region
        %s168 = ssub.s32 %s18, 1
        // Predicated region
        $region13: #{tpu_custom_call.1} parent=11 // pred_check
          %p169 = pneg %p65
        $region14: #{tpu_custom_call.1} parent=11 // pred_check_branch
          %171 = sbr.rel (%p169) target = $region16
        $region15: #{tpu_custom_call.1} parent=11 // pred_region
          %s173 = ssub.s32 9216, 9216
          %174 = vsyncadd [#allocation6], %s173
          %s175 = sshll.u32 [#allocation5], 4
          %s176 = int_to_ptr.vmem [resolvable:$true] %s175
          %181 = dma.hbm_to_vmem [thread:$0]  %s1, 9216, %s176, [#allocation6], 64, 64, 4
        $region16: #{tpu_custom_call.1} parent=11 // pred_fallthru
          _
        // Predicated region
        $region17: #{tpu_custom_call.1} parent=11 // pred_check
          %p182 = pneg %p86
        $region18: #{tpu_custom_call.1} parent=11 // pred_check_branch
          %184 = sbr.rel (%p182) target = $region20
        $region19: #{tpu_custom_call.1} parent=11 // pred_region
          _
        $region20: #{tpu_custom_call.1} parent=11 // pred_fallthru
          _
        // Predicated region
        $region21: #{tpu_custom_call.1} parent=11 // pred_check
          %p185 = pneg %p107
        $region22: #{tpu_custom_call.1} parent=11 // pred_check_branch
          %187 = sbr.rel (%p185) target = $region24
        $region23: #{tpu_custom_call.1} parent=11 // pred_region
          %s189 = ssub.s32 9216, 9216
          %190 = vsyncadd [#allocation6], %s189
          %s191 = sshll.u32 [#allocation7], 4
          %s192 = int_to_ptr.vmem [resolvable:$true] %s191
          %197 = dma.hbm_to_vmem [thread:$0]  %s3, 9216, %s192, [#allocation6], 64, 64, 4
        $region24: #{tpu_custom_call.1} parent=11 // pred_fallthru
          _
        // Predicated region
        $region25: #{tpu_custom_call.1} parent=11 // pred_check
          %p198 = pneg %p128
        $region26: #{tpu_custom_call.1} parent=11 // pred_check_branch
          %200 = sbr.rel (%p198) target = $region28
        $region27: #{tpu_custom_call.1} parent=11 // pred_region
          _
        $region28: #{tpu_custom_call.1} parent=11 // pred_fallthru
          _
      $region12: #{tpu_custom_call.1} parent=5 // pred_fallthru
        _
      %p201 = scmp.lt.s32.totalorder %s18, 2
      // Predicated region
      $region29: #{tpu_custom_call.1} parent=5 // pred_check
        %p202 = pneg %p201
      $region30: #{tpu_custom_call.1} parent=5 // pred_check_branch
        %204 = sbr.rel (%p202) target = $region32
      $region31: #{tpu_custom_call.1} parent=5 // pred_region
        // Predicated region
        $region33: #{tpu_custom_call.1} parent=31 // pred_check
          %p205 = pneg %p38
        $region34: #{tpu_custom_call.1} parent=31 // pred_check_branch
          %207 = sbr.rel (%p205) target = $region36
        $region35: #{tpu_custom_call.1} parent=31 // pred_region
          %s208 = sand.u32 %s28, 1
          %s209 = scalar_lea.sflag [#allocation3], %s208
          %s210 = sand.u32 %s28, 1
          %s211 = smul.addr %s210, 256
          %s212 = scalar_lea.vmem [#allocation2], %s211
          %s214 = ssub.s32 4096, 4096
          %215 = vsyncadd %s209, %s214
          %s216 = smul.addr %s18, 32
          %s217 = smul.addr %s216, 128
          %s218 = scalar_lea.hbm %s0, %s217
          %s219 = sshll.u32 %s212, 4
          %s220 = int_to_ptr.vmem [resolvable:$true] %s219
          %225 = dma.hbm_to_vmem [thread:$0]  %s218, 4096, %s220, %s209, 128, 128, 8
        $region36: #{tpu_custom_call.1} parent=31 // pred_fallthru
          _
      $region32: #{tpu_custom_call.1} parent=5 // pred_fallthru
        _
      %p226 = scmp.le.s32.totalorder 1, %s18
      %p227 = scmp.lt.s32.totalorder %s18, 3
      %p228 = pnand %p226, %p227
      %p229 = pneg %p228
      // Predicated region
      $region37: #{tpu_custom_call.1} parent=5 // pred_check
        _
      $region38: #{tpu_custom_call.1} parent=5 // pred_check_branch
        %231 = sbr.rel (%p228) target = $region40
      $region39: #{tpu_custom_call.1} parent=5 // pred_region
        %s232 = ssub.s32 %s18, 1
        %s233 = sand.u32 %s31, 1
        %s234 = scalar_lea.sflag [#allocation3], %s233
        %s235 = sand.u32 %s31, 1
        %s236 = smul.addr %s235, 256
        %s237 = scalar_lea.vmem [#allocation2], %s236
        // Predicated region
        $region41: #{tpu_custom_call.1} parent=39 // pred_check
          %p238 = pneg %p44
        $region42: #{tpu_custom_call.1} parent=39 // pred_check_branch
          %240 = sbr.rel (%p238) target = $region44
        $region43: #{tpu_custom_call.1} parent=39 // pred_region
          %241 = dma.done %s234, 4096
        $region44: #{tpu_custom_call.1} parent=39 // pred_fallthru
          _
        // Predicated region
        $region45: #{tpu_custom_call.1} parent=39 // pred_check
          %p242 = pneg %p65
        $region46: #{tpu_custom_call.1} parent=39 // pred_check_branch
          %244 = sbr.rel (%p242) target = $region48
        $region47: #{tpu_custom_call.1} parent=39 // pred_region
          %245 = dma.done [#allocation6], 9216
        $region48: #{tpu_custom_call.1} parent=39 // pred_fallthru
          _
        // Predicated region
        $region49: #{tpu_custom_call.1} parent=39 // pred_check
          %p246 = pneg %p107
        $region50: #{tpu_custom_call.1} parent=39 // pred_check_branch
          %248 = sbr.rel (%p246) target = $region52
        $region51: #{tpu_custom_call.1} parent=39 // pred_region
          %249 = dma.done [#allocation6], 9216
        $region52: #{tpu_custom_call.1} parent=39 // pred_fallthru
          _
        %s250 = sand.u32 %s31, 1
        %s251 = scalar_lea.sflag [#allocation3], %s250
        %s252 = sand.u32 %s31, 1
        %s253 = smul.addr %s252, 256
        %s254 = scalar_lea.vmem [#allocation2], %s253
        %p255 = pneg %p44
        %p256 = pneg %p41
        %p257 = pneg %p65
        %p258 = pneg %p62
        %p259 = pneg %p86
        %p260 = pneg %p83
        %p261 = pneg %p107
        %p262 = pneg %p104
        %p263 = pneg %p128
        %p264 = pneg %p125
        %p265 = pneg %p154
        %p266 = pneg %p151
        %s267 = sand.u32 %s141, 1
        %s268 = scalar_lea.sflag [#allocation4], %s267
        %s269 = sand.u32 %s141, 1
        %s270 = smul.addr %s269, 256
        %s271 = scalar_lea.vmem [#allocation8], %s270
        %v275 = vlaneseq
        %v276 = vshrl.u32 %v275, 7
        %v277 = vadd.s32 %v276, 8
        %v278 = vadd.s32 %v276, 16
        %v279 = vadd.s32 %v276, 24
        %v280 = vadd.s32 %v276, 32
        %v281 = vadd.s32 %v276, 40
        %v282 = vadd.s32 %v276, 48
        %v283 = vadd.s32 %v276, 56
        %v284 = vadd.s32 %v276, 64
        %v285 = vadd.s32 %v276, 72
        %v286 = vadd.s32 %v276, 80
        %v287 = vadd.s32 %v276, 88
        %v288 = vadd.s32 %v276, 96
        %v289 = vadd.s32 %v276, 104
        %v290 = vadd.s32 %v276, 112
        %v291 = vadd.s32 %v276, 120
        %v292 = vadd.s32 %v276, 128
        %v293 = vadd.s32 %v276, 136
        %v294 = vadd.s32 %v276, 144
        %v295 = vadd.s32 %v276, 152
        %v296 = vadd.s32 %v276, 160
        %v297 = vadd.s32 %v276, 168
        %v298 = vadd.s32 %v276, 176
        %v299 = vadd.s32 %v276, 184
        %v300 = vadd.s32 %v276, 192
        %v301 = vadd.s32 %v276, 200
        %v302 = vadd.s32 %v276, 208
        %v303 = vadd.s32 %v276, 216
        %v304 = vadd.s32 %v276, 224
        %v305 = vadd.s32 %v276, 232
        %v306 = vadd.s32 %v276, 240
        %v307 = vadd.s32 %v276, 248
        %vm308 = vcmp.lt.s32.totalorder %v276, 0
        %v309 = vsub.s32 0, %v276
        %v310 = vsel %vm308, %v309, %v276
        %v311 = vshrl.u32 %v310, 4
        %v312 = vand.u32 %v310, 15
        %v313 = vsub.s32 0, %v312
        %v314 = vsel %vm308, %v313, %v312
        %vm315 = vcmp.lt.s32.totalorder %v277, 0
        %v316 = vsub.s32 0, %v277
        %v317 = vsel %vm315, %v316, %v277
        %v318 = vshrl.u32 %v317, 4
        %v319 = vand.u32 %v317, 15
        %v320 = vsub.s32 0, %v319
        %v321 = vsel %vm315, %v320, %v319
        %vm322 = vcmp.lt.s32.totalorder %v278, 0
        %v323 = vsub.s32 0, %v278
        %v324 = vsel %vm322, %v323, %v278
        %v325 = vshrl.u32 %v324, 4
        %v326 = vand.u32 %v324, 15
        %v327 = vsub.s32 0, %v326
        %v328 = vsel %vm322, %v327, %v326
        %vm329 = vcmp.lt.s32.totalorder %v279, 0
        %v330 = vsub.s32 0, %v279
        %v331 = vsel %vm329, %v330, %v279
        %v332 = vshrl.u32 %v331, 4
        %v333 = vand.u32 %v331, 15
        %v334 = vsub.s32 0, %v333
        %v335 = vsel %vm329, %v334, %v333
        %vm336 = vcmp.lt.s32.totalorder %v280, 0
        %v337 = vsub.s32 0, %v280
        %v338 = vsel %vm336, %v337, %v280
        %v339 = vshrl.u32 %v338, 4
        %v340 = vand.u32 %v338, 15
        %v341 = vsub.s32 0, %v340
        %v342 = vsel %vm336, %v341, %v340
        %vm343 = vcmp.lt.s32.totalorder %v281, 0
        %v344 = vsub.s32 0, %v281
        %v345 = vsel %vm343, %v344, %v281
        %v346 = vshrl.u32 %v345, 4
        %v347 = vand.u32 %v345, 15
        %v348 = vsub.s32 0, %v347
        %v349 = vsel %vm343, %v348, %v347
        %vm350 = vcmp.lt.s32.totalorder %v282, 0
        %v351 = vsub.s32 0, %v282
        %v352 = vsel %vm350, %v351, %v282
        %v353 = vshrl.u32 %v352, 4
        %v354 = vand.u32 %v352, 15
        %v355 = vsub.s32 0, %v354
        %v356 = vsel %vm350, %v355, %v354
        %vm357 = vcmp.lt.s32.totalorder %v283, 0
        %v358 = vsub.s32 0, %v283
        %v359 = vsel %vm357, %v358, %v283
        %v360 = vshrl.u32 %v359, 4
        %v361 = vand.u32 %v359, 15
        %v362 = vsub.s32 0, %v361
        %v363 = vsel %vm357, %v362, %v361
        %vm364 = vcmp.lt.s32.totalorder %v284, 0
        %v365 = vsub.s32 0, %v284
        %v366 = vsel %vm364, %v365, %v284
        %v367 = vshrl.u32 %v366, 4
        %v368 = vand.u32 %v366, 15
        %v369 = vsub.s32 0, %v368
        %v370 = vsel %vm364, %v369, %v368
        %vm371 = vcmp.lt.s32.totalorder %v285, 0
        %v372 = vsub.s32 0, %v285
        %v373 = vsel %vm371, %v372, %v285
        %v374 = vshrl.u32 %v373, 4
        %v375 = vand.u32 %v373, 15
        %v376 = vsub.s32 0, %v375
        %v377 = vsel %vm371, %v376, %v375
        %vm378 = vcmp.lt.s32.totalorder %v286, 0
        %v379 = vsub.s32 0, %v286
        %v380 = vsel %vm378, %v379, %v286
        %v381 = vshrl.u32 %v380, 4
        %v382 = vand.u32 %v380, 15
        %v383 = vsub.s32 0, %v382
        %v384 = vsel %vm378, %v383, %v382
        %vm385 = vcmp.lt.s32.totalorder %v287, 0
        %v386 = vsub.s32 0, %v287
        %v387 = vsel %vm385, %v386, %v287
        %v388 = vshrl.u32 %v387, 4
        %v389 = vand.u32 %v387, 15
        %v390 = vsub.s32 0, %v389
        %v391 = vsel %vm385, %v390, %v389
        %vm392 = vcmp.lt.s32.totalorder %v288, 0
        %v393 = vsub.s32 0, %v288
        %v394 = vsel %vm392, %v393, %v288
        %v395 = vshrl.u32 %v394, 4
        %v396 = vand.u32 %v394, 15
        %v397 = vsub.s32 0, %v396
        %v398 = vsel %vm392, %v397, %v396
        %vm399 = vcmp.lt.s32.totalorder %v289, 0
        %v400 = vsub.s32 0, %v289
        %v401 = vsel %vm399, %v400, %v289
        %v402 = vshrl.u32 %v401, 4
        %v403 = vand.u32 %v401, 15
        %v404 = vsub.s32 0, %v403
        %v405 = vsel %vm399, %v404, %v403
        %vm406 = vcmp.lt.s32.totalorder %v290, 0
        %v407 = vsub.s32 0, %v290
        %v408 = vsel %vm406, %v407, %v290
        %v409 = vshrl.u32 %v408, 4
        %v410 = vand.u32 %v408, 15
        %v411 = vsub.s32 0, %v410
        %v412 = vsel %vm406, %v411, %v410
        %vm413 = vcmp.lt.s32.totalorder %v291, 0
        %v414 = vsub.s32 0, %v291
        %v415 = vsel %vm413, %v414, %v291
        %v416 = vshrl.u32 %v415, 4
        %v417 = vand.u32 %v415, 15
        %v418 = vsub.s32 0, %v417
        %v419 = vsel %vm413, %v418, %v417
        %vm420 = vcmp.lt.s32.totalorder %v292, 0
        %v421 = vsub.s32 0, %v292
        %v422 = vsel %vm420, %v421, %v292
        %v423 = vshrl.u32 %v422, 4
        %v424 = vand.u32 %v422, 15
        %v425 = vsub.s32 0, %v424
        %v426 = vsel %vm420, %v425, %v424
        %vm427 = vcmp.lt.s32.totalorder %v293, 0
        %v428 = vsub.s32 0, %v293
        %v429 = vsel %vm427, %v428, %v293
        %v430 = vshrl.u32 %v429, 4
        %v431 = vand.u32 %v429, 15
        %v432 = vsub.s32 0, %v431
        %v433 = vsel %vm427, %v432, %v431
        %vm434 = vcmp.lt.s32.totalorder %v294, 0
        %v435 = vsub.s32 0, %v294
        %v436 = vsel %vm434, %v435, %v294
        %v437 = vshrl.u32 %v436, 4
        %v438 = vand.u32 %v436, 15
        %v439 = vsub.s32 0, %v438
        %v440 = vsel %vm434, %v439, %v438
        %vm441 = vcmp.lt.s32.totalorder %v295, 0
        %v442 = vsub.s32 0, %v295
        %v443 = vsel %vm441, %v442, %v295
        %v444 = vshrl.u32 %v443, 4
        %v445 = vand.u32 %v443, 15
        %v446 = vsub.s32 0, %v445
        %v447 = vsel %vm441, %v446, %v445
        %vm448 = vcmp.lt.s32.totalorder %v296, 0
        %v449 = vsub.s32 0, %v296
        %v450 = vsel %vm448, %v449, %v296
        %v451 = vshrl.u32 %v450, 4
        %v452 = vand.u32 %v450, 15
        %v453 = vsub.s32 0, %v452
        %v454 = vsel %vm448, %v453, %v452
        %vm455 = vcmp.lt.s32.totalorder %v297, 0
        %v456 = vsub.s32 0, %v297
        %v457 = vsel %vm455, %v456, %v297
        %v458 = vshrl.u32 %v457, 4
        %v459 = vand.u32 %v457, 15
        %v460 = vsub.s32 0, %v459
        %v461 = vsel %vm455, %v460, %v459
        %vm462 = vcmp.lt.s32.totalorder %v298, 0
        %v463 = vsub.s32 0, %v298
        %v464 = vsel %vm462, %v463, %v298
        %v465 = vshrl.u32 %v464, 4
        %v466 = vand.u32 %v464, 15
        %v467 = vsub.s32 0, %v466
        %v468 = vsel %vm462, %v467, %v466
        %vm469 = vcmp.lt.s32.totalorder %v299, 0
        %v470 = vsub.s32 0, %v299
        %v471 = vsel %vm469, %v470, %v299
        %v472 = vshrl.u32 %v471, 4
        %v473 = vand.u32 %v471, 15
        %v474 = vsub.s32 0, %v473
        %v475 = vsel %vm469, %v474, %v473
        %vm476 = vcmp.lt.s32.totalorder %v300, 0
        %v477 = vsub.s32 0, %v300
        %v478 = vsel %vm476, %v477, %v300
        %v479 = vshrl.u32 %v478, 4
        %v480 = vand.u32 %v478, 15
        %v481 = vsub.s32 0, %v480
        %v482 = vsel %vm476, %v481, %v480
        %vm483 = vcmp.lt.s32.totalorder %v301, 0
        %v484 = vsub.s32 0, %v301
        %v485 = vsel %vm483, %v484, %v301
        %v486 = vshrl.u32 %v485, 4
        %v487 = vand.u32 %v485, 15
        %v488 = vsub.s32 0, %v487
        %v489 = vsel %vm483, %v488, %v487
        %vm490 = vcmp.lt.s32.totalorder %v302, 0
        %v491 = vsub.s32 0, %v302
        %v492 = vsel %vm490, %v491, %v302
        %v493 = vshrl.u32 %v492, 4
        %v494 = vand.u32 %v492, 15
        %v495 = vsub.s32 0, %v494
        %v496 = vsel %vm490, %v495, %v494
        %vm497 = vcmp.lt.s32.totalorder %v303, 0
        %v498 = vsub.s32 0, %v303
        %v499 = vsel %vm497, %v498, %v303
        %v500 = vshrl.u32 %v499, 4
        %v501 = vand.u32 %v499, 15
        %v502 = vsub.s32 0, %v501
        %v503 = vsel %vm497, %v502, %v501
        %vm504 = vcmp.lt.s32.totalorder %v304, 0
        %v505 = vsub.s32 0, %v304
        %v506 = vsel %vm504, %v505, %v304
        %v507 = vshrl.u32 %v506, 4
        %v508 = vand.u32 %v506, 15
        %v509 = vsub.s32 0, %v508
        %v510 = vsel %vm504, %v509, %v508
        %vm511 = vcmp.lt.s32.totalorder %v305, 0
        %v512 = vsub.s32 0, %v305
        %v513 = vsel %vm511, %v512, %v305
        %v514 = vshrl.u32 %v513, 4
        %v515 = vand.u32 %v513, 15
        %v516 = vsub.s32 0, %v515
        %v517 = vsel %vm511, %v516, %v515
        %vm518 = vcmp.lt.s32.totalorder %v306, 0
        %v519 = vsub.s32 0, %v306
        %v520 = vsel %vm518, %v519, %v306
        %v521 = vshrl.u32 %v520, 4
        %v522 = vand.u32 %v520, 15
        %v523 = vsub.s32 0, %v522
        %v524 = vsel %vm518, %v523, %v522
        %vm525 = vcmp.lt.s32.totalorder %v307, 0
        %v526 = vsub.s32 0, %v307
        %v527 = vsel %vm525, %v526, %v307
        %v528 = vshrl.u32 %v527, 4
        %v529 = vand.u32 %v527, 15
        %v530 = vsub.s32 0, %v529
        %v531 = vsel %vm525, %v530, %v529
        %vm532 = vcmp.ne.s32.totalorder %v314, 0
        %vm533 = vcmp.ne.s32.totalorder %v321, 0
        %vm534 = vcmp.ne.s32.totalorder %v328, 0
        %vm535 = vcmp.ne.s32.totalorder %v335, 0
        %vm536 = vcmp.ne.s32.totalorder %v342, 0
        %vm537 = vcmp.ne.s32.totalorder %v349, 0
        %vm538 = vcmp.ne.s32.totalorder %v356, 0
        %vm539 = vcmp.ne.s32.totalorder %v363, 0
        %vm540 = vcmp.ne.s32.totalorder %v370, 0
        %vm541 = vcmp.ne.s32.totalorder %v377, 0
        %vm542 = vcmp.ne.s32.totalorder %v384, 0
        %vm543 = vcmp.ne.s32.totalorder %v391, 0
        %vm544 = vcmp.ne.s32.totalorder %v398, 0
        %vm545 = vcmp.ne.s32.totalorder %v405, 0
        %vm546 = vcmp.ne.s32.totalorder %v412, 0
        %vm547 = vcmp.ne.s32.totalorder %v419, 0
        %vm548 = vcmp.ne.s32.totalorder %v426, 0
        %vm549 = vcmp.ne.s32.totalorder %v433, 0
        %vm550 = vcmp.ne.s32.totalorder %v440, 0
        %vm551 = vcmp.ne.s32.totalorder %v447, 0
        %vm552 = vcmp.ne.s32.totalorder %v454, 0
        %vm553 = vcmp.ne.s32.totalorder %v461, 0
        %vm554 = vcmp.ne.s32.totalorder %v468, 0
        %vm555 = vcmp.ne.s32.totalorder %v475, 0
        %vm556 = vcmp.ne.s32.totalorder %v482, 0
        %vm557 = vcmp.ne.s32.totalorder %v489, 0
        %vm558 = vcmp.ne.s32.totalorder %v496, 0
        %vm559 = vcmp.ne.s32.totalorder %v503, 0
        %vm560 = vcmp.ne.s32.totalorder %v510, 0
        %vm561 = vcmp.ne.s32.totalorder %v517, 0
        %vm562 = vcmp.ne.s32.totalorder %v524, 0
        %vm563 = vcmp.ne.s32.totalorder %v531, 0
        %vm564 = vcmp.lt.s32.totalorder %v314, 0
        %vm565 = vcmp.lt.s32.totalorder %v321, 0
        %vm566 = vcmp.lt.s32.totalorder %v328, 0
        %vm567 = vcmp.lt.s32.totalorder %v335, 0
        %vm568 = vcmp.lt.s32.totalorder %v342, 0
        %vm569 = vcmp.lt.s32.totalorder %v349, 0
        %vm570 = vcmp.lt.s32.totalorder %v356, 0
        %vm571 = vcmp.lt.s32.totalorder %v363, 0
        %vm572 = vcmp.lt.s32.totalorder %v370, 0
        %vm573 = vcmp.lt.s32.totalorder %v377, 0
        %vm574 = vcmp.lt.s32.totalorder %v384, 0
        %vm575 = vcmp.lt.s32.totalorder %v391, 0
        %vm576 = vcmp.lt.s32.totalorder %v398, 0
        %vm577 = vcmp.lt.s32.totalorder %v405, 0
        %vm578 = vcmp.lt.s32.totalorder %v412, 0
        %vm579 = vcmp.lt.s32.totalorder %v419, 0
        %vm580 = vcmp.lt.s32.totalorder %v426, 0
        %vm581 = vcmp.lt.s32.totalorder %v433, 0
        %vm582 = vcmp.lt.s32.totalorder %v440, 0
        %vm583 = vcmp.lt.s32.totalorder %v447, 0
        %vm584 = vcmp.lt.s32.totalorder %v454, 0
        %vm585 = vcmp.lt.s32.totalorder %v461, 0
        %vm586 = vcmp.lt.s32.totalorder %v468, 0
        %vm587 = vcmp.lt.s32.totalorder %v475, 0
        %vm588 = vcmp.lt.s32.totalorder %v482, 0
        %vm589 = vcmp.lt.s32.totalorder %v489, 0
        %vm590 = vcmp.lt.s32.totalorder %v496, 0
        %vm591 = vcmp.lt.s32.totalorder %v503, 0
        %vm592 = vcmp.lt.s32.totalorder %v510, 0
        %vm593 = vcmp.lt.s32.totalorder %v517, 0
        %vm594 = vcmp.lt.s32.totalorder %v524, 0
        %vm595 = vcmp.lt.s32.totalorder %v531, 0
        %vm596 = vmand %vm564, %vm532
        %vm597 = vmand %vm565, %vm533
        %vm598 = vmand %vm566, %vm534
        %vm599 = vmand %vm567, %vm535
        %vm600 = vmand %vm568, %vm536
        %vm601 = vmand %vm569, %vm537
        %vm602 = vmand %vm570, %vm538
        %vm603 = vmand %vm571, %vm539
        %vm604 = vmand %vm572, %vm540
        %vm605 = vmand %vm573, %vm541
        %vm606 = vmand %vm574, %vm542
        %vm607 = vmand %vm575, %vm543
        %vm608 = vmand %vm576, %vm544
        %vm609 = vmand %vm577, %vm545
        %vm610 = vmand %vm578, %vm546
        %vm611 = vmand %vm579, %vm547
        %vm612 = vmand %vm580, %vm548
        %vm613 = vmand %vm581, %vm549
        %vm614 = vmand %vm582, %vm550
        %vm615 = vmand %vm583, %vm551
        %vm616 = vmand %vm584, %vm552
        %vm617 = vmand %vm585, %vm553
        %vm618 = vmand %vm586, %vm554
        %vm619 = vmand %vm587, %vm555
        %vm620 = vmand %vm588, %vm556
        %vm621 = vmand %vm589, %vm557
        %vm622 = vmand %vm590, %vm558
        %vm623 = vmand %vm591, %vm559
        %vm624 = vmand %vm592, %vm560
        %vm625 = vmand %vm593, %vm561
        %vm626 = vmand %vm594, %vm562
        %vm627 = vmand %vm595, %vm563
        %v628 = vadd.s32 %v314, 16
        %v629 = vadd.s32 %v321, 16
        %v630 = vadd.s32 %v328, 16
        %v631 = vadd.s32 %v335, 16
        %v632 = vadd.s32 %v342, 16
        %v633 = vadd.s32 %v349, 16
        %v634 = vadd.s32 %v356, 16
        %v635 = vadd.s32 %v363, 16
        %v636 = vadd.s32 %v370, 16
        %v637 = vadd.s32 %v377, 16
        %v638 = vadd.s32 %v384, 16
        %v639 = vadd.s32 %v391, 16
        %v640 = vadd.s32 %v398, 16
        %v641 = vadd.s32 %v405, 16
        %v642 = vadd.s32 %v412, 16
        %v643 = vadd.s32 %v419, 16
        %v644 = vadd.s32 %v426, 16
        %v645 = vadd.s32 %v433, 16
        %v646 = vadd.s32 %v440, 16
        %v647 = vadd.s32 %v447, 16
        %v648 = vadd.s32 %v454, 16
        %v649 = vadd.s32 %v461, 16
        %v650 = vadd.s32 %v468, 16
        %v651 = vadd.s32 %v475, 16
        %v652 = vadd.s32 %v482, 16
        %v653 = vadd.s32 %v489, 16
        %v654 = vadd.s32 %v496, 16
        %v655 = vadd.s32 %v503, 16
        %v656 = vadd.s32 %v510, 16
        %v657 = vadd.s32 %v517, 16
        %v658 = vadd.s32 %v524, 16
        %v659 = vadd.s32 %v531, 16
        %v660 = vsel %vm596, %v628, %v314
        %v661 = vsel %vm597, %v629, %v321
        %v662 = vsel %vm598, %v630, %v328
        %v663 = vsel %vm599, %v631, %v335
        %v664 = vsel %vm600, %v632, %v342
        %v665 = vsel %vm601, %v633, %v349
        %v666 = vsel %vm602, %v634, %v356
        %v667 = vsel %vm603, %v635, %v363
        %v668 = vsel %vm604, %v636, %v370
        %v669 = vsel %vm605, %v637, %v377
        %v670 = vsel %vm606, %v638, %v384
        %v671 = vsel %vm607, %v639, %v391
        %v672 = vsel %vm608, %v640, %v398
        %v673 = vsel %vm609, %v641, %v405
        %v674 = vsel %vm610, %v642, %v412
        %v675 = vsel %vm611, %v643, %v419
        %v676 = vsel %vm612, %v644, %v426
        %v677 = vsel %vm613, %v645, %v433
        %v678 = vsel %vm614, %v646, %v440
        %v679 = vsel %vm615, %v647, %v447
        %v680 = vsel %vm616, %v648, %v454
        %v681 = vsel %vm617, %v649, %v461
        %v682 = vsel %vm618, %v650, %v468
        %v683 = vsel %vm619, %v651, %v475
        %v684 = vsel %vm620, %v652, %v482
        %v685 = vsel %vm621, %v653, %v489
        %v686 = vsel %vm622, %v654, %v496
        %v687 = vsel %vm623, %v655, %v503
        %v688 = vsel %vm624, %v656, %v510
        %v689 = vsel %vm625, %v657, %v517
        %v690 = vsel %vm626, %v658, %v524
        %v691 = vsel %vm627, %v659, %v531
        %vm692 = vcmp.eq.s32.totalorder %v660, 0
        %vm693 = vcmp.eq.s32.totalorder %v661, 0
        %vm694 = vcmp.eq.s32.totalorder %v662, 0
        %vm695 = vcmp.eq.s32.totalorder %v663, 0
        %vm696 = vcmp.eq.s32.totalorder %v664, 0
        %vm697 = vcmp.eq.s32.totalorder %v665, 0
        %vm698 = vcmp.eq.s32.totalorder %v666, 0
        %vm699 = vcmp.eq.s32.totalorder %v667, 0
        %vm700 = vcmp.eq.s32.totalorder %v668, 0
        %vm701 = vcmp.eq.s32.totalorder %v669, 0
        %vm702 = vcmp.eq.s32.totalorder %v670, 0
        %vm703 = vcmp.eq.s32.totalorder %v671, 0
        %vm704 = vcmp.eq.s32.totalorder %v672, 0
        %vm705 = vcmp.eq.s32.totalorder %v673, 0
        %vm706 = vcmp.eq.s32.totalorder %v674, 0
        %vm707 = vcmp.eq.s32.totalorder %v675, 0
        %vm708 = vcmp.eq.s32.totalorder %v676, 0
        %vm709 = vcmp.eq.s32.totalorder %v677, 0
        %vm710 = vcmp.eq.s32.totalorder %v678, 0
        %vm711 = vcmp.eq.s32.totalorder %v679, 0
        %vm712 = vcmp.eq.s32.totalorder %v680, 0
        %vm713 = vcmp.eq.s32.totalorder %v681, 0
        %vm714 = vcmp.eq.s32.totalorder %v682, 0
        %vm715 = vcmp.eq.s32.totalorder %v683, 0
        %vm716 = vcmp.eq.s32.totalorder %v684, 0
        %vm717 = vcmp.eq.s32.totalorder %v685, 0
        %vm718 = vcmp.eq.s32.totalorder %v686, 0
        %vm719 = vcmp.eq.s32.totalorder %v687, 0
        %vm720 = vcmp.eq.s32.totalorder %v688, 0
        %vm721 = vcmp.eq.s32.totalorder %v689, 0
        %vm722 = vcmp.eq.s32.totalorder %v690, 0
        %vm723 = vcmp.eq.s32.totalorder %v691, 0
        %vm724 = vcmp.eq.s32.totalorder %v660, 15
        %vm725 = vcmp.eq.s32.totalorder %v661, 15
        %vm726 = vcmp.eq.s32.totalorder %v662, 15
        %vm727 = vcmp.eq.s32.totalorder %v663, 15
        %vm728 = vcmp.eq.s32.totalorder %v664, 15
        %vm729 = vcmp.eq.s32.totalorder %v665, 15
        %vm730 = vcmp.eq.s32.totalorder %v666, 15
        %vm731 = vcmp.eq.s32.totalorder %v667, 15
        %vm732 = vcmp.eq.s32.totalorder %v668, 15
        %vm733 = vcmp.eq.s32.totalorder %v669, 15
        %vm734 = vcmp.eq.s32.totalorder %v670, 15
        %vm735 = vcmp.eq.s32.totalorder %v671, 15
        %vm736 = vcmp.eq.s32.totalorder %v672, 15
        %vm737 = vcmp.eq.s32.totalorder %v673, 15
        %vm738 = vcmp.eq.s32.totalorder %v674, 15
        %vm739 = vcmp.eq.s32.totalorder %v675, 15
        %vm740 = vcmp.eq.s32.totalorder %v676, 15
        %vm741 = vcmp.eq.s32.totalorder %v677, 15
        %vm742 = vcmp.eq.s32.totalorder %v678, 15
        %vm743 = vcmp.eq.s32.totalorder %v679, 15
        %vm744 = vcmp.eq.s32.totalorder %v680, 15
        %vm745 = vcmp.eq.s32.totalorder %v681, 15
        %vm746 = vcmp.eq.s32.totalorder %v682, 15
        %vm747 = vcmp.eq.s32.totalorder %v683, 15
        %vm748 = vcmp.eq.s32.totalorder %v684, 15
        %vm749 = vcmp.eq.s32.totalorder %v685, 15
        %vm750 = vcmp.eq.s32.totalorder %v686, 15
        %vm751 = vcmp.eq.s32.totalorder %v687, 15
        %vm752 = vcmp.eq.s32.totalorder %v688, 15
        %vm753 = vcmp.eq.s32.totalorder %v689, 15
        %vm754 = vcmp.eq.s32.totalorder %v690, 15
        %vm755 = vcmp.eq.s32.totalorder %v691, 15
        %v756 = vld [vmem:[%s237] sm:$0xff]
        %v757 = vld [vmem:[%s237 + $0x8] sm:$0xff]
        %v758 = vld [vmem:[%s237 + $0x10] sm:$0xff]
        %v759 = vld [vmem:[%s237 + $0x18] sm:$0xff]
        %v760 = vld [vmem:[%s237 + $0x20] sm:$0xff]
        %v761 = vld [vmem:[%s237 + $0x28] sm:$0xff]
        %v762 = vld [vmem:[%s237 + $0x30] sm:$0xff]
        %v763 = vld [vmem:[%s237 + $0x38] sm:$0xff]
        %v764 = vld [vmem:[%s237 + $0x40] sm:$0xff]
        %v765 = vld [vmem:[%s237 + $0x48] sm:$0xff]
        %v766 = vld [vmem:[%s237 + $0x50] sm:$0xff]
        %v767 = vld [vmem:[%s237 + $0x58] sm:$0xff]
        %v768 = vld [vmem:[%s237 + $0x60] sm:$0xff]
        %v769 = vld [vmem:[%s237 + $0x68] sm:$0xff]
        %v770 = vld [vmem:[%s237 + $0x70] sm:$0xff]
        %v771 = vld [vmem:[%s237 + $0x78] sm:$0xff]
        %v772 = vld [vmem:[%s237 + $0x80] sm:$0xff]
        %v773 = vld [vmem:[%s237 + $0x88] sm:$0xff]
        %v774 = vld [vmem:[%s237 + $0x90] sm:$0xff]
        %v775 = vld [vmem:[%s237 + $0x98] sm:$0xff]
        %v776 = vld [vmem:[%s237 + $0xa0] sm:$0xff]
        %v777 = vld [vmem:[%s237 + $0xa8] sm:$0xff]
        %v778 = vld [vmem:[%s237 + $0xb0] sm:$0xff]
        %v779 = vld [vmem:[%s237 + $0xb8] sm:$0xff]
        %v780 = vld [vmem:[%s237 + $0xc0] sm:$0xff]
        %v781 = vld [vmem:[%s237 + $0xc8] sm:$0xff]
        %v782 = vld [vmem:[%s237 + $0xd0] sm:$0xff]
        %v783 = vld [vmem:[%s237 + $0xd8] sm:$0xff]
        %v784 = vld [vmem:[%s237 + $0xe0] sm:$0xff]
        %v785 = vld [vmem:[%s237 + $0xe8] sm:$0xff]
        %v786 = vld [vmem:[%s237 + $0xf0] sm:$0xff]
        %v787 = vld [vmem:[%s237 + $0xf8] sm:$0xff]
        %v788 = vpack.c.bf16 %v757, %v756
        %v789 = vpack.c.bf16 %v759, %v758
        %v790 = vpack.c.bf16 %v761, %v760
        %v791 = vpack.c.bf16 %v763, %v762
        %v792 = vpack.c.bf16 %v765, %v764
        %v793 = vpack.c.bf16 %v767, %v766
        %v794 = vpack.c.bf16 %v769, %v768
        %v795 = vpack.c.bf16 %v771, %v770
        %v796 = vpack.c.bf16 %v773, %v772
        %v797 = vpack.c.bf16 %v775, %v774
        %v798 = vpack.c.bf16 %v777, %v776
        %v799 = vpack.c.bf16 %v779, %v778
        %v800 = vpack.c.bf16 %v781, %v780
        %v801 = vpack.c.bf16 %v783, %v782
        %v802 = vpack.c.bf16 %v785, %v784
        %v803 = vpack.c.bf16 %v787, %v786
        %vm804 = vsmask.f32 7424
        %v806 = vshrl.u32 %v788, 16
        %v808 = vshll.u32 %v788, 16
        %v810 = vrot.slane %v808, 1
        %v811 = vor.u32 %v806, %v810
        %v813 = vshll.u32 %v789, 16
        %v815 = vrot.slane %v813, 1
        %v816 = vsel %vm804, %v811, %v815
        %v817 = vshrl.u32 %v789, 16
        %v819 = vor.u32 %v817, %v815
        %v821 = vshll.u32 %v790, 16
        %v823 = vrot.slane %v821, 1
        %v824 = vsel %vm804, %v819, %v823
        %v825 = vshrl.u32 %v790, 16
        %v827 = vor.u32 %v825, %v823
        %v829 = vshll.u32 %v791, 16
        %v831 = vrot.slane %v829, 1
        %v832 = vsel %vm804, %v827, %v831
        %v833 = vshrl.u32 %v791, 16
        %v835 = vor.u32 %v833, %v831
        %v837 = vshll.u32 %v792, 16
        %v839 = vrot.slane %v837, 1
        %v840 = vsel %vm804, %v835, %v839
        %v841 = vshrl.u32 %v792, 16
        %v843 = vor.u32 %v841, %v839
        %v845 = vshll.u32 %v793, 16
        %v847 = vrot.slane %v845, 1
        %v848 = vsel %vm804, %v843, %v847
        %v849 = vshrl.u32 %v793, 16
        %v851 = vor.u32 %v849, %v847
        %v853 = vshll.u32 %v794, 16
        %v855 = vrot.slane %v853, 1
        %v856 = vsel %vm804, %v851, %v855
        %v857 = vshrl.u32 %v794, 16
        %v859 = vor.u32 %v857, %v855
        %v861 = vshll.u32 %v795, 16
        %v863 = vrot.slane %v861, 1
        %v864 = vsel %vm804, %v859, %v863
        %v865 = vshrl.u32 %v795, 16
        %v867 = vor.u32 %v865, %v863
        %v869 = vshll.u32 %v796, 16
        %v871 = vrot.slane %v869, 1
        %v872 = vsel %vm804, %v867, %v871
        %v873 = vshrl.u32 %v796, 16
        %v875 = vor.u32 %v873, %v871
        %v877 = vshll.u32 %v797, 16
        %v879 = vrot.slane %v877, 1
        %v880 = vsel %vm804, %v875, %v879
        %v881 = vshrl.u32 %v797, 16
        %v883 = vor.u32 %v881, %v879
        %v885 = vshll.u32 %v798, 16
        %v887 = vrot.slane %v885, 1
        %v888 = vsel %vm804, %v883, %v887
        %v889 = vshrl.u32 %v798, 16
        %v891 = vor.u32 %v889, %v887
        %v893 = vshll.u32 %v799, 16
        %v895 = vrot.slane %v893, 1
        %v896 = vsel %vm804, %v891, %v895
        %v897 = vshrl.u32 %v799, 16
        %v899 = vor.u32 %v897, %v895
        %v901 = vshll.u32 %v800, 16
        %v903 = vrot.slane %v901, 1
        %v904 = vsel %vm804, %v899, %v903
        %v905 = vshrl.u32 %v800, 16
        %v907 = vor.u32 %v905, %v903
        %v909 = vshll.u32 %v801, 16
        %v911 = vrot.slane %v909, 1
        %v912 = vsel %vm804, %v907, %v911
        %v913 = vshrl.u32 %v801, 16
        %v915 = vor.u32 %v913, %v911
        %v917 = vshll.u32 %v802, 16
        %v919 = vrot.slane %v917, 1
        %v920 = vsel %vm804, %v915, %v919
        %v921 = vshrl.u32 %v802, 16
        %v923 = vor.u32 %v921, %v919
        %v925 = vshll.u32 %v803, 16
        %v927 = vrot.slane %v925, 1
        %v928 = vsel %vm804, %v923, %v927
        %v929 = vshrl.u32 %v803, 16
        %v931 = vor.u32 %v929, %v927
        %vm949 = vcmask 1047552
        %vm950 = vmand %vm949, %vm804
        %v951 = vsel %vm950, %v931, %v810
        %v952 = vrot.slane %v929, 7
        %vm954 = vsmask.f32 256
        %v955 = vrot.slane %v806, 7
        %v956 = vor.u32 %v955, %v808
        %v957 = vrot.slane %v817, 7
        %v958 = vor.u32 %v957, %v813
        %v959 = vsel %vm954, %v955, %v958
        %v960 = vrot.slane %v825, 7
        %v961 = vor.u32 %v960, %v821
        %v962 = vsel %vm954, %v957, %v961
        %v963 = vrot.slane %v833, 7
        %v964 = vor.u32 %v963, %v829
        %v965 = vsel %vm954, %v960, %v964
        %v966 = vrot.slane %v841, 7
        %v967 = vor.u32 %v966, %v837
        %v968 = vsel %vm954, %v963, %v967
        %v969 = vrot.slane %v849, 7
        %v970 = vor.u32 %v969, %v845
        %v971 = vsel %vm954, %v966, %v970
        %v972 = vrot.slane %v857, 7
        %v973 = vor.u32 %v972, %v853
        %v974 = vsel %vm954, %v969, %v973
        %v975 = vrot.slane %v865, 7
        %v976 = vor.u32 %v975, %v861
        %v977 = vsel %vm954, %v972, %v976
        %v978 = vrot.slane %v873, 7
        %v979 = vor.u32 %v978, %v869
        %v980 = vsel %vm954, %v975, %v979
        %v981 = vrot.slane %v881, 7
        %v982 = vor.u32 %v981, %v877
        %v983 = vsel %vm954, %v978, %v982
        %v984 = vrot.slane %v889, 7
        %v985 = vor.u32 %v984, %v885
        %v986 = vsel %vm954, %v981, %v985
        %v987 = vrot.slane %v897, 7
        %v988 = vor.u32 %v987, %v893
        %v989 = vsel %vm954, %v984, %v988
        %v990 = vrot.slane %v905, 7
        %v991 = vor.u32 %v990, %v901
        %v992 = vsel %vm954, %v987, %v991
        %v993 = vrot.slane %v913, 7
        %v994 = vor.u32 %v993, %v909
        %v995 = vsel %vm954, %v990, %v994
        %v996 = vrot.slane %v921, 7
        %v997 = vor.u32 %v996, %v917
        %v998 = vsel %vm954, %v993, %v997
        %v999 = vor.u32 %v952, %v925
        %v1000 = vsel %vm954, %v996, %v999
        %vm1017 = vcmask 1040384
        %vm1018 = vmand %vm1017, %vm954
        %v1019 = vsel %vm1018, %v952, %v956
        %v1020 = vsel %vm692, 1, 0
        %v1021 = vsel %vm693, 1, 0
        %v1022 = vsel %vm694, 1, 0
        %v1023 = vsel %vm695, 1, 0
        %v1024 = vsel %vm696, 1, 0
        %v1025 = vsel %vm697, 1, 0
        %v1026 = vsel %vm698, 1, 0
        %v1027 = vsel %vm699, 1, 0
        %v1028 = vsel %vm700, 1, 0
        %v1029 = vsel %vm701, 1, 0
        %v1030 = vsel %vm702, 1, 0
        %v1031 = vsel %vm703, 1, 0
        %v1032 = vsel %vm704, 1, 0
        %v1033 = vsel %vm705, 1, 0
        %v1034 = vsel %vm706, 1, 0
        %v1035 = vsel %vm707, 1, 0
        %v1036 = vsel %vm708, 1, 0
        %v1037 = vsel %vm709, 1, 0
        %v1038 = vsel %vm710, 1, 0
        %v1039 = vsel %vm711, 1, 0
        %v1040 = vsel %vm712, 1, 0
        %v1041 = vsel %vm713, 1, 0
        %v1042 = vsel %vm714, 1, 0
        %v1043 = vsel %vm715, 1, 0
        %v1044 = vsel %vm716, 1, 0
        %v1045 = vsel %vm717, 1, 0
        %v1046 = vsel %vm718, 1, 0
        %v1047 = vsel %vm719, 1, 0
        %v1048 = vsel %vm720, 1, 0
        %v1049 = vsel %vm721, 1, 0
        %v1050 = vsel %vm722, 1, 0
        %v1051 = vsel %vm723, 1, 0
        %vm1052 = vcmp.eq.s32.totalorder %v1020, 1
        %vm1053 = vcmp.eq.s32.totalorder %v1021, 1
        %vm1054 = vcmp.eq.s32.totalorder %v1022, 1
        %vm1055 = vcmp.eq.s32.totalorder %v1023, 1
        %vm1056 = vcmp.eq.s32.totalorder %v1024, 1
        %vm1057 = vcmp.eq.s32.totalorder %v1025, 1
        %vm1058 = vcmp.eq.s32.totalorder %v1026, 1
        %vm1059 = vcmp.eq.s32.totalorder %v1027, 1
        %vm1060 = vcmp.eq.s32.totalorder %v1028, 1
        %vm1061 = vcmp.eq.s32.totalorder %v1029, 1
        %vm1062 = vcmp.eq.s32.totalorder %v1030, 1
        %vm1063 = vcmp.eq.s32.totalorder %v1031, 1
        %vm1064 = vcmp.eq.s32.totalorder %v1032, 1
        %vm1065 = vcmp.eq.s32.totalorder %v1033, 1
        %vm1066 = vcmp.eq.s32.totalorder %v1034, 1
        %vm1067 = vcmp.eq.s32.totalorder %v1035, 1
        %vm1068 = vcmp.eq.s32.totalorder %v1036, 1
        %vm1069 = vcmp.eq.s32.totalorder %v1037, 1
        %vm1070 = vcmp.eq.s32.totalorder %v1038, 1
        %vm1071 = vcmp.eq.s32.totalorder %v1039, 1
        %vm1072 = vcmp.eq.s32.totalorder %v1040, 1
        %vm1073 = vcmp.eq.s32.totalorder %v1041, 1
        %vm1074 = vcmp.eq.s32.totalorder %v1042, 1
        %vm1075 = vcmp.eq.s32.totalorder %v1043, 1
        %vm1076 = vcmp.eq.s32.totalorder %v1044, 1
        %vm1077 = vcmp.eq.s32.totalorder %v1045, 1
        %vm1078 = vcmp.eq.s32.totalorder %v1046, 1
        %vm1079 = vcmp.eq.s32.totalorder %v1047, 1
        %vm1080 = vcmp.eq.s32.totalorder %v1048, 1
        %vm1081 = vcmp.eq.s32.totalorder %v1049, 1
        %vm1082 = vcmp.eq.s32.totalorder %v1050, 1
        %vm1083 = vcmp.eq.s32.totalorder %v1051, 1
        %vm1084 = vmpackc.low %vm1052, %vm1052
        %vm1085 = vmpackc.low %vm1053, %vm1053
        %vm1086 = vmpackc.low %vm1054, %vm1054
        %vm1087 = vmpackc.low %vm1055, %vm1055
        %vm1088 = vmpackc.low %vm1056, %vm1056
        %vm1089 = vmpackc.low %vm1057, %vm1057
        %vm1090 = vmpackc.low %vm1058, %vm1058
        %vm1091 = vmpackc.low %vm1059, %vm1059
        %vm1092 = vmpackc.low %vm1060, %vm1060
        %vm1093 = vmpackc.low %vm1061, %vm1061
        %vm1094 = vmpackc.low %vm1062, %vm1062
        %vm1095 = vmpackc.low %vm1063, %vm1063
        %vm1096 = vmpackc.low %vm1064, %vm1064
        %vm1097 = vmpackc.low %vm1065, %vm1065
        %vm1098 = vmpackc.low %vm1066, %vm1066
        %vm1099 = vmpackc.low %vm1067, %vm1067
        %vm1100 = vmpackc.low %vm1068, %vm1068
        %vm1101 = vmpackc.low %vm1069, %vm1069
        %vm1102 = vmpackc.low %vm1070, %vm1070
        %vm1103 = vmpackc.low %vm1071, %vm1071
        %vm1104 = vmpackc.low %vm1072, %vm1072
        %vm1105 = vmpackc.low %vm1073, %vm1073
        %vm1106 = vmpackc.low %vm1074, %vm1074
        %vm1107 = vmpackc.low %vm1075, %vm1075
        %vm1108 = vmpackc.low %vm1076, %vm1076
        %vm1109 = vmpackc.low %vm1077, %vm1077
        %vm1110 = vmpackc.low %vm1078, %vm1078
        %vm1111 = vmpackc.low %vm1079, %vm1079
        %vm1112 = vmpackc.low %vm1080, %vm1080
        %vm1113 = vmpackc.low %vm1081, %vm1081
        %vm1114 = vmpackc.low %vm1082, %vm1082
        %vm1115 = vmpackc.low %vm1083, %vm1083
        %v1116 = vsel %vm1084, 65537, 0
        %v1117 = vsel %vm1085, 65537, 0
        %v1118 = vsel %vm1086, 65537, 0
        %v1119 = vsel %vm1087, 65537, 0
        %v1120 = vsel %vm1088, 65537, 0
        %v1121 = vsel %vm1089, 65537, 0
        %v1122 = vsel %vm1090, 65537, 0
        %v1123 = vsel %vm1091, 65537, 0
        %v1124 = vsel %vm1092, 65537, 0
        %v1125 = vsel %vm1093, 65537, 0
        %v1126 = vsel %vm1094, 65537, 0
        %v1127 = vsel %vm1095, 65537, 0
        %v1128 = vsel %vm1096, 65537, 0
        %v1129 = vsel %vm1097, 65537, 0
        %v1130 = vsel %vm1098, 65537, 0
        %v1131 = vsel %vm1099, 65537, 0
        %v1132 = vsel %vm1100, 65537, 0
        %v1133 = vsel %vm1101, 65537, 0
        %v1134 = vsel %vm1102, 65537, 0
        %v1135 = vsel %vm1103, 65537, 0
        %v1136 = vsel %vm1104, 65537, 0
        %v1137 = vsel %vm1105, 65537, 0
        %v1138 = vsel %vm1106, 65537, 0
        %v1139 = vsel %vm1107, 65537, 0
        %v1140 = vsel %vm1108, 65537, 0
        %v1141 = vsel %vm1109, 65537, 0
        %v1142 = vsel %vm1110, 65537, 0
        %v1143 = vsel %vm1111, 65537, 0
        %v1144 = vsel %vm1112, 65537, 0
        %v1145 = vsel %vm1113, 65537, 0
        %v1146 = vsel %vm1114, 65537, 0
        %v1147 = vsel %vm1115, 65537, 0
        %v1148 = vunpack.c.l.b16 %v1116
        %v1149 = vunpack.c.l.b16 %v1117
        %v1150 = vunpack.c.l.b16 %v1118
        %v1151 = vunpack.c.l.b16 %v1119
        %v1152 = vunpack.c.l.b16 %v1120
        %v1153 = vunpack.c.l.b16 %v1121
        %v1154 = vunpack.c.l.b16 %v1122
        %v1155 = vunpack.c.l.b16 %v1123
        %v1156 = vunpack.c.l.b16 %v1124
        %v1157 = vunpack.c.l.b16 %v1125
        %v1158 = vunpack.c.l.b16 %v1126
        %v1159 = vunpack.c.l.b16 %v1127
        %v1160 = vunpack.c.l.b16 %v1128
        %v1161 = vunpack.c.l.b16 %v1129
        %v1162 = vunpack.c.l.b16 %v1130
        %v1163 = vunpack.c.l.b16 %v1131
        %v1164 = vunpack.c.l.b16 %v1132
        %v1165 = vunpack.c.l.b16 %v1133
        %v1166 = vunpack.c.l.b16 %v1134
        %v1167 = vunpack.c.l.b16 %v1135
        %v1168 = vunpack.c.l.b16 %v1136
        %v1169 = vunpack.c.l.b16 %v1137
        %v1170 = vunpack.c.l.b16 %v1138
        %v1171 = vunpack.c.l.b16 %v1139
        %v1172 = vunpack.c.l.b16 %v1140
        %v1173 = vunpack.c.l.b16 %v1141
        %v1174 = vunpack.c.l.b16 %v1142
        %v1175 = vunpack.c.l.b16 %v1143
        %v1176 = vunpack.c.l.b16 %v1144
        %v1177 = vunpack.c.l.b16 %v1145
        %v1178 = vunpack.c.l.b16 %v1146
        %v1179 = vunpack.c.l.b16 %v1147
        %v1180 = vpack.c.b16 %v1149, %v1148
        %v1181 = vpack.c.b16 %v1151, %v1150
        %v1182 = vpack.c.b16 %v1153, %v1152
        %v1183 = vpack.c.b16 %v1155, %v1154
        %v1184 = vpack.c.b16 %v1157, %v1156
        %v1185 = vpack.c.b16 %v1159, %v1158
        %v1186 = vpack.c.b16 %v1161, %v1160
        %v1187 = vpack.c.b16 %v1163, %v1162
        %v1188 = vpack.c.b16 %v1165, %v1164
        %v1189 = vpack.c.b16 %v1167, %v1166
        %v1190 = vpack.c.b16 %v1169, %v1168
        %v1191 = vpack.c.b16 %v1171, %v1170
        %v1192 = vpack.c.b16 %v1173, %v1172
        %v1193 = vpack.c.b16 %v1175, %v1174
        %v1194 = vpack.c.b16 %v1177, %v1176
        %v1195 = vpack.c.b16 %v1179, %v1178
        %vm1196 = vcmp.ne.s16.totalorder %v1180, 0
        %vm1197 = vcmp.ne.s16.totalorder %v1181, 0
        %vm1198 = vcmp.ne.s16.totalorder %v1182, 0
        %vm1199 = vcmp.ne.s16.totalorder %v1183, 0
        %vm1200 = vcmp.ne.s16.totalorder %v1184, 0
        %vm1201 = vcmp.ne.s16.totalorder %v1185, 0
        %vm1202 = vcmp.ne.s16.totalorder %v1186, 0
        %vm1203 = vcmp.ne.s16.totalorder %v1187, 0
        %vm1204 = vcmp.ne.s16.totalorder %v1188, 0
        %vm1205 = vcmp.ne.s16.totalorder %v1189, 0
        %vm1206 = vcmp.ne.s16.totalorder %v1190, 0
        %vm1207 = vcmp.ne.s16.totalorder %v1191, 0
        %vm1208 = vcmp.ne.s16.totalorder %v1192, 0
        %vm1209 = vcmp.ne.s16.totalorder %v1193, 0
        %vm1210 = vcmp.ne.s16.totalorder %v1194, 0
        %vm1211 = vcmp.ne.s16.totalorder %v1195, 0
        %v1212 = vsel %vm1196, %v816, %v1019
        %v1213 = vsel %vm1197, %v824, %v959
        %v1214 = vsel %vm1198, %v832, %v962
        %v1215 = vsel %vm1199, %v840, %v965
        %v1216 = vsel %vm1200, %v848, %v968
        %v1217 = vsel %vm1201, %v856, %v971
        %v1218 = vsel %vm1202, %v864, %v974
        %v1219 = vsel %vm1203, %v872, %v977
        %v1220 = vsel %vm1204, %v880, %v980
        %v1221 = vsel %vm1205, %v888, %v983
        %v1222 = vsel %vm1206, %v896, %v986
        %v1223 = vsel %vm1207, %v904, %v989
        %v1224 = vsel %vm1208, %v912, %v992
        %v1225 = vsel %vm1209, %v920, %v995
        %v1226 = vsel %vm1210, %v928, %v998
        %v1227 = vsel %vm1211, %v951, %v1000
        %v1228 = vsel %vm724, 1, 0
        %v1229 = vsel %vm725, 1, 0
        %v1230 = vsel %vm726, 1, 0
        %v1231 = vsel %vm727, 1, 0
        %v1232 = vsel %vm728, 1, 0
        %v1233 = vsel %vm729, 1, 0
        %v1234 = vsel %vm730, 1, 0
        %v1235 = vsel %vm731, 1, 0
        %v1236 = vsel %vm732, 1, 0
        %v1237 = vsel %vm733, 1, 0
        %v1238 = vsel %vm734, 1, 0
        %v1239 = vsel %vm735, 1, 0
        %v1240 = vsel %vm736, 1, 0
        %v1241 = vsel %vm737, 1, 0
        %v1242 = vsel %vm738, 1, 0
        %v1243 = vsel %vm739, 1, 0
        %v1244 = vsel %vm740, 1, 0
        %v1245 = vsel %vm741, 1, 0
        %v1246 = vsel %vm742, 1, 0
        %v1247 = vsel %vm743, 1, 0
        %v1248 = vsel %vm744, 1, 0
        %v1249 = vsel %vm745, 1, 0
        %v1250 = vsel %vm746, 1, 0
        %v1251 = vsel %vm747, 1, 0
        %v1252 = vsel %vm748, 1, 0
        %v1253 = vsel %vm749, 1, 0
        %v1254 = vsel %vm750, 1, 0
        %v1255 = vsel %vm751, 1, 0
        %v1256 = vsel %vm752, 1, 0
        %v1257 = vsel %vm753, 1, 0
        %v1258 = vsel %vm754, 1, 0
        %v1259 = vsel %vm755, 1, 0
        %vm1260 = vcmp.eq.s32.totalorder %v1228, 1
        %vm1261 = vcmp.eq.s32.totalorder %v1229, 1
        %vm1262 = vcmp.eq.s32.totalorder %v1230, 1
        %vm1263 = vcmp.eq.s32.totalorder %v1231, 1
        %vm1264 = vcmp.eq.s32.totalorder %v1232, 1
        %vm1265 = vcmp.eq.s32.totalorder %v1233, 1
        %vm1266 = vcmp.eq.s32.totalorder %v1234, 1
        %vm1267 = vcmp.eq.s32.totalorder %v1235, 1
        %vm1268 = vcmp.eq.s32.totalorder %v1236, 1
        %vm1269 = vcmp.eq.s32.totalorder %v1237, 1
        %vm1270 = vcmp.eq.s32.totalorder %v1238, 1
        %vm1271 = vcmp.eq.s32.totalorder %v1239, 1
        %vm1272 = vcmp.eq.s32.totalorder %v1240, 1
        %vm1273 = vcmp.eq.s32.totalorder %v1241, 1
        %vm1274 = vcmp.eq.s32.totalorder %v1242, 1
        %vm1275 = vcmp.eq.s32.totalorder %v1243, 1
        %vm1276 = vcmp.eq.s32.totalorder %v1244, 1
        %vm1277 = vcmp.eq.s32.totalorder %v1245, 1
        %vm1278 = vcmp.eq.s32.totalorder %v1246, 1
        %vm1279 = vcmp.eq.s32.totalorder %v1247, 1
        %vm1280 = vcmp.eq.s32.totalorder %v1248, 1
        %vm1281 = vcmp.eq.s32.totalorder %v1249, 1
        %vm1282 = vcmp.eq.s32.totalorder %v1250, 1
        %vm1283 = vcmp.eq.s32.totalorder %v1251, 1
        %vm1284 = vcmp.eq.s32.totalorder %v1252, 1
        %vm1285 = vcmp.eq.s32.totalorder %v1253, 1
        %vm1286 = vcmp.eq.s32.totalorder %v1254, 1
        %vm1287 = vcmp.eq.s32.totalorder %v1255, 1
        %vm1288 = vcmp.eq.s32.totalorder %v1256, 1
        %vm1289 = vcmp.eq.s32.totalorder %v1257, 1
        %vm1290 = vcmp.eq.s32.totalorder %v1258, 1
        %vm1291 = vcmp.eq.s32.totalorder %v1259, 1
        %vm1292 = vmpackc.low %vm1260, %vm1260
        %vm1293 = vmpackc.low %vm1261, %vm1261
        %vm1294 = vmpackc.low %vm1262, %vm1262
        %vm1295 = vmpackc.low %vm1263, %vm1263
        %vm1296 = vmpackc.low %vm1264, %vm1264
        %vm1297 = vmpackc.low %vm1265, %vm1265
        %vm1298 = vmpackc.low %vm1266, %vm1266
        %vm1299 = vmpackc.low %vm1267, %vm1267
        %vm1300 = vmpackc.low %vm1268, %vm1268
        %vm1301 = vmpackc.low %vm1269, %vm1269
        %vm1302 = vmpackc.low %vm1270, %vm1270
        %vm1303 = vmpackc.low %vm1271, %vm1271
        %vm1304 = vmpackc.low %vm1272, %vm1272
        %vm1305 = vmpackc.low %vm1273, %vm1273
        %vm1306 = vmpackc.low %vm1274, %vm1274
        %vm1307 = vmpackc.low %vm1275, %vm1275
        %vm1308 = vmpackc.low %vm1276, %vm1276
        %vm1309 = vmpackc.low %vm1277, %vm1277
        %vm1310 = vmpackc.low %vm1278, %vm1278
        %vm1311 = vmpackc.low %vm1279, %vm1279
        %vm1312 = vmpackc.low %vm1280, %vm1280
        %vm1313 = vmpackc.low %vm1281, %vm1281
        %vm1314 = vmpackc.low %vm1282, %vm1282
        %vm1315 = vmpackc.low %vm1283, %vm1283
        %vm1316 = vmpackc.low %vm1284, %vm1284
        %vm1317 = vmpackc.low %vm1285, %vm1285
        %vm1318 = vmpackc.low %vm1286, %vm1286
        %vm1319 = vmpackc.low %vm1287, %vm1287
        %vm1320 = vmpackc.low %vm1288, %vm1288
        %vm1321 = vmpackc.low %vm1289, %vm1289
        %vm1322 = vmpackc.low %vm1290, %vm1290
        %vm1323 = vmpackc.low %vm1291, %vm1291
        %v1324 = vsel %vm1292, 65537, 0
        %v1325 = vsel %vm1293, 65537, 0
        %v1326 = vsel %vm1294, 65537, 0
        %v1327 = vsel %vm1295, 65537, 0
        %v1328 = vsel %vm1296, 65537, 0
        %v1329 = vsel %vm1297, 65537, 0
        %v1330 = vsel %vm1298, 65537, 0
        %v1331 = vsel %vm1299, 65537, 0
        %v1332 = vsel %vm1300, 65537, 0
        %v1333 = vsel %vm1301, 65537, 0
        %v1334 = vsel %vm1302, 65537, 0
        %v1335 = vsel %vm1303, 65537, 0
        %v1336 = vsel %vm1304, 65537, 0
        %v1337 = vsel %vm1305, 65537, 0
        %v1338 = vsel %vm1306, 65537, 0
        %v1339 = vsel %vm1307, 65537, 0
        %v1340 = vsel %vm1308, 65537, 0
        %v1341 = vsel %vm1309, 65537, 0
        %v1342 = vsel %vm1310, 65537, 0
        %v1343 = vsel %vm1311, 65537, 0
        %v1344 = vsel %vm1312, 65537, 0
        %v1345 = vsel %vm1313, 65537, 0
        %v1346 = vsel %vm1314, 65537, 0
        %v1347 = vsel %vm1315, 65537, 0
        %v1348 = vsel %vm1316, 65537, 0
        %v1349 = vsel %vm1317, 65537, 0
        %v1350 = vsel %vm1318, 65537, 0
        %v1351 = vsel %vm1319, 65537, 0
        %v1352 = vsel %vm1320, 65537, 0
        %v1353 = vsel %vm1321, 65537, 0
        %v1354 = vsel %vm1322, 65537, 0
        %v1355 = vsel %vm1323, 65537, 0
        %v1356 = vunpack.c.l.b16 %v1324
        %v1357 = vunpack.c.l.b16 %v1325
        %v1358 = vunpack.c.l.b16 %v1326
        %v1359 = vunpack.c.l.b16 %v1327
        %v1360 = vunpack.c.l.b16 %v1328
        %v1361 = vunpack.c.l.b16 %v1329
        %v1362 = vunpack.c.l.b16 %v1330
        %v1363 = vunpack.c.l.b16 %v1331
        %v1364 = vunpack.c.l.b16 %v1332
        %v1365 = vunpack.c.l.b16 %v1333
        %v1366 = vunpack.c.l.b16 %v1334
        %v1367 = vunpack.c.l.b16 %v1335
        %v1368 = vunpack.c.l.b16 %v1336
        %v1369 = vunpack.c.l.b16 %v1337
        %v1370 = vunpack.c.l.b16 %v1338
        %v1371 = vunpack.c.l.b16 %v1339
        %v1372 = vunpack.c.l.b16 %v1340
        %v1373 = vunpack.c.l.b16 %v1341
        %v1374 = vunpack.c.l.b16 %v1342
        %v1375 = vunpack.c.l.b16 %v1343
        %v1376 = vunpack.c.l.b16 %v1344
        %v1377 = vunpack.c.l.b16 %v1345
        %v1378 = vunpack.c.l.b16 %v1346
        %v1379 = vunpack.c.l.b16 %v1347
        %v1380 = vunpack.c.l.b16 %v1348
        %v1381 = vunpack.c.l.b16 %v1349
        %v1382 = vunpack.c.l.b16 %v1350
        %v1383 = vunpack.c.l.b16 %v1351
        %v1384 = vunpack.c.l.b16 %v1352
        %v1385 = vunpack.c.l.b16 %v1353
        %v1386 = vunpack.c.l.b16 %v1354
        %v1387 = vunpack.c.l.b16 %v1355
        %v1388 = vpack.c.b16 %v1357, %v1356
        %v1389 = vpack.c.b16 %v1359, %v1358
        %v1390 = vpack.c.b16 %v1361, %v1360
        %v1391 = vpack.c.b16 %v1363, %v1362
        %v1392 = vpack.c.b16 %v1365, %v1364
        %v1393 = vpack.c.b16 %v1367, %v1366
        %v1394 = vpack.c.b16 %v1369, %v1368
        %v1395 = vpack.c.b16 %v1371, %v1370
        %v1396 = vpack.c.b16 %v1373, %v1372
        %v1397 = vpack.c.b16 %v1375, %v1374
        %v1398 = vpack.c.b16 %v1377, %v1376
        %v1399 = vpack.c.b16 %v1379, %v1378
        %v1400 = vpack.c.b16 %v1381, %v1380
        %v1401 = vpack.c.b16 %v1383, %v1382
        %v1402 = vpack.c.b16 %v1385, %v1384
        %v1403 = vpack.c.b16 %v1387, %v1386
        %vm1404 = vcmp.ne.s16.totalorder %v1388, 0
        %vm1405 = vcmp.ne.s16.totalorder %v1389, 0
        %vm1406 = vcmp.ne.s16.totalorder %v1390, 0
        %vm1407 = vcmp.ne.s16.totalorder %v1391, 0
        %vm1408 = vcmp.ne.s16.totalorder %v1392, 0
        %vm1409 = vcmp.ne.s16.totalorder %v1393, 0
        %vm1410 = vcmp.ne.s16.totalorder %v1394, 0
        %vm1411 = vcmp.ne.s16.totalorder %v1395, 0
        %vm1412 = vcmp.ne.s16.totalorder %v1396, 0
        %vm1413 = vcmp.ne.s16.totalorder %v1397, 0
        %vm1414 = vcmp.ne.s16.totalorder %v1398, 0
        %vm1415 = vcmp.ne.s16.totalorder %v1399, 0
        %vm1416 = vcmp.ne.s16.totalorder %v1400, 0
        %vm1417 = vcmp.ne.s16.totalorder %v1401, 0
        %vm1418 = vcmp.ne.s16.totalorder %v1402, 0
        %vm1419 = vcmp.ne.s16.totalorder %v1403, 0
        %v1420 = vsel %vm1404, %v1019, %v816
        %v1421 = vsel %vm1405, %v959, %v824
        %v1422 = vsel %vm1406, %v962, %v832
        %v1423 = vsel %vm1407, %v965, %v840
        %v1424 = vsel %vm1408, %v968, %v848
        %v1425 = vsel %vm1409, %v971, %v856
        %v1426 = vsel %vm1410, %v974, %v864
        %v1427 = vsel %vm1411, %v977, %v872
        %v1428 = vsel %vm1412, %v980, %v880
        %v1429 = vsel %vm1413, %v983, %v888
        %v1430 = vsel %vm1414, %v986, %v896
        %v1431 = vsel %vm1415, %v989, %v904
        %v1432 = vsel %vm1416, %v992, %v912
        %v1433 = vsel %vm1417, %v995, %v920
        %v1434 = vsel %vm1418, %v998, %v928
        %v1435 = vsel %vm1419, %v1000, %v951
        %v1436 = vld [vmem:[#allocation5] sm:$0xf]
        %v1437 = vld [vmem:[#allocation5 + $0x4] sm:$0xf]
        %v1438 = vld [vmem:[#allocation5 + $0x8] sm:$0xf]
        %v1439 = vld [vmem:[#allocation5 + $0xc] sm:$0xf]
        %v1440 = vld [vmem:[#allocation5 + $0x10] sm:$0xf]
        %v1441 = vld [vmem:[#allocation5 + $0x14] sm:$0xf]
        %v1442 = vld [vmem:[#allocation5 + $0x18] sm:$0xf]
        %v1443 = vld [vmem:[#allocation5 + $0x1c] sm:$0xf]
        %v1444 = vld [vmem:[#allocation5 + $0x20] sm:$0xf]
        %v1445 = vld [vmem:[#allocation5 + $0x24] sm:$0xf]
        %v1446 = vld [vmem:[#allocation5 + $0x28] sm:$0xf]
        %v1447 = vld [vmem:[#allocation5 + $0x2c] sm:$0xf]
        %v1448 = vld [vmem:[#allocation5 + $0x30] sm:$0xf]
        %v1449 = vld [vmem:[#allocation5 + $0x34] sm:$0xf]
        %v1450 = vld [vmem:[#allocation5 + $0x38] sm:$0xf]
        %v1451 = vld [vmem:[#allocation5 + $0x3c] sm:$0xf]
        %s1452 = scalar_lea.vmem [#allocation5], 64
        %v1453 = vld [vmem:[%s1452] sm:$0xf]
        %v1454 = vld [vmem:[%s1452 + $0x4] sm:$0xf]
        %v1455 = vld [vmem:[%s1452 + $0x8] sm:$0xf]
        %v1456 = vld [vmem:[%s1452 + $0xc] sm:$0xf]
        %v1457 = vld [vmem:[%s1452 + $0x10] sm:$0xf]
        %v1458 = vld [vmem:[%s1452 + $0x14] sm:$0xf]
        %v1459 = vld [vmem:[%s1452 + $0x18] sm:$0xf]
        %v1460 = vld [vmem:[%s1452 + $0x1c] sm:$0xf]
        %v1461 = vld [vmem:[%s1452 + $0x20] sm:$0xf]
        %v1462 = vld [vmem:[%s1452 + $0x24] sm:$0xf]
        %v1463 = vld [vmem:[%s1452 + $0x28] sm:$0xf]
        %v1464 = vld [vmem:[%s1452 + $0x2c] sm:$0xf]
        %v1465 = vld [vmem:[%s1452 + $0x30] sm:$0xf]
        %v1466 = vld [vmem:[%s1452 + $0x34] sm:$0xf]
        %v1467 = vld [vmem:[%s1452 + $0x38] sm:$0xf]
        %v1468 = vld [vmem:[%s1452 + $0x3c] sm:$0xf]
        %v1485 = vunpack.c.l.b16 %v1453
        %v1486 = vunpack.c.l.b16 %v1454
        %v1487 = vunpack.c.l.b16 %v1455
        %v1488 = vunpack.c.l.b16 %v1456
        %v1489 = vunpack.c.l.b16 %v1457
        %v1490 = vunpack.c.l.b16 %v1458
        %v1491 = vunpack.c.l.b16 %v1459
        %v1492 = vunpack.c.l.b16 %v1460
        %v1493 = vunpack.c.l.b16 %v1461
        %v1494 = vunpack.c.l.b16 %v1462
        %v1495 = vunpack.c.l.b16 %v1463
        %v1496 = vunpack.c.l.b16 %v1464
        %v1497 = vunpack.c.l.b16 %v1465
        %v1498 = vunpack.c.l.b16 %v1466
        %v1499 = vunpack.c.l.b16 %v1467
        %v1500 = vunpack.c.l.b16 %v1468
        %v1501 = vpack.c.b16 %v1486, %v1485
        %v1502 = vpack.c.b16 %v1488, %v1487
        %v1503 = vpack.c.b16 %v1490, %v1489
        %v1504 = vpack.c.b16 %v1492, %v1491
        %v1505 = vpack.c.b16 %v1494, %v1493
        %v1506 = vpack.c.b16 %v1496, %v1495
        %v1507 = vpack.c.b16 %v1498, %v1497
        %v1508 = vpack.c.b16 %v1500, %v1499
        %1517 = vmatprep.subr.bf16.mxu0 0
        %1518 = vmatpush1.bf16.msra.mxu0 %v1508
        %1519 = vmatprep.subr.bf16.mxu0 0
        %1520 = vmatpush1.bf16.msra.mxu0 %v1507
        %1521 = vmatprep.subr.bf16.mxu0 0
        %1522 = vmatpush1.bf16.msra.mxu0 %v1506
        %1523 = vmatprep.subr.bf16.mxu0 0
        %1524 = vmatpush1.bf16.msra.mxu0 %v1505
        %1525 = vmatprep.subr.bf16.mxu0 0
        %1526 = vmatpush1.bf16.msra.mxu0 %v1504
        %1527 = vmatprep.subr.bf16.mxu0 0
        %1528 = vmatpush1.bf16.msra.mxu0 %v1503
        %1529 = vmatprep.subr.bf16.mxu0 0
        %1530 = vmatpush1.bf16.msra.mxu0 %v1502
        %1531 = vmatprep.subr.bf16.mxu0 0
        %1532 = vmatpush1.bf16.msra.mxu0 %v1501
        %1533 = vmatprep.subr.bf16.mxu0 0
        %1534 = vmatpush2.bf16.msra.mxu0 0
        %1535 = vmatprep.subr.bf16.mxu0 0
        %1536 = vmatpush2.bf16.msra.mxu0 0
        %1537 = vmatprep.subr.bf16.mxu0 0
        %1538 = vmatpush2.bf16.msra.mxu0 0
        %1539 = vmatprep.subr.bf16.mxu0 0
        %1540 = vmatpush2.bf16.msra.mxu0 0
        %1541 = vmatprep.subr.bf16.mxu0 0
        %1542 = vmatpush2.bf16.msra.mxu0 0
        %1543 = vmatprep.subr.bf16.mxu0 0
        %1544 = vmatpush2.bf16.msra.mxu0 0
        %1545 = vmatprep.subr.bf16.mxu0 0
        %1546 = vmatpush2.bf16.msra.mxu0 0
        %1547 = vmatprep.subr.bf16.mxu0 0
        %1548 = vmatpush2.bf16.msra.mxu0 0
        %1549 = vmatprep.mubr.bf16.mxu0 0
        %1550 = vmatmul.mubr.bf16.gmra.mxu0 %v789
        %v1551 = vpop.f32.mrf.mxu0
        %v1552 = vadd.f32 0.0, %v1551
        %v1553 = vpop.f32.mrf.mxu0
        %v1554 = vpop.f32.mrf.mxu0
        %v1555 = vadd.f32 0.0, %v1554
        %v1556 = vpop.f32.mrf.mxu0
        %1557 = vmatprep.mubr.bf16.mxu0 0
        %1558 = vmatmul.mubr.bf16.gmra.mxu0 %v788
        %v1559 = vpop.f32.mrf.mxu0
        %v1560 = vadd.f32 0.0, %v1559
        %v1561 = vpop.f32.mrf.mxu0
        %v1562 = vpop.f32.mrf.mxu0
        %v1563 = vadd.f32 0.0, %v1562
        %v1564 = vpop.f32.mrf.mxu0
        %1565 = vmatprep.mubr.bf16.mxu0 0
        %1566 = vmatmul.mubr.bf16.gmra.mxu0 %v789
        %v1567 = vpop.f32.mrf.mxu0
        %v1568 = vadd.f32 0.0, %v1567
        %v1569 = vpop.f32.mrf.mxu0
        %v1570 = vpop.f32.mrf.mxu0
        %v1571 = vadd.f32 0.0, %v1570
        %v1572 = vpop.f32.mrf.mxu0
        %1573 = vmatprep.mubr.bf16.mxu0 0
        %1574 = vmatmul.mubr.bf16.gmra.mxu0 %v790
        %v1575 = vpop.f32.mrf.mxu0
        %v1576 = vadd.f32 0.0, %v1575
        %v1577 = vpop.f32.mrf.mxu0
        %v1578 = vpop.f32.mrf.mxu0
        %v1579 = vadd.f32 0.0, %v1578
        %v1580 = vpop.f32.mrf.mxu0
        %1581 = vmatprep.mubr.bf16.mxu0 0
        %1582 = vmatmul.mubr.bf16.gmra.mxu0 %v791
        %v1583 = vpop.f32.mrf.mxu0
        %v1584 = vadd.f32 0.0, %v1583
        %v1585 = vpop.f32.mrf.mxu0
        %v1586 = vpop.f32.mrf.mxu0
        %v1587 = vadd.f32 0.0, %v1586
        %v1588 = vpop.f32.mrf.mxu0
        %1589 = vmatprep.mubr.bf16.mxu0 0
        %1590 = vmatmul.mubr.bf16.gmra.mxu0 %v792
        %v1591 = vpop.f32.mrf.mxu0
        %v1592 = vadd.f32 0.0, %v1591
        %v1593 = vpop.f32.mrf.mxu0
        %v1594 = vpop.f32.mrf.mxu0
        %v1595 = vadd.f32 0.0, %v1594
        %v1596 = vpop.f32.mrf.mxu0
        %1597 = vmatprep.mubr.bf16.mxu0 0
        %1598 = vmatmul.mubr.bf16.gmra.mxu0 %v793
        %v1599 = vpop.f32.mrf.mxu0
        %v1600 = vadd.f32 0.0, %v1599
        %v1601 = vpop.f32.mrf.mxu0
        %v1602 = vpop.f32.mrf.mxu0
        %v1603 = vadd.f32 0.0, %v1602
        %v1604 = vpop.f32.mrf.mxu0
        %1605 = vmatprep.mubr.bf16.mxu0 0
        %1606 = vmatmul.mubr.bf16.gmra.mxu0 %v794
        %v1607 = vpop.f32.mrf.mxu0
        %v1608 = vadd.f32 0.0, %v1607
        %v1609 = vpop.f32.mrf.mxu0
        %v1610 = vpop.f32.mrf.mxu0
        %v1611 = vadd.f32 0.0, %v1610
        %v1612 = vpop.f32.mrf.mxu0
        %1613 = vmatprep.mubr.bf16.mxu0 0
        %1614 = vmatmul.mubr.bf16.gmra.mxu0 %v795
        %v1615 = vpop.f32.mrf.mxu0
        %v1616 = vadd.f32 0.0, %v1615
        %v1617 = vpop.f32.mrf.mxu0
        %v1618 = vpop.f32.mrf.mxu0
        %v1619 = vadd.f32 0.0, %v1618
        %v1620 = vpop.f32.mrf.mxu0
        %1621 = vmatprep.mubr.bf16.mxu0 0
        %1622 = vmatmul.mubr.bf16.gmra.mxu0 %v796
        %v1623 = vpop.f32.mrf.mxu0
        %v1624 = vadd.f32 0.0, %v1623
        %v1625 = vpop.f32.mrf.mxu0
        %v1626 = vpop.f32.mrf.mxu0
        %v1627 = vadd.f32 0.0, %v1626
        %v1628 = vpop.f32.mrf.mxu0
        %1629 = vmatprep.mubr.bf16.mxu0 0
        %1630 = vmatmul.mubr.bf16.gmra.mxu0 %v797
        %v1631 = vpop.f32.mrf.mxu0
        %v1632 = vadd.f32 0.0, %v1631
        %v1633 = vpop.f32.mrf.mxu0
        %v1634 = vpop.f32.mrf.mxu0
        %v1635 = vadd.f32 0.0, %v1634
        %v1636 = vpop.f32.mrf.mxu0
        %1637 = vmatprep.mubr.bf16.mxu0 0
        %1638 = vmatmul.mubr.bf16.gmra.mxu0 %v798
        %v1639 = vpop.f32.mrf.mxu0
        %v1640 = vadd.f32 0.0, %v1639
        %v1641 = vpop.f32.mrf.mxu0
        %v1642 = vpop.f32.mrf.mxu0
        %v1643 = vadd.f32 0.0, %v1642
        %v1644 = vpop.f32.mrf.mxu0
        %1645 = vmatprep.mubr.bf16.mxu0 0
        %1646 = vmatmul.mubr.bf16.gmra.mxu0 %v799
        %v1647 = vpop.f32.mrf.mxu0
        %v1648 = vadd.f32 0.0, %v1647
        %v1649 = vpop.f32.mrf.mxu0
        %v1650 = vpop.f32.mrf.mxu0
        %v1651 = vadd.f32 0.0, %v1650
        %v1652 = vpop.f32.mrf.mxu0
        %1653 = vmatprep.mubr.bf16.mxu0 0
        %1654 = vmatmul.mubr.bf16.gmra.mxu0 %v800
        %v1655 = vpop.f32.mrf.mxu0
        %v1656 = vadd.f32 0.0, %v1655
        %v1657 = vpop.f32.mrf.mxu0
        %v1658 = vpop.f32.mrf.mxu0
        %v1659 = vadd.f32 0.0, %v1658
        %v1660 = vpop.f32.mrf.mxu0
        %1661 = vmatprep.mubr.bf16.mxu0 0
        %1662 = vmatmul.mubr.bf16.gmra.mxu0 %v801
        %v1663 = vpop.f32.mrf.mxu0
        %v1664 = vadd.f32 0.0, %v1663
        %v1665 = vpop.f32.mrf.mxu0
        %v1666 = vpop.f32.mrf.mxu0
        %v1667 = vadd.f32 0.0, %v1666
        %v1668 = vpop.f32.mrf.mxu0
        %1669 = vmatprep.mubr.bf16.mxu0 0
        %1670 = vmatmul.mubr.bf16.gmra.mxu0 %v802
        %v1671 = vpop.f32.mrf.mxu0
        %v1672 = vadd.f32 0.0, %v1671
        %v1673 = vpop.f32.mrf.mxu0
        %v1674 = vpop.f32.mrf.mxu0
        %v1675 = vadd.f32 0.0, %v1674
        %v1676 = vpop.f32.mrf.mxu0
        %1677 = vdwg.mxu0
        %v1694 = vunpack.c.l.b16 %v1436
        %v1695 = vunpack.c.l.b16 %v1437
        %v1696 = vunpack.c.l.b16 %v1438
        %v1697 = vunpack.c.l.b16 %v1439
        %v1698 = vunpack.c.l.b16 %v1440
        %v1699 = vunpack.c.l.b16 %v1441
        %v1700 = vunpack.c.l.b16 %v1442
        %v1701 = vunpack.c.l.b16 %v1443
        %v1702 = vunpack.c.l.b16 %v1444
        %v1703 = vunpack.c.l.b16 %v1445
        %v1704 = vunpack.c.l.b16 %v1446
        %v1705 = vunpack.c.l.b16 %v1447
        %v1706 = vunpack.c.l.b16 %v1448
        %v1707 = vunpack.c.l.b16 %v1449
        %v1708 = vunpack.c.l.b16 %v1450
        %v1709 = vunpack.c.l.b16 %v1451
        %v1710 = vpack.c.b16 %v1695, %v1694
        %v1711 = vpack.c.b16 %v1697, %v1696
        %v1712 = vpack.c.b16 %v1699, %v1698
        %v1713 = vpack.c.b16 %v1701, %v1700
        %v1714 = vpack.c.b16 %v1703, %v1702
        %v1715 = vpack.c.b16 %v1705, %v1704
        %v1716 = vpack.c.b16 %v1707, %v1706
        %v1717 = vpack.c.b16 %v1709, %v1708
        %1726 = vmatprep.subr.bf16.mxu0 0
        %1727 = vmatpush1.bf16.msra.mxu0 %v1717
        %1728 = vmatprep.subr.bf16.mxu0 0
        %1729 = vmatpush1.bf16.msra.mxu0 %v1716
        %1730 = vmatprep.subr.bf16.mxu0 0
        %1731 = vmatpush1.bf16.msra.mxu0 %v1715
        %1732 = vmatprep.subr.bf16.mxu0 0
        %1733 = vmatpush1.bf16.msra.mxu0 %v1714
        %1734 = vmatprep.subr.bf16.mxu0 0
        %1735 = vmatpush1.bf16.msra.mxu0 %v1713
        %1736 = vmatprep.subr.bf16.mxu0 0
        %1737 = vmatpush1.bf16.msra.mxu0 %v1712
        %1738 = vmatprep.subr.bf16.mxu0 0
        %1739 = vmatpush1.bf16.msra.mxu0 %v1711
        %1740 = vmatprep.subr.bf16.mxu0 0
        %1741 = vmatpush1.bf16.msra.mxu0 %v1710
        %1742 = vmatprep.subr.bf16.mxu0 0
        %1743 = vmatpush2.bf16.msra.mxu0 0
        %1744 = vmatprep.subr.bf16.mxu0 0
        %1745 = vmatpush2.bf16.msra.mxu0 0
        %1746 = vmatprep.subr.bf16.mxu0 0
        %1747 = vmatpush2.bf16.msra.mxu0 0
        %1748 = vmatprep.subr.bf16.mxu0 0
        %1749 = vmatpush2.bf16.msra.mxu0 0
        %1750 = vmatprep.subr.bf16.mxu0 0
        %1751 = vmatpush2.bf16.msra.mxu0 0
        %1752 = vmatprep.subr.bf16.mxu0 0
        %1753 = vmatpush2.bf16.msra.mxu0 0
        %1754 = vmatprep.subr.bf16.mxu0 0
        %1755 = vmatpush2.bf16.msra.mxu0 0
        %1756 = vmatprep.subr.bf16.mxu0 0
        %1757 = vmatpush2.bf16.msra.mxu0 0
        %1758 = vmatprep.mubr.bf16.mxu0 0
        %1759 = vmatmul.mubr.bf16.gmra.mxu0 %v1213
        %v1760 = vpop.f32.mrf.mxu0
        %v1761 = vadd.f32 %v1552, %v1760
        %v1762 = vpop.f32.mrf.mxu0
        %v1763 = vpop.f32.mrf.mxu0
        %v1764 = vadd.f32 %v1555, %v1763
        %v1765 = vpop.f32.mrf.mxu0
        %1766 = vmatprep.mubr.bf16.mxu0 0
        %1767 = vmatmul.mubr.bf16.gmra.mxu0 %v1212
        %v1768 = vpop.f32.mrf.mxu0
        %v1769 = vadd.f32 %v1560, %v1768
        %v1770 = vpop.f32.mrf.mxu0
        %v1771 = vpop.f32.mrf.mxu0
        %v1772 = vadd.f32 %v1563, %v1771
        %v1773 = vpop.f32.mrf.mxu0
        %1774 = vmatprep.mubr.bf16.mxu0 0
        %1775 = vmatmul.mubr.bf16.gmra.mxu0 %v1213
        %v1776 = vpop.f32.mrf.mxu0
        %v1777 = vadd.f32 %v1568, %v1776
        %v1778 = vpop.f32.mrf.mxu0
        %v1779 = vpop.f32.mrf.mxu0
        %v1780 = vadd.f32 %v1571, %v1779
        %v1781 = vpop.f32.mrf.mxu0
        %1782 = vmatprep.mubr.bf16.mxu0 0
        %1783 = vmatmul.mubr.bf16.gmra.mxu0 %v1214
        %v1784 = vpop.f32.mrf.mxu0
        %v1785 = vadd.f32 %v1576, %v1784
        %v1786 = vpop.f32.mrf.mxu0
        %v1787 = vpop.f32.mrf.mxu0
        %v1788 = vadd.f32 %v1579, %v1787
        %v1789 = vpop.f32.mrf.mxu0
        %1790 = vmatprep.mubr.bf16.mxu0 0
        %1791 = vmatmul.mubr.bf16.gmra.mxu0 %v1215
        %v1792 = vpop.f32.mrf.mxu0
        %v1793 = vadd.f32 %v1584, %v1792
        %v1794 = vpop.f32.mrf.mxu0
        %v1795 = vpop.f32.mrf.mxu0
        %v1796 = vadd.f32 %v1587, %v1795
        %v1797 = vpop.f32.mrf.mxu0
        %1798 = vmatprep.mubr.bf16.mxu0 0
        %1799 = vmatmul.mubr.bf16.gmra.mxu0 %v1216
        %v1800 = vpop.f32.mrf.mxu0
        %v1801 = vadd.f32 %v1592, %v1800
        %v1802 = vpop.f32.mrf.mxu0
        %v1803 = vpop.f32.mrf.mxu0
        %v1804 = vadd.f32 %v1595, %v1803
        %v1805 = vpop.f32.mrf.mxu0
        %1806 = vmatprep.mubr.bf16.mxu0 0
        %1807 = vmatmul.mubr.bf16.gmra.mxu0 %v1217
        %v1808 = vpop.f32.mrf.mxu0
        %v1809 = vadd.f32 %v1600, %v1808
        %v1810 = vpop.f32.mrf.mxu0
        %v1811 = vpop.f32.mrf.mxu0
        %v1812 = vadd.f32 %v1603, %v1811
        %v1813 = vpop.f32.mrf.mxu0
        %1814 = vmatprep.mubr.bf16.mxu0 0
        %1815 = vmatmul.mubr.bf16.gmra.mxu0 %v1218
        %v1816 = vpop.f32.mrf.mxu0
        %v1817 = vadd.f32 %v1608, %v1816
        %v1818 = vpop.f32.mrf.mxu0
        %v1819 = vpop.f32.mrf.mxu0
        %v1820 = vadd.f32 %v1611, %v1819
        %v1821 = vpop.f32.mrf.mxu0
        %1822 = vmatprep.mubr.bf16.mxu0 0
        %1823 = vmatmul.mubr.bf16.gmra.mxu0 %v1219
        %v1824 = vpop.f32.mrf.mxu0
        %v1825 = vadd.f32 %v1616, %v1824
        %v1826 = vpop.f32.mrf.mxu0
        %v1827 = vpop.f32.mrf.mxu0
        %v1828 = vadd.f32 %v1619, %v1827
        %v1829 = vpop.f32.mrf.mxu0
        %1830 = vmatprep.mubr.bf16.mxu0 0
        %1831 = vmatmul.mubr.bf16.gmra.mxu0 %v1220
        %v1832 = vpop.f32.mrf.mxu0
        %v1833 = vadd.f32 %v1624, %v1832
        %v1834 = vpop.f32.mrf.mxu0
        %v1835 = vpop.f32.mrf.mxu0
        %v1836 = vadd.f32 %v1627, %v1835
        %v1837 = vpop.f32.mrf.mxu0
        %1838 = vmatprep.mubr.bf16.mxu0 0
        %1839 = vmatmul.mubr.bf16.gmra.mxu0 %v1221
        %v1840 = vpop.f32.mrf.mxu0
        %v1841 = vadd.f32 %v1632, %v1840
        %v1842 = vpop.f32.mrf.mxu0
        %v1843 = vpop.f32.mrf.mxu0
        %v1844 = vadd.f32 %v1635, %v1843
        %v1845 = vpop.f32.mrf.mxu0
        %1846 = vmatprep.mubr.bf16.mxu0 0
        %1847 = vmatmul.mubr.bf16.gmra.mxu0 %v1222
        %v1848 = vpop.f32.mrf.mxu0
        %v1849 = vadd.f32 %v1640, %v1848
        %v1850 = vpop.f32.mrf.mxu0
        %v1851 = vpop.f32.mrf.mxu0
        %v1852 = vadd.f32 %v1643, %v1851
        %v1853 = vpop.f32.mrf.mxu0
        %1854 = vmatprep.mubr.bf16.mxu0 0
        %1855 = vmatmul.mubr.bf16.gmra.mxu0 %v1223
        %v1856 = vpop.f32.mrf.mxu0
        %v1857 = vadd.f32 %v1648, %v1856
        %v1858 = vpop.f32.mrf.mxu0
        %v1859 = vpop.f32.mrf.mxu0
        %v1860 = vadd.f32 %v1651, %v1859
        %v1861 = vpop.f32.mrf.mxu0
        %1862 = vmatprep.mubr.bf16.mxu0 0
        %1863 = vmatmul.mubr.bf16.gmra.mxu0 %v1224
        %v1864 = vpop.f32.mrf.mxu0
        %v1865 = vadd.f32 %v1656, %v1864
        %v1866 = vpop.f32.mrf.mxu0
        %v1867 = vpop.f32.mrf.mxu0
        %v1868 = vadd.f32 %v1659, %v1867
        %v1869 = vpop.f32.mrf.mxu0
        %1870 = vmatprep.mubr.bf16.mxu0 0
        %1871 = vmatmul.mubr.bf16.gmra.mxu0 %v1225
        %v1872 = vpop.f32.mrf.mxu0
        %v1873 = vadd.f32 %v1664, %v1872
        %v1874 = vpop.f32.mrf.mxu0
        %v1875 = vpop.f32.mrf.mxu0
        %v1876 = vadd.f32 %v1667, %v1875
        %v1877 = vpop.f32.mrf.mxu0
        %1878 = vmatprep.mubr.bf16.mxu0 0
        %1879 = vmatmul.mubr.bf16.gmra.mxu0 %v1226
        %v1880 = vpop.f32.mrf.mxu0
        %v1881 = vadd.f32 %v1672, %v1880
        %v1882 = vpop.f32.mrf.mxu0
        %v1883 = vpop.f32.mrf.mxu0
        %v1884 = vadd.f32 %v1675, %v1883
        %v1885 = vpop.f32.mrf.mxu0
        %1886 = vdwg.mxu0
        %s1887 = scalar_lea.vmem [#allocation5], 128
        %v1888 = vld [vmem:[%s1887] sm:$0xf]
        %v1889 = vld [vmem:[%s1887 + $0x4] sm:$0xf]
        %v1890 = vld [vmem:[%s1887 + $0x8] sm:$0xf]
        %v1891 = vld [vmem:[%s1887 + $0xc] sm:$0xf]
        %v1892 = vld [vmem:[%s1887 + $0x10] sm:$0xf]
        %v1893 = vld [vmem:[%s1887 + $0x14] sm:$0xf]
        %v1894 = vld [vmem:[%s1887 + $0x18] sm:$0xf]
        %v1895 = vld [vmem:[%s1887 + $0x1c] sm:$0xf]
        %v1896 = vld [vmem:[%s1887 + $0x20] sm:$0xf]
        %v1897 = vld [vmem:[%s1887 + $0x24] sm:$0xf]
        %v1898 = vld [vmem:[%s1887 + $0x28] sm:$0xf]
        %v1899 = vld [vmem:[%s1887 + $0x2c] sm:$0xf]
        %v1900 = vld [vmem:[%s1887 + $0x30] sm:$0xf]
        %v1901 = vld [vmem:[%s1887 + $0x34] sm:$0xf]
        %v1902 = vld [vmem:[%s1887 + $0x38] sm:$0xf]
        %v1903 = vld [vmem:[%s1887 + $0x3c] sm:$0xf]
        %v1920 = vunpack.c.l.b16 %v1888
        %v1921 = vunpack.c.l.b16 %v1889
        %v1922 = vunpack.c.l.b16 %v1890
        %v1923 = vunpack.c.l.b16 %v1891
        %v1924 = vunpack.c.l.b16 %v1892
        %v1925 = vunpack.c.l.b16 %v1893
        %v1926 = vunpack.c.l.b16 %v1894
        %v1927 = vunpack.c.l.b16 %v1895
        %v1928 = vunpack.c.l.b16 %v1896
        %v1929 = vunpack.c.l.b16 %v1897
        %v1930 = vunpack.c.l.b16 %v1898
        %v1931 = vunpack.c.l.b16 %v1899
        %v1932 = vunpack.c.l.b16 %v1900
        %v1933 = vunpack.c.l.b16 %v1901
        %v1934 = vunpack.c.l.b16 %v1902
        %v1935 = vunpack.c.l.b16 %v1903
        %v1936 = vpack.c.b16 %v1921, %v1920
        %v1937 = vpack.c.b16 %v1923, %v1922
        %v1938 = vpack.c.b16 %v1925, %v1924
        %v1939 = vpack.c.b16 %v1927, %v1926
        %v1940 = vpack.c.b16 %v1929, %v1928
        %v1941 = vpack.c.b16 %v1931, %v1930
        %v1942 = vpack.c.b16 %v1933, %v1932
        %v1943 = vpack.c.b16 %v1935, %v1934
        %1952 = vmatprep.subr.bf16.mxu0 0
        %1953 = vmatpush1.bf16.msra.mxu0 %v1943
        %1954 = vmatprep.subr.bf16.mxu0 0
        %1955 = vmatpush1.bf16.msra.mxu0 %v1942
        %1956 = vmatprep.subr.bf16.mxu0 0
        %1957 = vmatpush1.bf16.msra.mxu0 %v1941
        %1958 = vmatprep.subr.bf16.mxu0 0
        %1959 = vmatpush1.bf16.msra.mxu0 %v1940
        %1960 = vmatprep.subr.bf16.mxu0 0
        %1961 = vmatpush1.bf16.msra.mxu0 %v1939
        %1962 = vmatprep.subr.bf16.mxu0 0
        %1963 = vmatpush1.bf16.msra.mxu0 %v1938
        %1964 = vmatprep.subr.bf16.mxu0 0
        %1965 = vmatpush1.bf16.msra.mxu0 %v1937
        %1966 = vmatprep.subr.bf16.mxu0 0
        %1967 = vmatpush1.bf16.msra.mxu0 %v1936
        %1968 = vmatprep.subr.bf16.mxu0 0
        %1969 = vmatpush2.bf16.msra.mxu0 0
        %1970 = vmatprep.subr.bf16.mxu0 0
        %1971 = vmatpush2.bf16.msra.mxu0 0
        %1972 = vmatprep.subr.bf16.mxu0 0
        %1973 = vmatpush2.bf16.msra.mxu0 0
        %1974 = vmatprep.subr.bf16.mxu0 0
        %1975 = vmatpush2.bf16.msra.mxu0 0
        %1976 = vmatprep.subr.bf16.mxu0 0
        %1977 = vmatpush2.bf16.msra.mxu0 0
        %1978 = vmatprep.subr.bf16.mxu0 0
        %1979 = vmatpush2.bf16.msra.mxu0 0
        %1980 = vmatprep.subr.bf16.mxu0 0
        %1981 = vmatpush2.bf16.msra.mxu0 0
        %1982 = vmatprep.subr.bf16.mxu0 0
        %1983 = vmatpush2.bf16.msra.mxu0 0
        %1984 = vmatprep.mubr.bf16.mxu0 0
        %1985 = vmatmul.mubr.bf16.gmra.mxu0 %v1421
        %v1986 = vpop.f32.mrf.mxu0
        %v1987 = vadd.f32 0.0, %v1986
        %v1988 = vpop.f32.mrf.mxu0
        %v1989 = vpop.f32.mrf.mxu0
        %v1990 = vadd.f32 0.0, %v1989
        %v1991 = vpop.f32.mrf.mxu0
        %1992 = vmatprep.mubr.bf16.mxu0 0
        %1993 = vmatmul.mubr.bf16.gmra.mxu0 %v1420
        %v1994 = vpop.f32.mrf.mxu0
        %v1995 = vadd.f32 0.0, %v1994
        %v1996 = vpop.f32.mrf.mxu0
        %v1997 = vpop.f32.mrf.mxu0
        %v1998 = vadd.f32 0.0, %v1997
        %v1999 = vpop.f32.mrf.mxu0
        %2000 = vmatprep.mubr.bf16.mxu0 0
        %2001 = vmatmul.mubr.bf16.gmra.mxu0 %v1421
        %v2002 = vpop.f32.mrf.mxu0
        %v2003 = vadd.f32 0.0, %v2002
        %v2004 = vpop.f32.mrf.mxu0
        %v2005 = vpop.f32.mrf.mxu0
        %v2006 = vadd.f32 0.0, %v2005
        %v2007 = vpop.f32.mrf.mxu0
        %2008 = vmatprep.mubr.bf16.mxu0 0
        %2009 = vmatmul.mubr.bf16.gmra.mxu0 %v1422
        %v2010 = vpop.f32.mrf.mxu0
        %v2011 = vadd.f32 0.0, %v2010
        %v2012 = vpop.f32.mrf.mxu0
        %v2013 = vpop.f32.mrf.mxu0
        %v2014 = vadd.f32 0.0, %v2013
        %v2015 = vpop.f32.mrf.mxu0
        %2016 = vmatprep.mubr.bf16.mxu0 0
        %2017 = vmatmul.mubr.bf16.gmra.mxu0 %v1423
        %v2018 = vpop.f32.mrf.mxu0
        %v2019 = vadd.f32 0.0, %v2018
        %v2020 = vpop.f32.mrf.mxu0
        %v2021 = vpop.f32.mrf.mxu0
        %v2022 = vadd.f32 0.0, %v2021
        %v2023 = vpop.f32.mrf.mxu0
        %2024 = vmatprep.mubr.bf16.mxu0 0
        %2025 = vmatmul.mubr.bf16.gmra.mxu0 %v1424
        %v2026 = vpop.f32.mrf.mxu0
        %v2027 = vadd.f32 0.0, %v2026
        %v2028 = vpop.f32.mrf.mxu0
        %v2029 = vpop.f32.mrf.mxu0
        %v2030 = vadd.f32 0.0, %v2029
        %v2031 = vpop.f32.mrf.mxu0
        %2032 = vmatprep.mubr.bf16.mxu0 0
        %2033 = vmatmul.mubr.bf16.gmra.mxu0 %v1425
        %v2034 = vpop.f32.mrf.mxu0
        %v2035 = vadd.f32 0.0, %v2034
        %v2036 = vpop.f32.mrf.mxu0
        %v2037 = vpop.f32.mrf.mxu0
        %v2038 = vadd.f32 0.0, %v2037
        %v2039 = vpop.f32.mrf.mxu0
        %2040 = vmatprep.mubr.bf16.mxu0 0
        %2041 = vmatmul.mubr.bf16.gmra.mxu0 %v1426
        %v2042 = vpop.f32.mrf.mxu0
        %v2043 = vadd.f32 0.0, %v2042
        %v2044 = vpop.f32.mrf.mxu0
        %v2045 = vpop.f32.mrf.mxu0
        %v2046 = vadd.f32 0.0, %v2045
        %v2047 = vpop.f32.mrf.mxu0
        %2048 = vmatprep.mubr.bf16.mxu0 0
        %2049 = vmatmul.mubr.bf16.gmra.mxu0 %v1427
        %v2050 = vpop.f32.mrf.mxu0
        %v2051 = vadd.f32 0.0, %v2050
        %v2052 = vpop.f32.mrf.mxu0
        %v2053 = vpop.f32.mrf.mxu0
        %v2054 = vadd.f32 0.0, %v2053
        %v2055 = vpop.f32.mrf.mxu0
        %2056 = vmatprep.mubr.bf16.mxu0 0
        %2057 = vmatmul.mubr.bf16.gmra.mxu0 %v1428
        %v2058 = vpop.f32.mrf.mxu0
        %v2059 = vadd.f32 0.0, %v2058
        %v2060 = vpop.f32.mrf.mxu0
        %v2061 = vpop.f32.mrf.mxu0
        %v2062 = vadd.f32 0.0, %v2061
        %v2063 = vpop.f32.mrf.mxu0
        %2064 = vmatprep.mubr.bf16.mxu0 0
        %2065 = vmatmul.mubr.bf16.gmra.mxu0 %v1429
        %v2066 = vpop.f32.mrf.mxu0
        %v2067 = vadd.f32 0.0, %v2066
        %v2068 = vpop.f32.mrf.mxu0
        %v2069 = vpop.f32.mrf.mxu0
        %v2070 = vadd.f32 0.0, %v2069
        %v2071 = vpop.f32.mrf.mxu0
        %2072 = vmatprep.mubr.bf16.mxu0 0
        %2073 = vmatmul.mubr.bf16.gmra.mxu0 %v1430
        %v2074 = vpop.f32.mrf.mxu0
        %v2075 = vadd.f32 0.0, %v2074
        %v2076 = vpop.f32.mrf.mxu0
        %v2077 = vpop.f32.mrf.mxu0
        %v2078 = vadd.f32 0.0, %v2077
        %v2079 = vpop.f32.mrf.mxu0
        %2080 = vmatprep.mubr.bf16.mxu0 0
        %2081 = vmatmul.mubr.bf16.gmra.mxu0 %v1431
        %v2082 = vpop.f32.mrf.mxu0
        %v2083 = vadd.f32 0.0, %v2082
        %v2084 = vpop.f32.mrf.mxu0
        %v2085 = vpop.f32.mrf.mxu0
        %v2086 = vadd.f32 0.0, %v2085
        %v2087 = vpop.f32.mrf.mxu0
        %2088 = vmatprep.mubr.bf16.mxu0 0
        %2089 = vmatmul.mubr.bf16.gmra.mxu0 %v1432
        %v2090 = vpop.f32.mrf.mxu0
        %v2091 = vadd.f32 0.0, %v2090
        %v2092 = vpop.f32.mrf.mxu0
        %v2093 = vpop.f32.mrf.mxu0
        %v2094 = vadd.f32 0.0, %v2093
        %v2095 = vpop.f32.mrf.mxu0
        %2096 = vmatprep.mubr.bf16.mxu0 0
        %2097 = vmatmul.mubr.bf16.gmra.mxu0 %v1433
        %v2098 = vpop.f32.mrf.mxu0
        %v2099 = vadd.f32 0.0, %v2098
        %v2100 = vpop.f32.mrf.mxu0
        %v2101 = vpop.f32.mrf.mxu0
        %v2102 = vadd.f32 0.0, %v2101
        %v2103 = vpop.f32.mrf.mxu0
        %2104 = vmatprep.mubr.bf16.mxu0 0
        %2105 = vmatmul.mubr.bf16.gmra.mxu0 %v1434
        %v2106 = vpop.f32.mrf.mxu0
        %v2107 = vadd.f32 0.0, %v2106
        %v2108 = vpop.f32.mrf.mxu0
        %v2109 = vpop.f32.mrf.mxu0
        %v2110 = vadd.f32 0.0, %v2109
        %v2111 = vpop.f32.mrf.mxu0
        %2112 = vdwg.mxu0
        %v2113 = vadd.f32 %v1761, %v1987
        %v2114 = vadd.f32 %v1764, %v1990
        %v2115 = vadd.f32 %v1769, %v1995
        %v2116 = vadd.f32 %v1772, %v1998
        %v2117 = vadd.f32 %v1777, %v2003
        %v2118 = vadd.f32 %v1780, %v2006
        %v2119 = vadd.f32 %v1785, %v2011
        %v2120 = vadd.f32 %v1788, %v2014
        %v2121 = vadd.f32 %v1793, %v2019
        %v2122 = vadd.f32 %v1796, %v2022
        %v2123 = vadd.f32 %v1801, %v2027
        %v2124 = vadd.f32 %v1804, %v2030
        %v2125 = vadd.f32 %v1809, %v2035
        %v2126 = vadd.f32 %v1812, %v2038
        %v2127 = vadd.f32 %v1817, %v2043
        %v2128 = vadd.f32 %v1820, %v2046
        %v2129 = vadd.f32 %v1825, %v2051
        %v2130 = vadd.f32 %v1828, %v2054
        %v2131 = vadd.f32 %v1833, %v2059
        %v2132 = vadd.f32 %v1836, %v2062
        %v2133 = vadd.f32 %v1841, %v2067
        %v2134 = vadd.f32 %v1844, %v2070
        %v2135 = vadd.f32 %v1849, %v2075
        %v2136 = vadd.f32 %v1852, %v2078
        %v2137 = vadd.f32 %v1857, %v2083
        %v2138 = vadd.f32 %v1860, %v2086
        %v2139 = vadd.f32 %v1865, %v2091
        %v2140 = vadd.f32 %v1868, %v2094
        %v2141 = vadd.f32 %v1873, %v2099
        %v2142 = vadd.f32 %v1876, %v2102
        %v2143 = vadd.f32 %v1881, %v2107
        %v2144 = vadd.f32 %v1884, %v2110
        %s2145 = scalar_lea.vmem [#allocation5], 192
        %v2146 = vld [vmem:[%s2145] sm:$0xf]
        %v2147 = vld [vmem:[%s2145 + $0x4] sm:$0xf]
        %v2148 = vld [vmem:[%s2145 + $0x8] sm:$0xf]
        %v2149 = vld [vmem:[%s2145 + $0xc] sm:$0xf]
        %v2150 = vld [vmem:[%s2145 + $0x10] sm:$0xf]
        %v2151 = vld [vmem:[%s2145 + $0x14] sm:$0xf]
        %v2152 = vld [vmem:[%s2145 + $0x18] sm:$0xf]
        %v2153 = vld [vmem:[%s2145 + $0x1c] sm:$0xf]
        %v2154 = vld [vmem:[%s2145 + $0x20] sm:$0xf]
        %v2155 = vld [vmem:[%s2145 + $0x24] sm:$0xf]
        %v2156 = vld [vmem:[%s2145 + $0x28] sm:$0xf]
        %v2157 = vld [vmem:[%s2145 + $0x2c] sm:$0xf]
        %v2158 = vld [vmem:[%s2145 + $0x30] sm:$0xf]
        %v2159 = vld [vmem:[%s2145 + $0x34] sm:$0xf]
        %v2160 = vld [vmem:[%s2145 + $0x38] sm:$0xf]
        %v2161 = vld [vmem:[%s2145 + $0x3c] sm:$0xf]
        %v2178 = vunpack.c.l.b16 %v2146
        %v2179 = vunpack.c.l.b16 %v2147
        %v2180 = vunpack.c.l.b16 %v2148
        %v2181 = vunpack.c.l.b16 %v2149
        %v2182 = vunpack.c.l.b16 %v2150
        %v2183 = vunpack.c.l.b16 %v2151
        %v2184 = vunpack.c.l.b16 %v2152
        %v2185 = vunpack.c.l.b16 %v2153
        %v2186 = vunpack.c.l.b16 %v2154
        %v2187 = vunpack.c.l.b16 %v2155
        %v2188 = vunpack.c.l.b16 %v2156
        %v2189 = vunpack.c.l.b16 %v2157
        %v2190 = vunpack.c.l.b16 %v2158
        %v2191 = vunpack.c.l.b16 %v2159
        %v2192 = vunpack.c.l.b16 %v2160
        %v2193 = vunpack.c.l.b16 %v2161
        %v2194 = vpack.c.b16 %v2179, %v2178
        %v2195 = vpack.c.b16 %v2181, %v2180
        %v2196 = vpack.c.b16 %v2183, %v2182
        %v2197 = vpack.c.b16 %v2185, %v2184
        %v2198 = vpack.c.b16 %v2187, %v2186
        %v2199 = vpack.c.b16 %v2189, %v2188
        %v2200 = vpack.c.b16 %v2191, %v2190
        %v2201 = vpack.c.b16 %v2193, %v2192
        %2210 = vmatprep.subr.bf16.mxu0 0
        %2211 = vmatpush1.bf16.msra.mxu0 %v2201
        %2212 = vmatprep.subr.bf16.mxu0 0
        %2213 = vmatpush1.bf16.msra.mxu0 %v2200
        %2214 = vmatprep.subr.bf16.mxu0 0
        %2215 = vmatpush1.bf16.msra.mxu0 %v2199
        %2216 = vmatprep.subr.bf16.mxu0 0
        %2217 = vmatpush1.bf16.msra.mxu0 %v2198
        %2218 = vmatprep.subr.bf16.mxu0 0
        %2219 = vmatpush1.bf16.msra.mxu0 %v2197
        %2220 = vmatprep.subr.bf16.mxu0 0
        %2221 = vmatpush1.bf16.msra.mxu0 %v2196
        %2222 = vmatprep.subr.bf16.mxu0 0
        %2223 = vmatpush1.bf16.msra.mxu0 %v2195
        %2224 = vmatprep.subr.bf16.mxu0 0
        %2225 = vmatpush1.bf16.msra.mxu0 %v2194
        %2226 = vmatprep.subr.bf16.mxu0 0
        %2227 = vmatpush2.bf16.msra.mxu0 0
        %2228 = vmatprep.subr.bf16.mxu0 0
        %2229 = vmatpush2.bf16.msra.mxu0 0
        %2230 = vmatprep.subr.bf16.mxu0 0
        %2231 = vmatpush2.bf16.msra.mxu0 0
        %2232 = vmatprep.subr.bf16.mxu0 0
        %2233 = vmatpush2.bf16.msra.mxu0 0
        %2234 = vmatprep.subr.bf16.mxu0 0
        %2235 = vmatpush2.bf16.msra.mxu0 0
        %2236 = vmatprep.subr.bf16.mxu0 0
        %2237 = vmatpush2.bf16.msra.mxu0 0
        %2238 = vmatprep.subr.bf16.mxu0 0
        %2239 = vmatpush2.bf16.msra.mxu0 0
        %2240 = vmatprep.subr.bf16.mxu0 0
        %2241 = vmatpush2.bf16.msra.mxu0 0
        %2242 = vmatprep.mubr.bf16.mxu0 0
        %2243 = vmatmul.mubr.bf16.gmra.mxu0 %v1212
        %v2244 = vpop.f32.mrf.mxu0
        %v2245 = vadd.f32 0.0, %v2244
        %v2246 = vpop.f32.mrf.mxu0
        %v2247 = vpop.f32.mrf.mxu0
        %v2248 = vadd.f32 0.0, %v2247
        %v2249 = vpop.f32.mrf.mxu0
        %2250 = vmatprep.mubr.bf16.mxu0 0
        %2251 = vmatmul.mubr.bf16.gmra.mxu0 %v1213
        %v2252 = vpop.f32.mrf.mxu0
        %v2253 = vadd.f32 0.0, %v2252
        %v2254 = vpop.f32.mrf.mxu0
        %v2255 = vpop.f32.mrf.mxu0
        %v2256 = vadd.f32 0.0, %v2255
        %v2257 = vpop.f32.mrf.mxu0
        %2258 = vmatprep.mubr.bf16.mxu0 0
        %2259 = vmatmul.mubr.bf16.gmra.mxu0 %v1214
        %v2260 = vpop.f32.mrf.mxu0
        %v2261 = vadd.f32 0.0, %v2260
        %v2262 = vpop.f32.mrf.mxu0
        %v2263 = vpop.f32.mrf.mxu0
        %v2264 = vadd.f32 0.0, %v2263
        %v2265 = vpop.f32.mrf.mxu0
        %2266 = vmatprep.mubr.bf16.mxu0 0
        %2267 = vmatmul.mubr.bf16.gmra.mxu0 %v1215
        %v2268 = vpop.f32.mrf.mxu0
        %v2269 = vadd.f32 0.0, %v2268
        %v2270 = vpop.f32.mrf.mxu0
        %v2271 = vpop.f32.mrf.mxu0
        %v2272 = vadd.f32 0.0, %v2271
        %v2273 = vpop.f32.mrf.mxu0
        %2274 = vmatprep.mubr.bf16.mxu0 0
        %2275 = vmatmul.mubr.bf16.gmra.mxu0 %v1216
        %v2276 = vpop.f32.mrf.mxu0
        %v2277 = vadd.f32 0.0, %v2276
        %v2278 = vpop.f32.mrf.mxu0
        %v2279 = vpop.f32.mrf.mxu0
        %v2280 = vadd.f32 0.0, %v2279
        %v2281 = vpop.f32.mrf.mxu0
        %2282 = vmatprep.mubr.bf16.mxu0 0
        %2283 = vmatmul.mubr.bf16.gmra.mxu0 %v1217
        %v2284 = vpop.f32.mrf.mxu0
        %v2285 = vadd.f32 0.0, %v2284
        %v2286 = vpop.f32.mrf.mxu0
        %v2287 = vpop.f32.mrf.mxu0
        %v2288 = vadd.f32 0.0, %v2287
        %v2289 = vpop.f32.mrf.mxu0
        %2290 = vmatprep.mubr.bf16.mxu0 0
        %2291 = vmatmul.mubr.bf16.gmra.mxu0 %v1218
        %v2292 = vpop.f32.mrf.mxu0
        %v2293 = vadd.f32 0.0, %v2292
        %v2294 = vpop.f32.mrf.mxu0
        %v2295 = vpop.f32.mrf.mxu0
        %v2296 = vadd.f32 0.0, %v2295
        %v2297 = vpop.f32.mrf.mxu0
        %2298 = vmatprep.mubr.bf16.mxu0 0
        %2299 = vmatmul.mubr.bf16.gmra.mxu0 %v1219
        %v2300 = vpop.f32.mrf.mxu0
        %v2301 = vadd.f32 0.0, %v2300
        %v2302 = vpop.f32.mrf.mxu0
        %v2303 = vpop.f32.mrf.mxu0
        %v2304 = vadd.f32 0.0, %v2303
        %v2305 = vpop.f32.mrf.mxu0
        %2306 = vmatprep.mubr.bf16.mxu0 0
        %2307 = vmatmul.mubr.bf16.gmra.mxu0 %v1220
        %v2308 = vpop.f32.mrf.mxu0
        %v2309 = vadd.f32 0.0, %v2308
        %v2310 = vpop.f32.mrf.mxu0
        %v2311 = vpop.f32.mrf.mxu0
        %v2312 = vadd.f32 0.0, %v2311
        %v2313 = vpop.f32.mrf.mxu0
        %2314 = vmatprep.mubr.bf16.mxu0 0
        %2315 = vmatmul.mubr.bf16.gmra.mxu0 %v1221
        %v2316 = vpop.f32.mrf.mxu0
        %v2317 = vadd.f32 0.0, %v2316
        %v2318 = vpop.f32.mrf.mxu0
        %v2319 = vpop.f32.mrf.mxu0
        %v2320 = vadd.f32 0.0, %v2319
        %v2321 = vpop.f32.mrf.mxu0
        %2322 = vmatprep.mubr.bf16.mxu0 0
        %2323 = vmatmul.mubr.bf16.gmra.mxu0 %v1222
        %v2324 = vpop.f32.mrf.mxu0
        %v2325 = vadd.f32 0.0, %v2324
        %v2326 = vpop.f32.mrf.mxu0
        %v2327 = vpop.f32.mrf.mxu0
        %v2328 = vadd.f32 0.0, %v2327
        %v2329 = vpop.f32.mrf.mxu0
        %2330 = vmatprep.mubr.bf16.mxu0 0
        %2331 = vmatmul.mubr.bf16.gmra.mxu0 %v1223
        %v2332 = vpop.f32.mrf.mxu0
        %v2333 = vadd.f32 0.0, %v2332
        %v2334 = vpop.f32.mrf.mxu0
        %v2335 = vpop.f32.mrf.mxu0
        %v2336 = vadd.f32 0.0, %v2335
        %v2337 = vpop.f32.mrf.mxu0
        %2338 = vmatprep.mubr.bf16.mxu0 0
        %2339 = vmatmul.mubr.bf16.gmra.mxu0 %v1224
        %v2340 = vpop.f32.mrf.mxu0
        %v2341 = vadd.f32 0.0, %v2340
        %v2342 = vpop.f32.mrf.mxu0
        %v2343 = vpop.f32.mrf.mxu0
        %v2344 = vadd.f32 0.0, %v2343
        %v2345 = vpop.f32.mrf.mxu0
        %2346 = vmatprep.mubr.bf16.mxu0 0
        %2347 = vmatmul.mubr.bf16.gmra.mxu0 %v1225
        %v2348 = vpop.f32.mrf.mxu0
        %v2349 = vadd.f32 0.0, %v2348
        %v2350 = vpop.f32.mrf.mxu0
        %v2351 = vpop.f32.mrf.mxu0
        %v2352 = vadd.f32 0.0, %v2351
        %v2353 = vpop.f32.mrf.mxu0
        %2354 = vmatprep.mubr.bf16.mxu0 0
        %2355 = vmatmul.mubr.bf16.gmra.mxu0 %v1226
        %v2356 = vpop.f32.mrf.mxu0
        %v2357 = vadd.f32 0.0, %v2356
        %v2358 = vpop.f32.mrf.mxu0
        %v2359 = vpop.f32.mrf.mxu0
        %v2360 = vadd.f32 0.0, %v2359
        %v2361 = vpop.f32.mrf.mxu0
        %2362 = vmatprep.mubr.bf16.mxu0 0
        %2363 = vmatmul.mubr.bf16.gmra.mxu0 %v1227
        %v2364 = vpop.f32.mrf.mxu0
        %v2365 = vadd.f32 0.0, %v2364
        %v2366 = vpop.f32.mrf.mxu0
        %v2367 = vpop.f32.mrf.mxu0
        %v2368 = vadd.f32 0.0, %v2367
        %v2369 = vpop.f32.mrf.mxu0
        %2370 = vdwg.mxu0
        %v2371 = vadd.f32 %v2113, %v2245
        %v2372 = vadd.f32 %v2114, %v2248
        %v2373 = vadd.f32 %v2115, %v2253
        %v2374 = vadd.f32 %v2116, %v2256
        %v2375 = vadd.f32 %v2117, %v2261
        %v2376 = vadd.f32 %v2118, %v2264
        %v2377 = vadd.f32 %v2119, %v2269
        %v2378 = vadd.f32 %v2120, %v2272
        %v2379 = vadd.f32 %v2121, %v2277
        %v2380 = vadd.f32 %v2122, %v2280
        %v2381 = vadd.f32 %v2123, %v2285
        %v2382 = vadd.f32 %v2124, %v2288
        %v2383 = vadd.f32 %v2125, %v2293
        %v2384 = vadd.f32 %v2126, %v2296
        %v2385 = vadd.f32 %v2127, %v2301
        %v2386 = vadd.f32 %v2128, %v2304
        %v2387 = vadd.f32 %v2129, %v2309
        %v2388 = vadd.f32 %v2130, %v2312
        %v2389 = vadd.f32 %v2131, %v2317
        %v2390 = vadd.f32 %v2132, %v2320
        %v2391 = vadd.f32 %v2133, %v2325
        %v2392 = vadd.f32 %v2134, %v2328
        %v2393 = vadd.f32 %v2135, %v2333
        %v2394 = vadd.f32 %v2136, %v2336
        %v2395 = vadd.f32 %v2137, %v2341
        %v2396 = vadd.f32 %v2138, %v2344
        %v2397 = vadd.f32 %v2139, %v2349
        %v2398 = vadd.f32 %v2140, %v2352
        %v2399 = vadd.f32 %v2141, %v2357
        %v2400 = vadd.f32 %v2142, %v2360
        %v2401 = vadd.f32 %v2143, %v2365
        %v2402 = vadd.f32 %v2144, %v2368
        %s2403 = scalar_lea.vmem [#allocation5], 256
        %v2404 = vld [vmem:[%s2403] sm:$0xf]
        %v2405 = vld [vmem:[%s2403 + $0x4] sm:$0xf]
        %v2406 = vld [vmem:[%s2403 + $0x8] sm:$0xf]
        %v2407 = vld [vmem:[%s2403 + $0xc] sm:$0xf]
        %v2408 = vld [vmem:[%s2403 + $0x10] sm:$0xf]
        %v2409 = vld [vmem:[%s2403 + $0x14] sm:$0xf]
        %v2410 = vld [vmem:[%s2403 + $0x18] sm:$0xf]
        %v2411 = vld [vmem:[%s2403 + $0x1c] sm:$0xf]
        %v2412 = vld [vmem:[%s2403 + $0x20] sm:$0xf]
        %v2413 = vld [vmem:[%s2403 + $0x24] sm:$0xf]
        %v2414 = vld [vmem:[%s2403 + $0x28] sm:$0xf]
        %v2415 = vld [vmem:[%s2403 + $0x2c] sm:$0xf]
        %v2416 = vld [vmem:[%s2403 + $0x30] sm:$0xf]
        %v2417 = vld [vmem:[%s2403 + $0x34] sm:$0xf]
        %v2418 = vld [vmem:[%s2403 + $0x38] sm:$0xf]
        %v2419 = vld [vmem:[%s2403 + $0x3c] sm:$0xf]
        %v2436 = vunpack.c.l.b16 %v2404
        %v2437 = vunpack.c.l.b16 %v2405
        %v2438 = vunpack.c.l.b16 %v2406
        %v2439 = vunpack.c.l.b16 %v2407
        %v2440 = vunpack.c.l.b16 %v2408
        %v2441 = vunpack.c.l.b16 %v2409
        %v2442 = vunpack.c.l.b16 %v2410
        %v2443 = vunpack.c.l.b16 %v2411
        %v2444 = vunpack.c.l.b16 %v2412
        %v2445 = vunpack.c.l.b16 %v2413
        %v2446 = vunpack.c.l.b16 %v2414
        %v2447 = vunpack.c.l.b16 %v2415
        %v2448 = vunpack.c.l.b16 %v2416
        %v2449 = vunpack.c.l.b16 %v2417
        %v2450 = vunpack.c.l.b16 %v2418
        %v2451 = vunpack.c.l.b16 %v2419
        %v2452 = vpack.c.b16 %v2437, %v2436
        %v2453 = vpack.c.b16 %v2439, %v2438
        %v2454 = vpack.c.b16 %v2441, %v2440
        %v2455 = vpack.c.b16 %v2443, %v2442
        %v2456 = vpack.c.b16 %v2445, %v2444
        %v2457 = vpack.c.b16 %v2447, %v2446
        %v2458 = vpack.c.b16 %v2449, %v2448
        %v2459 = vpack.c.b16 %v2451, %v2450
        %2468 = vmatprep.subr.bf16.mxu0 0
        %2469 = vmatpush1.bf16.msra.mxu0 %v2459
        %2470 = vmatprep.subr.bf16.mxu0 0
        %2471 = vmatpush1.bf16.msra.mxu0 %v2458
        %2472 = vmatprep.subr.bf16.mxu0 0
        %2473 = vmatpush1.bf16.msra.mxu0 %v2457
        %2474 = vmatprep.subr.bf16.mxu0 0
        %2475 = vmatpush1.bf16.msra.mxu0 %v2456
        %2476 = vmatprep.subr.bf16.mxu0 0
        %2477 = vmatpush1.bf16.msra.mxu0 %v2455
        %2478 = vmatprep.subr.bf16.mxu0 0
        %2479 = vmatpush1.bf16.msra.mxu0 %v2454
        %2480 = vmatprep.subr.bf16.mxu0 0
        %2481 = vmatpush1.bf16.msra.mxu0 %v2453
        %2482 = vmatprep.subr.bf16.mxu0 0
        %2483 = vmatpush1.bf16.msra.mxu0 %v2452
        %2484 = vmatprep.subr.bf16.mxu0 0
        %2485 = vmatpush2.bf16.msra.mxu0 0
        %2486 = vmatprep.subr.bf16.mxu0 0
        %2487 = vmatpush2.bf16.msra.mxu0 0
        %2488 = vmatprep.subr.bf16.mxu0 0
        %2489 = vmatpush2.bf16.msra.mxu0 0
        %2490 = vmatprep.subr.bf16.mxu0 0
        %2491 = vmatpush2.bf16.msra.mxu0 0
        %2492 = vmatprep.subr.bf16.mxu0 0
        %2493 = vmatpush2.bf16.msra.mxu0 0
        %2494 = vmatprep.subr.bf16.mxu0 0
        %2495 = vmatpush2.bf16.msra.mxu0 0
        %2496 = vmatprep.subr.bf16.mxu0 0
        %2497 = vmatpush2.bf16.msra.mxu0 0
        %2498 = vmatprep.subr.bf16.mxu0 0
        %2499 = vmatpush2.bf16.msra.mxu0 0
        %2500 = vmatprep.mubr.bf16.mxu0 0
        %2501 = vmatmul.mubr.bf16.gmra.mxu0 %v788
        %v2502 = vpop.f32.mrf.mxu0
        %v2503 = vadd.f32 0.0, %v2502
        %v2504 = vpop.f32.mrf.mxu0
        %v2505 = vpop.f32.mrf.mxu0
        %v2506 = vadd.f32 0.0, %v2505
        %v2507 = vpop.f32.mrf.mxu0
        %2508 = vmatprep.mubr.bf16.mxu0 0
        %2509 = vmatmul.mubr.bf16.gmra.mxu0 %v789
        %v2510 = vpop.f32.mrf.mxu0
        %v2511 = vadd.f32 0.0, %v2510
        %v2512 = vpop.f32.mrf.mxu0
        %v2513 = vpop.f32.mrf.mxu0
        %v2514 = vadd.f32 0.0, %v2513
        %v2515 = vpop.f32.mrf.mxu0
        %2516 = vmatprep.mubr.bf16.mxu0 0
        %2517 = vmatmul.mubr.bf16.gmra.mxu0 %v790
        %v2518 = vpop.f32.mrf.mxu0
        %v2519 = vadd.f32 0.0, %v2518
        %v2520 = vpop.f32.mrf.mxu0
        %v2521 = vpop.f32.mrf.mxu0
        %v2522 = vadd.f32 0.0, %v2521
        %v2523 = vpop.f32.mrf.mxu0
        %2524 = vmatprep.mubr.bf16.mxu0 0
        %2525 = vmatmul.mubr.bf16.gmra.mxu0 %v791
        %v2526 = vpop.f32.mrf.mxu0
        %v2527 = vadd.f32 0.0, %v2526
        %v2528 = vpop.f32.mrf.mxu0
        %v2529 = vpop.f32.mrf.mxu0
        %v2530 = vadd.f32 0.0, %v2529
        %v2531 = vpop.f32.mrf.mxu0
        %2532 = vmatprep.mubr.bf16.mxu0 0
        %2533 = vmatmul.mubr.bf16.gmra.mxu0 %v792
        %v2534 = vpop.f32.mrf.mxu0
        %v2535 = vadd.f32 0.0, %v2534
        %v2536 = vpop.f32.mrf.mxu0
        %v2537 = vpop.f32.mrf.mxu0
        %v2538 = vadd.f32 0.0, %v2537
        %v2539 = vpop.f32.mrf.mxu0
        %2540 = vmatprep.mubr.bf16.mxu0 0
        %2541 = vmatmul.mubr.bf16.gmra.mxu0 %v793
        %v2542 = vpop.f32.mrf.mxu0
        %v2543 = vadd.f32 0.0, %v2542
        %v2544 = vpop.f32.mrf.mxu0
        %v2545 = vpop.f32.mrf.mxu0
        %v2546 = vadd.f32 0.0, %v2545
        %v2547 = vpop.f32.mrf.mxu0
        %2548 = vmatprep.mubr.bf16.mxu0 0
        %2549 = vmatmul.mubr.bf16.gmra.mxu0 %v794
        %v2550 = vpop.f32.mrf.mxu0
        %v2551 = vadd.f32 0.0, %v2550
        %v2552 = vpop.f32.mrf.mxu0
        %v2553 = vpop.f32.mrf.mxu0
        %v2554 = vadd.f32 0.0, %v2553
        %v2555 = vpop.f32.mrf.mxu0
        %2556 = vmatprep.mubr.bf16.mxu0 0
        %2557 = vmatmul.mubr.bf16.gmra.mxu0 %v795
        %v2558 = vpop.f32.mrf.mxu0
        %v2559 = vadd.f32 0.0, %v2558
        %v2560 = vpop.f32.mrf.mxu0
        %v2561 = vpop.f32.mrf.mxu0
        %v2562 = vadd.f32 0.0, %v2561
        %v2563 = vpop.f32.mrf.mxu0
        %2564 = vmatprep.mubr.bf16.mxu0 0
        %2565 = vmatmul.mubr.bf16.gmra.mxu0 %v796
        %v2566 = vpop.f32.mrf.mxu0
        %v2567 = vadd.f32 0.0, %v2566
        %v2568 = vpop.f32.mrf.mxu0
        %v2569 = vpop.f32.mrf.mxu0
        %v2570 = vadd.f32 0.0, %v2569
        %v2571 = vpop.f32.mrf.mxu0
        %2572 = vmatprep.mubr.bf16.mxu0 0
        %2573 = vmatmul.mubr.bf16.gmra.mxu0 %v797
        %v2574 = vpop.f32.mrf.mxu0
        %v2575 = vadd.f32 0.0, %v2574
        %v2576 = vpop.f32.mrf.mxu0
        %v2577 = vpop.f32.mrf.mxu0
        %v2578 = vadd.f32 0.0, %v2577
        %v2579 = vpop.f32.mrf.mxu0
        %2580 = vmatprep.mubr.bf16.mxu0 0
        %2581 = vmatmul.mubr.bf16.gmra.mxu0 %v798
        %v2582 = vpop.f32.mrf.mxu0
        %v2583 = vadd.f32 0.0, %v2582
        %v2584 = vpop.f32.mrf.mxu0
        %v2585 = vpop.f32.mrf.mxu0
        %v2586 = vadd.f32 0.0, %v2585
        %v2587 = vpop.f32.mrf.mxu0
        %2588 = vmatprep.mubr.bf16.mxu0 0
        %2589 = vmatmul.mubr.bf16.gmra.mxu0 %v799
        %v2590 = vpop.f32.mrf.mxu0
        %v2591 = vadd.f32 0.0, %v2590
        %v2592 = vpop.f32.mrf.mxu0
        %v2593 = vpop.f32.mrf.mxu0
        %v2594 = vadd.f32 0.0, %v2593
        %v2595 = vpop.f32.mrf.mxu0
        %2596 = vmatprep.mubr.bf16.mxu0 0
        %2597 = vmatmul.mubr.bf16.gmra.mxu0 %v800
        %v2598 = vpop.f32.mrf.mxu0
        %v2599 = vadd.f32 0.0, %v2598
        %v2600 = vpop.f32.mrf.mxu0
        %v2601 = vpop.f32.mrf.mxu0
        %v2602 = vadd.f32 0.0, %v2601
        %v2603 = vpop.f32.mrf.mxu0
        %2604 = vmatprep.mubr.bf16.mxu0 0
        %2605 = vmatmul.mubr.bf16.gmra.mxu0 %v801
        %v2606 = vpop.f32.mrf.mxu0
        %v2607 = vadd.f32 0.0, %v2606
        %v2608 = vpop.f32.mrf.mxu0
        %v2609 = vpop.f32.mrf.mxu0
        %v2610 = vadd.f32 0.0, %v2609
        %v2611 = vpop.f32.mrf.mxu0
        %2612 = vmatprep.mubr.bf16.mxu0 0
        %2613 = vmatmul.mubr.bf16.gmra.mxu0 %v802
        %v2614 = vpop.f32.mrf.mxu0
        %v2615 = vadd.f32 0.0, %v2614
        %v2616 = vpop.f32.mrf.mxu0
        %v2617 = vpop.f32.mrf.mxu0
        %v2618 = vadd.f32 0.0, %v2617
        %v2619 = vpop.f32.mrf.mxu0
        %2620 = vmatprep.mubr.bf16.mxu0 0
        %2621 = vmatmul.mubr.bf16.gmra.mxu0 %v803
        %v2622 = vpop.f32.mrf.mxu0
        %v2623 = vadd.f32 0.0, %v2622
        %v2624 = vpop.f32.mrf.mxu0
        %v2625 = vpop.f32.mrf.mxu0
        %v2626 = vadd.f32 0.0, %v2625
        %v2627 = vpop.f32.mrf.mxu0
        %2628 = vdwg.mxu0
        %v2629 = vadd.f32 %v2371, %v2503
        %v2630 = vadd.f32 %v2372, %v2506
        %v2631 = vadd.f32 %v2373, %v2511
        %v2632 = vadd.f32 %v2374, %v2514
        %v2633 = vadd.f32 %v2375, %v2519
        %v2634 = vadd.f32 %v2376, %v2522
        %v2635 = vadd.f32 %v2377, %v2527
        %v2636 = vadd.f32 %v2378, %v2530
        %v2637 = vadd.f32 %v2379, %v2535
        %v2638 = vadd.f32 %v2380, %v2538
        %v2639 = vadd.f32 %v2381, %v2543
        %v2640 = vadd.f32 %v2382, %v2546
        %v2641 = vadd.f32 %v2383, %v2551
        %v2642 = vadd.f32 %v2384, %v2554
        %v2643 = vadd.f32 %v2385, %v2559
        %v2644 = vadd.f32 %v2386, %v2562
        %v2645 = vadd.f32 %v2387, %v2567
        %v2646 = vadd.f32 %v2388, %v2570
        %v2647 = vadd.f32 %v2389, %v2575
        %v2648 = vadd.f32 %v2390, %v2578
        %v2649 = vadd.f32 %v2391, %v2583
        %v2650 = vadd.f32 %v2392, %v2586
        %v2651 = vadd.f32 %v2393, %v2591
        %v2652 = vadd.f32 %v2394, %v2594
        %v2653 = vadd.f32 %v2395, %v2599
        %v2654 = vadd.f32 %v2396, %v2602
        %v2655 = vadd.f32 %v2397, %v2607
        %v2656 = vadd.f32 %v2398, %v2610
        %v2657 = vadd.f32 %v2399, %v2615
        %v2658 = vadd.f32 %v2400, %v2618
        %v2659 = vadd.f32 %v2401, %v2623
        %v2660 = vadd.f32 %v2402, %v2626
        %s2661 = scalar_lea.vmem [#allocation5], 320
        %v2662 = vld [vmem:[%s2661] sm:$0xf]
        %v2663 = vld [vmem:[%s2661 + $0x4] sm:$0xf]
        %v2664 = vld [vmem:[%s2661 + $0x8] sm:$0xf]
        %v2665 = vld [vmem:[%s2661 + $0xc] sm:$0xf]
        %v2666 = vld [vmem:[%s2661 + $0x10] sm:$0xf]
        %v2667 = vld [vmem:[%s2661 + $0x14] sm:$0xf]
        %v2668 = vld [vmem:[%s2661 + $0x18] sm:$0xf]
        %v2669 = vld [vmem:[%s2661 + $0x1c] sm:$0xf]
        %v2670 = vld [vmem:[%s2661 + $0x20] sm:$0xf]
        %v2671 = vld [vmem:[%s2661 + $0x24] sm:$0xf]
        %v2672 = vld [vmem:[%s2661 + $0x28] sm:$0xf]
        %v2673 = vld [vmem:[%s2661 + $0x2c] sm:$0xf]
        %v2674 = vld [vmem:[%s2661 + $0x30] sm:$0xf]
        %v2675 = vld [vmem:[%s2661 + $0x34] sm:$0xf]
        %v2676 = vld [vmem:[%s2661 + $0x38] sm:$0xf]
        %v2677 = vld [vmem:[%s2661 + $0x3c] sm:$0xf]
        %v2694 = vunpack.c.l.b16 %v2662
        %v2695 = vunpack.c.l.b16 %v2663
        %v2696 = vunpack.c.l.b16 %v2664
        %v2697 = vunpack.c.l.b16 %v2665
        %v2698 = vunpack.c.l.b16 %v2666
        %v2699 = vunpack.c.l.b16 %v2667
        %v2700 = vunpack.c.l.b16 %v2668
        %v2701 = vunpack.c.l.b16 %v2669
        %v2702 = vunpack.c.l.b16 %v2670
        %v2703 = vunpack.c.l.b16 %v2671
        %v2704 = vunpack.c.l.b16 %v2672
        %v2705 = vunpack.c.l.b16 %v2673
        %v2706 = vunpack.c.l.b16 %v2674
        %v2707 = vunpack.c.l.b16 %v2675
        %v2708 = vunpack.c.l.b16 %v2676
        %v2709 = vunpack.c.l.b16 %v2677
        %v2710 = vpack.c.b16 %v2695, %v2694
        %v2711 = vpack.c.b16 %v2697, %v2696
        %v2712 = vpack.c.b16 %v2699, %v2698
        %v2713 = vpack.c.b16 %v2701, %v2700
        %v2714 = vpack.c.b16 %v2703, %v2702
        %v2715 = vpack.c.b16 %v2705, %v2704
        %v2716 = vpack.c.b16 %v2707, %v2706
        %v2717 = vpack.c.b16 %v2709, %v2708
        %2726 = vmatprep.subr.bf16.mxu0 0
        %2727 = vmatpush1.bf16.msra.mxu0 %v2717
        %2728 = vmatprep.subr.bf16.mxu0 0
        %2729 = vmatpush1.bf16.msra.mxu0 %v2716
        %2730 = vmatprep.subr.bf16.mxu0 0
        %2731 = vmatpush1.bf16.msra.mxu0 %v2715
        %2732 = vmatprep.subr.bf16.mxu0 0
        %2733 = vmatpush1.bf16.msra.mxu0 %v2714
        %2734 = vmatprep.subr.bf16.mxu0 0
        %2735 = vmatpush1.bf16.msra.mxu0 %v2713
        %2736 = vmatprep.subr.bf16.mxu0 0
        %2737 = vmatpush1.bf16.msra.mxu0 %v2712
        %2738 = vmatprep.subr.bf16.mxu0 0
        %2739 = vmatpush1.bf16.msra.mxu0 %v2711
        %2740 = vmatprep.subr.bf16.mxu0 0
        %2741 = vmatpush1.bf16.msra.mxu0 %v2710
        %2742 = vmatprep.subr.bf16.mxu0 0
        %2743 = vmatpush2.bf16.msra.mxu0 0
        %2744 = vmatprep.subr.bf16.mxu0 0
        %2745 = vmatpush2.bf16.msra.mxu0 0
        %2746 = vmatprep.subr.bf16.mxu0 0
        %2747 = vmatpush2.bf16.msra.mxu0 0
        %2748 = vmatprep.subr.bf16.mxu0 0
        %2749 = vmatpush2.bf16.msra.mxu0 0
        %2750 = vmatprep.subr.bf16.mxu0 0
        %2751 = vmatpush2.bf16.msra.mxu0 0
        %2752 = vmatprep.subr.bf16.mxu0 0
        %2753 = vmatpush2.bf16.msra.mxu0 0
        %2754 = vmatprep.subr.bf16.mxu0 0
        %2755 = vmatpush2.bf16.msra.mxu0 0
        %2756 = vmatprep.subr.bf16.mxu0 0
        %2757 = vmatpush2.bf16.msra.mxu0 0
        %2758 = vmatprep.mubr.bf16.mxu0 0
        %2759 = vmatmul.mubr.bf16.gmra.mxu0 %v1420
        %v2760 = vpop.f32.mrf.mxu0
        %v2761 = vadd.f32 0.0, %v2760
        %v2762 = vpop.f32.mrf.mxu0
        %v2763 = vpop.f32.mrf.mxu0
        %v2764 = vadd.f32 0.0, %v2763
        %v2765 = vpop.f32.mrf.mxu0
        %2766 = vmatprep.mubr.bf16.mxu0 0
        %2767 = vmatmul.mubr.bf16.gmra.mxu0 %v1421
        %v2768 = vpop.f32.mrf.mxu0
        %v2769 = vadd.f32 0.0, %v2768
        %v2770 = vpop.f32.mrf.mxu0
        %v2771 = vpop.f32.mrf.mxu0
        %v2772 = vadd.f32 0.0, %v2771
        %v2773 = vpop.f32.mrf.mxu0
        %2774 = vmatprep.mubr.bf16.mxu0 0
        %2775 = vmatmul.mubr.bf16.gmra.mxu0 %v1422
        %v2776 = vpop.f32.mrf.mxu0
        %v2777 = vadd.f32 0.0, %v2776
        %v2778 = vpop.f32.mrf.mxu0
        %v2779 = vpop.f32.mrf.mxu0
        %v2780 = vadd.f32 0.0, %v2779
        %v2781 = vpop.f32.mrf.mxu0
        %2782 = vmatprep.mubr.bf16.mxu0 0
        %2783 = vmatmul.mubr.bf16.gmra.mxu0 %v1423
        %v2784 = vpop.f32.mrf.mxu0
        %v2785 = vadd.f32 0.0, %v2784
        %v2786 = vpop.f32.mrf.mxu0
        %v2787 = vpop.f32.mrf.mxu0
        %v2788 = vadd.f32 0.0, %v2787
        %v2789 = vpop.f32.mrf.mxu0
        %2790 = vmatprep.mubr.bf16.mxu0 0
        %2791 = vmatmul.mubr.bf16.gmra.mxu0 %v1424
        %v2792 = vpop.f32.mrf.mxu0
        %v2793 = vadd.f32 0.0, %v2792
        %v2794 = vpop.f32.mrf.mxu0
        %v2795 = vpop.f32.mrf.mxu0
        %v2796 = vadd.f32 0.0, %v2795
        %v2797 = vpop.f32.mrf.mxu0
        %2798 = vmatprep.mubr.bf16.mxu0 0
        %2799 = vmatmul.mubr.bf16.gmra.mxu0 %v1425
        %v2800 = vpop.f32.mrf.mxu0
        %v2801 = vadd.f32 0.0, %v2800
        %v2802 = vpop.f32.mrf.mxu0
        %v2803 = vpop.f32.mrf.mxu0
        %v2804 = vadd.f32 0.0, %v2803
        %v2805 = vpop.f32.mrf.mxu0
        %2806 = vmatprep.mubr.bf16.mxu0 0
        %2807 = vmatmul.mubr.bf16.gmra.mxu0 %v1426
        %v2808 = vpop.f32.mrf.mxu0
        %v2809 = vadd.f32 0.0, %v2808
        %v2810 = vpop.f32.mrf.mxu0
        %v2811 = vpop.f32.mrf.mxu0
        %v2812 = vadd.f32 0.0, %v2811
        %v2813 = vpop.f32.mrf.mxu0
        %2814 = vmatprep.mubr.bf16.mxu0 0
        %2815 = vmatmul.mubr.bf16.gmra.mxu0 %v1427
        %v2816 = vpop.f32.mrf.mxu0
        %v2817 = vadd.f32 0.0, %v2816
        %v2818 = vpop.f32.mrf.mxu0
        %v2819 = vpop.f32.mrf.mxu0
        %v2820 = vadd.f32 0.0, %v2819
        %v2821 = vpop.f32.mrf.mxu0
        %2822 = vmatprep.mubr.bf16.mxu0 0
        %2823 = vmatmul.mubr.bf16.gmra.mxu0 %v1428
        %v2824 = vpop.f32.mrf.mxu0
        %v2825 = vadd.f32 0.0, %v2824
        %v2826 = vpop.f32.mrf.mxu0
        %v2827 = vpop.f32.mrf.mxu0
        %v2828 = vadd.f32 0.0, %v2827
        %v2829 = vpop.f32.mrf.mxu0
        %2830 = vmatprep.mubr.bf16.mxu0 0
        %2831 = vmatmul.mubr.bf16.gmra.mxu0 %v1429
        %v2832 = vpop.f32.mrf.mxu0
        %v2833 = vadd.f32 0.0, %v2832
        %v2834 = vpop.f32.mrf.mxu0
        %v2835 = vpop.f32.mrf.mxu0
        %v2836 = vadd.f32 0.0, %v2835
        %v2837 = vpop.f32.mrf.mxu0
        %2838 = vmatprep.mubr.bf16.mxu0 0
        %2839 = vmatmul.mubr.bf16.gmra.mxu0 %v1430
        %v2840 = vpop.f32.mrf.mxu0
        %v2841 = vadd.f32 0.0, %v2840
        %v2842 = vpop.f32.mrf.mxu0
        %v2843 = vpop.f32.mrf.mxu0
        %v2844 = vadd.f32 0.0, %v2843
        %v2845 = vpop.f32.mrf.mxu0
        %2846 = vmatprep.mubr.bf16.mxu0 0
        %2847 = vmatmul.mubr.bf16.gmra.mxu0 %v1431
        %v2848 = vpop.f32.mrf.mxu0
        %v2849 = vadd.f32 0.0, %v2848
        %v2850 = vpop.f32.mrf.mxu0
        %v2851 = vpop.f32.mrf.mxu0
        %v2852 = vadd.f32 0.0, %v2851
        %v2853 = vpop.f32.mrf.mxu0
        %2854 = vmatprep.mubr.bf16.mxu0 0
        %2855 = vmatmul.mubr.bf16.gmra.mxu0 %v1432
        %v2856 = vpop.f32.mrf.mxu0
        %v2857 = vadd.f32 0.0, %v2856
        %v2858 = vpop.f32.mrf.mxu0
        %v2859 = vpop.f32.mrf.mxu0
        %v2860 = vadd.f32 0.0, %v2859
        %v2861 = vpop.f32.mrf.mxu0
        %2862 = vmatprep.mubr.bf16.mxu0 0
        %2863 = vmatmul.mubr.bf16.gmra.mxu0 %v1433
        %v2864 = vpop.f32.mrf.mxu0
        %v2865 = vadd.f32 0.0, %v2864
        %v2866 = vpop.f32.mrf.mxu0
        %v2867 = vpop.f32.mrf.mxu0
        %v2868 = vadd.f32 0.0, %v2867
        %v2869 = vpop.f32.mrf.mxu0
        %2870 = vmatprep.mubr.bf16.mxu0 0
        %2871 = vmatmul.mubr.bf16.gmra.mxu0 %v1434
        %v2872 = vpop.f32.mrf.mxu0
        %v2873 = vadd.f32 0.0, %v2872
        %v2874 = vpop.f32.mrf.mxu0
        %v2875 = vpop.f32.mrf.mxu0
        %v2876 = vadd.f32 0.0, %v2875
        %v2877 = vpop.f32.mrf.mxu0
        %2878 = vmatprep.mubr.bf16.mxu0 0
        %2879 = vmatmul.mubr.bf16.gmra.mxu0 %v1435
        %v2880 = vpop.f32.mrf.mxu0
        %v2881 = vadd.f32 0.0, %v2880
        %v2882 = vpop.f32.mrf.mxu0
        %v2883 = vpop.f32.mrf.mxu0
        %v2884 = vadd.f32 0.0, %v2883
        %v2885 = vpop.f32.mrf.mxu0
        %2886 = vdwg.mxu0
        %v2887 = vadd.f32 %v2629, %v2761
        %v2888 = vadd.f32 %v2630, %v2764
        %v2889 = vadd.f32 %v2631, %v2769
        %v2890 = vadd.f32 %v2632, %v2772
        %v2891 = vadd.f32 %v2633, %v2777
        %v2892 = vadd.f32 %v2634, %v2780
        %v2893 = vadd.f32 %v2635, %v2785
        %v2894 = vadd.f32 %v2636, %v2788
        %v2895 = vadd.f32 %v2637, %v2793
        %v2896 = vadd.f32 %v2638, %v2796
        %v2897 = vadd.f32 %v2639, %v2801
        %v2898 = vadd.f32 %v2640, %v2804
        %v2899 = vadd.f32 %v2641, %v2809
        %v2900 = vadd.f32 %v2642, %v2812
        %v2901 = vadd.f32 %v2643, %v2817
        %v2902 = vadd.f32 %v2644, %v2820
        %v2903 = vadd.f32 %v2645, %v2825
        %v2904 = vadd.f32 %v2646, %v2828
        %v2905 = vadd.f32 %v2647, %v2833
        %v2906 = vadd.f32 %v2648, %v2836
        %v2907 = vadd.f32 %v2649, %v2841
        %v2908 = vadd.f32 %v2650, %v2844
        %v2909 = vadd.f32 %v2651, %v2849
        %v2910 = vadd.f32 %v2652, %v2852
        %v2911 = vadd.f32 %v2653, %v2857
        %v2912 = vadd.f32 %v2654, %v2860
        %v2913 = vadd.f32 %v2655, %v2865
        %v2914 = vadd.f32 %v2656, %v2868
        %v2915 = vadd.f32 %v2657, %v2873
        %v2916 = vadd.f32 %v2658, %v2876
        %v2917 = vadd.f32 %v2659, %v2881
        %v2918 = vadd.f32 %v2660, %v2884
        %s2919 = scalar_lea.vmem [#allocation5], 384
        %v2920 = vld [vmem:[%s2919] sm:$0xf]
        %v2921 = vld [vmem:[%s2919 + $0x4] sm:$0xf]
        %v2922 = vld [vmem:[%s2919 + $0x8] sm:$0xf]
        %v2923 = vld [vmem:[%s2919 + $0xc] sm:$0xf]
        %v2924 = vld [vmem:[%s2919 + $0x10] sm:$0xf]
        %v2925 = vld [vmem:[%s2919 + $0x14] sm:$0xf]
        %v2926 = vld [vmem:[%s2919 + $0x18] sm:$0xf]
        %v2927 = vld [vmem:[%s2919 + $0x1c] sm:$0xf]
        %v2928 = vld [vmem:[%s2919 + $0x20] sm:$0xf]
        %v2929 = vld [vmem:[%s2919 + $0x24] sm:$0xf]
        %v2930 = vld [vmem:[%s2919 + $0x28] sm:$0xf]
        %v2931 = vld [vmem:[%s2919 + $0x2c] sm:$0xf]
        %v2932 = vld [vmem:[%s2919 + $0x30] sm:$0xf]
        %v2933 = vld [vmem:[%s2919 + $0x34] sm:$0xf]
        %v2934 = vld [vmem:[%s2919 + $0x38] sm:$0xf]
        %v2935 = vld [vmem:[%s2919 + $0x3c] sm:$0xf]
        %v2952 = vunpack.c.l.b16 %v2920
        %v2953 = vunpack.c.l.b16 %v2921
        %v2954 = vunpack.c.l.b16 %v2922
        %v2955 = vunpack.c.l.b16 %v2923
        %v2956 = vunpack.c.l.b16 %v2924
        %v2957 = vunpack.c.l.b16 %v2925
        %v2958 = vunpack.c.l.b16 %v2926
        %v2959 = vunpack.c.l.b16 %v2927
        %v2960 = vunpack.c.l.b16 %v2928
        %v2961 = vunpack.c.l.b16 %v2929
        %v2962 = vunpack.c.l.b16 %v2930
        %v2963 = vunpack.c.l.b16 %v2931
        %v2964 = vunpack.c.l.b16 %v2932
        %v2965 = vunpack.c.l.b16 %v2933
        %v2966 = vunpack.c.l.b16 %v2934
        %v2967 = vunpack.c.l.b16 %v2935
        %v2968 = vpack.c.b16 %v2953, %v2952
        %v2969 = vpack.c.b16 %v2955, %v2954
        %v2970 = vpack.c.b16 %v2957, %v2956
        %v2971 = vpack.c.b16 %v2959, %v2958
        %v2972 = vpack.c.b16 %v2961, %v2960
        %v2973 = vpack.c.b16 %v2963, %v2962
        %v2974 = vpack.c.b16 %v2965, %v2964
        %v2975 = vpack.c.b16 %v2967, %v2966
        %2984 = vmatprep.subr.bf16.mxu0 0
        %2985 = vmatpush1.bf16.msra.mxu0 %v2975
        %2986 = vmatprep.subr.bf16.mxu0 0
        %2987 = vmatpush1.bf16.msra.mxu0 %v2974
        %2988 = vmatprep.subr.bf16.mxu0 0
        %2989 = vmatpush1.bf16.msra.mxu0 %v2973
        %2990 = vmatprep.subr.bf16.mxu0 0
        %2991 = vmatpush1.bf16.msra.mxu0 %v2972
        %2992 = vmatprep.subr.bf16.mxu0 0
        %2993 = vmatpush1.bf16.msra.mxu0 %v2971
        %2994 = vmatprep.subr.bf16.mxu0 0
        %2995 = vmatpush1.bf16.msra.mxu0 %v2970
        %2996 = vmatprep.subr.bf16.mxu0 0
        %2997 = vmatpush1.bf16.msra.mxu0 %v2969
        %2998 = vmatprep.subr.bf16.mxu0 0
        %2999 = vmatpush1.bf16.msra.mxu0 %v2968
        %3000 = vmatprep.subr.bf16.mxu0 0
        %3001 = vmatpush2.bf16.msra.mxu0 0
        %3002 = vmatprep.subr.bf16.mxu0 0
        %3003 = vmatpush2.bf16.msra.mxu0 0
        %3004 = vmatprep.subr.bf16.mxu0 0
        %3005 = vmatpush2.bf16.msra.mxu0 0
        %3006 = vmatprep.subr.bf16.mxu0 0
        %3007 = vmatpush2.bf16.msra.mxu0 0
        %3008 = vmatprep.subr.bf16.mxu0 0
        %3009 = vmatpush2.bf16.msra.mxu0 0
        %3010 = vmatprep.subr.bf16.mxu0 0
        %3011 = vmatpush2.bf16.msra.mxu0 0
        %3012 = vmatprep.subr.bf16.mxu0 0
        %3013 = vmatpush2.bf16.msra.mxu0 0
        %3014 = vmatprep.subr.bf16.mxu0 0
        %3015 = vmatpush2.bf16.msra.mxu0 0
        %3016 = vmatprep.mubr.bf16.mxu0 0
        %3017 = vmatmul.mubr.bf16.gmra.mxu0 %v1213
        %v3018 = vpop.f32.mrf.mxu0
        %v3019 = vadd.f32 0.0, %v3018
        %v3020 = vpop.f32.mrf.mxu0
        %v3021 = vpop.f32.mrf.mxu0
        %v3022 = vadd.f32 0.0, %v3021
        %v3023 = vpop.f32.mrf.mxu0
        %3024 = vmatprep.mubr.bf16.mxu0 0
        %3025 = vmatmul.mubr.bf16.gmra.mxu0 %v1214
        %v3026 = vpop.f32.mrf.mxu0
        %v3027 = vadd.f32 0.0, %v3026
        %v3028 = vpop.f32.mrf.mxu0
        %v3029 = vpop.f32.mrf.mxu0
        %v3030 = vadd.f32 0.0, %v3029
        %v3031 = vpop.f32.mrf.mxu0
        %3032 = vmatprep.mubr.bf16.mxu0 0
        %3033 = vmatmul.mubr.bf16.gmra.mxu0 %v1215
        %v3034 = vpop.f32.mrf.mxu0
        %v3035 = vadd.f32 0.0, %v3034
        %v3036 = vpop.f32.mrf.mxu0
        %v3037 = vpop.f32.mrf.mxu0
        %v3038 = vadd.f32 0.0, %v3037
        %v3039 = vpop.f32.mrf.mxu0
        %3040 = vmatprep.mubr.bf16.mxu0 0
        %3041 = vmatmul.mubr.bf16.gmra.mxu0 %v1216
        %v3042 = vpop.f32.mrf.mxu0
        %v3043 = vadd.f32 0.0, %v3042
        %v3044 = vpop.f32.mrf.mxu0
        %v3045 = vpop.f32.mrf.mxu0
        %v3046 = vadd.f32 0.0, %v3045
        %v3047 = vpop.f32.mrf.mxu0
        %3048 = vmatprep.mubr.bf16.mxu0 0
        %3049 = vmatmul.mubr.bf16.gmra.mxu0 %v1217
        %v3050 = vpop.f32.mrf.mxu0
        %v3051 = vadd.f32 0.0, %v3050
        %v3052 = vpop.f32.mrf.mxu0
        %v3053 = vpop.f32.mrf.mxu0
        %v3054 = vadd.f32 0.0, %v3053
        %v3055 = vpop.f32.mrf.mxu0
        %3056 = vmatprep.mubr.bf16.mxu0 0
        %3057 = vmatmul.mubr.bf16.gmra.mxu0 %v1218
        %v3058 = vpop.f32.mrf.mxu0
        %v3059 = vadd.f32 0.0, %v3058
        %v3060 = vpop.f32.mrf.mxu0
        %v3061 = vpop.f32.mrf.mxu0
        %v3062 = vadd.f32 0.0, %v3061
        %v3063 = vpop.f32.mrf.mxu0
        %3064 = vmatprep.mubr.bf16.mxu0 0
        %3065 = vmatmul.mubr.bf16.gmra.mxu0 %v1219
        %v3066 = vpop.f32.mrf.mxu0
        %v3067 = vadd.f32 0.0, %v3066
        %v3068 = vpop.f32.mrf.mxu0
        %v3069 = vpop.f32.mrf.mxu0
        %v3070 = vadd.f32 0.0, %v3069
        %v3071 = vpop.f32.mrf.mxu0
        %3072 = vmatprep.mubr.bf16.mxu0 0
        %3073 = vmatmul.mubr.bf16.gmra.mxu0 %v1220
        %v3074 = vpop.f32.mrf.mxu0
        %v3075 = vadd.f32 0.0, %v3074
        %v3076 = vpop.f32.mrf.mxu0
        %v3077 = vpop.f32.mrf.mxu0
        %v3078 = vadd.f32 0.0, %v3077
        %v3079 = vpop.f32.mrf.mxu0
        %3080 = vmatprep.mubr.bf16.mxu0 0
        %3081 = vmatmul.mubr.bf16.gmra.mxu0 %v1221
        %v3082 = vpop.f32.mrf.mxu0
        %v3083 = vadd.f32 0.0, %v3082
        %v3084 = vpop.f32.mrf.mxu0
        %v3085 = vpop.f32.mrf.mxu0
        %v3086 = vadd.f32 0.0, %v3085
        %v3087 = vpop.f32.mrf.mxu0
        %3088 = vmatprep.mubr.bf16.mxu0 0
        %3089 = vmatmul.mubr.bf16.gmra.mxu0 %v1222
        %v3090 = vpop.f32.mrf.mxu0
        %v3091 = vadd.f32 0.0, %v3090
        %v3092 = vpop.f32.mrf.mxu0
        %v3093 = vpop.f32.mrf.mxu0
        %v3094 = vadd.f32 0.0, %v3093
        %v3095 = vpop.f32.mrf.mxu0
        %3096 = vmatprep.mubr.bf16.mxu0 0
        %3097 = vmatmul.mubr.bf16.gmra.mxu0 %v1223
        %v3098 = vpop.f32.mrf.mxu0
        %v3099 = vadd.f32 0.0, %v3098
        %v3100 = vpop.f32.mrf.mxu0
        %v3101 = vpop.f32.mrf.mxu0
        %v3102 = vadd.f32 0.0, %v3101
        %v3103 = vpop.f32.mrf.mxu0
        %3104 = vmatprep.mubr.bf16.mxu0 0
        %3105 = vmatmul.mubr.bf16.gmra.mxu0 %v1224
        %v3106 = vpop.f32.mrf.mxu0
        %v3107 = vadd.f32 0.0, %v3106
        %v3108 = vpop.f32.mrf.mxu0
        %v3109 = vpop.f32.mrf.mxu0
        %v3110 = vadd.f32 0.0, %v3109
        %v3111 = vpop.f32.mrf.mxu0
        %3112 = vmatprep.mubr.bf16.mxu0 0
        %3113 = vmatmul.mubr.bf16.gmra.mxu0 %v1225
        %v3114 = vpop.f32.mrf.mxu0
        %v3115 = vadd.f32 0.0, %v3114
        %v3116 = vpop.f32.mrf.mxu0
        %v3117 = vpop.f32.mrf.mxu0
        %v3118 = vadd.f32 0.0, %v3117
        %v3119 = vpop.f32.mrf.mxu0
        %3120 = vmatprep.mubr.bf16.mxu0 0
        %3121 = vmatmul.mubr.bf16.gmra.mxu0 %v1226
        %v3122 = vpop.f32.mrf.mxu0
        %v3123 = vadd.f32 0.0, %v3122
        %v3124 = vpop.f32.mrf.mxu0
        %v3125 = vpop.f32.mrf.mxu0
        %v3126 = vadd.f32 0.0, %v3125
        %v3127 = vpop.f32.mrf.mxu0
        %3128 = vmatprep.mubr.bf16.mxu0 0
        %3129 = vmatmul.mubr.bf16.gmra.mxu0 %v1227
        %v3130 = vpop.f32.mrf.mxu0
        %v3131 = vadd.f32 0.0, %v3130
        %v3132 = vpop.f32.mrf.mxu0
        %v3133 = vpop.f32.mrf.mxu0
        %v3134 = vadd.f32 0.0, %v3133
        %v3135 = vpop.f32.mrf.mxu0
        %3136 = vmatprep.mubr.bf16.mxu0 0
        %3137 = vmatmul.mubr.bf16.gmra.mxu0 %v1226
        %v3138 = vpop.f32.mrf.mxu0
        %v3139 = vadd.f32 0.0, %v3138
        %v3140 = vpop.f32.mrf.mxu0
        %v3141 = vpop.f32.mrf.mxu0
        %v3142 = vadd.f32 0.0, %v3141
        %v3143 = vpop.f32.mrf.mxu0
        %3144 = vdwg.mxu0
        %v3145 = vadd.f32 %v2887, %v3019
        %v3146 = vadd.f32 %v2888, %v3022
        %v3147 = vadd.f32 %v2889, %v3027
        %v3148 = vadd.f32 %v2890, %v3030
        %v3149 = vadd.f32 %v2891, %v3035
        %v3150 = vadd.f32 %v2892, %v3038
        %v3151 = vadd.f32 %v2893, %v3043
        %v3152 = vadd.f32 %v2894, %v3046
        %v3153 = vadd.f32 %v2895, %v3051
        %v3154 = vadd.f32 %v2896, %v3054
        %v3155 = vadd.f32 %v2897, %v3059
        %v3156 = vadd.f32 %v2898, %v3062
        %v3157 = vadd.f32 %v2899, %v3067
        %v3158 = vadd.f32 %v2900, %v3070
        %v3159 = vadd.f32 %v2901, %v3075
        %v3160 = vadd.f32 %v2902, %v3078
        %v3161 = vadd.f32 %v2903, %v3083
        %v3162 = vadd.f32 %v2904, %v3086
        %v3163 = vadd.f32 %v2905, %v3091
        %v3164 = vadd.f32 %v2906, %v3094
        %v3165 = vadd.f32 %v2907, %v3099
        %v3166 = vadd.f32 %v2908, %v3102
        %v3167 = vadd.f32 %v2909, %v3107
        %v3168 = vadd.f32 %v2910, %v3110
        %v3169 = vadd.f32 %v2911, %v3115
        %v3170 = vadd.f32 %v2912, %v3118
        %v3171 = vadd.f32 %v2913, %v3123
        %v3172 = vadd.f32 %v2914, %v3126
        %v3173 = vadd.f32 %v2915, %v3131
        %v3174 = vadd.f32 %v2916, %v3134
        %v3175 = vadd.f32 %v2917, %v3139
        %v3176 = vadd.f32 %v2918, %v3142
        %s3177 = scalar_lea.vmem [#allocation5], 448
        %v3178 = vld [vmem:[%s3177] sm:$0xf]
        %v3179 = vld [vmem:[%s3177 + $0x4] sm:$0xf]
        %v3180 = vld [vmem:[%s3177 + $0x8] sm:$0xf]
        %v3181 = vld [vmem:[%s3177 + $0xc] sm:$0xf]
        %v3182 = vld [vmem:[%s3177 + $0x10] sm:$0xf]
        %v3183 = vld [vmem:[%s3177 + $0x14] sm:$0xf]
        %v3184 = vld [vmem:[%s3177 + $0x18] sm:$0xf]
        %v3185 = vld [vmem:[%s3177 + $0x1c] sm:$0xf]
        %v3186 = vld [vmem:[%s3177 + $0x20] sm:$0xf]
        %v3187 = vld [vmem:[%s3177 + $0x24] sm:$0xf]
        %v3188 = vld [vmem:[%s3177 + $0x28] sm:$0xf]
        %v3189 = vld [vmem:[%s3177 + $0x2c] sm:$0xf]
        %v3190 = vld [vmem:[%s3177 + $0x30] sm:$0xf]
        %v3191 = vld [vmem:[%s3177 + $0x34] sm:$0xf]
        %v3192 = vld [vmem:[%s3177 + $0x38] sm:$0xf]
        %v3193 = vld [vmem:[%s3177 + $0x3c] sm:$0xf]
        %v3210 = vunpack.c.l.b16 %v3178
        %v3211 = vunpack.c.l.b16 %v3179
        %v3212 = vunpack.c.l.b16 %v3180
        %v3213 = vunpack.c.l.b16 %v3181
        %v3214 = vunpack.c.l.b16 %v3182
        %v3215 = vunpack.c.l.b16 %v3183
        %v3216 = vunpack.c.l.b16 %v3184
        %v3217 = vunpack.c.l.b16 %v3185
        %v3218 = vunpack.c.l.b16 %v3186
        %v3219 = vunpack.c.l.b16 %v3187
        %v3220 = vunpack.c.l.b16 %v3188
        %v3221 = vunpack.c.l.b16 %v3189
        %v3222 = vunpack.c.l.b16 %v3190
        %v3223 = vunpack.c.l.b16 %v3191
        %v3224 = vunpack.c.l.b16 %v3192
        %v3225 = vunpack.c.l.b16 %v3193
        %v3226 = vpack.c.b16 %v3211, %v3210
        %v3227 = vpack.c.b16 %v3213, %v3212
        %v3228 = vpack.c.b16 %v3215, %v3214
        %v3229 = vpack.c.b16 %v3217, %v3216
        %v3230 = vpack.c.b16 %v3219, %v3218
        %v3231 = vpack.c.b16 %v3221, %v3220
        %v3232 = vpack.c.b16 %v3223, %v3222
        %v3233 = vpack.c.b16 %v3225, %v3224
        %3242 = vmatprep.subr.bf16.mxu0 0
        %3243 = vmatpush1.bf16.msra.mxu0 %v3233
        %3244 = vmatprep.subr.bf16.mxu0 0
        %3245 = vmatpush1.bf16.msra.mxu0 %v3232
        %3246 = vmatprep.subr.bf16.mxu0 0
        %3247 = vmatpush1.bf16.msra.mxu0 %v3231
        %3248 = vmatprep.subr.bf16.mxu0 0
        %3249 = vmatpush1.bf16.msra.mxu0 %v3230
        %3250 = vmatprep.subr.bf16.mxu0 0
        %3251 = vmatpush1.bf16.msra.mxu0 %v3229
        %3252 = vmatprep.subr.bf16.mxu0 0
        %3253 = vmatpush1.bf16.msra.mxu0 %v3228
        %3254 = vmatprep.subr.bf16.mxu0 0
        %3255 = vmatpush1.bf16.msra.mxu0 %v3227
        %3256 = vmatprep.subr.bf16.mxu0 0
        %3257 = vmatpush1.bf16.msra.mxu0 %v3226
        %3258 = vmatprep.subr.bf16.mxu0 0
        %3259 = vmatpush2.bf16.msra.mxu0 0
        %3260 = vmatprep.subr.bf16.mxu0 0
        %3261 = vmatpush2.bf16.msra.mxu0 0
        %3262 = vmatprep.subr.bf16.mxu0 0
        %3263 = vmatpush2.bf16.msra.mxu0 0
        %3264 = vmatprep.subr.bf16.mxu0 0
        %3265 = vmatpush2.bf16.msra.mxu0 0
        %3266 = vmatprep.subr.bf16.mxu0 0
        %3267 = vmatpush2.bf16.msra.mxu0 0
        %3268 = vmatprep.subr.bf16.mxu0 0
        %3269 = vmatpush2.bf16.msra.mxu0 0
        %3270 = vmatprep.subr.bf16.mxu0 0
        %3271 = vmatpush2.bf16.msra.mxu0 0
        %3272 = vmatprep.subr.bf16.mxu0 0
        %3273 = vmatpush2.bf16.msra.mxu0 0
        %3274 = vmatprep.mubr.bf16.mxu0 0
        %3275 = vmatmul.mubr.bf16.gmra.mxu0 %v789
        %v3276 = vpop.f32.mrf.mxu0
        %v3277 = vadd.f32 0.0, %v3276
        %v3278 = vpop.f32.mrf.mxu0
        %v3279 = vpop.f32.mrf.mxu0
        %v3280 = vadd.f32 0.0, %v3279
        %v3281 = vpop.f32.mrf.mxu0
        %3282 = vmatprep.mubr.bf16.mxu0 0
        %3283 = vmatmul.mubr.bf16.gmra.mxu0 %v790
        %v3284 = vpop.f32.mrf.mxu0
        %v3285 = vadd.f32 0.0, %v3284
        %v3286 = vpop.f32.mrf.mxu0
        %v3287 = vpop.f32.mrf.mxu0
        %v3288 = vadd.f32 0.0, %v3287
        %v3289 = vpop.f32.mrf.mxu0
        %3290 = vmatprep.mubr.bf16.mxu0 0
        %3291 = vmatmul.mubr.bf16.gmra.mxu0 %v791
        %v3292 = vpop.f32.mrf.mxu0
        %v3293 = vadd.f32 0.0, %v3292
        %v3294 = vpop.f32.mrf.mxu0
        %v3295 = vpop.f32.mrf.mxu0
        %v3296 = vadd.f32 0.0, %v3295
        %v3297 = vpop.f32.mrf.mxu0
        %3298 = vmatprep.mubr.bf16.mxu0 0
        %3299 = vmatmul.mubr.bf16.gmra.mxu0 %v792
        %v3300 = vpop.f32.mrf.mxu0
        %v3301 = vadd.f32 0.0, %v3300
        %v3302 = vpop.f32.mrf.mxu0
        %v3303 = vpop.f32.mrf.mxu0
        %v3304 = vadd.f32 0.0, %v3303
        %v3305 = vpop.f32.mrf.mxu0
        %3306 = vmatprep.mubr.bf16.mxu0 0
        %3307 = vmatmul.mubr.bf16.gmra.mxu0 %v793
        %v3308 = vpop.f32.mrf.mxu0
        %v3309 = vadd.f32 0.0, %v3308
        %v3310 = vpop.f32.mrf.mxu0
        %v3311 = vpop.f32.mrf.mxu0
        %v3312 = vadd.f32 0.0, %v3311
        %v3313 = vpop.f32.mrf.mxu0
        %3314 = vmatprep.mubr.bf16.mxu0 0
        %3315 = vmatmul.mubr.bf16.gmra.mxu0 %v794
        %v3316 = vpop.f32.mrf.mxu0
        %v3317 = vadd.f32 0.0, %v3316
        %v3318 = vpop.f32.mrf.mxu0
        %v3319 = vpop.f32.mrf.mxu0
        %v3320 = vadd.f32 0.0, %v3319
        %v3321 = vpop.f32.mrf.mxu0
        %3322 = vmatprep.mubr.bf16.mxu0 0
        %3323 = vmatmul.mubr.bf16.gmra.mxu0 %v795
        %v3324 = vpop.f32.mrf.mxu0
        %v3325 = vadd.f32 0.0, %v3324
        %v3326 = vpop.f32.mrf.mxu0
        %v3327 = vpop.f32.mrf.mxu0
        %v3328 = vadd.f32 0.0, %v3327
        %v3329 = vpop.f32.mrf.mxu0
        %3330 = vmatprep.mubr.bf16.mxu0 0
        %3331 = vmatmul.mubr.bf16.gmra.mxu0 %v796
        %v3332 = vpop.f32.mrf.mxu0
        %v3333 = vadd.f32 0.0, %v3332
        %v3334 = vpop.f32.mrf.mxu0
        %v3335 = vpop.f32.mrf.mxu0
        %v3336 = vadd.f32 0.0, %v3335
        %v3337 = vpop.f32.mrf.mxu0
        %3338 = vmatprep.mubr.bf16.mxu0 0
        %3339 = vmatmul.mubr.bf16.gmra.mxu0 %v797
        %v3340 = vpop.f32.mrf.mxu0
        %v3341 = vadd.f32 0.0, %v3340
        %v3342 = vpop.f32.mrf.mxu0
        %v3343 = vpop.f32.mrf.mxu0
        %v3344 = vadd.f32 0.0, %v3343
        %v3345 = vpop.f32.mrf.mxu0
        %3346 = vmatprep.mubr.bf16.mxu0 0
        %3347 = vmatmul.mubr.bf16.gmra.mxu0 %v798
        %v3348 = vpop.f32.mrf.mxu0
        %v3349 = vadd.f32 0.0, %v3348
        %v3350 = vpop.f32.mrf.mxu0
        %v3351 = vpop.f32.mrf.mxu0
        %v3352 = vadd.f32 0.0, %v3351
        %v3353 = vpop.f32.mrf.mxu0
        %3354 = vmatprep.mubr.bf16.mxu0 0
        %3355 = vmatmul.mubr.bf16.gmra.mxu0 %v799
        %v3356 = vpop.f32.mrf.mxu0
        %v3357 = vadd.f32 0.0, %v3356
        %v3358 = vpop.f32.mrf.mxu0
        %v3359 = vpop.f32.mrf.mxu0
        %v3360 = vadd.f32 0.0, %v3359
        %v3361 = vpop.f32.mrf.mxu0
        %3362 = vmatprep.mubr.bf16.mxu0 0
        %3363 = vmatmul.mubr.bf16.gmra.mxu0 %v800
        %v3364 = vpop.f32.mrf.mxu0
        %v3365 = vadd.f32 0.0, %v3364
        %v3366 = vpop.f32.mrf.mxu0
        %v3367 = vpop.f32.mrf.mxu0
        %v3368 = vadd.f32 0.0, %v3367
        %v3369 = vpop.f32.mrf.mxu0
        %3370 = vmatprep.mubr.bf16.mxu0 0
        %3371 = vmatmul.mubr.bf16.gmra.mxu0 %v801
        %v3372 = vpop.f32.mrf.mxu0
        %v3373 = vadd.f32 0.0, %v3372
        %v3374 = vpop.f32.mrf.mxu0
        %v3375 = vpop.f32.mrf.mxu0
        %v3376 = vadd.f32 0.0, %v3375
        %v3377 = vpop.f32.mrf.mxu0
        %3378 = vmatprep.mubr.bf16.mxu0 0
        %3379 = vmatmul.mubr.bf16.gmra.mxu0 %v802
        %v3380 = vpop.f32.mrf.mxu0
        %v3381 = vadd.f32 0.0, %v3380
        %v3382 = vpop.f32.mrf.mxu0
        %v3383 = vpop.f32.mrf.mxu0
        %v3384 = vadd.f32 0.0, %v3383
        %v3385 = vpop.f32.mrf.mxu0
        %3386 = vmatprep.mubr.bf16.mxu0 0
        %3387 = vmatmul.mubr.bf16.gmra.mxu0 %v803
        %v3388 = vpop.f32.mrf.mxu0
        %v3389 = vadd.f32 0.0, %v3388
        %v3390 = vpop.f32.mrf.mxu0
        %v3391 = vpop.f32.mrf.mxu0
        %v3392 = vadd.f32 0.0, %v3391
        %v3393 = vpop.f32.mrf.mxu0
        %3394 = vmatprep.mubr.bf16.mxu0 0
        %3395 = vmatmul.mubr.bf16.gmra.mxu0 %v802
        %v3396 = vpop.f32.mrf.mxu0
        %v3397 = vadd.f32 0.0, %v3396
        %v3398 = vpop.f32.mrf.mxu0
        %v3399 = vpop.f32.mrf.mxu0
        %v3400 = vadd.f32 0.0, %v3399
        %v3401 = vpop.f32.mrf.mxu0
        %3402 = vdwg.mxu0
        %v3403 = vadd.f32 %v3145, %v3277
        %v3404 = vadd.f32 %v3146, %v3280
        %v3405 = vadd.f32 %v3147, %v3285
        %v3406 = vadd.f32 %v3148, %v3288
        %v3407 = vadd.f32 %v3149, %v3293
        %v3408 = vadd.f32 %v3150, %v3296
        %v3409 = vadd.f32 %v3151, %v3301
        %v3410 = vadd.f32 %v3152, %v3304
        %v3411 = vadd.f32 %v3153, %v3309
        %v3412 = vadd.f32 %v3154, %v3312
        %v3413 = vadd.f32 %v3155, %v3317
        %v3414 = vadd.f32 %v3156, %v3320
        %v3415 = vadd.f32 %v3157, %v3325
        %v3416 = vadd.f32 %v3158, %v3328
        %v3417 = vadd.f32 %v3159, %v3333
        %v3418 = vadd.f32 %v3160, %v3336
        %v3419 = vadd.f32 %v3161, %v3341
        %v3420 = vadd.f32 %v3162, %v3344
        %v3421 = vadd.f32 %v3163, %v3349
        %v3422 = vadd.f32 %v3164, %v3352
        %v3423 = vadd.f32 %v3165, %v3357
        %v3424 = vadd.f32 %v3166, %v3360
        %v3425 = vadd.f32 %v3167, %v3365
        %v3426 = vadd.f32 %v3168, %v3368
        %v3427 = vadd.f32 %v3169, %v3373
        %v3428 = vadd.f32 %v3170, %v3376
        %v3429 = vadd.f32 %v3171, %v3381
        %v3430 = vadd.f32 %v3172, %v3384
        %v3431 = vadd.f32 %v3173, %v3389
        %v3432 = vadd.f32 %v3174, %v3392
        %v3433 = vadd.f32 %v3175, %v3397
        %v3434 = vadd.f32 %v3176, %v3400
        %s3435 = scalar_lea.vmem [#allocation5], 512
        %v3436 = vld [vmem:[%s3435] sm:$0xf]
        %v3437 = vld [vmem:[%s3435 + $0x4] sm:$0xf]
        %v3438 = vld [vmem:[%s3435 + $0x8] sm:$0xf]
        %v3439 = vld [vmem:[%s3435 + $0xc] sm:$0xf]
        %v3440 = vld [vmem:[%s3435 + $0x10] sm:$0xf]
        %v3441 = vld [vmem:[%s3435 + $0x14] sm:$0xf]
        %v3442 = vld [vmem:[%s3435 + $0x18] sm:$0xf]
        %v3443 = vld [vmem:[%s3435 + $0x1c] sm:$0xf]
        %v3444 = vld [vmem:[%s3435 + $0x20] sm:$0xf]
        %v3445 = vld [vmem:[%s3435 + $0x24] sm:$0xf]
        %v3446 = vld [vmem:[%s3435 + $0x28] sm:$0xf]
        %v3447 = vld [vmem:[%s3435 + $0x2c] sm:$0xf]
        %v3448 = vld [vmem:[%s3435 + $0x30] sm:$0xf]
        %v3449 = vld [vmem:[%s3435 + $0x34] sm:$0xf]
        %v3450 = vld [vmem:[%s3435 + $0x38] sm:$0xf]
        %v3451 = vld [vmem:[%s3435 + $0x3c] sm:$0xf]
        %v3468 = vunpack.c.l.b16 %v3436
        %v3469 = vunpack.c.l.b16 %v3437
        %v3470 = vunpack.c.l.b16 %v3438
        %v3471 = vunpack.c.l.b16 %v3439
        %v3472 = vunpack.c.l.b16 %v3440
        %v3473 = vunpack.c.l.b16 %v3441
        %v3474 = vunpack.c.l.b16 %v3442
        %v3475 = vunpack.c.l.b16 %v3443
        %v3476 = vunpack.c.l.b16 %v3444
        %v3477 = vunpack.c.l.b16 %v3445
        %v3478 = vunpack.c.l.b16 %v3446
        %v3479 = vunpack.c.l.b16 %v3447
        %v3480 = vunpack.c.l.b16 %v3448
        %v3481 = vunpack.c.l.b16 %v3449
        %v3482 = vunpack.c.l.b16 %v3450
        %v3483 = vunpack.c.l.b16 %v3451
        %v3484 = vpack.c.b16 %v3469, %v3468
        %v3485 = vpack.c.b16 %v3471, %v3470
        %v3486 = vpack.c.b16 %v3473, %v3472
        %v3487 = vpack.c.b16 %v3475, %v3474
        %v3488 = vpack.c.b16 %v3477, %v3476
        %v3489 = vpack.c.b16 %v3479, %v3478
        %v3490 = vpack.c.b16 %v3481, %v3480
        %v3491 = vpack.c.b16 %v3483, %v3482
        %3500 = vmatprep.subr.bf16.mxu0 0
        %3501 = vmatpush1.bf16.msra.mxu0 %v3491
        %3502 = vmatprep.subr.bf16.mxu0 0
        %3503 = vmatpush1.bf16.msra.mxu0 %v3490
        %3504 = vmatprep.subr.bf16.mxu0 0
        %3505 = vmatpush1.bf16.msra.mxu0 %v3489
        %3506 = vmatprep.subr.bf16.mxu0 0
        %3507 = vmatpush1.bf16.msra.mxu0 %v3488
        %3508 = vmatprep.subr.bf16.mxu0 0
        %3509 = vmatpush1.bf16.msra.mxu0 %v3487
        %3510 = vmatprep.subr.bf16.mxu0 0
        %3511 = vmatpush1.bf16.msra.mxu0 %v3486
        %3512 = vmatprep.subr.bf16.mxu0 0
        %3513 = vmatpush1.bf16.msra.mxu0 %v3485
        %3514 = vmatprep.subr.bf16.mxu0 0
        %3515 = vmatpush1.bf16.msra.mxu0 %v3484
        %3516 = vmatprep.subr.bf16.mxu0 0
        %3517 = vmatpush2.bf16.msra.mxu0 0
        %3518 = vmatprep.subr.bf16.mxu0 0
        %3519 = vmatpush2.bf16.msra.mxu0 0
        %3520 = vmatprep.subr.bf16.mxu0 0
        %3521 = vmatpush2.bf16.msra.mxu0 0
        %3522 = vmatprep.subr.bf16.mxu0 0
        %3523 = vmatpush2.bf16.msra.mxu0 0
        %3524 = vmatprep.subr.bf16.mxu0 0
        %3525 = vmatpush2.bf16.msra.mxu0 0
        %3526 = vmatprep.subr.bf16.mxu0 0
        %3527 = vmatpush2.bf16.msra.mxu0 0
        %3528 = vmatprep.subr.bf16.mxu0 0
        %3529 = vmatpush2.bf16.msra.mxu0 0
        %3530 = vmatprep.subr.bf16.mxu0 0
        %3531 = vmatpush2.bf16.msra.mxu0 0
        %3532 = vmatprep.mubr.bf16.mxu0 0
        %3533 = vmatmul.mubr.bf16.gmra.mxu0 %v1421
        %v3534 = vpop.f32.mrf.mxu0
        %v3535 = vadd.f32 0.0, %v3534
        %v3536 = vpop.f32.mrf.mxu0
        %v3537 = vpop.f32.mrf.mxu0
        %v3538 = vadd.f32 0.0, %v3537
        %v3539 = vpop.f32.mrf.mxu0
        %3540 = vmatprep.mubr.bf16.mxu0 0
        %3541 = vmatmul.mubr.bf16.gmra.mxu0 %v1422
        %v3542 = vpop.f32.mrf.mxu0
        %v3543 = vadd.f32 0.0, %v3542
        %v3544 = vpop.f32.mrf.mxu0
        %v3545 = vpop.f32.mrf.mxu0
        %v3546 = vadd.f32 0.0, %v3545
        %v3547 = vpop.f32.mrf.mxu0
        %3548 = vmatprep.mubr.bf16.mxu0 0
        %3549 = vmatmul.mubr.bf16.gmra.mxu0 %v1423
        %v3550 = vpop.f32.mrf.mxu0
        %v3551 = vadd.f32 0.0, %v3550
        %v3552 = vpop.f32.mrf.mxu0
        %v3553 = vpop.f32.mrf.mxu0
        %v3554 = vadd.f32 0.0, %v3553
        %v3555 = vpop.f32.mrf.mxu0
        %3556 = vmatprep.mubr.bf16.mxu0 0
        %3557 = vmatmul.mubr.bf16.gmra.mxu0 %v1424
        %v3558 = vpop.f32.mrf.mxu0
        %v3559 = vadd.f32 0.0, %v3558
        %v3560 = vpop.f32.mrf.mxu0
        %v3561 = vpop.f32.mrf.mxu0
        %v3562 = vadd.f32 0.0, %v3561
        %v3563 = vpop.f32.mrf.mxu0
        %3564 = vmatprep.mubr.bf16.mxu0 0
        %3565 = vmatmul.mubr.bf16.gmra.mxu0 %v1425
        %v3566 = vpop.f32.mrf.mxu0
        %v3567 = vadd.f32 0.0, %v3566
        %v3568 = vpop.f32.mrf.mxu0
        %v3569 = vpop.f32.mrf.mxu0
        %v3570 = vadd.f32 0.0, %v3569
        %v3571 = vpop.f32.mrf.mxu0
        %3572 = vmatprep.mubr.bf16.mxu0 0
        %3573 = vmatmul.mubr.bf16.gmra.mxu0 %v1426
        %v3574 = vpop.f32.mrf.mxu0
        %v3575 = vadd.f32 0.0, %v3574
        %v3576 = vpop.f32.mrf.mxu0
        %v3577 = vpop.f32.mrf.mxu0
        %v3578 = vadd.f32 0.0, %v3577
        %v3579 = vpop.f32.mrf.mxu0
        %3580 = vmatprep.mubr.bf16.mxu0 0
        %3581 = vmatmul.mubr.bf16.gmra.mxu0 %v1427
        %v3582 = vpop.f32.mrf.mxu0
        %v3583 = vadd.f32 0.0, %v3582
        %v3584 = vpop.f32.mrf.mxu0
        %v3585 = vpop.f32.mrf.mxu0
        %v3586 = vadd.f32 0.0, %v3585
        %v3587 = vpop.f32.mrf.mxu0
        %3588 = vmatprep.mubr.bf16.mxu0 0
        %3589 = vmatmul.mubr.bf16.gmra.mxu0 %v1428
        %v3590 = vpop.f32.mrf.mxu0
        %v3591 = vadd.f32 0.0, %v3590
        %v3592 = vpop.f32.mrf.mxu0
        %v3593 = vpop.f32.mrf.mxu0
        %v3594 = vadd.f32 0.0, %v3593
        %v3595 = vpop.f32.mrf.mxu0
        %3596 = vmatprep.mubr.bf16.mxu0 0
        %3597 = vmatmul.mubr.bf16.gmra.mxu0 %v1429
        %v3598 = vpop.f32.mrf.mxu0
        %v3599 = vadd.f32 0.0, %v3598
        %v3600 = vpop.f32.mrf.mxu0
        %v3601 = vpop.f32.mrf.mxu0
        %v3602 = vadd.f32 0.0, %v3601
        %v3603 = vpop.f32.mrf.mxu0
        %3604 = vmatprep.mubr.bf16.mxu0 0
        %3605 = vmatmul.mubr.bf16.gmra.mxu0 %v1430
        %v3606 = vpop.f32.mrf.mxu0
        %v3607 = vadd.f32 0.0, %v3606
        %v3608 = vpop.f32.mrf.mxu0
        %v3609 = vpop.f32.mrf.mxu0
        %v3610 = vadd.f32 0.0, %v3609
        %v3611 = vpop.f32.mrf.mxu0
        %3612 = vmatprep.mubr.bf16.mxu0 0
        %3613 = vmatmul.mubr.bf16.gmra.mxu0 %v1431
        %v3614 = vpop.f32.mrf.mxu0
        %v3615 = vadd.f32 0.0, %v3614
        %v3616 = vpop.f32.mrf.mxu0
        %v3617 = vpop.f32.mrf.mxu0
        %v3618 = vadd.f32 0.0, %v3617
        %v3619 = vpop.f32.mrf.mxu0
        %3620 = vmatprep.mubr.bf16.mxu0 0
        %3621 = vmatmul.mubr.bf16.gmra.mxu0 %v1432
        %v3622 = vpop.f32.mrf.mxu0
        %v3623 = vadd.f32 0.0, %v3622
        %v3624 = vpop.f32.mrf.mxu0
        %v3625 = vpop.f32.mrf.mxu0
        %v3626 = vadd.f32 0.0, %v3625
        %v3627 = vpop.f32.mrf.mxu0
        %3628 = vmatprep.mubr.bf16.mxu0 0
        %3629 = vmatmul.mubr.bf16.gmra.mxu0 %v1433
        %v3630 = vpop.f32.mrf.mxu0
        %v3631 = vadd.f32 0.0, %v3630
        %v3632 = vpop.f32.mrf.mxu0
        %v3633 = vpop.f32.mrf.mxu0
        %v3634 = vadd.f32 0.0, %v3633
        %v3635 = vpop.f32.mrf.mxu0
        %3636 = vmatprep.mubr.bf16.mxu0 0
        %3637 = vmatmul.mubr.bf16.gmra.mxu0 %v1434
        %v3638 = vpop.f32.mrf.mxu0
        %v3639 = vadd.f32 0.0, %v3638
        %v3640 = vpop.f32.mrf.mxu0
        %v3641 = vpop.f32.mrf.mxu0
        %v3642 = vadd.f32 0.0, %v3641
        %v3643 = vpop.f32.mrf.mxu0
        %3644 = vmatprep.mubr.bf16.mxu0 0
        %3645 = vmatmul.mubr.bf16.gmra.mxu0 %v1435
        %v3646 = vpop.f32.mrf.mxu0
        %v3647 = vadd.f32 0.0, %v3646
        %v3648 = vpop.f32.mrf.mxu0
        %v3649 = vpop.f32.mrf.mxu0
        %v3650 = vadd.f32 0.0, %v3649
        %v3651 = vpop.f32.mrf.mxu0
        %3652 = vmatprep.mubr.bf16.mxu0 0
        %3653 = vmatmul.mubr.bf16.gmra.mxu0 %v1434
        %v3654 = vpop.f32.mrf.mxu0
        %v3655 = vadd.f32 0.0, %v3654
        %v3656 = vpop.f32.mrf.mxu0
        %v3657 = vpop.f32.mrf.mxu0
        %v3658 = vadd.f32 0.0, %v3657
        %v3659 = vpop.f32.mrf.mxu0
        %3660 = vdwg.mxu0
        %v3661 = vadd.f32 %v3403, %v3535
        %v3662 = vadd.f32 %v3404, %v3538
        %v3663 = vadd.f32 %v3405, %v3543
        %v3664 = vadd.f32 %v3406, %v3546
        %v3665 = vadd.f32 %v3407, %v3551
        %v3666 = vadd.f32 %v3408, %v3554
        %v3667 = vadd.f32 %v3409, %v3559
        %v3668 = vadd.f32 %v3410, %v3562
        %v3669 = vadd.f32 %v3411, %v3567
        %v3670 = vadd.f32 %v3412, %v3570
        %v3671 = vadd.f32 %v3413, %v3575
        %v3672 = vadd.f32 %v3414, %v3578
        %v3673 = vadd.f32 %v3415, %v3583
        %v3674 = vadd.f32 %v3416, %v3586
        %v3675 = vadd.f32 %v3417, %v3591
        %v3676 = vadd.f32 %v3418, %v3594
        %v3677 = vadd.f32 %v3419, %v3599
        %v3678 = vadd.f32 %v3420, %v3602
        %v3679 = vadd.f32 %v3421, %v3607
        %v3680 = vadd.f32 %v3422, %v3610
        %v3681 = vadd.f32 %v3423, %v3615
        %v3682 = vadd.f32 %v3424, %v3618
        %v3683 = vadd.f32 %v3425, %v3623
        %v3684 = vadd.f32 %v3426, %v3626
        %v3685 = vadd.f32 %v3427, %v3631
        %v3686 = vadd.f32 %v3428, %v3634
        %v3687 = vadd.f32 %v3429, %v3639
        %v3688 = vadd.f32 %v3430, %v3642
        %v3689 = vadd.f32 %v3431, %v3647
        %v3690 = vadd.f32 %v3432, %v3650
        %v3691 = vadd.f32 %v3433, %v3655
        %v3692 = vadd.f32 %v3434, %v3658
        %v3693 = vld [vmem:[%s2] sm:$0x1]
        %v3695 = vlaneseq
        %v3696 = vshrl.u32 %v3695, 7
        %v3697 = vsub.s32 0, %v3696
        %v3698 = vrot.slane %v3693, %v3697
        %v3700 = vadd.f32 %v3661, %v3698
        %v3701 = vadd.f32 %v3662, %v3698
        %v3702 = vadd.f32 %v3663, %v3698
        %v3703 = vadd.f32 %v3664, %v3698
        %v3704 = vadd.f32 %v3665, %v3698
        %v3705 = vadd.f32 %v3666, %v3698
        %v3706 = vadd.f32 %v3667, %v3698
        %v3707 = vadd.f32 %v3668, %v3698
        %v3708 = vadd.f32 %v3669, %v3698
        %v3709 = vadd.f32 %v3670, %v3698
        %v3710 = vadd.f32 %v3671, %v3698
        %v3711 = vadd.f32 %v3672, %v3698
        %v3712 = vadd.f32 %v3673, %v3698
        %v3713 = vadd.f32 %v3674, %v3698
        %v3714 = vadd.f32 %v3675, %v3698
        %v3715 = vadd.f32 %v3676, %v3698
        %v3716 = vadd.f32 %v3677, %v3698
        %v3717 = vadd.f32 %v3678, %v3698
        %v3718 = vadd.f32 %v3679, %v3698
        %v3719 = vadd.f32 %v3680, %v3698
        %v3720 = vadd.f32 %v3681, %v3698
        %v3721 = vadd.f32 %v3682, %v3698
        %v3722 = vadd.f32 %v3683, %v3698
        %v3723 = vadd.f32 %v3684, %v3698
        %v3724 = vadd.f32 %v3685, %v3698
        %v3725 = vadd.f32 %v3686, %v3698
        %v3726 = vadd.f32 %v3687, %v3698
        %v3727 = vadd.f32 %v3688, %v3698
        %v3728 = vadd.f32 %v3689, %v3698
        %v3729 = vadd.f32 %v3690, %v3698
        %v3730 = vadd.f32 %v3691, %v3698
        %v3731 = vadd.f32 %v3692, %v3698
        %v3732 = vadd.f32 %v3700, %v3701
        %v3733 = vadd.f32 %v3732, %v3702
        %v3734 = vadd.f32 %v3733, %v3703
        %v3735 = vadd.f32 %v3734, %v3704
        %v3736 = vadd.f32 %v3735, %v3705
        %v3737 = vadd.f32 %v3736, %v3706
        %v3738 = vadd.f32 %v3737, %v3707
        %v3739 = vadd.f32 %v3738, %v3708
        %v3740 = vadd.f32 %v3739, %v3709
        %v3741 = vadd.f32 %v3740, %v3710
        %v3742 = vadd.f32 %v3741, %v3711
        %v3743 = vadd.f32 %v3742, %v3712
        %v3744 = vadd.f32 %v3743, %v3713
        %v3745 = vadd.f32 %v3744, %v3714
        %v3746 = vadd.f32 %v3745, %v3715
        %v3747 = vadd.f32 %v3746, %v3716
        %v3748 = vadd.f32 %v3747, %v3717
        %v3749 = vadd.f32 %v3748, %v3718
        %v3750 = vadd.f32 %v3749, %v3719
        %v3751 = vadd.f32 %v3750, %v3720
        %v3752 = vadd.f32 %v3751, %v3721
        %v3753 = vadd.f32 %v3752, %v3722
        %v3754 = vadd.f32 %v3753, %v3723
        %v3755 = vadd.f32 %v3754, %v3724
        %v3756 = vadd.f32 %v3755, %v3725
        %v3757 = vadd.f32 %v3756, %v3726
        %v3758 = vadd.f32 %v3757, %v3727
        %v3759 = vadd.f32 %v3758, %v3728
        %v3760 = vadd.f32 %v3759, %v3729
        %v3761 = vadd.f32 %v3760, %v3730
        %v3762 = vadd.f32 %v3761, %v3731
        %v3763 = vrot.slane %v3762, 4
        %v3764 = vadd.f32 %v3762, %v3763
        %v3765 = vrot.slane %v3764, 2
        %v3766 = vadd.f32 %v3764, %v3765
        %v3767 = vrot.slane %v3766, 1
        %v3768 = vadd.f32 %v3766, %v3767
        %v3769 = vmul.f32 %v3768, 0.00390625
        %v3770 = vsub.f32 %v3700, %v3769
        %v3771 = vsub.f32 %v3701, %v3769
        %v3772 = vsub.f32 %v3702, %v3769
        %v3773 = vsub.f32 %v3703, %v3769
        %v3774 = vsub.f32 %v3704, %v3769
        %v3775 = vsub.f32 %v3705, %v3769
        %v3776 = vsub.f32 %v3706, %v3769
        %v3777 = vsub.f32 %v3707, %v3769
        %v3778 = vsub.f32 %v3708, %v3769
        %v3779 = vsub.f32 %v3709, %v3769
        %v3780 = vsub.f32 %v3710, %v3769
        %v3781 = vsub.f32 %v3711, %v3769
        %v3782 = vsub.f32 %v3712, %v3769
        %v3783 = vsub.f32 %v3713, %v3769
        %v3784 = vsub.f32 %v3714, %v3769
        %v3785 = vsub.f32 %v3715, %v3769
        %v3786 = vsub.f32 %v3716, %v3769
        %v3787 = vsub.f32 %v3717, %v3769
        %v3788 = vsub.f32 %v3718, %v3769
        %v3789 = vsub.f32 %v3719, %v3769
        %v3790 = vsub.f32 %v3720, %v3769
        %v3791 = vsub.f32 %v3721, %v3769
        %v3792 = vsub.f32 %v3722, %v3769
        %v3793 = vsub.f32 %v3723, %v3769
        %v3794 = vsub.f32 %v3724, %v3769
        %v3795 = vsub.f32 %v3725, %v3769
        %v3796 = vsub.f32 %v3726, %v3769
        %v3797 = vsub.f32 %v3727, %v3769
        %v3798 = vsub.f32 %v3728, %v3769
        %v3799 = vsub.f32 %v3729, %v3769
        %v3800 = vsub.f32 %v3730, %v3769
        %v3801 = vsub.f32 %v3731, %v3769
        %v3802 = vmul.f32 %v3770, %v3770
        %v3803 = vmul.f32 %v3771, %v3771
        %v3804 = vmul.f32 %v3772, %v3772
        %v3805 = vmul.f32 %v3773, %v3773
        %v3806 = vmul.f32 %v3774, %v3774
        %v3807 = vmul.f32 %v3775, %v3775
        %v3808 = vmul.f32 %v3776, %v3776
        %v3809 = vmul.f32 %v3777, %v3777
        %v3810 = vmul.f32 %v3778, %v3778
        %v3811 = vmul.f32 %v3779, %v3779
        %v3812 = vmul.f32 %v3780, %v3780
        %v3813 = vmul.f32 %v3781, %v3781
        %v3814 = vmul.f32 %v3782, %v3782
        %v3815 = vmul.f32 %v3783, %v3783
        %v3816 = vmul.f32 %v3784, %v3784
        %v3817 = vmul.f32 %v3785, %v3785
        %v3818 = vmul.f32 %v3786, %v3786
        %v3819 = vmul.f32 %v3787, %v3787
        %v3820 = vmul.f32 %v3788, %v3788
        %v3821 = vmul.f32 %v3789, %v3789
        %v3822 = vmul.f32 %v3790, %v3790
        %v3823 = vmul.f32 %v3791, %v3791
        %v3824 = vmul.f32 %v3792, %v3792
        %v3825 = vmul.f32 %v3793, %v3793
        %v3826 = vmul.f32 %v3794, %v3794
        %v3827 = vmul.f32 %v3795, %v3795
        %v3828 = vmul.f32 %v3796, %v3796
        %v3829 = vmul.f32 %v3797, %v3797
        %v3830 = vmul.f32 %v3798, %v3798
        %v3831 = vmul.f32 %v3799, %v3799
        %v3832 = vmul.f32 %v3800, %v3800
        %v3833 = vmul.f32 %v3801, %v3801
        %v3834 = vadd.f32 %v3802, %v3803
        %v3835 = vadd.f32 %v3834, %v3804
        %v3836 = vadd.f32 %v3835, %v3805
        %v3837 = vadd.f32 %v3836, %v3806
        %v3838 = vadd.f32 %v3837, %v3807
        %v3839 = vadd.f32 %v3838, %v3808
        %v3840 = vadd.f32 %v3839, %v3809
        %v3841 = vadd.f32 %v3840, %v3810
        %v3842 = vadd.f32 %v3841, %v3811
        %v3843 = vadd.f32 %v3842, %v3812
        %v3844 = vadd.f32 %v3843, %v3813
        %v3845 = vadd.f32 %v3844, %v3814
        %v3846 = vadd.f32 %v3845, %v3815
        %v3847 = vadd.f32 %v3846, %v3816
        %v3848 = vadd.f32 %v3847, %v3817
        %v3849 = vadd.f32 %v3848, %v3818
        %v3850 = vadd.f32 %v3849, %v3819
        %v3851 = vadd.f32 %v3850, %v3820
        %v3852 = vadd.f32 %v3851, %v3821
        %v3853 = vadd.f32 %v3852, %v3822
        %v3854 = vadd.f32 %v3853, %v3823
        %v3855 = vadd.f32 %v3854, %v3824
        %v3856 = vadd.f32 %v3855, %v3825
        %v3857 = vadd.f32 %v3856, %v3826
        %v3858 = vadd.f32 %v3857, %v3827
        %v3859 = vadd.f32 %v3858, %v3828
        %v3860 = vadd.f32 %v3859, %v3829
        %v3861 = vadd.f32 %v3860, %v3830
        %v3862 = vadd.f32 %v3861, %v3831
        %v3863 = vadd.f32 %v3862, %v3832
        %v3864 = vadd.f32 %v3863, %v3833
        %v3865 = vrot.slane %v3864, 4
        %v3866 = vadd.f32 %v3864, %v3865
        %v3867 = vrot.slane %v3866, 2
        %v3868 = vadd.f32 %v3866, %v3867
        %v3869 = vrot.slane %v3868, 1
        %v3870 = vadd.f32 %v3868, %v3869
        %v3871 = vmul.f32 %v3870, 0.00390625
        %v3872 = vadd.f32 %v3871, 1e-05
        %v3873 = vrsqrt.pop %v3872
        %v3874 = vmul.f32 %v3770, %v3873
        %v3875 = vmul.f32 %v3771, %v3873
        %v3876 = vmul.f32 %v3772, %v3873
        %v3877 = vmul.f32 %v3773, %v3873
        %v3878 = vmul.f32 %v3774, %v3873
        %v3879 = vmul.f32 %v3775, %v3873
        %v3880 = vmul.f32 %v3776, %v3873
        %v3881 = vmul.f32 %v3777, %v3873
        %v3882 = vmul.f32 %v3778, %v3873
        %v3883 = vmul.f32 %v3779, %v3873
        %v3884 = vmul.f32 %v3780, %v3873
        %v3885 = vmul.f32 %v3781, %v3873
        %v3886 = vmul.f32 %v3782, %v3873
        %v3887 = vmul.f32 %v3783, %v3873
        %v3888 = vmul.f32 %v3784, %v3873
        %v3889 = vmul.f32 %v3785, %v3873
        %v3890 = vmul.f32 %v3786, %v3873
        %v3891 = vmul.f32 %v3787, %v3873
        %v3892 = vmul.f32 %v3788, %v3873
        %v3893 = vmul.f32 %v3789, %v3873
        %v3894 = vmul.f32 %v3790, %v3873
        %v3895 = vmul.f32 %v3791, %v3873
        %v3896 = vmul.f32 %v3792, %v3873
        %v3897 = vmul.f32 %v3793, %v3873
        %v3898 = vmul.f32 %v3794, %v3873
        %v3899 = vmul.f32 %v3795, %v3873
        %v3900 = vmul.f32 %v3796, %v3873
        %v3901 = vmul.f32 %v3797, %v3873
        %v3902 = vmul.f32 %v3798, %v3873
        %v3903 = vmul.f32 %v3799, %v3873
        %v3904 = vmul.f32 %v3800, %v3873
        %v3905 = vmul.f32 %v3801, %v3873
        %v3906 = vmax.f32 %v3874, 0.0
        %v3907 = vmax.f32 %v3875, 0.0
        %v3908 = vmax.f32 %v3876, 0.0
        %v3909 = vmax.f32 %v3877, 0.0
        %v3910 = vmax.f32 %v3878, 0.0
        %v3911 = vmax.f32 %v3879, 0.0
        %v3912 = vmax.f32 %v3880, 0.0
        %v3913 = vmax.f32 %v3881, 0.0
        %v3914 = vmax.f32 %v3882, 0.0
        %v3915 = vmax.f32 %v3883, 0.0
        %v3916 = vmax.f32 %v3884, 0.0
        %v3917 = vmax.f32 %v3885, 0.0
        %v3918 = vmax.f32 %v3886, 0.0
        %v3919 = vmax.f32 %v3887, 0.0
        %v3920 = vmax.f32 %v3888, 0.0
        %v3921 = vmax.f32 %v3889, 0.0
        %v3922 = vmax.f32 %v3890, 0.0
        %v3923 = vmax.f32 %v3891, 0.0
        %v3924 = vmax.f32 %v3892, 0.0
        %v3925 = vmax.f32 %v3893, 0.0
        %v3926 = vmax.f32 %v3894, 0.0
        %v3927 = vmax.f32 %v3895, 0.0
        %v3928 = vmax.f32 %v3896, 0.0
        %v3929 = vmax.f32 %v3897, 0.0
        %v3930 = vmax.f32 %v3898, 0.0
        %v3931 = vmax.f32 %v3899, 0.0
        %v3932 = vmax.f32 %v3900, 0.0
        %v3933 = vmax.f32 %v3901, 0.0
        %v3934 = vmax.f32 %v3902, 0.0
        %v3935 = vmax.f32 %v3903, 0.0
        %v3936 = vmax.f32 %v3904, 0.0
        %v3937 = vmax.f32 %v3905, 0.0
        %v3938 = vpack.c.bf16 %v3907, %v3906
        %v3939 = vpack.c.bf16 %v3909, %v3908
        %v3940 = vpack.c.bf16 %v3911, %v3910
        %v3941 = vpack.c.bf16 %v3913, %v3912
        %v3942 = vpack.c.bf16 %v3915, %v3914
        %v3943 = vpack.c.bf16 %v3917, %v3916
        %v3944 = vpack.c.bf16 %v3919, %v3918
        %v3945 = vpack.c.bf16 %v3921, %v3920
        %v3946 = vpack.c.bf16 %v3923, %v3922
        %v3947 = vpack.c.bf16 %v3925, %v3924
        %v3948 = vpack.c.bf16 %v3927, %v3926
        %v3949 = vpack.c.bf16 %v3929, %v3928
        %v3950 = vpack.c.bf16 %v3931, %v3930
        %v3951 = vpack.c.bf16 %v3933, %v3932
        %v3952 = vpack.c.bf16 %v3935, %v3934
        %v3953 = vpack.c.bf16 %v3937, %v3936
        %v3955 = vshrl.u32 %v3938, 16
        %v3957 = vshll.u32 %v3938, 16
        %v3959 = vrot.slane %v3957, 1
        %v3960 = vor.u32 %v3955, %v3959
        %v3962 = vshll.u32 %v3939, 16
        %v3964 = vrot.slane %v3962, 1
        %v3965 = vsel %vm804, %v3960, %v3964
        %v3966 = vshrl.u32 %v3939, 16
        %v3968 = vor.u32 %v3966, %v3964
        %v3970 = vshll.u32 %v3940, 16
        %v3972 = vrot.slane %v3970, 1
        %v3973 = vsel %vm804, %v3968, %v3972
        %v3974 = vshrl.u32 %v3940, 16
        %v3976 = vor.u32 %v3974, %v3972
        %v3978 = vshll.u32 %v3941, 16
        %v3980 = vrot.slane %v3978, 1
        %v3981 = vsel %vm804, %v3976, %v3980
        %v3982 = vshrl.u32 %v3941, 16
        %v3984 = vor.u32 %v3982, %v3980
        %v3986 = vshll.u32 %v3942, 16
        %v3988 = vrot.slane %v3986, 1
        %v3989 = vsel %vm804, %v3984, %v3988
        %v3990 = vshrl.u32 %v3942, 16
        %v3992 = vor.u32 %v3990, %v3988
        %v3994 = vshll.u32 %v3943, 16
        %v3996 = vrot.slane %v3994, 1
        %v3997 = vsel %vm804, %v3992, %v3996
        %v3998 = vshrl.u32 %v3943, 16
        %v4000 = vor.u32 %v3998, %v3996
        %v4002 = vshll.u32 %v3944, 16
        %v4004 = vrot.slane %v4002, 1
        %v4005 = vsel %vm804, %v4000, %v4004
        %v4006 = vshrl.u32 %v3944, 16
        %v4008 = vor.u32 %v4006, %v4004
        %v4010 = vshll.u32 %v3945, 16
        %v4012 = vrot.slane %v4010, 1
        %v4013 = vsel %vm804, %v4008, %v4012
        %v4014 = vshrl.u32 %v3945, 16
        %v4016 = vor.u32 %v4014, %v4012
        %v4018 = vshll.u32 %v3946, 16
        %v4020 = vrot.slane %v4018, 1
        %v4021 = vsel %vm804, %v4016, %v4020
        %v4022 = vshrl.u32 %v3946, 16
        %v4024 = vor.u32 %v4022, %v4020
        %v4026 = vshll.u32 %v3947, 16
        %v4028 = vrot.slane %v4026, 1
        %v4029 = vsel %vm804, %v4024, %v4028
        %v4030 = vshrl.u32 %v3947, 16
        %v4032 = vor.u32 %v4030, %v4028
        %v4034 = vshll.u32 %v3948, 16
        %v4036 = vrot.slane %v4034, 1
        %v4037 = vsel %vm804, %v4032, %v4036
        %v4038 = vshrl.u32 %v3948, 16
        %v4040 = vor.u32 %v4038, %v4036
        %v4042 = vshll.u32 %v3949, 16
        %v4044 = vrot.slane %v4042, 1
        %v4045 = vsel %vm804, %v4040, %v4044
        %v4046 = vshrl.u32 %v3949, 16
        %v4048 = vor.u32 %v4046, %v4044
        %v4050 = vshll.u32 %v3950, 16
        %v4052 = vrot.slane %v4050, 1
        %v4053 = vsel %vm804, %v4048, %v4052
        %v4054 = vshrl.u32 %v3950, 16
        %v4056 = vor.u32 %v4054, %v4052
        %v4058 = vshll.u32 %v3951, 16
        %v4060 = vrot.slane %v4058, 1
        %v4061 = vsel %vm804, %v4056, %v4060
        %v4062 = vshrl.u32 %v3951, 16
        %v4064 = vor.u32 %v4062, %v4060
        %v4066 = vshll.u32 %v3952, 16
        %v4068 = vrot.slane %v4066, 1
        %v4069 = vsel %vm804, %v4064, %v4068
        %v4070 = vshrl.u32 %v3952, 16
        %v4072 = vor.u32 %v4070, %v4068
        %v4074 = vshll.u32 %v3953, 16
        %v4076 = vrot.slane %v4074, 1
        %v4077 = vsel %vm804, %v4072, %v4076
        %v4078 = vshrl.u32 %v3953, 16
        %v4080 = vor.u32 %v4078, %v4076
        %v4098 = vsel %vm950, %v4080, %v3959
        %v4099 = vrot.slane %v4078, 7
        %v4101 = vrot.slane %v3955, 7
        %v4102 = vor.u32 %v4101, %v3957
        %v4103 = vrot.slane %v3966, 7
        %v4104 = vor.u32 %v4103, %v3962
        %v4105 = vsel %vm954, %v4101, %v4104
        %v4106 = vrot.slane %v3974, 7
        %v4107 = vor.u32 %v4106, %v3970
        %v4108 = vsel %vm954, %v4103, %v4107
        %v4109 = vrot.slane %v3982, 7
        %v4110 = vor.u32 %v4109, %v3978
        %v4111 = vsel %vm954, %v4106, %v4110
        %v4112 = vrot.slane %v3990, 7
        %v4113 = vor.u32 %v4112, %v3986
        %v4114 = vsel %vm954, %v4109, %v4113
        %v4115 = vrot.slane %v3998, 7
        %v4116 = vor.u32 %v4115, %v3994
        %v4117 = vsel %vm954, %v4112, %v4116
        %v4118 = vrot.slane %v4006, 7
        %v4119 = vor.u32 %v4118, %v4002
        %v4120 = vsel %vm954, %v4115, %v4119
        %v4121 = vrot.slane %v4014, 7
        %v4122 = vor.u32 %v4121, %v4010
        %v4123 = vsel %vm954, %v4118, %v4122
        %v4124 = vrot.slane %v4022, 7
        %v4125 = vor.u32 %v4124, %v4018
        %v4126 = vsel %vm954, %v4121, %v4125
        %v4127 = vrot.slane %v4030, 7
        %v4128 = vor.u32 %v4127, %v4026
        %v4129 = vsel %vm954, %v4124, %v4128
        %v4130 = vrot.slane %v4038, 7
        %v4131 = vor.u32 %v4130, %v4034
        %v4132 = vsel %vm954, %v4127, %v4131
        %v4133 = vrot.slane %v4046, 7
        %v4134 = vor.u32 %v4133, %v4042
        %v4135 = vsel %vm954, %v4130, %v4134
        %v4136 = vrot.slane %v4054, 7
        %v4137 = vor.u32 %v4136, %v4050
        %v4138 = vsel %vm954, %v4133, %v4137
        %v4139 = vrot.slane %v4062, 7
        %v4140 = vor.u32 %v4139, %v4058
        %v4141 = vsel %vm954, %v4136, %v4140
        %v4142 = vrot.slane %v4070, 7
        %v4143 = vor.u32 %v4142, %v4066
        %v4144 = vsel %vm954, %v4139, %v4143
        %v4145 = vor.u32 %v4099, %v4074
        %v4146 = vsel %vm954, %v4142, %v4145
        %v4163 = vsel %vm1018, %v4099, %v4102
        %v4164 = vsel %vm1196, %v3965, %v4163
        %v4165 = vsel %vm1197, %v3973, %v4105
        %v4166 = vsel %vm1198, %v3981, %v4108
        %v4167 = vsel %vm1199, %v3989, %v4111
        %v4168 = vsel %vm1200, %v3997, %v4114
        %v4169 = vsel %vm1201, %v4005, %v4117
        %v4170 = vsel %vm1202, %v4013, %v4120
        %v4171 = vsel %vm1203, %v4021, %v4123
        %v4172 = vsel %vm1204, %v4029, %v4126
        %v4173 = vsel %vm1205, %v4037, %v4129
        %v4174 = vsel %vm1206, %v4045, %v4132
        %v4175 = vsel %vm1207, %v4053, %v4135
        %v4176 = vsel %vm1208, %v4061, %v4138
        %v4177 = vsel %vm1209, %v4069, %v4141
        %v4178 = vsel %vm1210, %v4077, %v4144
        %v4179 = vsel %vm1211, %v4098, %v4146
        %v4180 = vsel %vm1404, %v4163, %v3965
        %v4181 = vsel %vm1405, %v4105, %v3973
        %v4182 = vsel %vm1406, %v4108, %v3981
        %v4183 = vsel %vm1407, %v4111, %v3989
        %v4184 = vsel %vm1408, %v4114, %v3997
        %v4185 = vsel %vm1409, %v4117, %v4005
        %v4186 = vsel %vm1410, %v4120, %v4013
        %v4187 = vsel %vm1411, %v4123, %v4021
        %v4188 = vsel %vm1412, %v4126, %v4029
        %v4189 = vsel %vm1413, %v4129, %v4037
        %v4190 = vsel %vm1414, %v4132, %v4045
        %v4191 = vsel %vm1415, %v4135, %v4053
        %v4192 = vsel %vm1416, %v4138, %v4061
        %v4193 = vsel %vm1417, %v4141, %v4069
        %v4194 = vsel %vm1418, %v4144, %v4077
        %v4195 = vsel %vm1419, %v4146, %v4098
        %v4196 = vld [vmem:[#allocation7] sm:$0xf]
        %v4197 = vld [vmem:[#allocation7 + $0x4] sm:$0xf]
        %v4198 = vld [vmem:[#allocation7 + $0x8] sm:$0xf]
        %v4199 = vld [vmem:[#allocation7 + $0xc] sm:$0xf]
        %v4200 = vld [vmem:[#allocation7 + $0x10] sm:$0xf]
        %v4201 = vld [vmem:[#allocation7 + $0x14] sm:$0xf]
        %v4202 = vld [vmem:[#allocation7 + $0x18] sm:$0xf]
        %v4203 = vld [vmem:[#allocation7 + $0x1c] sm:$0xf]
        %v4204 = vld [vmem:[#allocation7 + $0x20] sm:$0xf]
        %v4205 = vld [vmem:[#allocation7 + $0x24] sm:$0xf]
        %v4206 = vld [vmem:[#allocation7 + $0x28] sm:$0xf]
        %v4207 = vld [vmem:[#allocation7 + $0x2c] sm:$0xf]
        %v4208 = vld [vmem:[#allocation7 + $0x30] sm:$0xf]
        %v4209 = vld [vmem:[#allocation7 + $0x34] sm:$0xf]
        %v4210 = vld [vmem:[#allocation7 + $0x38] sm:$0xf]
        %v4211 = vld [vmem:[#allocation7 + $0x3c] sm:$0xf]
        %s4212 = scalar_lea.vmem [#allocation7], 64
        %v4213 = vld [vmem:[%s4212] sm:$0xf]
        %v4214 = vld [vmem:[%s4212 + $0x4] sm:$0xf]
        %v4215 = vld [vmem:[%s4212 + $0x8] sm:$0xf]
        %v4216 = vld [vmem:[%s4212 + $0xc] sm:$0xf]
        %v4217 = vld [vmem:[%s4212 + $0x10] sm:$0xf]
        %v4218 = vld [vmem:[%s4212 + $0x14] sm:$0xf]
        %v4219 = vld [vmem:[%s4212 + $0x18] sm:$0xf]
        %v4220 = vld [vmem:[%s4212 + $0x1c] sm:$0xf]
        %v4221 = vld [vmem:[%s4212 + $0x20] sm:$0xf]
        %v4222 = vld [vmem:[%s4212 + $0x24] sm:$0xf]
        %v4223 = vld [vmem:[%s4212 + $0x28] sm:$0xf]
        %v4224 = vld [vmem:[%s4212 + $0x2c] sm:$0xf]
        %v4225 = vld [vmem:[%s4212 + $0x30] sm:$0xf]
        %v4226 = vld [vmem:[%s4212 + $0x34] sm:$0xf]
        %v4227 = vld [vmem:[%s4212 + $0x38] sm:$0xf]
        %v4228 = vld [vmem:[%s4212 + $0x3c] sm:$0xf]
        %v4245 = vunpack.c.l.b16 %v4213
        %v4246 = vunpack.c.l.b16 %v4214
        %v4247 = vunpack.c.l.b16 %v4215
        %v4248 = vunpack.c.l.b16 %v4216
        %v4249 = vunpack.c.l.b16 %v4217
        %v4250 = vunpack.c.l.b16 %v4218
        %v4251 = vunpack.c.l.b16 %v4219
        %v4252 = vunpack.c.l.b16 %v4220
        %v4253 = vunpack.c.l.b16 %v4221
        %v4254 = vunpack.c.l.b16 %v4222
        %v4255 = vunpack.c.l.b16 %v4223
        %v4256 = vunpack.c.l.b16 %v4224
        %v4257 = vunpack.c.l.b16 %v4225
        %v4258 = vunpack.c.l.b16 %v4226
        %v4259 = vunpack.c.l.b16 %v4227
        %v4260 = vunpack.c.l.b16 %v4228
        %v4261 = vpack.c.b16 %v4246, %v4245
        %v4262 = vpack.c.b16 %v4248, %v4247
        %v4263 = vpack.c.b16 %v4250, %v4249
        %v4264 = vpack.c.b16 %v4252, %v4251
        %v4265 = vpack.c.b16 %v4254, %v4253
        %v4266 = vpack.c.b16 %v4256, %v4255
        %v4267 = vpack.c.b16 %v4258, %v4257
        %v4268 = vpack.c.b16 %v4260, %v4259
        %4277 = vmatprep.subr.bf16.mxu0 0
        %4278 = vmatpush1.bf16.msra.mxu0 %v4268
        %4279 = vmatprep.subr.bf16.mxu0 0
        %4280 = vmatpush1.bf16.msra.mxu0 %v4267
        %4281 = vmatprep.subr.bf16.mxu0 0
        %4282 = vmatpush1.bf16.msra.mxu0 %v4266
        %4283 = vmatprep.subr.bf16.mxu0 0
        %4284 = vmatpush1.bf16.msra.mxu0 %v4265
        %4285 = vmatprep.subr.bf16.mxu0 0
        %4286 = vmatpush1.bf16.msra.mxu0 %v4264
        %4287 = vmatprep.subr.bf16.mxu0 0
        %4288 = vmatpush1.bf16.msra.mxu0 %v4263
        %4289 = vmatprep.subr.bf16.mxu0 0
        %4290 = vmatpush1.bf16.msra.mxu0 %v4262
        %4291 = vmatprep.subr.bf16.mxu0 0
        %4292 = vmatpush1.bf16.msra.mxu0 %v4261
        %4293 = vmatprep.subr.bf16.mxu0 0
        %4294 = vmatpush2.bf16.msra.mxu0 0
        %4295 = vmatprep.subr.bf16.mxu0 0
        %4296 = vmatpush2.bf16.msra.mxu0 0
        %4297 = vmatprep.subr.bf16.mxu0 0
        %4298 = vmatpush2.bf16.msra.mxu0 0
        %4299 = vmatprep.subr.bf16.mxu0 0
        %4300 = vmatpush2.bf16.msra.mxu0 0
        %4301 = vmatprep.subr.bf16.mxu0 0
        %4302 = vmatpush2.bf16.msra.mxu0 0
        %4303 = vmatprep.subr.bf16.mxu0 0
        %4304 = vmatpush2.bf16.msra.mxu0 0
        %4305 = vmatprep.subr.bf16.mxu0 0
        %4306 = vmatpush2.bf16.msra.mxu0 0
        %4307 = vmatprep.subr.bf16.mxu0 0
        %4308 = vmatpush2.bf16.msra.mxu0 0
        %4309 = vmatprep.mubr.bf16.mxu0 0
        %4310 = vmatmul.mubr.bf16.gmra.mxu0 %v3939
        %v4311 = vpop.f32.mrf.mxu0
        %v4312 = vadd.f32 0.0, %v4311
        %v4313 = vpop.f32.mrf.mxu0
        %v4314 = vpop.f32.mrf.mxu0
        %v4315 = vadd.f32 0.0, %v4314
        %v4316 = vpop.f32.mrf.mxu0
        %4317 = vmatprep.mubr.bf16.mxu0 0
        %4318 = vmatmul.mubr.bf16.gmra.mxu0 %v3938
        %v4319 = vpop.f32.mrf.mxu0
        %v4320 = vadd.f32 0.0, %v4319
        %v4321 = vpop.f32.mrf.mxu0
        %v4322 = vpop.f32.mrf.mxu0
        %v4323 = vadd.f32 0.0, %v4322
        %v4324 = vpop.f32.mrf.mxu0
        %4325 = vmatprep.mubr.bf16.mxu0 0
        %4326 = vmatmul.mubr.bf16.gmra.mxu0 %v3939
        %v4327 = vpop.f32.mrf.mxu0
        %v4328 = vadd.f32 0.0, %v4327
        %v4329 = vpop.f32.mrf.mxu0
        %v4330 = vpop.f32.mrf.mxu0
        %v4331 = vadd.f32 0.0, %v4330
        %v4332 = vpop.f32.mrf.mxu0
        %4333 = vmatprep.mubr.bf16.mxu0 0
        %4334 = vmatmul.mubr.bf16.gmra.mxu0 %v3940
        %v4335 = vpop.f32.mrf.mxu0
        %v4336 = vadd.f32 0.0, %v4335
        %v4337 = vpop.f32.mrf.mxu0
        %v4338 = vpop.f32.mrf.mxu0
        %v4339 = vadd.f32 0.0, %v4338
        %v4340 = vpop.f32.mrf.mxu0
        %4341 = vmatprep.mubr.bf16.mxu0 0
        %4342 = vmatmul.mubr.bf16.gmra.mxu0 %v3941
        %v4343 = vpop.f32.mrf.mxu0
        %v4344 = vadd.f32 0.0, %v4343
        %v4345 = vpop.f32.mrf.mxu0
        %v4346 = vpop.f32.mrf.mxu0
        %v4347 = vadd.f32 0.0, %v4346
        %v4348 = vpop.f32.mrf.mxu0
        %4349 = vmatprep.mubr.bf16.mxu0 0
        %4350 = vmatmul.mubr.bf16.gmra.mxu0 %v3942
        %v4351 = vpop.f32.mrf.mxu0
        %v4352 = vadd.f32 0.0, %v4351
        %v4353 = vpop.f32.mrf.mxu0
        %v4354 = vpop.f32.mrf.mxu0
        %v4355 = vadd.f32 0.0, %v4354
        %v4356 = vpop.f32.mrf.mxu0
        %4357 = vmatprep.mubr.bf16.mxu0 0
        %4358 = vmatmul.mubr.bf16.gmra.mxu0 %v3943
        %v4359 = vpop.f32.mrf.mxu0
        %v4360 = vadd.f32 0.0, %v4359
        %v4361 = vpop.f32.mrf.mxu0
        %v4362 = vpop.f32.mrf.mxu0
        %v4363 = vadd.f32 0.0, %v4362
        %v4364 = vpop.f32.mrf.mxu0
        %4365 = vmatprep.mubr.bf16.mxu0 0
        %4366 = vmatmul.mubr.bf16.gmra.mxu0 %v3944
        %v4367 = vpop.f32.mrf.mxu0
        %v4368 = vadd.f32 0.0, %v4367
        %v4369 = vpop.f32.mrf.mxu0
        %v4370 = vpop.f32.mrf.mxu0
        %v4371 = vadd.f32 0.0, %v4370
        %v4372 = vpop.f32.mrf.mxu0
        %4373 = vmatprep.mubr.bf16.mxu0 0
        %4374 = vmatmul.mubr.bf16.gmra.mxu0 %v3945
        %v4375 = vpop.f32.mrf.mxu0
        %v4376 = vadd.f32 0.0, %v4375
        %v4377 = vpop.f32.mrf.mxu0
        %v4378 = vpop.f32.mrf.mxu0
        %v4379 = vadd.f32 0.0, %v4378
        %v4380 = vpop.f32.mrf.mxu0
        %4381 = vmatprep.mubr.bf16.mxu0 0
        %4382 = vmatmul.mubr.bf16.gmra.mxu0 %v3946
        %v4383 = vpop.f32.mrf.mxu0
        %v4384 = vadd.f32 0.0, %v4383
        %v4385 = vpop.f32.mrf.mxu0
        %v4386 = vpop.f32.mrf.mxu0
        %v4387 = vadd.f32 0.0, %v4386
        %v4388 = vpop.f32.mrf.mxu0
        %4389 = vmatprep.mubr.bf16.mxu0 0
        %4390 = vmatmul.mubr.bf16.gmra.mxu0 %v3947
        %v4391 = vpop.f32.mrf.mxu0
        %v4392 = vadd.f32 0.0, %v4391
        %v4393 = vpop.f32.mrf.mxu0
        %v4394 = vpop.f32.mrf.mxu0
        %v4395 = vadd.f32 0.0, %v4394
        %v4396 = vpop.f32.mrf.mxu0
        %4397 = vmatprep.mubr.bf16.mxu0 0
        %4398 = vmatmul.mubr.bf16.gmra.mxu0 %v3948
        %v4399 = vpop.f32.mrf.mxu0
        %v4400 = vadd.f32 0.0, %v4399
        %v4401 = vpop.f32.mrf.mxu0
        %v4402 = vpop.f32.mrf.mxu0
        %v4403 = vadd.f32 0.0, %v4402
        %v4404 = vpop.f32.mrf.mxu0
        %4405 = vmatprep.mubr.bf16.mxu0 0
        %4406 = vmatmul.mubr.bf16.gmra.mxu0 %v3949
        %v4407 = vpop.f32.mrf.mxu0
        %v4408 = vadd.f32 0.0, %v4407
        %v4409 = vpop.f32.mrf.mxu0
        %v4410 = vpop.f32.mrf.mxu0
        %v4411 = vadd.f32 0.0, %v4410
        %v4412 = vpop.f32.mrf.mxu0
        %4413 = vmatprep.mubr.bf16.mxu0 0
        %4414 = vmatmul.mubr.bf16.gmra.mxu0 %v3950
        %v4415 = vpop.f32.mrf.mxu0
        %v4416 = vadd.f32 0.0, %v4415
        %v4417 = vpop.f32.mrf.mxu0
        %v4418 = vpop.f32.mrf.mxu0
        %v4419 = vadd.f32 0.0, %v4418
        %v4420 = vpop.f32.mrf.mxu0
        %4421 = vmatprep.mubr.bf16.mxu0 0
        %4422 = vmatmul.mubr.bf16.gmra.mxu0 %v3951
        %v4423 = vpop.f32.mrf.mxu0
        %v4424 = vadd.f32 0.0, %v4423
        %v4425 = vpop.f32.mrf.mxu0
        %v4426 = vpop.f32.mrf.mxu0
        %v4427 = vadd.f32 0.0, %v4426
        %v4428 = vpop.f32.mrf.mxu0
        %4429 = vmatprep.mubr.bf16.mxu0 0
        %4430 = vmatmul.mubr.bf16.gmra.mxu0 %v3952
        %v4431 = vpop.f32.mrf.mxu0
        %v4432 = vadd.f32 0.0, %v4431
        %v4433 = vpop.f32.mrf.mxu0
        %v4434 = vpop.f32.mrf.mxu0
        %v4435 = vadd.f32 0.0, %v4434
        %v4436 = vpop.f32.mrf.mxu0
        %4437 = vdwg.mxu0
        %v4454 = vunpack.c.l.b16 %v4196
        %v4455 = vunpack.c.l.b16 %v4197
        %v4456 = vunpack.c.l.b16 %v4198
        %v4457 = vunpack.c.l.b16 %v4199
        %v4458 = vunpack.c.l.b16 %v4200
        %v4459 = vunpack.c.l.b16 %v4201
        %v4460 = vunpack.c.l.b16 %v4202
        %v4461 = vunpack.c.l.b16 %v4203
        %v4462 = vunpack.c.l.b16 %v4204
        %v4463 = vunpack.c.l.b16 %v4205
        %v4464 = vunpack.c.l.b16 %v4206
        %v4465 = vunpack.c.l.b16 %v4207
        %v4466 = vunpack.c.l.b16 %v4208
        %v4467 = vunpack.c.l.b16 %v4209
        %v4468 = vunpack.c.l.b16 %v4210
        %v4469 = vunpack.c.l.b16 %v4211
        %v4470 = vpack.c.b16 %v4455, %v4454
        %v4471 = vpack.c.b16 %v4457, %v4456
        %v4472 = vpack.c.b16 %v4459, %v4458
        %v4473 = vpack.c.b16 %v4461, %v4460
        %v4474 = vpack.c.b16 %v4463, %v4462
        %v4475 = vpack.c.b16 %v4465, %v4464
        %v4476 = vpack.c.b16 %v4467, %v4466
        %v4477 = vpack.c.b16 %v4469, %v4468
        %4486 = vmatprep.subr.bf16.mxu0 0
        %4487 = vmatpush1.bf16.msra.mxu0 %v4477
        %4488 = vmatprep.subr.bf16.mxu0 0
        %4489 = vmatpush1.bf16.msra.mxu0 %v4476
        %4490 = vmatprep.subr.bf16.mxu0 0
        %4491 = vmatpush1.bf16.msra.mxu0 %v4475
        %4492 = vmatprep.subr.bf16.mxu0 0
        %4493 = vmatpush1.bf16.msra.mxu0 %v4474
        %4494 = vmatprep.subr.bf16.mxu0 0
        %4495 = vmatpush1.bf16.msra.mxu0 %v4473
        %4496 = vmatprep.subr.bf16.mxu0 0
        %4497 = vmatpush1.bf16.msra.mxu0 %v4472
        %4498 = vmatprep.subr.bf16.mxu0 0
        %4499 = vmatpush1.bf16.msra.mxu0 %v4471
        %4500 = vmatprep.subr.bf16.mxu0 0
        %4501 = vmatpush1.bf16.msra.mxu0 %v4470
        %4502 = vmatprep.subr.bf16.mxu0 0
        %4503 = vmatpush2.bf16.msra.mxu0 0
        %4504 = vmatprep.subr.bf16.mxu0 0
        %4505 = vmatpush2.bf16.msra.mxu0 0
        %4506 = vmatprep.subr.bf16.mxu0 0
        %4507 = vmatpush2.bf16.msra.mxu0 0
        %4508 = vmatprep.subr.bf16.mxu0 0
        %4509 = vmatpush2.bf16.msra.mxu0 0
        %4510 = vmatprep.subr.bf16.mxu0 0
        %4511 = vmatpush2.bf16.msra.mxu0 0
        %4512 = vmatprep.subr.bf16.mxu0 0
        %4513 = vmatpush2.bf16.msra.mxu0 0
        %4514 = vmatprep.subr.bf16.mxu0 0
        %4515 = vmatpush2.bf16.msra.mxu0 0
        %4516 = vmatprep.subr.bf16.mxu0 0
        %4517 = vmatpush2.bf16.msra.mxu0 0
        %4518 = vmatprep.mubr.bf16.mxu0 0
        %4519 = vmatmul.mubr.bf16.gmra.mxu0 %v4165
        %v4520 = vpop.f32.mrf.mxu0
        %v4521 = vadd.f32 %v4312, %v4520
        %v4522 = vpop.f32.mrf.mxu0
        %v4523 = vpop.f32.mrf.mxu0
        %v4524 = vadd.f32 %v4315, %v4523
        %v4525 = vpop.f32.mrf.mxu0
        %4526 = vmatprep.mubr.bf16.mxu0 0
        %4527 = vmatmul.mubr.bf16.gmra.mxu0 %v4164
        %v4528 = vpop.f32.mrf.mxu0
        %v4529 = vadd.f32 %v4320, %v4528
        %v4530 = vpop.f32.mrf.mxu0
        %v4531 = vpop.f32.mrf.mxu0
        %v4532 = vadd.f32 %v4323, %v4531
        %v4533 = vpop.f32.mrf.mxu0
        %4534 = vmatprep.mubr.bf16.mxu0 0
        %4535 = vmatmul.mubr.bf16.gmra.mxu0 %v4165
        %v4536 = vpop.f32.mrf.mxu0
        %v4537 = vadd.f32 %v4328, %v4536
        %v4538 = vpop.f32.mrf.mxu0
        %v4539 = vpop.f32.mrf.mxu0
        %v4540 = vadd.f32 %v4331, %v4539
        %v4541 = vpop.f32.mrf.mxu0
        %4542 = vmatprep.mubr.bf16.mxu0 0
        %4543 = vmatmul.mubr.bf16.gmra.mxu0 %v4166
        %v4544 = vpop.f32.mrf.mxu0
        %v4545 = vadd.f32 %v4336, %v4544
        %v4546 = vpop.f32.mrf.mxu0
        %v4547 = vpop.f32.mrf.mxu0
        %v4548 = vadd.f32 %v4339, %v4547
        %v4549 = vpop.f32.mrf.mxu0
        %4550 = vmatprep.mubr.bf16.mxu0 0
        %4551 = vmatmul.mubr.bf16.gmra.mxu0 %v4167
        %v4552 = vpop.f32.mrf.mxu0
        %v4553 = vadd.f32 %v4344, %v4552
        %v4554 = vpop.f32.mrf.mxu0
        %v4555 = vpop.f32.mrf.mxu0
        %v4556 = vadd.f32 %v4347, %v4555
        %v4557 = vpop.f32.mrf.mxu0
        %4558 = vmatprep.mubr.bf16.mxu0 0
        %4559 = vmatmul.mubr.bf16.gmra.mxu0 %v4168
        %v4560 = vpop.f32.mrf.mxu0
        %v4561 = vadd.f32 %v4352, %v4560
        %v4562 = vpop.f32.mrf.mxu0
        %v4563 = vpop.f32.mrf.mxu0
        %v4564 = vadd.f32 %v4355, %v4563
        %v4565 = vpop.f32.mrf.mxu0
        %4566 = vmatprep.mubr.bf16.mxu0 0
        %4567 = vmatmul.mubr.bf16.gmra.mxu0 %v4169
        %v4568 = vpop.f32.mrf.mxu0
        %v4569 = vadd.f32 %v4360, %v4568
        %v4570 = vpop.f32.mrf.mxu0
        %v4571 = vpop.f32.mrf.mxu0
        %v4572 = vadd.f32 %v4363, %v4571
        %v4573 = vpop.f32.mrf.mxu0
        %4574 = vmatprep.mubr.bf16.mxu0 0
        %4575 = vmatmul.mubr.bf16.gmra.mxu0 %v4170
        %v4576 = vpop.f32.mrf.mxu0
        %v4577 = vadd.f32 %v4368, %v4576
        %v4578 = vpop.f32.mrf.mxu0
        %v4579 = vpop.f32.mrf.mxu0
        %v4580 = vadd.f32 %v4371, %v4579
        %v4581 = vpop.f32.mrf.mxu0
        %4582 = vmatprep.mubr.bf16.mxu0 0
        %4583 = vmatmul.mubr.bf16.gmra.mxu0 %v4171
        %v4584 = vpop.f32.mrf.mxu0
        %v4585 = vadd.f32 %v4376, %v4584
        %v4586 = vpop.f32.mrf.mxu0
        %v4587 = vpop.f32.mrf.mxu0
        %v4588 = vadd.f32 %v4379, %v4587
        %v4589 = vpop.f32.mrf.mxu0
        %4590 = vmatprep.mubr.bf16.mxu0 0
        %4591 = vmatmul.mubr.bf16.gmra.mxu0 %v4172
        %v4592 = vpop.f32.mrf.mxu0
        %v4593 = vadd.f32 %v4384, %v4592
        %v4594 = vpop.f32.mrf.mxu0
        %v4595 = vpop.f32.mrf.mxu0
        %v4596 = vadd.f32 %v4387, %v4595
        %v4597 = vpop.f32.mrf.mxu0
        %4598 = vmatprep.mubr.bf16.mxu0 0
        %4599 = vmatmul.mubr.bf16.gmra.mxu0 %v4173
        %v4600 = vpop.f32.mrf.mxu0
        %v4601 = vadd.f32 %v4392, %v4600
        %v4602 = vpop.f32.mrf.mxu0
        %v4603 = vpop.f32.mrf.mxu0
        %v4604 = vadd.f32 %v4395, %v4603
        %v4605 = vpop.f32.mrf.mxu0
        %4606 = vmatprep.mubr.bf16.mxu0 0
        %4607 = vmatmul.mubr.bf16.gmra.mxu0 %v4174
        %v4608 = vpop.f32.mrf.mxu0
        %v4609 = vadd.f32 %v4400, %v4608
        %v4610 = vpop.f32.mrf.mxu0
        %v4611 = vpop.f32.mrf.mxu0
        %v4612 = vadd.f32 %v4403, %v4611
        %v4613 = vpop.f32.mrf.mxu0
        %4614 = vmatprep.mubr.bf16.mxu0 0
        %4615 = vmatmul.mubr.bf16.gmra.mxu0 %v4175
        %v4616 = vpop.f32.mrf.mxu0
        %v4617 = vadd.f32 %v4408, %v4616
        %v4618 = vpop.f32.mrf.mxu0
        %v4619 = vpop.f32.mrf.mxu0
        %v4620 = vadd.f32 %v4411, %v4619
        %v4621 = vpop.f32.mrf.mxu0
        %4622 = vmatprep.mubr.bf16.mxu0 0
        %4623 = vmatmul.mubr.bf16.gmra.mxu0 %v4176
        %v4624 = vpop.f32.mrf.mxu0
        %v4625 = vadd.f32 %v4416, %v4624
        %v4626 = vpop.f32.mrf.mxu0
        %v4627 = vpop.f32.mrf.mxu0
        %v4628 = vadd.f32 %v4419, %v4627
        %v4629 = vpop.f32.mrf.mxu0
        %4630 = vmatprep.mubr.bf16.mxu0 0
        %4631 = vmatmul.mubr.bf16.gmra.mxu0 %v4177
        %v4632 = vpop.f32.mrf.mxu0
        %v4633 = vadd.f32 %v4424, %v4632
        %v4634 = vpop.f32.mrf.mxu0
        %v4635 = vpop.f32.mrf.mxu0
        %v4636 = vadd.f32 %v4427, %v4635
        %v4637 = vpop.f32.mrf.mxu0
        %4638 = vmatprep.mubr.bf16.mxu0 0
        %4639 = vmatmul.mubr.bf16.gmra.mxu0 %v4178
        %v4640 = vpop.f32.mrf.mxu0
        %v4641 = vadd.f32 %v4432, %v4640
        %v4642 = vpop.f32.mrf.mxu0
        %v4643 = vpop.f32.mrf.mxu0
        %v4644 = vadd.f32 %v4435, %v4643
        %v4645 = vpop.f32.mrf.mxu0
        %4646 = vdwg.mxu0
        %s4647 = scalar_lea.vmem [#allocation7], 128
        %v4648 = vld [vmem:[%s4647] sm:$0xf]
        %v4649 = vld [vmem:[%s4647 + $0x4] sm:$0xf]
        %v4650 = vld [vmem:[%s4647 + $0x8] sm:$0xf]
        %v4651 = vld [vmem:[%s4647 + $0xc] sm:$0xf]
        %v4652 = vld [vmem:[%s4647 + $0x10] sm:$0xf]
        %v4653 = vld [vmem:[%s4647 + $0x14] sm:$0xf]
        %v4654 = vld [vmem:[%s4647 + $0x18] sm:$0xf]
        %v4655 = vld [vmem:[%s4647 + $0x1c] sm:$0xf]
        %v4656 = vld [vmem:[%s4647 + $0x20] sm:$0xf]
        %v4657 = vld [vmem:[%s4647 + $0x24] sm:$0xf]
        %v4658 = vld [vmem:[%s4647 + $0x28] sm:$0xf]
        %v4659 = vld [vmem:[%s4647 + $0x2c] sm:$0xf]
        %v4660 = vld [vmem:[%s4647 + $0x30] sm:$0xf]
        %v4661 = vld [vmem:[%s4647 + $0x34] sm:$0xf]
        %v4662 = vld [vmem:[%s4647 + $0x38] sm:$0xf]
        %v4663 = vld [vmem:[%s4647 + $0x3c] sm:$0xf]
        %v4680 = vunpack.c.l.b16 %v4648
        %v4681 = vunpack.c.l.b16 %v4649
        %v4682 = vunpack.c.l.b16 %v4650
        %v4683 = vunpack.c.l.b16 %v4651
        %v4684 = vunpack.c.l.b16 %v4652
        %v4685 = vunpack.c.l.b16 %v4653
        %v4686 = vunpack.c.l.b16 %v4654
        %v4687 = vunpack.c.l.b16 %v4655
        %v4688 = vunpack.c.l.b16 %v4656
        %v4689 = vunpack.c.l.b16 %v4657
        %v4690 = vunpack.c.l.b16 %v4658
        %v4691 = vunpack.c.l.b16 %v4659
        %v4692 = vunpack.c.l.b16 %v4660
        %v4693 = vunpack.c.l.b16 %v4661
        %v4694 = vunpack.c.l.b16 %v4662
        %v4695 = vunpack.c.l.b16 %v4663
        %v4696 = vpack.c.b16 %v4681, %v4680
        %v4697 = vpack.c.b16 %v4683, %v4682
        %v4698 = vpack.c.b16 %v4685, %v4684
        %v4699 = vpack.c.b16 %v4687, %v4686
        %v4700 = vpack.c.b16 %v4689, %v4688
        %v4701 = vpack.c.b16 %v4691, %v4690
        %v4702 = vpack.c.b16 %v4693, %v4692
        %v4703 = vpack.c.b16 %v4695, %v4694
        %4712 = vmatprep.subr.bf16.mxu0 0
        %4713 = vmatpush1.bf16.msra.mxu0 %v4703
        %4714 = vmatprep.subr.bf16.mxu0 0
        %4715 = vmatpush1.bf16.msra.mxu0 %v4702
        %4716 = vmatprep.subr.bf16.mxu0 0
        %4717 = vmatpush1.bf16.msra.mxu0 %v4701
        %4718 = vmatprep.subr.bf16.mxu0 0
        %4719 = vmatpush1.bf16.msra.mxu0 %v4700
        %4720 = vmatprep.subr.bf16.mxu0 0
        %4721 = vmatpush1.bf16.msra.mxu0 %v4699
        %4722 = vmatprep.subr.bf16.mxu0 0
        %4723 = vmatpush1.bf16.msra.mxu0 %v4698
        %4724 = vmatprep.subr.bf16.mxu0 0
        %4725 = vmatpush1.bf16.msra.mxu0 %v4697
        %4726 = vmatprep.subr.bf16.mxu0 0
        %4727 = vmatpush1.bf16.msra.mxu0 %v4696
        %4728 = vmatprep.subr.bf16.mxu0 0
        %4729 = vmatpush2.bf16.msra.mxu0 0
        %4730 = vmatprep.subr.bf16.mxu0 0
        %4731 = vmatpush2.bf16.msra.mxu0 0
        %4732 = vmatprep.subr.bf16.mxu0 0
        %4733 = vmatpush2.bf16.msra.mxu0 0
        %4734 = vmatprep.subr.bf16.mxu0 0
        %4735 = vmatpush2.bf16.msra.mxu0 0
        %4736 = vmatprep.subr.bf16.mxu0 0
        %4737 = vmatpush2.bf16.msra.mxu0 0
        %4738 = vmatprep.subr.bf16.mxu0 0
        %4739 = vmatpush2.bf16.msra.mxu0 0
        %4740 = vmatprep.subr.bf16.mxu0 0
        %4741 = vmatpush2.bf16.msra.mxu0 0
        %4742 = vmatprep.subr.bf16.mxu0 0
        %4743 = vmatpush2.bf16.msra.mxu0 0
        %4744 = vmatprep.mubr.bf16.mxu0 0
        %4745 = vmatmul.mubr.bf16.gmra.mxu0 %v4181
        %v4746 = vpop.f32.mrf.mxu0
        %v4747 = vadd.f32 0.0, %v4746
        %v4748 = vpop.f32.mrf.mxu0
        %v4749 = vpop.f32.mrf.mxu0
        %v4750 = vadd.f32 0.0, %v4749
        %v4751 = vpop.f32.mrf.mxu0
        %4752 = vmatprep.mubr.bf16.mxu0 0
        %4753 = vmatmul.mubr.bf16.gmra.mxu0 %v4180
        %v4754 = vpop.f32.mrf.mxu0
        %v4755 = vadd.f32 0.0, %v4754
        %v4756 = vpop.f32.mrf.mxu0
        %v4757 = vpop.f32.mrf.mxu0
        %v4758 = vadd.f32 0.0, %v4757
        %v4759 = vpop.f32.mrf.mxu0
        %4760 = vmatprep.mubr.bf16.mxu0 0
        %4761 = vmatmul.mubr.bf16.gmra.mxu0 %v4181
        %v4762 = vpop.f32.mrf.mxu0
        %v4763 = vadd.f32 0.0, %v4762
        %v4764 = vpop.f32.mrf.mxu0
        %v4765 = vpop.f32.mrf.mxu0
        %v4766 = vadd.f32 0.0, %v4765
        %v4767 = vpop.f32.mrf.mxu0
        %4768 = vmatprep.mubr.bf16.mxu0 0
        %4769 = vmatmul.mubr.bf16.gmra.mxu0 %v4182
        %v4770 = vpop.f32.mrf.mxu0
        %v4771 = vadd.f32 0.0, %v4770
        %v4772 = vpop.f32.mrf.mxu0
        %v4773 = vpop.f32.mrf.mxu0
        %v4774 = vadd.f32 0.0, %v4773
        %v4775 = vpop.f32.mrf.mxu0
        %4776 = vmatprep.mubr.bf16.mxu0 0
        %4777 = vmatmul.mubr.bf16.gmra.mxu0 %v4183
        %v4778 = vpop.f32.mrf.mxu0
        %v4779 = vadd.f32 0.0, %v4778
        %v4780 = vpop.f32.mrf.mxu0
        %v4781 = vpop.f32.mrf.mxu0
        %v4782 = vadd.f32 0.0, %v4781
        %v4783 = vpop.f32.mrf.mxu0
        %4784 = vmatprep.mubr.bf16.mxu0 0
        %4785 = vmatmul.mubr.bf16.gmra.mxu0 %v4184
        %v4786 = vpop.f32.mrf.mxu0
        %v4787 = vadd.f32 0.0, %v4786
        %v4788 = vpop.f32.mrf.mxu0
        %v4789 = vpop.f32.mrf.mxu0
        %v4790 = vadd.f32 0.0, %v4789
        %v4791 = vpop.f32.mrf.mxu0
        %4792 = vmatprep.mubr.bf16.mxu0 0
        %4793 = vmatmul.mubr.bf16.gmra.mxu0 %v4185
        %v4794 = vpop.f32.mrf.mxu0
        %v4795 = vadd.f32 0.0, %v4794
        %v4796 = vpop.f32.mrf.mxu0
        %v4797 = vpop.f32.mrf.mxu0
        %v4798 = vadd.f32 0.0, %v4797
        %v4799 = vpop.f32.mrf.mxu0
        %4800 = vmatprep.mubr.bf16.mxu0 0
        %4801 = vmatmul.mubr.bf16.gmra.mxu0 %v4186
        %v4802 = vpop.f32.mrf.mxu0
        %v4803 = vadd.f32 0.0, %v4802
        %v4804 = vpop.f32.mrf.mxu0
        %v4805 = vpop.f32.mrf.mxu0
        %v4806 = vadd.f32 0.0, %v4805
        %v4807 = vpop.f32.mrf.mxu0
        %4808 = vmatprep.mubr.bf16.mxu0 0
        %4809 = vmatmul.mubr.bf16.gmra.mxu0 %v4187
        %v4810 = vpop.f32.mrf.mxu0
        %v4811 = vadd.f32 0.0, %v4810
        %v4812 = vpop.f32.mrf.mxu0
        %v4813 = vpop.f32.mrf.mxu0
        %v4814 = vadd.f32 0.0, %v4813
        %v4815 = vpop.f32.mrf.mxu0
        %4816 = vmatprep.mubr.bf16.mxu0 0
        %4817 = vmatmul.mubr.bf16.gmra.mxu0 %v4188
        %v4818 = vpop.f32.mrf.mxu0
        %v4819 = vadd.f32 0.0, %v4818
        %v4820 = vpop.f32.mrf.mxu0
        %v4821 = vpop.f32.mrf.mxu0
        %v4822 = vadd.f32 0.0, %v4821
        %v4823 = vpop.f32.mrf.mxu0
        %4824 = vmatprep.mubr.bf16.mxu0 0
        %4825 = vmatmul.mubr.bf16.gmra.mxu0 %v4189
        %v4826 = vpop.f32.mrf.mxu0
        %v4827 = vadd.f32 0.0, %v4826
        %v4828 = vpop.f32.mrf.mxu0
        %v4829 = vpop.f32.mrf.mxu0
        %v4830 = vadd.f32 0.0, %v4829
        %v4831 = vpop.f32.mrf.mxu0
        %4832 = vmatprep.mubr.bf16.mxu0 0
        %4833 = vmatmul.mubr.bf16.gmra.mxu0 %v4190
        %v4834 = vpop.f32.mrf.mxu0
        %v4835 = vadd.f32 0.0, %v4834
        %v4836 = vpop.f32.mrf.mxu0
        %v4837 = vpop.f32.mrf.mxu0
        %v4838 = vadd.f32 0.0, %v4837
        %v4839 = vpop.f32.mrf.mxu0
        %4840 = vmatprep.mubr.bf16.mxu0 0
        %4841 = vmatmul.mubr.bf16.gmra.mxu0 %v4191
        %v4842 = vpop.f32.mrf.mxu0
        %v4843 = vadd.f32 0.0, %v4842
        %v4844 = vpop.f32.mrf.mxu0
        %v4845 = vpop.f32.mrf.mxu0
        %v4846 = vadd.f32 0.0, %v4845
        %v4847 = vpop.f32.mrf.mxu0
        %4848 = vmatprep.mubr.bf16.mxu0 0
        %4849 = vmatmul.mubr.bf16.gmra.mxu0 %v4192
        %v4850 = vpop.f32.mrf.mxu0
        %v4851 = vadd.f32 0.0, %v4850
        %v4852 = vpop.f32.mrf.mxu0
        %v4853 = vpop.f32.mrf.mxu0
        %v4854 = vadd.f32 0.0, %v4853
        %v4855 = vpop.f32.mrf.mxu0
        %4856 = vmatprep.mubr.bf16.mxu0 0
        %4857 = vmatmul.mubr.bf16.gmra.mxu0 %v4193
        %v4858 = vpop.f32.mrf.mxu0
        %v4859 = vadd.f32 0.0, %v4858
        %v4860 = vpop.f32.mrf.mxu0
        %v4861 = vpop.f32.mrf.mxu0
        %v4862 = vadd.f32 0.0, %v4861
        %v4863 = vpop.f32.mrf.mxu0
        %4864 = vmatprep.mubr.bf16.mxu0 0
        %4865 = vmatmul.mubr.bf16.gmra.mxu0 %v4194
        %v4866 = vpop.f32.mrf.mxu0
        %v4867 = vadd.f32 0.0, %v4866
        %v4868 = vpop.f32.mrf.mxu0
        %v4869 = vpop.f32.mrf.mxu0
        %v4870 = vadd.f32 0.0, %v4869
        %v4871 = vpop.f32.mrf.mxu0
        %4872 = vdwg.mxu0
        %v4873 = vadd.f32 %v4521, %v4747
        %v4874 = vadd.f32 %v4524, %v4750
        %v4875 = vadd.f32 %v4529, %v4755
        %v4876 = vadd.f32 %v4532, %v4758
        %v4877 = vadd.f32 %v4537, %v4763
        %v4878 = vadd.f32 %v4540, %v4766
        %v4879 = vadd.f32 %v4545, %v4771
        %v4880 = vadd.f32 %v4548, %v4774
        %v4881 = vadd.f32 %v4553, %v4779
        %v4882 = vadd.f32 %v4556, %v4782
        %v4883 = vadd.f32 %v4561, %v4787
        %v4884 = vadd.f32 %v4564, %v4790
        %v4885 = vadd.f32 %v4569, %v4795
        %v4886 = vadd.f32 %v4572, %v4798
        %v4887 = vadd.f32 %v4577, %v4803
        %v4888 = vadd.f32 %v4580, %v4806
        %v4889 = vadd.f32 %v4585, %v4811
        %v4890 = vadd.f32 %v4588, %v4814
        %v4891 = vadd.f32 %v4593, %v4819
        %v4892 = vadd.f32 %v4596, %v4822
        %v4893 = vadd.f32 %v4601, %v4827
        %v4894 = vadd.f32 %v4604, %v4830
        %v4895 = vadd.f32 %v4609, %v4835
        %v4896 = vadd.f32 %v4612, %v4838
        %v4897 = vadd.f32 %v4617, %v4843
        %v4898 = vadd.f32 %v4620, %v4846
        %v4899 = vadd.f32 %v4625, %v4851
        %v4900 = vadd.f32 %v4628, %v4854
        %v4901 = vadd.f32 %v4633, %v4859
        %v4902 = vadd.f32 %v4636, %v4862
        %v4903 = vadd.f32 %v4641, %v4867
        %v4904 = vadd.f32 %v4644, %v4870
        %s4905 = scalar_lea.vmem [#allocation7], 192
        %v4906 = vld [vmem:[%s4905] sm:$0xf]
        %v4907 = vld [vmem:[%s4905 + $0x4] sm:$0xf]
        %v4908 = vld [vmem:[%s4905 + $0x8] sm:$0xf]
        %v4909 = vld [vmem:[%s4905 + $0xc] sm:$0xf]
        %v4910 = vld [vmem:[%s4905 + $0x10] sm:$0xf]
        %v4911 = vld [vmem:[%s4905 + $0x14] sm:$0xf]
        %v4912 = vld [vmem:[%s4905 + $0x18] sm:$0xf]
        %v4913 = vld [vmem:[%s4905 + $0x1c] sm:$0xf]
        %v4914 = vld [vmem:[%s4905 + $0x20] sm:$0xf]
        %v4915 = vld [vmem:[%s4905 + $0x24] sm:$0xf]
        %v4916 = vld [vmem:[%s4905 + $0x28] sm:$0xf]
        %v4917 = vld [vmem:[%s4905 + $0x2c] sm:$0xf]
        %v4918 = vld [vmem:[%s4905 + $0x30] sm:$0xf]
        %v4919 = vld [vmem:[%s4905 + $0x34] sm:$0xf]
        %v4920 = vld [vmem:[%s4905 + $0x38] sm:$0xf]
        %v4921 = vld [vmem:[%s4905 + $0x3c] sm:$0xf]
        %v4938 = vunpack.c.l.b16 %v4906
        %v4939 = vunpack.c.l.b16 %v4907
        %v4940 = vunpack.c.l.b16 %v4908
        %v4941 = vunpack.c.l.b16 %v4909
        %v4942 = vunpack.c.l.b16 %v4910
        %v4943 = vunpack.c.l.b16 %v4911
        %v4944 = vunpack.c.l.b16 %v4912
        %v4945 = vunpack.c.l.b16 %v4913
        %v4946 = vunpack.c.l.b16 %v4914
        %v4947 = vunpack.c.l.b16 %v4915
        %v4948 = vunpack.c.l.b16 %v4916
        %v4949 = vunpack.c.l.b16 %v4917
        %v4950 = vunpack.c.l.b16 %v4918
        %v4951 = vunpack.c.l.b16 %v4919
        %v4952 = vunpack.c.l.b16 %v4920
        %v4953 = vunpack.c.l.b16 %v4921
        %v4954 = vpack.c.b16 %v4939, %v4938
        %v4955 = vpack.c.b16 %v4941, %v4940
        %v4956 = vpack.c.b16 %v4943, %v4942
        %v4957 = vpack.c.b16 %v4945, %v4944
        %v4958 = vpack.c.b16 %v4947, %v4946
        %v4959 = vpack.c.b16 %v4949, %v4948
        %v4960 = vpack.c.b16 %v4951, %v4950
        %v4961 = vpack.c.b16 %v4953, %v4952
        %4970 = vmatprep.subr.bf16.mxu0 0
        %4971 = vmatpush1.bf16.msra.mxu0 %v4961
        %4972 = vmatprep.subr.bf16.mxu0 0
        %4973 = vmatpush1.bf16.msra.mxu0 %v4960
        %4974 = vmatprep.subr.bf16.mxu0 0
        %4975 = vmatpush1.bf16.msra.mxu0 %v4959
        %4976 = vmatprep.subr.bf16.mxu0 0
        %4977 = vmatpush1.bf16.msra.mxu0 %v4958
        %4978 = vmatprep.subr.bf16.mxu0 0
        %4979 = vmatpush1.bf16.msra.mxu0 %v4957
        %4980 = vmatprep.subr.bf16.mxu0 0
        %4981 = vmatpush1.bf16.msra.mxu0 %v4956
        %4982 = vmatprep.subr.bf16.mxu0 0
        %4983 = vmatpush1.bf16.msra.mxu0 %v4955
        %4984 = vmatprep.subr.bf16.mxu0 0
        %4985 = vmatpush1.bf16.msra.mxu0 %v4954
        %4986 = vmatprep.subr.bf16.mxu0 0
        %4987 = vmatpush2.bf16.msra.mxu0 0
        %4988 = vmatprep.subr.bf16.mxu0 0
        %4989 = vmatpush2.bf16.msra.mxu0 0
        %4990 = vmatprep.subr.bf16.mxu0 0
        %4991 = vmatpush2.bf16.msra.mxu0 0
        %4992 = vmatprep.subr.bf16.mxu0 0
        %4993 = vmatpush2.bf16.msra.mxu0 0
        %4994 = vmatprep.subr.bf16.mxu0 0
        %4995 = vmatpush2.bf16.msra.mxu0 0
        %4996 = vmatprep.subr.bf16.mxu0 0
        %4997 = vmatpush2.bf16.msra.mxu0 0
        %4998 = vmatprep.subr.bf16.mxu0 0
        %4999 = vmatpush2.bf16.msra.mxu0 0
        %5000 = vmatprep.subr.bf16.mxu0 0
        %5001 = vmatpush2.bf16.msra.mxu0 0
        %5002 = vmatprep.mubr.bf16.mxu0 0
        %5003 = vmatmul.mubr.bf16.gmra.mxu0 %v4164
        %v5004 = vpop.f32.mrf.mxu0
        %v5005 = vadd.f32 0.0, %v5004
        %v5006 = vpop.f32.mrf.mxu0
        %v5007 = vpop.f32.mrf.mxu0
        %v5008 = vadd.f32 0.0, %v5007
        %v5009 = vpop.f32.mrf.mxu0
        %5010 = vmatprep.mubr.bf16.mxu0 0
        %5011 = vmatmul.mubr.bf16.gmra.mxu0 %v4165
        %v5012 = vpop.f32.mrf.mxu0
        %v5013 = vadd.f32 0.0, %v5012
        %v5014 = vpop.f32.mrf.mxu0
        %v5015 = vpop.f32.mrf.mxu0
        %v5016 = vadd.f32 0.0, %v5015
        %v5017 = vpop.f32.mrf.mxu0
        %5018 = vmatprep.mubr.bf16.mxu0 0
        %5019 = vmatmul.mubr.bf16.gmra.mxu0 %v4166
        %v5020 = vpop.f32.mrf.mxu0
        %v5021 = vadd.f32 0.0, %v5020
        %v5022 = vpop.f32.mrf.mxu0
        %v5023 = vpop.f32.mrf.mxu0
        %v5024 = vadd.f32 0.0, %v5023
        %v5025 = vpop.f32.mrf.mxu0
        %5026 = vmatprep.mubr.bf16.mxu0 0
        %5027 = vmatmul.mubr.bf16.gmra.mxu0 %v4167
        %v5028 = vpop.f32.mrf.mxu0
        %v5029 = vadd.f32 0.0, %v5028
        %v5030 = vpop.f32.mrf.mxu0
        %v5031 = vpop.f32.mrf.mxu0
        %v5032 = vadd.f32 0.0, %v5031
        %v5033 = vpop.f32.mrf.mxu0
        %5034 = vmatprep.mubr.bf16.mxu0 0
        %5035 = vmatmul.mubr.bf16.gmra.mxu0 %v4168
        %v5036 = vpop.f32.mrf.mxu0
        %v5037 = vadd.f32 0.0, %v5036
        %v5038 = vpop.f32.mrf.mxu0
        %v5039 = vpop.f32.mrf.mxu0
        %v5040 = vadd.f32 0.0, %v5039
        %v5041 = vpop.f32.mrf.mxu0
        %5042 = vmatprep.mubr.bf16.mxu0 0
        %5043 = vmatmul.mubr.bf16.gmra.mxu0 %v4169
        %v5044 = vpop.f32.mrf.mxu0
        %v5045 = vadd.f32 0.0, %v5044
        %v5046 = vpop.f32.mrf.mxu0
        %v5047 = vpop.f32.mrf.mxu0
        %v5048 = vadd.f32 0.0, %v5047
        %v5049 = vpop.f32.mrf.mxu0
        %5050 = vmatprep.mubr.bf16.mxu0 0
        %5051 = vmatmul.mubr.bf16.gmra.mxu0 %v4170
        %v5052 = vpop.f32.mrf.mxu0
        %v5053 = vadd.f32 0.0, %v5052
        %v5054 = vpop.f32.mrf.mxu0
        %v5055 = vpop.f32.mrf.mxu0
        %v5056 = vadd.f32 0.0, %v5055
        %v5057 = vpop.f32.mrf.mxu0
        %5058 = vmatprep.mubr.bf16.mxu0 0
        %5059 = vmatmul.mubr.bf16.gmra.mxu0 %v4171
        %v5060 = vpop.f32.mrf.mxu0
        %v5061 = vadd.f32 0.0, %v5060
        %v5062 = vpop.f32.mrf.mxu0
        %v5063 = vpop.f32.mrf.mxu0
        %v5064 = vadd.f32 0.0, %v5063
        %v5065 = vpop.f32.mrf.mxu0
        %5066 = vmatprep.mubr.bf16.mxu0 0
        %5067 = vmatmul.mubr.bf16.gmra.mxu0 %v4172
        %v5068 = vpop.f32.mrf.mxu0
        %v5069 = vadd.f32 0.0, %v5068
        %v5070 = vpop.f32.mrf.mxu0
        %v5071 = vpop.f32.mrf.mxu0
        %v5072 = vadd.f32 0.0, %v5071
        %v5073 = vpop.f32.mrf.mxu0
        %5074 = vmatprep.mubr.bf16.mxu0 0
        %5075 = vmatmul.mubr.bf16.gmra.mxu0 %v4173
        %v5076 = vpop.f32.mrf.mxu0
        %v5077 = vadd.f32 0.0, %v5076
        %v5078 = vpop.f32.mrf.mxu0
        %v5079 = vpop.f32.mrf.mxu0
        %v5080 = vadd.f32 0.0, %v5079
        %v5081 = vpop.f32.mrf.mxu0
        %5082 = vmatprep.mubr.bf16.mxu0 0
        %5083 = vmatmul.mubr.bf16.gmra.mxu0 %v4174
        %v5084 = vpop.f32.mrf.mxu0
        %v5085 = vadd.f32 0.0, %v5084
        %v5086 = vpop.f32.mrf.mxu0
        %v5087 = vpop.f32.mrf.mxu0
        %v5088 = vadd.f32 0.0, %v5087
        %v5089 = vpop.f32.mrf.mxu0
        %5090 = vmatprep.mubr.bf16.mxu0 0
        %5091 = vmatmul.mubr.bf16.gmra.mxu0 %v4175
        %v5092 = vpop.f32.mrf.mxu0
        %v5093 = vadd.f32 0.0, %v5092
        %v5094 = vpop.f32.mrf.mxu0
        %v5095 = vpop.f32.mrf.mxu0
        %v5096 = vadd.f32 0.0, %v5095
        %v5097 = vpop.f32.mrf.mxu0
        %5098 = vmatprep.mubr.bf16.mxu0 0
        %5099 = vmatmul.mubr.bf16.gmra.mxu0 %v4176
        %v5100 = vpop.f32.mrf.mxu0
        %v5101 = vadd.f32 0.0, %v5100
        %v5102 = vpop.f32.mrf.mxu0
        %v5103 = vpop.f32.mrf.mxu0
        %v5104 = vadd.f32 0.0, %v5103
        %v5105 = vpop.f32.mrf.mxu0
        %5106 = vmatprep.mubr.bf16.mxu0 0
        %5107 = vmatmul.mubr.bf16.gmra.mxu0 %v4177
        %v5108 = vpop.f32.mrf.mxu0
        %v5109 = vadd.f32 0.0, %v5108
        %v5110 = vpop.f32.mrf.mxu0
        %v5111 = vpop.f32.mrf.mxu0
        %v5112 = vadd.f32 0.0, %v5111
        %v5113 = vpop.f32.mrf.mxu0
        %5114 = vmatprep.mubr.bf16.mxu0 0
        %5115 = vmatmul.mubr.bf16.gmra.mxu0 %v4178
        %v5116 = vpop.f32.mrf.mxu0
        %v5117 = vadd.f32 0.0, %v5116
        %v5118 = vpop.f32.mrf.mxu0
        %v5119 = vpop.f32.mrf.mxu0
        %v5120 = vadd.f32 0.0, %v5119
        %v5121 = vpop.f32.mrf.mxu0
        %5122 = vmatprep.mubr.bf16.mxu0 0
        %5123 = vmatmul.mubr.bf16.gmra.mxu0 %v4179
        %v5124 = vpop.f32.mrf.mxu0
        %v5125 = vadd.f32 0.0, %v5124
        %v5126 = vpop.f32.mrf.mxu0
        %v5127 = vpop.f32.mrf.mxu0
        %v5128 = vadd.f32 0.0, %v5127
        %v5129 = vpop.f32.mrf.mxu0
        %5130 = vdwg.mxu0
        %v5131 = vadd.f32 %v4873, %v5005
        %v5132 = vadd.f32 %v4874, %v5008
        %v5133 = vadd.f32 %v4875, %v5013
        %v5134 = vadd.f32 %v4876, %v5016
        %v5135 = vadd.f32 %v4877, %v5021
        %v5136 = vadd.f32 %v4878, %v5024
        %v5137 = vadd.f32 %v4879, %v5029
        %v5138 = vadd.f32 %v4880, %v5032
        %v5139 = vadd.f32 %v4881, %v5037
        %v5140 = vadd.f32 %v4882, %v5040
        %v5141 = vadd.f32 %v4883, %v5045
        %v5142 = vadd.f32 %v4884, %v5048
        %v5143 = vadd.f32 %v4885, %v5053
        %v5144 = vadd.f32 %v4886, %v5056
        %v5145 = vadd.f32 %v4887, %v5061
        %v5146 = vadd.f32 %v4888, %v5064
        %v5147 = vadd.f32 %v4889, %v5069
        %v5148 = vadd.f32 %v4890, %v5072
        %v5149 = vadd.f32 %v4891, %v5077
        %v5150 = vadd.f32 %v4892, %v5080
        %v5151 = vadd.f32 %v4893, %v5085
        %v5152 = vadd.f32 %v4894, %v5088
        %v5153 = vadd.f32 %v4895, %v5093
        %v5154 = vadd.f32 %v4896, %v5096
        %v5155 = vadd.f32 %v4897, %v5101
        %v5156 = vadd.f32 %v4898, %v5104
        %v5157 = vadd.f32 %v4899, %v5109
        %v5158 = vadd.f32 %v4900, %v5112
        %v5159 = vadd.f32 %v4901, %v5117
        %v5160 = vadd.f32 %v4902, %v5120
        %v5161 = vadd.f32 %v4903, %v5125
        %v5162 = vadd.f32 %v4904, %v5128
        %s5163 = scalar_lea.vmem [#allocation7], 256
        %v5164 = vld [vmem:[%s5163] sm:$0xf]
        %v5165 = vld [vmem:[%s5163 + $0x4] sm:$0xf]
        %v5166 = vld [vmem:[%s5163 + $0x8] sm:$0xf]
        %v5167 = vld [vmem:[%s5163 + $0xc] sm:$0xf]
        %v5168 = vld [vmem:[%s5163 + $0x10] sm:$0xf]
        %v5169 = vld [vmem:[%s5163 + $0x14] sm:$0xf]
        %v5170 = vld [vmem:[%s5163 + $0x18] sm:$0xf]
        %v5171 = vld [vmem:[%s5163 + $0x1c] sm:$0xf]
        %v5172 = vld [vmem:[%s5163 + $0x20] sm:$0xf]
        %v5173 = vld [vmem:[%s5163 + $0x24] sm:$0xf]
        %v5174 = vld [vmem:[%s5163 + $0x28] sm:$0xf]
        %v5175 = vld [vmem:[%s5163 + $0x2c] sm:$0xf]
        %v5176 = vld [vmem:[%s5163 + $0x30] sm:$0xf]
        %v5177 = vld [vmem:[%s5163 + $0x34] sm:$0xf]
        %v5178 = vld [vmem:[%s5163 + $0x38] sm:$0xf]
        %v5179 = vld [vmem:[%s5163 + $0x3c] sm:$0xf]
        %v5196 = vunpack.c.l.b16 %v5164
        %v5197 = vunpack.c.l.b16 %v5165
        %v5198 = vunpack.c.l.b16 %v5166
        %v5199 = vunpack.c.l.b16 %v5167
        %v5200 = vunpack.c.l.b16 %v5168
        %v5201 = vunpack.c.l.b16 %v5169
        %v5202 = vunpack.c.l.b16 %v5170
        %v5203 = vunpack.c.l.b16 %v5171
        %v5204 = vunpack.c.l.b16 %v5172
        %v5205 = vunpack.c.l.b16 %v5173
        %v5206 = vunpack.c.l.b16 %v5174
        %v5207 = vunpack.c.l.b16 %v5175
        %v5208 = vunpack.c.l.b16 %v5176
        %v5209 = vunpack.c.l.b16 %v5177
        %v5210 = vunpack.c.l.b16 %v5178
        %v5211 = vunpack.c.l.b16 %v5179
        %v5212 = vpack.c.b16 %v5197, %v5196
        %v5213 = vpack.c.b16 %v5199, %v5198
        %v5214 = vpack.c.b16 %v5201, %v5200
        %v5215 = vpack.c.b16 %v5203, %v5202
        %v5216 = vpack.c.b16 %v5205, %v5204
        %v5217 = vpack.c.b16 %v5207, %v5206
        %v5218 = vpack.c.b16 %v5209, %v5208
        %v5219 = vpack.c.b16 %v5211, %v5210
        %5228 = vmatprep.subr.bf16.mxu0 0
        %5229 = vmatpush1.bf16.msra.mxu0 %v5219
        %5230 = vmatprep.subr.bf16.mxu0 0
        %5231 = vmatpush1.bf16.msra.mxu0 %v5218
        %5232 = vmatprep.subr.bf16.mxu0 0
        %5233 = vmatpush1.bf16.msra.mxu0 %v5217
        %5234 = vmatprep.subr.bf16.mxu0 0
        %5235 = vmatpush1.bf16.msra.mxu0 %v5216
        %5236 = vmatprep.subr.bf16.mxu0 0
        %5237 = vmatpush1.bf16.msra.mxu0 %v5215
        %5238 = vmatprep.subr.bf16.mxu0 0
        %5239 = vmatpush1.bf16.msra.mxu0 %v5214
        %5240 = vmatprep.subr.bf16.mxu0 0
        %5241 = vmatpush1.bf16.msra.mxu0 %v5213
        %5242 = vmatprep.subr.bf16.mxu0 0
        %5243 = vmatpush1.bf16.msra.mxu0 %v5212
        %5244 = vmatprep.subr.bf16.mxu0 0
        %5245 = vmatpush2.bf16.msra.mxu0 0
        %5246 = vmatprep.subr.bf16.mxu0 0
        %5247 = vmatpush2.bf16.msra.mxu0 0
        %5248 = vmatprep.subr.bf16.mxu0 0
        %5249 = vmatpush2.bf16.msra.mxu0 0
        %5250 = vmatprep.subr.bf16.mxu0 0
        %5251 = vmatpush2.bf16.msra.mxu0 0
        %5252 = vmatprep.subr.bf16.mxu0 0
        %5253 = vmatpush2.bf16.msra.mxu0 0
        %5254 = vmatprep.subr.bf16.mxu0 0
        %5255 = vmatpush2.bf16.msra.mxu0 0
        %5256 = vmatprep.subr.bf16.mxu0 0
        %5257 = vmatpush2.bf16.msra.mxu0 0
        %5258 = vmatprep.subr.bf16.mxu0 0
        %5259 = vmatpush2.bf16.msra.mxu0 0
        %5260 = vmatprep.mubr.bf16.mxu0 0
        %5261 = vmatmul.mubr.bf16.gmra.mxu0 %v3938
        %v5262 = vpop.f32.mrf.mxu0
        %v5263 = vadd.f32 0.0, %v5262
        %v5264 = vpop.f32.mrf.mxu0
        %v5265 = vpop.f32.mrf.mxu0
        %v5266 = vadd.f32 0.0, %v5265
        %v5267 = vpop.f32.mrf.mxu0
        %5268 = vmatprep.mubr.bf16.mxu0 0
        %5269 = vmatmul.mubr.bf16.gmra.mxu0 %v3939
        %v5270 = vpop.f32.mrf.mxu0
        %v5271 = vadd.f32 0.0, %v5270
        %v5272 = vpop.f32.mrf.mxu0
        %v5273 = vpop.f32.mrf.mxu0
        %v5274 = vadd.f32 0.0, %v5273
        %v5275 = vpop.f32.mrf.mxu0
        %5276 = vmatprep.mubr.bf16.mxu0 0
        %5277 = vmatmul.mubr.bf16.gmra.mxu0 %v3940
        %v5278 = vpop.f32.mrf.mxu0
        %v5279 = vadd.f32 0.0, %v5278
        %v5280 = vpop.f32.mrf.mxu0
        %v5281 = vpop.f32.mrf.mxu0
        %v5282 = vadd.f32 0.0, %v5281
        %v5283 = vpop.f32.mrf.mxu0
        %5284 = vmatprep.mubr.bf16.mxu0 0
        %5285 = vmatmul.mubr.bf16.gmra.mxu0 %v3941
        %v5286 = vpop.f32.mrf.mxu0
        %v5287 = vadd.f32 0.0, %v5286
        %v5288 = vpop.f32.mrf.mxu0
        %v5289 = vpop.f32.mrf.mxu0
        %v5290 = vadd.f32 0.0, %v5289
        %v5291 = vpop.f32.mrf.mxu0
        %5292 = vmatprep.mubr.bf16.mxu0 0
        %5293 = vmatmul.mubr.bf16.gmra.mxu0 %v3942
        %v5294 = vpop.f32.mrf.mxu0
        %v5295 = vadd.f32 0.0, %v5294
        %v5296 = vpop.f32.mrf.mxu0
        %v5297 = vpop.f32.mrf.mxu0
        %v5298 = vadd.f32 0.0, %v5297
        %v5299 = vpop.f32.mrf.mxu0
        %5300 = vmatprep.mubr.bf16.mxu0 0
        %5301 = vmatmul.mubr.bf16.gmra.mxu0 %v3943
        %v5302 = vpop.f32.mrf.mxu0
        %v5303 = vadd.f32 0.0, %v5302
        %v5304 = vpop.f32.mrf.mxu0
        %v5305 = vpop.f32.mrf.mxu0
        %v5306 = vadd.f32 0.0, %v5305
        %v5307 = vpop.f32.mrf.mxu0
        %5308 = vmatprep.mubr.bf16.mxu0 0
        %5309 = vmatmul.mubr.bf16.gmra.mxu0 %v3944
        %v5310 = vpop.f32.mrf.mxu0
        %v5311 = vadd.f32 0.0, %v5310
        %v5312 = vpop.f32.mrf.mxu0
        %v5313 = vpop.f32.mrf.mxu0
        %v5314 = vadd.f32 0.0, %v5313
        %v5315 = vpop.f32.mrf.mxu0
        %5316 = vmatprep.mubr.bf16.mxu0 0
        %5317 = vmatmul.mubr.bf16.gmra.mxu0 %v3945
        %v5318 = vpop.f32.mrf.mxu0
        %v5319 = vadd.f32 0.0, %v5318
        %v5320 = vpop.f32.mrf.mxu0
        %v5321 = vpop.f32.mrf.mxu0
        %v5322 = vadd.f32 0.0, %v5321
        %v5323 = vpop.f32.mrf.mxu0
        %5324 = vmatprep.mubr.bf16.mxu0 0
        %5325 = vmatmul.mubr.bf16.gmra.mxu0 %v3946
        %v5326 = vpop.f32.mrf.mxu0
        %v5327 = vadd.f32 0.0, %v5326
        %v5328 = vpop.f32.mrf.mxu0
        %v5329 = vpop.f32.mrf.mxu0
        %v5330 = vadd.f32 0.0, %v5329
        %v5331 = vpop.f32.mrf.mxu0
        %5332 = vmatprep.mubr.bf16.mxu0 0
        %5333 = vmatmul.mubr.bf16.gmra.mxu0 %v3947
        %v5334 = vpop.f32.mrf.mxu0
        %v5335 = vadd.f32 0.0, %v5334
        %v5336 = vpop.f32.mrf.mxu0
        %v5337 = vpop.f32.mrf.mxu0
        %v5338 = vadd.f32 0.0, %v5337
        %v5339 = vpop.f32.mrf.mxu0
        %5340 = vmatprep.mubr.bf16.mxu0 0
        %5341 = vmatmul.mubr.bf16.gmra.mxu0 %v3948
        %v5342 = vpop.f32.mrf.mxu0
        %v5343 = vadd.f32 0.0, %v5342
        %v5344 = vpop.f32.mrf.mxu0
        %v5345 = vpop.f32.mrf.mxu0
        %v5346 = vadd.f32 0.0, %v5345
        %v5347 = vpop.f32.mrf.mxu0
        %5348 = vmatprep.mubr.bf16.mxu0 0
        %5349 = vmatmul.mubr.bf16.gmra.mxu0 %v3949
        %v5350 = vpop.f32.mrf.mxu0
        %v5351 = vadd.f32 0.0, %v5350
        %v5352 = vpop.f32.mrf.mxu0
        %v5353 = vpop.f32.mrf.mxu0
        %v5354 = vadd.f32 0.0, %v5353
        %v5355 = vpop.f32.mrf.mxu0
        %5356 = vmatprep.mubr.bf16.mxu0 0
        %5357 = vmatmul.mubr.bf16.gmra.mxu0 %v3950
        %v5358 = vpop.f32.mrf.mxu0
        %v5359 = vadd.f32 0.0, %v5358
        %v5360 = vpop.f32.mrf.mxu0
        %v5361 = vpop.f32.mrf.mxu0
        %v5362 = vadd.f32 0.0, %v5361
        %v5363 = vpop.f32.mrf.mxu0
        %5364 = vmatprep.mubr.bf16.mxu0 0
        %5365 = vmatmul.mubr.bf16.gmra.mxu0 %v3951
        %v5366 = vpop.f32.mrf.mxu0
        %v5367 = vadd.f32 0.0, %v5366
        %v5368 = vpop.f32.mrf.mxu0
        %v5369 = vpop.f32.mrf.mxu0
        %v5370 = vadd.f32 0.0, %v5369
        %v5371 = vpop.f32.mrf.mxu0
        %5372 = vmatprep.mubr.bf16.mxu0 0
        %5373 = vmatmul.mubr.bf16.gmra.mxu0 %v3952
        %v5374 = vpop.f32.mrf.mxu0
        %v5375 = vadd.f32 0.0, %v5374
        %v5376 = vpop.f32.mrf.mxu0
        %v5377 = vpop.f32.mrf.mxu0
        %v5378 = vadd.f32 0.0, %v5377
        %v5379 = vpop.f32.mrf.mxu0
        %5380 = vmatprep.mubr.bf16.mxu0 0
        %5381 = vmatmul.mubr.bf16.gmra.mxu0 %v3953
        %v5382 = vpop.f32.mrf.mxu0
        %v5383 = vadd.f32 0.0, %v5382
        %v5384 = vpop.f32.mrf.mxu0
        %v5385 = vpop.f32.mrf.mxu0
        %v5386 = vadd.f32 0.0, %v5385
        %v5387 = vpop.f32.mrf.mxu0
        %5388 = vdwg.mxu0
        %v5389 = vadd.f32 %v5131, %v5263
        %v5390 = vadd.f32 %v5132, %v5266
        %v5391 = vadd.f32 %v5133, %v5271
        %v5392 = vadd.f32 %v5134, %v5274
        %v5393 = vadd.f32 %v5135, %v5279
        %v5394 = vadd.f32 %v5136, %v5282
        %v5395 = vadd.f32 %v5137, %v5287
        %v5396 = vadd.f32 %v5138, %v5290
        %v5397 = vadd.f32 %v5139, %v5295
        %v5398 = vadd.f32 %v5140, %v5298
        %v5399 = vadd.f32 %v5141, %v5303
        %v5400 = vadd.f32 %v5142, %v5306
        %v5401 = vadd.f32 %v5143, %v5311
        %v5402 = vadd.f32 %v5144, %v5314
        %v5403 = vadd.f32 %v5145, %v5319
        %v5404 = vadd.f32 %v5146, %v5322
        %v5405 = vadd.f32 %v5147, %v5327
        %v5406 = vadd.f32 %v5148, %v5330
        %v5407 = vadd.f32 %v5149, %v5335
        %v5408 = vadd.f32 %v5150, %v5338
        %v5409 = vadd.f32 %v5151, %v5343
        %v5410 = vadd.f32 %v5152, %v5346
        %v5411 = vadd.f32 %v5153, %v5351
        %v5412 = vadd.f32 %v5154, %v5354
        %v5413 = vadd.f32 %v5155, %v5359
        %v5414 = vadd.f32 %v5156, %v5362
        %v5415 = vadd.f32 %v5157, %v5367
        %v5416 = vadd.f32 %v5158, %v5370
        %v5417 = vadd.f32 %v5159, %v5375
        %v5418 = vadd.f32 %v5160, %v5378
        %v5419 = vadd.f32 %v5161, %v5383
        %v5420 = vadd.f32 %v5162, %v5386
        %s5421 = scalar_lea.vmem [#allocation7], 320
        %v5422 = vld [vmem:[%s5421] sm:$0xf]
        %v5423 = vld [vmem:[%s5421 + $0x4] sm:$0xf]
        %v5424 = vld [vmem:[%s5421 + $0x8] sm:$0xf]
        %v5425 = vld [vmem:[%s5421 + $0xc] sm:$0xf]
        %v5426 = vld [vmem:[%s5421 + $0x10] sm:$0xf]
        %v5427 = vld [vmem:[%s5421 + $0x14] sm:$0xf]
        %v5428 = vld [vmem:[%s5421 + $0x18] sm:$0xf]
        %v5429 = vld [vmem:[%s5421 + $0x1c] sm:$0xf]
        %v5430 = vld [vmem:[%s5421 + $0x20] sm:$0xf]
        %v5431 = vld [vmem:[%s5421 + $0x24] sm:$0xf]
        %v5432 = vld [vmem:[%s5421 + $0x28] sm:$0xf]
        %v5433 = vld [vmem:[%s5421 + $0x2c] sm:$0xf]
        %v5434 = vld [vmem:[%s5421 + $0x30] sm:$0xf]
        %v5435 = vld [vmem:[%s5421 + $0x34] sm:$0xf]
        %v5436 = vld [vmem:[%s5421 + $0x38] sm:$0xf]
        %v5437 = vld [vmem:[%s5421 + $0x3c] sm:$0xf]
        %v5454 = vunpack.c.l.b16 %v5422
        %v5455 = vunpack.c.l.b16 %v5423
        %v5456 = vunpack.c.l.b16 %v5424
        %v5457 = vunpack.c.l.b16 %v5425
        %v5458 = vunpack.c.l.b16 %v5426
        %v5459 = vunpack.c.l.b16 %v5427
        %v5460 = vunpack.c.l.b16 %v5428
        %v5461 = vunpack.c.l.b16 %v5429
        %v5462 = vunpack.c.l.b16 %v5430
        %v5463 = vunpack.c.l.b16 %v5431
        %v5464 = vunpack.c.l.b16 %v5432
        %v5465 = vunpack.c.l.b16 %v5433
        %v5466 = vunpack.c.l.b16 %v5434
        %v5467 = vunpack.c.l.b16 %v5435
        %v5468 = vunpack.c.l.b16 %v5436
        %v5469 = vunpack.c.l.b16 %v5437
        %v5470 = vpack.c.b16 %v5455, %v5454
        %v5471 = vpack.c.b16 %v5457, %v5456
        %v5472 = vpack.c.b16 %v5459, %v5458
        %v5473 = vpack.c.b16 %v5461, %v5460
        %v5474 = vpack.c.b16 %v5463, %v5462
        %v5475 = vpack.c.b16 %v5465, %v5464
        %v5476 = vpack.c.b16 %v5467, %v5466
        %v5477 = vpack.c.b16 %v5469, %v5468
        %5486 = vmatprep.subr.bf16.mxu0 0
        %5487 = vmatpush1.bf16.msra.mxu0 %v5477
        %5488 = vmatprep.subr.bf16.mxu0 0
        %5489 = vmatpush1.bf16.msra.mxu0 %v5476
        %5490 = vmatprep.subr.bf16.mxu0 0
        %5491 = vmatpush1.bf16.msra.mxu0 %v5475
        %5492 = vmatprep.subr.bf16.mxu0 0
        %5493 = vmatpush1.bf16.msra.mxu0 %v5474
        %5494 = vmatprep.subr.bf16.mxu0 0
        %5495 = vmatpush1.bf16.msra.mxu0 %v5473
        %5496 = vmatprep.subr.bf16.mxu0 0
        %5497 = vmatpush1.bf16.msra.mxu0 %v5472
        %5498 = vmatprep.subr.bf16.mxu0 0
        %5499 = vmatpush1.bf16.msra.mxu0 %v5471
        %5500 = vmatprep.subr.bf16.mxu0 0
        %5501 = vmatpush1.bf16.msra.mxu0 %v5470
        %5502 = vmatprep.subr.bf16.mxu0 0
        %5503 = vmatpush2.bf16.msra.mxu0 0
        %5504 = vmatprep.subr.bf16.mxu0 0
        %5505 = vmatpush2.bf16.msra.mxu0 0
        %5506 = vmatprep.subr.bf16.mxu0 0
        %5507 = vmatpush2.bf16.msra.mxu0 0
        %5508 = vmatprep.subr.bf16.mxu0 0
        %5509 = vmatpush2.bf16.msra.mxu0 0
        %5510 = vmatprep.subr.bf16.mxu0 0
        %5511 = vmatpush2.bf16.msra.mxu0 0
        %5512 = vmatprep.subr.bf16.mxu0 0
        %5513 = vmatpush2.bf16.msra.mxu0 0
        %5514 = vmatprep.subr.bf16.mxu0 0
        %5515 = vmatpush2.bf16.msra.mxu0 0
        %5516 = vmatprep.subr.bf16.mxu0 0
        %5517 = vmatpush2.bf16.msra.mxu0 0
        %5518 = vmatprep.mubr.bf16.mxu0 0
        %5519 = vmatmul.mubr.bf16.gmra.mxu0 %v4180
        %v5520 = vpop.f32.mrf.mxu0
        %v5521 = vadd.f32 0.0, %v5520
        %v5522 = vpop.f32.mrf.mxu0
        %v5523 = vpop.f32.mrf.mxu0
        %v5524 = vadd.f32 0.0, %v5523
        %v5525 = vpop.f32.mrf.mxu0
        %5526 = vmatprep.mubr.bf16.mxu0 0
        %5527 = vmatmul.mubr.bf16.gmra.mxu0 %v4181
        %v5528 = vpop.f32.mrf.mxu0
        %v5529 = vadd.f32 0.0, %v5528
        %v5530 = vpop.f32.mrf.mxu0
        %v5531 = vpop.f32.mrf.mxu0
        %v5532 = vadd.f32 0.0, %v5531
        %v5533 = vpop.f32.mrf.mxu0
        %5534 = vmatprep.mubr.bf16.mxu0 0
        %5535 = vmatmul.mubr.bf16.gmra.mxu0 %v4182
        %v5536 = vpop.f32.mrf.mxu0
        %v5537 = vadd.f32 0.0, %v5536
        %v5538 = vpop.f32.mrf.mxu0
        %v5539 = vpop.f32.mrf.mxu0
        %v5540 = vadd.f32 0.0, %v5539
        %v5541 = vpop.f32.mrf.mxu0
        %5542 = vmatprep.mubr.bf16.mxu0 0
        %5543 = vmatmul.mubr.bf16.gmra.mxu0 %v4183
        %v5544 = vpop.f32.mrf.mxu0
        %v5545 = vadd.f32 0.0, %v5544
        %v5546 = vpop.f32.mrf.mxu0
        %v5547 = vpop.f32.mrf.mxu0
        %v5548 = vadd.f32 0.0, %v5547
        %v5549 = vpop.f32.mrf.mxu0
        %5550 = vmatprep.mubr.bf16.mxu0 0
        %5551 = vmatmul.mubr.bf16.gmra.mxu0 %v4184
        %v5552 = vpop.f32.mrf.mxu0
        %v5553 = vadd.f32 0.0, %v5552
        %v5554 = vpop.f32.mrf.mxu0
        %v5555 = vpop.f32.mrf.mxu0
        %v5556 = vadd.f32 0.0, %v5555
        %v5557 = vpop.f32.mrf.mxu0
        %5558 = vmatprep.mubr.bf16.mxu0 0
        %5559 = vmatmul.mubr.bf16.gmra.mxu0 %v4185
        %v5560 = vpop.f32.mrf.mxu0
        %v5561 = vadd.f32 0.0, %v5560
        %v5562 = vpop.f32.mrf.mxu0
        %v5563 = vpop.f32.mrf.mxu0
        %v5564 = vadd.f32 0.0, %v5563
        %v5565 = vpop.f32.mrf.mxu0
        %5566 = vmatprep.mubr.bf16.mxu0 0
        %5567 = vmatmul.mubr.bf16.gmra.mxu0 %v4186
        %v5568 = vpop.f32.mrf.mxu0
        %v5569 = vadd.f32 0.0, %v5568
        %v5570 = vpop.f32.mrf.mxu0
        %v5571 = vpop.f32.mrf.mxu0
        %v5572 = vadd.f32 0.0, %v5571
        %v5573 = vpop.f32.mrf.mxu0
        %5574 = vmatprep.mubr.bf16.mxu0 0
        %5575 = vmatmul.mubr.bf16.gmra.mxu0 %v4187
        %v5576 = vpop.f32.mrf.mxu0
        %v5577 = vadd.f32 0.0, %v5576
        %v5578 = vpop.f32.mrf.mxu0
        %v5579 = vpop.f32.mrf.mxu0
        %v5580 = vadd.f32 0.0, %v5579
        %v5581 = vpop.f32.mrf.mxu0
        %5582 = vmatprep.mubr.bf16.mxu0 0
        %5583 = vmatmul.mubr.bf16.gmra.mxu0 %v4188
        %v5584 = vpop.f32.mrf.mxu0
        %v5585 = vadd.f32 0.0, %v5584
        %v5586 = vpop.f32.mrf.mxu0
        %v5587 = vpop.f32.mrf.mxu0
        %v5588 = vadd.f32 0.0, %v5587
        %v5589 = vpop.f32.mrf.mxu0
        %5590 = vmatprep.mubr.bf16.mxu0 0
        %5591 = vmatmul.mubr.bf16.gmra.mxu0 %v4189
        %v5592 = vpop.f32.mrf.mxu0
        %v5593 = vadd.f32 0.0, %v5592
        %v5594 = vpop.f32.mrf.mxu0
        %v5595 = vpop.f32.mrf.mxu0
        %v5596 = vadd.f32 0.0, %v5595
        %v5597 = vpop.f32.mrf.mxu0
        %5598 = vmatprep.mubr.bf16.mxu0 0
        %5599 = vmatmul.mubr.bf16.gmra.mxu0 %v4190
        %v5600 = vpop.f32.mrf.mxu0
        %v5601 = vadd.f32 0.0, %v5600
        %v5602 = vpop.f32.mrf.mxu0
        %v5603 = vpop.f32.mrf.mxu0
        %v5604 = vadd.f32 0.0, %v5603
        %v5605 = vpop.f32.mrf.mxu0
        %5606 = vmatprep.mubr.bf16.mxu0 0
        %5607 = vmatmul.mubr.bf16.gmra.mxu0 %v4191
        %v5608 = vpop.f32.mrf.mxu0
        %v5609 = vadd.f32 0.0, %v5608
        %v5610 = vpop.f32.mrf.mxu0
        %v5611 = vpop.f32.mrf.mxu0
        %v5612 = vadd.f32 0.0, %v5611
        %v5613 = vpop.f32.mrf.mxu0
        %5614 = vmatprep.mubr.bf16.mxu0 0
        %5615 = vmatmul.mubr.bf16.gmra.mxu0 %v4192
        %v5616 = vpop.f32.mrf.mxu0
        %v5617 = vadd.f32 0.0, %v5616
        %v5618 = vpop.f32.mrf.mxu0
        %v5619 = vpop.f32.mrf.mxu0
        %v5620 = vadd.f32 0.0, %v5619
        %v5621 = vpop.f32.mrf.mxu0
        %5622 = vmatprep.mubr.bf16.mxu0 0
        %5623 = vmatmul.mubr.bf16.gmra.mxu0 %v4193
        %v5624 = vpop.f32.mrf.mxu0
        %v5625 = vadd.f32 0.0, %v5624
        %v5626 = vpop.f32.mrf.mxu0
        %v5627 = vpop.f32.mrf.mxu0
        %v5628 = vadd.f32 0.0, %v5627
        %v5629 = vpop.f32.mrf.mxu0
        %5630 = vmatprep.mubr.bf16.mxu0 0
        %5631 = vmatmul.mubr.bf16.gmra.mxu0 %v4194
        %v5632 = vpop.f32.mrf.mxu0
        %v5633 = vadd.f32 0.0, %v5632
        %v5634 = vpop.f32.mrf.mxu0
        %v5635 = vpop.f32.mrf.mxu0
        %v5636 = vadd.f32 0.0, %v5635
        %v5637 = vpop.f32.mrf.mxu0
        %5638 = vmatprep.mubr.bf16.mxu0 0
        %5639 = vmatmul.mubr.bf16.gmra.mxu0 %v4195
        %v5640 = vpop.f32.mrf.mxu0
        %v5641 = vadd.f32 0.0, %v5640
        %v5642 = vpop.f32.mrf.mxu0
        %v5643 = vpop.f32.mrf.mxu0
        %v5644 = vadd.f32 0.0, %v5643
        %v5645 = vpop.f32.mrf.mxu0
        %5646 = vdwg.mxu0
        %v5647 = vadd.f32 %v5389, %v5521
        %v5648 = vadd.f32 %v5390, %v5524
        %v5649 = vadd.f32 %v5391, %v5529
        %v5650 = vadd.f32 %v5392, %v5532
        %v5651 = vadd.f32 %v5393, %v5537
        %v5652 = vadd.f32 %v5394, %v5540
        %v5653 = vadd.f32 %v5395, %v5545
        %v5654 = vadd.f32 %v5396, %v5548
        %v5655 = vadd.f32 %v5397, %v5553
        %v5656 = vadd.f32 %v5398, %v5556
        %v5657 = vadd.f32 %v5399, %v5561
        %v5658 = vadd.f32 %v5400, %v5564
        %v5659 = vadd.f32 %v5401, %v5569
        %v5660 = vadd.f32 %v5402, %v5572
        %v5661 = vadd.f32 %v5403, %v5577
        %v5662 = vadd.f32 %v5404, %v5580
        %v5663 = vadd.f32 %v5405, %v5585
        %v5664 = vadd.f32 %v5406, %v5588
        %v5665 = vadd.f32 %v5407, %v5593
        %v5666 = vadd.f32 %v5408, %v5596
        %v5667 = vadd.f32 %v5409, %v5601
        %v5668 = vadd.f32 %v5410, %v5604
        %v5669 = vadd.f32 %v5411, %v5609
        %v5670 = vadd.f32 %v5412, %v5612
        %v5671 = vadd.f32 %v5413, %v5617
        %v5672 = vadd.f32 %v5414, %v5620
        %v5673 = vadd.f32 %v5415, %v5625
        %v5674 = vadd.f32 %v5416, %v5628
        %v5675 = vadd.f32 %v5417, %v5633
        %v5676 = vadd.f32 %v5418, %v5636
        %v5677 = vadd.f32 %v5419, %v5641
        %v5678 = vadd.f32 %v5420, %v5644
        %s5679 = scalar_lea.vmem [#allocation7], 384
        %v5680 = vld [vmem:[%s5679] sm:$0xf]
        %v5681 = vld [vmem:[%s5679 + $0x4] sm:$0xf]
        %v5682 = vld [vmem:[%s5679 + $0x8] sm:$0xf]
        %v5683 = vld [vmem:[%s5679 + $0xc] sm:$0xf]
        %v5684 = vld [vmem:[%s5679 + $0x10] sm:$0xf]
        %v5685 = vld [vmem:[%s5679 + $0x14] sm:$0xf]
        %v5686 = vld [vmem:[%s5679 + $0x18] sm:$0xf]
        %v5687 = vld [vmem:[%s5679 + $0x1c] sm:$0xf]
        %v5688 = vld [vmem:[%s5679 + $0x20] sm:$0xf]
        %v5689 = vld [vmem:[%s5679 + $0x24] sm:$0xf]
        %v5690 = vld [vmem:[%s5679 + $0x28] sm:$0xf]
        %v5691 = vld [vmem:[%s5679 + $0x2c] sm:$0xf]
        %v5692 = vld [vmem:[%s5679 + $0x30] sm:$0xf]
        %v5693 = vld [vmem:[%s5679 + $0x34] sm:$0xf]
        %v5694 = vld [vmem:[%s5679 + $0x38] sm:$0xf]
        %v5695 = vld [vmem:[%s5679 + $0x3c] sm:$0xf]
        %v5712 = vunpack.c.l.b16 %v5680
        %v5713 = vunpack.c.l.b16 %v5681
        %v5714 = vunpack.c.l.b16 %v5682
        %v5715 = vunpack.c.l.b16 %v5683
        %v5716 = vunpack.c.l.b16 %v5684
        %v5717 = vunpack.c.l.b16 %v5685
        %v5718 = vunpack.c.l.b16 %v5686
        %v5719 = vunpack.c.l.b16 %v5687
        %v5720 = vunpack.c.l.b16 %v5688
        %v5721 = vunpack.c.l.b16 %v5689
        %v5722 = vunpack.c.l.b16 %v5690
        %v5723 = vunpack.c.l.b16 %v5691
        %v5724 = vunpack.c.l.b16 %v5692
        %v5725 = vunpack.c.l.b16 %v5693
        %v5726 = vunpack.c.l.b16 %v5694
        %v5727 = vunpack.c.l.b16 %v5695
        %v5728 = vpack.c.b16 %v5713, %v5712
        %v5729 = vpack.c.b16 %v5715, %v5714
        %v5730 = vpack.c.b16 %v5717, %v5716
        %v5731 = vpack.c.b16 %v5719, %v5718
        %v5732 = vpack.c.b16 %v5721, %v5720
        %v5733 = vpack.c.b16 %v5723, %v5722
        %v5734 = vpack.c.b16 %v5725, %v5724
        %v5735 = vpack.c.b16 %v5727, %v5726
        %5744 = vmatprep.subr.bf16.mxu0 0
        %5745 = vmatpush1.bf16.msra.mxu0 %v5735
        %5746 = vmatprep.subr.bf16.mxu0 0
        %5747 = vmatpush1.bf16.msra.mxu0 %v5734
        %5748 = vmatprep.subr.bf16.mxu0 0
        %5749 = vmatpush1.bf16.msra.mxu0 %v5733
        %5750 = vmatprep.subr.bf16.mxu0 0
        %5751 = vmatpush1.bf16.msra.mxu0 %v5732
        %5752 = vmatprep.subr.bf16.mxu0 0
        %5753 = vmatpush1.bf16.msra.mxu0 %v5731
        %5754 = vmatprep.subr.bf16.mxu0 0
        %5755 = vmatpush1.bf16.msra.mxu0 %v5730
        %5756 = vmatprep.subr.bf16.mxu0 0
        %5757 = vmatpush1.bf16.msra.mxu0 %v5729
        %5758 = vmatprep.subr.bf16.mxu0 0
        %5759 = vmatpush1.bf16.msra.mxu0 %v5728
        %5760 = vmatprep.subr.bf16.mxu0 0
        %5761 = vmatpush2.bf16.msra.mxu0 0
        %5762 = vmatprep.subr.bf16.mxu0 0
        %5763 = vmatpush2.bf16.msra.mxu0 0
        %5764 = vmatprep.subr.bf16.mxu0 0
        %5765 = vmatpush2.bf16.msra.mxu0 0
        %5766 = vmatprep.subr.bf16.mxu0 0
        %5767 = vmatpush2.bf16.msra.mxu0 0
        %5768 = vmatprep.subr.bf16.mxu0 0
        %5769 = vmatpush2.bf16.msra.mxu0 0
        %5770 = vmatprep.subr.bf16.mxu0 0
        %5771 = vmatpush2.bf16.msra.mxu0 0
        %5772 = vmatprep.subr.bf16.mxu0 0
        %5773 = vmatpush2.bf16.msra.mxu0 0
        %5774 = vmatprep.subr.bf16.mxu0 0
        %5775 = vmatpush2.bf16.msra.mxu0 0
        %5776 = vmatprep.mubr.bf16.mxu0 0
        %5777 = vmatmul.mubr.bf16.gmra.mxu0 %v4165
        %v5778 = vpop.f32.mrf.mxu0
        %v5779 = vadd.f32 0.0, %v5778
        %v5780 = vpop.f32.mrf.mxu0
        %v5781 = vpop.f32.mrf.mxu0
        %v5782 = vadd.f32 0.0, %v5781
        %v5783 = vpop.f32.mrf.mxu0
        %5784 = vmatprep.mubr.bf16.mxu0 0
        %5785 = vmatmul.mubr.bf16.gmra.mxu0 %v4166
        %v5786 = vpop.f32.mrf.mxu0
        %v5787 = vadd.f32 0.0, %v5786
        %v5788 = vpop.f32.mrf.mxu0
        %v5789 = vpop.f32.mrf.mxu0
        %v5790 = vadd.f32 0.0, %v5789
        %v5791 = vpop.f32.mrf.mxu0
        %5792 = vmatprep.mubr.bf16.mxu0 0
        %5793 = vmatmul.mubr.bf16.gmra.mxu0 %v4167
        %v5794 = vpop.f32.mrf.mxu0
        %v5795 = vadd.f32 0.0, %v5794
        %v5796 = vpop.f32.mrf.mxu0
        %v5797 = vpop.f32.mrf.mxu0
        %v5798 = vadd.f32 0.0, %v5797
        %v5799 = vpop.f32.mrf.mxu0
        %5800 = vmatprep.mubr.bf16.mxu0 0
        %5801 = vmatmul.mubr.bf16.gmra.mxu0 %v4168
        %v5802 = vpop.f32.mrf.mxu0
        %v5803 = vadd.f32 0.0, %v5802
        %v5804 = vpop.f32.mrf.mxu0
        %v5805 = vpop.f32.mrf.mxu0
        %v5806 = vadd.f32 0.0, %v5805
        %v5807 = vpop.f32.mrf.mxu0
        %5808 = vmatprep.mubr.bf16.mxu0 0
        %5809 = vmatmul.mubr.bf16.gmra.mxu0 %v4169
        %v5810 = vpop.f32.mrf.mxu0
        %v5811 = vadd.f32 0.0, %v5810
        %v5812 = vpop.f32.mrf.mxu0
        %v5813 = vpop.f32.mrf.mxu0
        %v5814 = vadd.f32 0.0, %v5813
        %v5815 = vpop.f32.mrf.mxu0
        %5816 = vmatprep.mubr.bf16.mxu0 0
        %5817 = vmatmul.mubr.bf16.gmra.mxu0 %v4170
        %v5818 = vpop.f32.mrf.mxu0
        %v5819 = vadd.f32 0.0, %v5818
        %v5820 = vpop.f32.mrf.mxu0
        %v5821 = vpop.f32.mrf.mxu0
        %v5822 = vadd.f32 0.0, %v5821
        %v5823 = vpop.f32.mrf.mxu0
        %5824 = vmatprep.mubr.bf16.mxu0 0
        %5825 = vmatmul.mubr.bf16.gmra.mxu0 %v4171
        %v5826 = vpop.f32.mrf.mxu0
        %v5827 = vadd.f32 0.0, %v5826
        %v5828 = vpop.f32.mrf.mxu0
        %v5829 = vpop.f32.mrf.mxu0
        %v5830 = vadd.f32 0.0, %v5829
        %v5831 = vpop.f32.mrf.mxu0
        %5832 = vmatprep.mubr.bf16.mxu0 0
        %5833 = vmatmul.mubr.bf16.gmra.mxu0 %v4172
        %v5834 = vpop.f32.mrf.mxu0
        %v5835 = vadd.f32 0.0, %v5834
        %v5836 = vpop.f32.mrf.mxu0
        %v5837 = vpop.f32.mrf.mxu0
        %v5838 = vadd.f32 0.0, %v5837
        %v5839 = vpop.f32.mrf.mxu0
        %5840 = vmatprep.mubr.bf16.mxu0 0
        %5841 = vmatmul.mubr.bf16.gmra.mxu0 %v4173
        %v5842 = vpop.f32.mrf.mxu0
        %v5843 = vadd.f32 0.0, %v5842
        %v5844 = vpop.f32.mrf.mxu0
        %v5845 = vpop.f32.mrf.mxu0
        %v5846 = vadd.f32 0.0, %v5845
        %v5847 = vpop.f32.mrf.mxu0
        %5848 = vmatprep.mubr.bf16.mxu0 0
        %5849 = vmatmul.mubr.bf16.gmra.mxu0 %v4174
        %v5850 = vpop.f32.mrf.mxu0
        %v5851 = vadd.f32 0.0, %v5850
        %v5852 = vpop.f32.mrf.mxu0
        %v5853 = vpop.f32.mrf.mxu0
        %v5854 = vadd.f32 0.0, %v5853
        %v5855 = vpop.f32.mrf.mxu0
        %5856 = vmatprep.mubr.bf16.mxu0 0
        %5857 = vmatmul.mubr.bf16.gmra.mxu0 %v4175
        %v5858 = vpop.f32.mrf.mxu0
        %v5859 = vadd.f32 0.0, %v5858
        %v5860 = vpop.f32.mrf.mxu0
        %v5861 = vpop.f32.mrf.mxu0
        %v5862 = vadd.f32 0.0, %v5861
        %v5863 = vpop.f32.mrf.mxu0
        %5864 = vmatprep.mubr.bf16.mxu0 0
        %5865 = vmatmul.mubr.bf16.gmra.mxu0 %v4176
        %v5866 = vpop.f32.mrf.mxu0
        %v5867 = vadd.f32 0.0, %v5866
        %v5868 = vpop.f32.mrf.mxu0
        %v5869 = vpop.f32.mrf.mxu0
        %v5870 = vadd.f32 0.0, %v5869
        %v5871 = vpop.f32.mrf.mxu0
        %5872 = vmatprep.mubr.bf16.mxu0 0
        %5873 = vmatmul.mubr.bf16.gmra.mxu0 %v4177
        %v5874 = vpop.f32.mrf.mxu0
        %v5875 = vadd.f32 0.0, %v5874
        %v5876 = vpop.f32.mrf.mxu0
        %v5877 = vpop.f32.mrf.mxu0
        %v5878 = vadd.f32 0.0, %v5877
        %v5879 = vpop.f32.mrf.mxu0
        %5880 = vmatprep.mubr.bf16.mxu0 0
        %5881 = vmatmul.mubr.bf16.gmra.mxu0 %v4178
        %v5882 = vpop.f32.mrf.mxu0
        %v5883 = vadd.f32 0.0, %v5882
        %v5884 = vpop.f32.mrf.mxu0
        %v5885 = vpop.f32.mrf.mxu0
        %v5886 = vadd.f32 0.0, %v5885
        %v5887 = vpop.f32.mrf.mxu0
        %5888 = vmatprep.mubr.bf16.mxu0 0
        %5889 = vmatmul.mubr.bf16.gmra.mxu0 %v4179
        %v5890 = vpop.f32.mrf.mxu0
        %v5891 = vadd.f32 0.0, %v5890
        %v5892 = vpop.f32.mrf.mxu0
        %v5893 = vpop.f32.mrf.mxu0
        %v5894 = vadd.f32 0.0, %v5893
        %v5895 = vpop.f32.mrf.mxu0
        %5896 = vmatprep.mubr.bf16.mxu0 0
        %5897 = vmatmul.mubr.bf16.gmra.mxu0 %v4178
        %v5898 = vpop.f32.mrf.mxu0
        %v5899 = vadd.f32 0.0, %v5898
        %v5900 = vpop.f32.mrf.mxu0
        %v5901 = vpop.f32.mrf.mxu0
        %v5902 = vadd.f32 0.0, %v5901
        %v5903 = vpop.f32.mrf.mxu0
        %5904 = vdwg.mxu0
        %v5905 = vadd.f32 %v5647, %v5779
        %v5906 = vadd.f32 %v5648, %v5782
        %v5907 = vadd.f32 %v5649, %v5787
        %v5908 = vadd.f32 %v5650, %v5790
        %v5909 = vadd.f32 %v5651, %v5795
        %v5910 = vadd.f32 %v5652, %v5798
        %v5911 = vadd.f32 %v5653, %v5803
        %v5912 = vadd.f32 %v5654, %v5806
        %v5913 = vadd.f32 %v5655, %v5811
        %v5914 = vadd.f32 %v5656, %v5814
        %v5915 = vadd.f32 %v5657, %v5819
        %v5916 = vadd.f32 %v5658, %v5822
        %v5917 = vadd.f32 %v5659, %v5827
        %v5918 = vadd.f32 %v5660, %v5830
        %v5919 = vadd.f32 %v5661, %v5835
        %v5920 = vadd.f32 %v5662, %v5838
        %v5921 = vadd.f32 %v5663, %v5843
        %v5922 = vadd.f32 %v5664, %v5846
        %v5923 = vadd.f32 %v5665, %v5851
        %v5924 = vadd.f32 %v5666, %v5854
        %v5925 = vadd.f32 %v5667, %v5859
        %v5926 = vadd.f32 %v5668, %v5862
        %v5927 = vadd.f32 %v5669, %v5867
        %v5928 = vadd.f32 %v5670, %v5870
        %v5929 = vadd.f32 %v5671, %v5875
        %v5930 = vadd.f32 %v5672, %v5878
        %v5931 = vadd.f32 %v5673, %v5883
        %v5932 = vadd.f32 %v5674, %v5886
        %v5933 = vadd.f32 %v5675, %v5891
        %v5934 = vadd.f32 %v5676, %v5894
        %v5935 = vadd.f32 %v5677, %v5899
        %v5936 = vadd.f32 %v5678, %v5902
        %s5937 = scalar_lea.vmem [#allocation7], 448
        %v5938 = vld [vmem:[%s5937] sm:$0xf]
        %v5939 = vld [vmem:[%s5937 + $0x4] sm:$0xf]
        %v5940 = vld [vmem:[%s5937 + $0x8] sm:$0xf]
        %v5941 = vld [vmem:[%s5937 + $0xc] sm:$0xf]
        %v5942 = vld [vmem:[%s5937 + $0x10] sm:$0xf]
        %v5943 = vld [vmem:[%s5937 + $0x14] sm:$0xf]
        %v5944 = vld [vmem:[%s5937 + $0x18] sm:$0xf]
        %v5945 = vld [vmem:[%s5937 + $0x1c] sm:$0xf]
        %v5946 = vld [vmem:[%s5937 + $0x20] sm:$0xf]
        %v5947 = vld [vmem:[%s5937 + $0x24] sm:$0xf]
        %v5948 = vld [vmem:[%s5937 + $0x28] sm:$0xf]
        %v5949 = vld [vmem:[%s5937 + $0x2c] sm:$0xf]
        %v5950 = vld [vmem:[%s5937 + $0x30] sm:$0xf]
        %v5951 = vld [vmem:[%s5937 + $0x34] sm:$0xf]
        %v5952 = vld [vmem:[%s5937 + $0x38] sm:$0xf]
        %v5953 = vld [vmem:[%s5937 + $0x3c] sm:$0xf]
        %v5970 = vunpack.c.l.b16 %v5938
        %v5971 = vunpack.c.l.b16 %v5939
        %v5972 = vunpack.c.l.b16 %v5940
        %v5973 = vunpack.c.l.b16 %v5941
        %v5974 = vunpack.c.l.b16 %v5942
        %v5975 = vunpack.c.l.b16 %v5943
        %v5976 = vunpack.c.l.b16 %v5944
        %v5977 = vunpack.c.l.b16 %v5945
        %v5978 = vunpack.c.l.b16 %v5946
        %v5979 = vunpack.c.l.b16 %v5947
        %v5980 = vunpack.c.l.b16 %v5948
        %v5981 = vunpack.c.l.b16 %v5949
        %v5982 = vunpack.c.l.b16 %v5950
        %v5983 = vunpack.c.l.b16 %v5951
        %v5984 = vunpack.c.l.b16 %v5952
        %v5985 = vunpack.c.l.b16 %v5953
        %v5986 = vpack.c.b16 %v5971, %v5970
        %v5987 = vpack.c.b16 %v5973, %v5972
        %v5988 = vpack.c.b16 %v5975, %v5974
        %v5989 = vpack.c.b16 %v5977, %v5976
        %v5990 = vpack.c.b16 %v5979, %v5978
        %v5991 = vpack.c.b16 %v5981, %v5980
        %v5992 = vpack.c.b16 %v5983, %v5982
        %v5993 = vpack.c.b16 %v5985, %v5984
        %6002 = vmatprep.subr.bf16.mxu0 0
        %6003 = vmatpush1.bf16.msra.mxu0 %v5993
        %6004 = vmatprep.subr.bf16.mxu0 0
        %6005 = vmatpush1.bf16.msra.mxu0 %v5992
        %6006 = vmatprep.subr.bf16.mxu0 0
        %6007 = vmatpush1.bf16.msra.mxu0 %v5991
        %6008 = vmatprep.subr.bf16.mxu0 0
        %6009 = vmatpush1.bf16.msra.mxu0 %v5990
        %6010 = vmatprep.subr.bf16.mxu0 0
        %6011 = vmatpush1.bf16.msra.mxu0 %v5989
        %6012 = vmatprep.subr.bf16.mxu0 0
        %6013 = vmatpush1.bf16.msra.mxu0 %v5988
        %6014 = vmatprep.subr.bf16.mxu0 0
        %6015 = vmatpush1.bf16.msra.mxu0 %v5987
        %6016 = vmatprep.subr.bf16.mxu0 0
        %6017 = vmatpush1.bf16.msra.mxu0 %v5986
        %6018 = vmatprep.subr.bf16.mxu0 0
        %6019 = vmatpush2.bf16.msra.mxu0 0
        %6020 = vmatprep.subr.bf16.mxu0 0
        %6021 = vmatpush2.bf16.msra.mxu0 0
        %6022 = vmatprep.subr.bf16.mxu0 0
        %6023 = vmatpush2.bf16.msra.mxu0 0
        %6024 = vmatprep.subr.bf16.mxu0 0
        %6025 = vmatpush2.bf16.msra.mxu0 0
        %6026 = vmatprep.subr.bf16.mxu0 0
        %6027 = vmatpush2.bf16.msra.mxu0 0
        %6028 = vmatprep.subr.bf16.mxu0 0
        %6029 = vmatpush2.bf16.msra.mxu0 0
        %6030 = vmatprep.subr.bf16.mxu0 0
        %6031 = vmatpush2.bf16.msra.mxu0 0
        %6032 = vmatprep.subr.bf16.mxu0 0
        %6033 = vmatpush2.bf16.msra.mxu0 0
        %6034 = vmatprep.mubr.bf16.mxu0 0
        %6035 = vmatmul.mubr.bf16.gmra.mxu0 %v3939
        %v6036 = vpop.f32.mrf.mxu0
        %v6037 = vadd.f32 0.0, %v6036
        %v6038 = vpop.f32.mrf.mxu0
        %v6039 = vpop.f32.mrf.mxu0
        %v6040 = vadd.f32 0.0, %v6039
        %v6041 = vpop.f32.mrf.mxu0
        %6042 = vmatprep.mubr.bf16.mxu0 0
        %6043 = vmatmul.mubr.bf16.gmra.mxu0 %v3940
        %v6044 = vpop.f32.mrf.mxu0
        %v6045 = vadd.f32 0.0, %v6044
        %v6046 = vpop.f32.mrf.mxu0
        %v6047 = vpop.f32.mrf.mxu0
        %v6048 = vadd.f32 0.0, %v6047
        %v6049 = vpop.f32.mrf.mxu0
        %6050 = vmatprep.mubr.bf16.mxu0 0
        %6051 = vmatmul.mubr.bf16.gmra.mxu0 %v3941
        %v6052 = vpop.f32.mrf.mxu0
        %v6053 = vadd.f32 0.0, %v6052
        %v6054 = vpop.f32.mrf.mxu0
        %v6055 = vpop.f32.mrf.mxu0
        %v6056 = vadd.f32 0.0, %v6055
        %v6057 = vpop.f32.mrf.mxu0
        %6058 = vmatprep.mubr.bf16.mxu0 0
        %6059 = vmatmul.mubr.bf16.gmra.mxu0 %v3942
        %v6060 = vpop.f32.mrf.mxu0
        %v6061 = vadd.f32 0.0, %v6060
        %v6062 = vpop.f32.mrf.mxu0
        %v6063 = vpop.f32.mrf.mxu0
        %v6064 = vadd.f32 0.0, %v6063
        %v6065 = vpop.f32.mrf.mxu0
        %6066 = vmatprep.mubr.bf16.mxu0 0
        %6067 = vmatmul.mubr.bf16.gmra.mxu0 %v3943
        %v6068 = vpop.f32.mrf.mxu0
        %v6069 = vadd.f32 0.0, %v6068
        %v6070 = vpop.f32.mrf.mxu0
        %v6071 = vpop.f32.mrf.mxu0
        %v6072 = vadd.f32 0.0, %v6071
        %v6073 = vpop.f32.mrf.mxu0
        %6074 = vmatprep.mubr.bf16.mxu0 0
        %6075 = vmatmul.mubr.bf16.gmra.mxu0 %v3944
        %v6076 = vpop.f32.mrf.mxu0
        %v6077 = vadd.f32 0.0, %v6076
        %v6078 = vpop.f32.mrf.mxu0
        %v6079 = vpop.f32.mrf.mxu0
        %v6080 = vadd.f32 0.0, %v6079
        %v6081 = vpop.f32.mrf.mxu0
        %6082 = vmatprep.mubr.bf16.mxu0 0
        %6083 = vmatmul.mubr.bf16.gmra.mxu0 %v3945
        %v6084 = vpop.f32.mrf.mxu0
        %v6085 = vadd.f32 0.0, %v6084
        %v6086 = vpop.f32.mrf.mxu0
        %v6087 = vpop.f32.mrf.mxu0
        %v6088 = vadd.f32 0.0, %v6087
        %v6089 = vpop.f32.mrf.mxu0
        %6090 = vmatprep.mubr.bf16.mxu0 0
        %6091 = vmatmul.mubr.bf16.gmra.mxu0 %v3946
        %v6092 = vpop.f32.mrf.mxu0
        %v6093 = vadd.f32 0.0, %v6092
        %v6094 = vpop.f32.mrf.mxu0
        %v6095 = vpop.f32.mrf.mxu0
        %v6096 = vadd.f32 0.0, %v6095
        %v6097 = vpop.f32.mrf.mxu0
        %6098 = vmatprep.mubr.bf16.mxu0 0
        %6099 = vmatmul.mubr.bf16.gmra.mxu0 %v3947
        %v6100 = vpop.f32.mrf.mxu0
        %v6101 = vadd.f32 0.0, %v6100
        %v6102 = vpop.f32.mrf.mxu0
        %v6103 = vpop.f32.mrf.mxu0
        %v6104 = vadd.f32 0.0, %v6103
        %v6105 = vpop.f32.mrf.mxu0
        %6106 = vmatprep.mubr.bf16.mxu0 0
        %6107 = vmatmul.mubr.bf16.gmra.mxu0 %v3948
        %v6108 = vpop.f32.mrf.mxu0
        %v6109 = vadd.f32 0.0, %v6108
        %v6110 = vpop.f32.mrf.mxu0
        %v6111 = vpop.f32.mrf.mxu0
        %v6112 = vadd.f32 0.0, %v6111
        %v6113 = vpop.f32.mrf.mxu0
        %6114 = vmatprep.mubr.bf16.mxu0 0
        %6115 = vmatmul.mubr.bf16.gmra.mxu0 %v3949
        %v6116 = vpop.f32.mrf.mxu0
        %v6117 = vadd.f32 0.0, %v6116
        %v6118 = vpop.f32.mrf.mxu0
        %v6119 = vpop.f32.mrf.mxu0
        %v6120 = vadd.f32 0.0, %v6119
        %v6121 = vpop.f32.mrf.mxu0
        %6122 = vmatprep.mubr.bf16.mxu0 0
        %6123 = vmatmul.mubr.bf16.gmra.mxu0 %v3950
        %v6124 = vpop.f32.mrf.mxu0
        %v6125 = vadd.f32 0.0, %v6124
        %v6126 = vpop.f32.mrf.mxu0
        %v6127 = vpop.f32.mrf.mxu0
        %v6128 = vadd.f32 0.0, %v6127
        %v6129 = vpop.f32.mrf.mxu0
        %6130 = vmatprep.mubr.bf16.mxu0 0
        %6131 = vmatmul.mubr.bf16.gmra.mxu0 %v3951
        %v6132 = vpop.f32.mrf.mxu0
        %v6133 = vadd.f32 0.0, %v6132
        %v6134 = vpop.f32.mrf.mxu0
        %v6135 = vpop.f32.mrf.mxu0
        %v6136 = vadd.f32 0.0, %v6135
        %v6137 = vpop.f32.mrf.mxu0
        %6138 = vmatprep.mubr.bf16.mxu0 0
        %6139 = vmatmul.mubr.bf16.gmra.mxu0 %v3952
        %v6140 = vpop.f32.mrf.mxu0
        %v6141 = vadd.f32 0.0, %v6140
        %v6142 = vpop.f32.mrf.mxu0
        %v6143 = vpop.f32.mrf.mxu0
        %v6144 = vadd.f32 0.0, %v6143
        %v6145 = vpop.f32.mrf.mxu0
        %6146 = vmatprep.mubr.bf16.mxu0 0
        %6147 = vmatmul.mubr.bf16.gmra.mxu0 %v3953
        %v6148 = vpop.f32.mrf.mxu0
        %v6149 = vadd.f32 0.0, %v6148
        %v6150 = vpop.f32.mrf.mxu0
        %v6151 = vpop.f32.mrf.mxu0
        %v6152 = vadd.f32 0.0, %v6151
        %v6153 = vpop.f32.mrf.mxu0
        %6154 = vmatprep.mubr.bf16.mxu0 0
        %6155 = vmatmul.mubr.bf16.gmra.mxu0 %v3952
        %v6156 = vpop.f32.mrf.mxu0
        %v6157 = vadd.f32 0.0, %v6156
        %v6158 = vpop.f32.mrf.mxu0
        %v6159 = vpop.f32.mrf.mxu0
        %v6160 = vadd.f32 0.0, %v6159
        %v6161 = vpop.f32.mrf.mxu0
        %6162 = vdwg.mxu0
        %v6163 = vadd.f32 %v5905, %v6037
        %v6164 = vadd.f32 %v5906, %v6040
        %v6165 = vadd.f32 %v5907, %v6045
        %v6166 = vadd.f32 %v5908, %v6048
        %v6167 = vadd.f32 %v5909, %v6053
        %v6168 = vadd.f32 %v5910, %v6056
        %v6169 = vadd.f32 %v5911, %v6061
        %v6170 = vadd.f32 %v5912, %v6064
        %v6171 = vadd.f32 %v5913, %v6069
        %v6172 = vadd.f32 %v5914, %v6072
        %v6173 = vadd.f32 %v5915, %v6077
        %v6174 = vadd.f32 %v5916, %v6080
        %v6175 = vadd.f32 %v5917, %v6085
        %v6176 = vadd.f32 %v5918, %v6088
        %v6177 = vadd.f32 %v5919, %v6093
        %v6178 = vadd.f32 %v5920, %v6096
        %v6179 = vadd.f32 %v5921, %v6101
        %v6180 = vadd.f32 %v5922, %v6104
        %v6181 = vadd.f32 %v5923, %v6109
        %v6182 = vadd.f32 %v5924, %v6112
        %v6183 = vadd.f32 %v5925, %v6117
        %v6184 = vadd.f32 %v5926, %v6120
        %v6185 = vadd.f32 %v5927, %v6125
        %v6186 = vadd.f32 %v5928, %v6128
        %v6187 = vadd.f32 %v5929, %v6133
        %v6188 = vadd.f32 %v5930, %v6136
        %v6189 = vadd.f32 %v5931, %v6141
        %v6190 = vadd.f32 %v5932, %v6144
        %v6191 = vadd.f32 %v5933, %v6149
        %v6192 = vadd.f32 %v5934, %v6152
        %v6193 = vadd.f32 %v5935, %v6157
        %v6194 = vadd.f32 %v5936, %v6160
        %s6195 = scalar_lea.vmem [#allocation7], 512
        %v6196 = vld [vmem:[%s6195] sm:$0xf]
        %v6197 = vld [vmem:[%s6195 + $0x4] sm:$0xf]
        %v6198 = vld [vmem:[%s6195 + $0x8] sm:$0xf]
        %v6199 = vld [vmem:[%s6195 + $0xc] sm:$0xf]
        %v6200 = vld [vmem:[%s6195 + $0x10] sm:$0xf]
        %v6201 = vld [vmem:[%s6195 + $0x14] sm:$0xf]
        %v6202 = vld [vmem:[%s6195 + $0x18] sm:$0xf]
        %v6203 = vld [vmem:[%s6195 + $0x1c] sm:$0xf]
        %v6204 = vld [vmem:[%s6195 + $0x20] sm:$0xf]
        %v6205 = vld [vmem:[%s6195 + $0x24] sm:$0xf]
        %v6206 = vld [vmem:[%s6195 + $0x28] sm:$0xf]
        %v6207 = vld [vmem:[%s6195 + $0x2c] sm:$0xf]
        %v6208 = vld [vmem:[%s6195 + $0x30] sm:$0xf]
        %v6209 = vld [vmem:[%s6195 + $0x34] sm:$0xf]
        %v6210 = vld [vmem:[%s6195 + $0x38] sm:$0xf]
        %v6211 = vld [vmem:[%s6195 + $0x3c] sm:$0xf]
        %v6228 = vunpack.c.l.b16 %v6196
        %v6229 = vunpack.c.l.b16 %v6197
        %v6230 = vunpack.c.l.b16 %v6198
        %v6231 = vunpack.c.l.b16 %v6199
        %v6232 = vunpack.c.l.b16 %v6200
        %v6233 = vunpack.c.l.b16 %v6201
        %v6234 = vunpack.c.l.b16 %v6202
        %v6235 = vunpack.c.l.b16 %v6203
        %v6236 = vunpack.c.l.b16 %v6204
        %v6237 = vunpack.c.l.b16 %v6205
        %v6238 = vunpack.c.l.b16 %v6206
        %v6239 = vunpack.c.l.b16 %v6207
        %v6240 = vunpack.c.l.b16 %v6208
        %v6241 = vunpack.c.l.b16 %v6209
        %v6242 = vunpack.c.l.b16 %v6210
        %v6243 = vunpack.c.l.b16 %v6211
        %v6244 = vpack.c.b16 %v6229, %v6228
        %v6245 = vpack.c.b16 %v6231, %v6230
        %v6246 = vpack.c.b16 %v6233, %v6232
        %v6247 = vpack.c.b16 %v6235, %v6234
        %v6248 = vpack.c.b16 %v6237, %v6236
        %v6249 = vpack.c.b16 %v6239, %v6238
        %v6250 = vpack.c.b16 %v6241, %v6240
        %v6251 = vpack.c.b16 %v6243, %v6242
        %6260 = vmatprep.subr.bf16.mxu0 0
        %6261 = vmatpush1.bf16.msra.mxu0 %v6251
        %6262 = vmatprep.subr.bf16.mxu0 0
        %6263 = vmatpush1.bf16.msra.mxu0 %v6250
        %6264 = vmatprep.subr.bf16.mxu0 0
        %6265 = vmatpush1.bf16.msra.mxu0 %v6249
        %6266 = vmatprep.subr.bf16.mxu0 0
        %6267 = vmatpush1.bf16.msra.mxu0 %v6248
        %6268 = vmatprep.subr.bf16.mxu0 0
        %6269 = vmatpush1.bf16.msra.mxu0 %v6247
        %6270 = vmatprep.subr.bf16.mxu0 0
        %6271 = vmatpush1.bf16.msra.mxu0 %v6246
        %6272 = vmatprep.subr.bf16.mxu0 0
        %6273 = vmatpush1.bf16.msra.mxu0 %v6245
        %6274 = vmatprep.subr.bf16.mxu0 0
        %6275 = vmatpush1.bf16.msra.mxu0 %v6244
        %6276 = vmatprep.subr.bf16.mxu0 0
        %6277 = vmatpush2.bf16.msra.mxu0 0
        %6278 = vmatprep.subr.bf16.mxu0 0
        %6279 = vmatpush2.bf16.msra.mxu0 0
        %6280 = vmatprep.subr.bf16.mxu0 0
        %6281 = vmatpush2.bf16.msra.mxu0 0
        %6282 = vmatprep.subr.bf16.mxu0 0
        %6283 = vmatpush2.bf16.msra.mxu0 0
        %6284 = vmatprep.subr.bf16.mxu0 0
        %6285 = vmatpush2.bf16.msra.mxu0 0
        %6286 = vmatprep.subr.bf16.mxu0 0
        %6287 = vmatpush2.bf16.msra.mxu0 0
        %6288 = vmatprep.subr.bf16.mxu0 0
        %6289 = vmatpush2.bf16.msra.mxu0 0
        %6290 = vmatprep.subr.bf16.mxu0 0
        %6291 = vmatpush2.bf16.msra.mxu0 0
        %6292 = vmatprep.mubr.bf16.mxu0 0
        %6293 = vmatmul.mubr.bf16.gmra.mxu0 %v4181
        %v6294 = vpop.f32.mrf.mxu0
        %v6295 = vadd.f32 0.0, %v6294
        %v6296 = vpop.f32.mrf.mxu0
        %v6297 = vpop.f32.mrf.mxu0
        %v6298 = vadd.f32 0.0, %v6297
        %v6299 = vpop.f32.mrf.mxu0
        %6300 = vmatprep.mubr.bf16.mxu0 0
        %6301 = vmatmul.mubr.bf16.gmra.mxu0 %v4182
        %v6302 = vpop.f32.mrf.mxu0
        %v6303 = vadd.f32 0.0, %v6302
        %v6304 = vpop.f32.mrf.mxu0
        %v6305 = vpop.f32.mrf.mxu0
        %v6306 = vadd.f32 0.0, %v6305
        %v6307 = vpop.f32.mrf.mxu0
        %6308 = vmatprep.mubr.bf16.mxu0 0
        %6309 = vmatmul.mubr.bf16.gmra.mxu0 %v4183
        %v6310 = vpop.f32.mrf.mxu0
        %v6311 = vadd.f32 0.0, %v6310
        %v6312 = vpop.f32.mrf.mxu0
        %v6313 = vpop.f32.mrf.mxu0
        %v6314 = vadd.f32 0.0, %v6313
        %v6315 = vpop.f32.mrf.mxu0
        %6316 = vmatprep.mubr.bf16.mxu0 0
        %6317 = vmatmul.mubr.bf16.gmra.mxu0 %v4184
        %v6318 = vpop.f32.mrf.mxu0
        %v6319 = vadd.f32 0.0, %v6318
        %v6320 = vpop.f32.mrf.mxu0
        %v6321 = vpop.f32.mrf.mxu0
        %v6322 = vadd.f32 0.0, %v6321
        %v6323 = vpop.f32.mrf.mxu0
        %6324 = vmatprep.mubr.bf16.mxu0 0
        %6325 = vmatmul.mubr.bf16.gmra.mxu0 %v4185
        %v6326 = vpop.f32.mrf.mxu0
        %v6327 = vadd.f32 0.0, %v6326
        %v6328 = vpop.f32.mrf.mxu0
        %v6329 = vpop.f32.mrf.mxu0
        %v6330 = vadd.f32 0.0, %v6329
        %v6331 = vpop.f32.mrf.mxu0
        %6332 = vmatprep.mubr.bf16.mxu0 0
        %6333 = vmatmul.mubr.bf16.gmra.mxu0 %v4186
        %v6334 = vpop.f32.mrf.mxu0
        %v6335 = vadd.f32 0.0, %v6334
        %v6336 = vpop.f32.mrf.mxu0
        %v6337 = vpop.f32.mrf.mxu0
        %v6338 = vadd.f32 0.0, %v6337
        %v6339 = vpop.f32.mrf.mxu0
        %6340 = vmatprep.mubr.bf16.mxu0 0
        %6341 = vmatmul.mubr.bf16.gmra.mxu0 %v4187
        %v6342 = vpop.f32.mrf.mxu0
        %v6343 = vadd.f32 0.0, %v6342
        %v6344 = vpop.f32.mrf.mxu0
        %v6345 = vpop.f32.mrf.mxu0
        %v6346 = vadd.f32 0.0, %v6345
        %v6347 = vpop.f32.mrf.mxu0
        %6348 = vmatprep.mubr.bf16.mxu0 0
        %6349 = vmatmul.mubr.bf16.gmra.mxu0 %v4188
        %v6350 = vpop.f32.mrf.mxu0
        %v6351 = vadd.f32 0.0, %v6350
        %v6352 = vpop.f32.mrf.mxu0
        %v6353 = vpop.f32.mrf.mxu0
        %v6354 = vadd.f32 0.0, %v6353
        %v6355 = vpop.f32.mrf.mxu0
        %6356 = vmatprep.mubr.bf16.mxu0 0
        %6357 = vmatmul.mubr.bf16.gmra.mxu0 %v4189
        %v6358 = vpop.f32.mrf.mxu0
        %v6359 = vadd.f32 0.0, %v6358
        %v6360 = vpop.f32.mrf.mxu0
        %v6361 = vpop.f32.mrf.mxu0
        %v6362 = vadd.f32 0.0, %v6361
        %v6363 = vpop.f32.mrf.mxu0
        %6364 = vmatprep.mubr.bf16.mxu0 0
        %6365 = vmatmul.mubr.bf16.gmra.mxu0 %v4190
        %v6366 = vpop.f32.mrf.mxu0
        %v6367 = vadd.f32 0.0, %v6366
        %v6368 = vpop.f32.mrf.mxu0
        %v6369 = vpop.f32.mrf.mxu0
        %v6370 = vadd.f32 0.0, %v6369
        %v6371 = vpop.f32.mrf.mxu0
        %6372 = vmatprep.mubr.bf16.mxu0 0
        %6373 = vmatmul.mubr.bf16.gmra.mxu0 %v4191
        %v6374 = vpop.f32.mrf.mxu0
        %v6375 = vadd.f32 0.0, %v6374
        %v6376 = vpop.f32.mrf.mxu0
        %v6377 = vpop.f32.mrf.mxu0
        %v6378 = vadd.f32 0.0, %v6377
        %v6379 = vpop.f32.mrf.mxu0
        %6380 = vmatprep.mubr.bf16.mxu0 0
        %6381 = vmatmul.mubr.bf16.gmra.mxu0 %v4192
        %v6382 = vpop.f32.mrf.mxu0
        %v6383 = vadd.f32 0.0, %v6382
        %v6384 = vpop.f32.mrf.mxu0
        %v6385 = vpop.f32.mrf.mxu0
        %v6386 = vadd.f32 0.0, %v6385
        %v6387 = vpop.f32.mrf.mxu0
        %6388 = vmatprep.mubr.bf16.mxu0 0
        %6389 = vmatmul.mubr.bf16.gmra.mxu0 %v4193
        %v6390 = vpop.f32.mrf.mxu0
        %v6391 = vadd.f32 0.0, %v6390
        %v6392 = vpop.f32.mrf.mxu0
        %v6393 = vpop.f32.mrf.mxu0
        %v6394 = vadd.f32 0.0, %v6393
        %v6395 = vpop.f32.mrf.mxu0
        %6396 = vmatprep.mubr.bf16.mxu0 0
        %6397 = vmatmul.mubr.bf16.gmra.mxu0 %v4194
        %v6398 = vpop.f32.mrf.mxu0
        %v6399 = vadd.f32 0.0, %v6398
        %v6400 = vpop.f32.mrf.mxu0
        %v6401 = vpop.f32.mrf.mxu0
        %v6402 = vadd.f32 0.0, %v6401
        %v6403 = vpop.f32.mrf.mxu0
        %6404 = vmatprep.mubr.bf16.mxu0 0
        %6405 = vmatmul.mubr.bf16.gmra.mxu0 %v4195
        %v6406 = vpop.f32.mrf.mxu0
        %v6407 = vadd.f32 0.0, %v6406
        %v6408 = vpop.f32.mrf.mxu0
        %v6409 = vpop.f32.mrf.mxu0
        %v6410 = vadd.f32 0.0, %v6409
        %v6411 = vpop.f32.mrf.mxu0
        %6412 = vmatprep.mubr.bf16.mxu0 0
        %6413 = vmatmul.mubr.bf16.gmra.mxu0 %v4194
        %v6414 = vpop.f32.mrf.mxu0
        %v6415 = vadd.f32 0.0, %v6414
        %v6416 = vpop.f32.mrf.mxu0
        %v6417 = vpop.f32.mrf.mxu0
        %v6418 = vadd.f32 0.0, %v6417
        %v6419 = vpop.f32.mrf.mxu0
        %6420 = vdwg.mxu0
        %v6421 = vadd.f32 %v6163, %v6295
        %v6422 = vadd.f32 %v6164, %v6298
        %v6423 = vadd.f32 %v6165, %v6303
        %v6424 = vadd.f32 %v6166, %v6306
        %v6425 = vadd.f32 %v6167, %v6311
        %v6426 = vadd.f32 %v6168, %v6314
        %v6427 = vadd.f32 %v6169, %v6319
        %v6428 = vadd.f32 %v6170, %v6322
        %v6429 = vadd.f32 %v6171, %v6327
        %v6430 = vadd.f32 %v6172, %v6330
        %v6431 = vadd.f32 %v6173, %v6335
        %v6432 = vadd.f32 %v6174, %v6338
        %v6433 = vadd.f32 %v6175, %v6343
        %v6434 = vadd.f32 %v6176, %v6346
        %v6435 = vadd.f32 %v6177, %v6351
        %v6436 = vadd.f32 %v6178, %v6354
        %v6437 = vadd.f32 %v6179, %v6359
        %v6438 = vadd.f32 %v6180, %v6362
        %v6439 = vadd.f32 %v6181, %v6367
        %v6440 = vadd.f32 %v6182, %v6370
        %v6441 = vadd.f32 %v6183, %v6375
        %v6442 = vadd.f32 %v6184, %v6378
        %v6443 = vadd.f32 %v6185, %v6383
        %v6444 = vadd.f32 %v6186, %v6386
        %v6445 = vadd.f32 %v6187, %v6391
        %v6446 = vadd.f32 %v6188, %v6394
        %v6447 = vadd.f32 %v6189, %v6399
        %v6448 = vadd.f32 %v6190, %v6402
        %v6449 = vadd.f32 %v6191, %v6407
        %v6450 = vadd.f32 %v6192, %v6410
        %v6451 = vadd.f32 %v6193, %v6415
        %v6452 = vadd.f32 %v6194, %v6418
        %v6453 = vld [vmem:[%s4] sm:$0x1]
        %v6455 = vlaneseq
        %v6456 = vshrl.u32 %v6455, 7
        %v6457 = vsub.s32 0, %v6456
        %v6458 = vrot.slane %v6453, %v6457
        %v6460 = vadd.f32 %v6421, %v6458
        %v6461 = vadd.f32 %v6422, %v6458
        %v6462 = vadd.f32 %v6423, %v6458
        %v6463 = vadd.f32 %v6424, %v6458
        %v6464 = vadd.f32 %v6425, %v6458
        %v6465 = vadd.f32 %v6426, %v6458
        %v6466 = vadd.f32 %v6427, %v6458
        %v6467 = vadd.f32 %v6428, %v6458
        %v6468 = vadd.f32 %v6429, %v6458
        %v6469 = vadd.f32 %v6430, %v6458
        %v6470 = vadd.f32 %v6431, %v6458
        %v6471 = vadd.f32 %v6432, %v6458
        %v6472 = vadd.f32 %v6433, %v6458
        %v6473 = vadd.f32 %v6434, %v6458
        %v6474 = vadd.f32 %v6435, %v6458
        %v6475 = vadd.f32 %v6436, %v6458
        %v6476 = vadd.f32 %v6437, %v6458
        %v6477 = vadd.f32 %v6438, %v6458
        %v6478 = vadd.f32 %v6439, %v6458
        %v6479 = vadd.f32 %v6440, %v6458
        %v6480 = vadd.f32 %v6441, %v6458
        %v6481 = vadd.f32 %v6442, %v6458
        %v6482 = vadd.f32 %v6443, %v6458
        %v6483 = vadd.f32 %v6444, %v6458
        %v6484 = vadd.f32 %v6445, %v6458
        %v6485 = vadd.f32 %v6446, %v6458
        %v6486 = vadd.f32 %v6447, %v6458
        %v6487 = vadd.f32 %v6448, %v6458
        %v6488 = vadd.f32 %v6449, %v6458
        %v6489 = vadd.f32 %v6450, %v6458
        %v6490 = vadd.f32 %v6451, %v6458
        %v6491 = vadd.f32 %v6452, %v6458
        %v6492 = vadd.f32 %v6460, %v6461
        %v6493 = vadd.f32 %v6492, %v6462
        %v6494 = vadd.f32 %v6493, %v6463
        %v6495 = vadd.f32 %v6494, %v6464
        %v6496 = vadd.f32 %v6495, %v6465
        %v6497 = vadd.f32 %v6496, %v6466
        %v6498 = vadd.f32 %v6497, %v6467
        %v6499 = vadd.f32 %v6498, %v6468
        %v6500 = vadd.f32 %v6499, %v6469
        %v6501 = vadd.f32 %v6500, %v6470
        %v6502 = vadd.f32 %v6501, %v6471
        %v6503 = vadd.f32 %v6502, %v6472
        %v6504 = vadd.f32 %v6503, %v6473
        %v6505 = vadd.f32 %v6504, %v6474
        %v6506 = vadd.f32 %v6505, %v6475
        %v6507 = vadd.f32 %v6506, %v6476
        %v6508 = vadd.f32 %v6507, %v6477
        %v6509 = vadd.f32 %v6508, %v6478
        %v6510 = vadd.f32 %v6509, %v6479
        %v6511 = vadd.f32 %v6510, %v6480
        %v6512 = vadd.f32 %v6511, %v6481
        %v6513 = vadd.f32 %v6512, %v6482
        %v6514 = vadd.f32 %v6513, %v6483
        %v6515 = vadd.f32 %v6514, %v6484
        %v6516 = vadd.f32 %v6515, %v6485
        %v6517 = vadd.f32 %v6516, %v6486
        %v6518 = vadd.f32 %v6517, %v6487
        %v6519 = vadd.f32 %v6518, %v6488
        %v6520 = vadd.f32 %v6519, %v6489
        %v6521 = vadd.f32 %v6520, %v6490
        %v6522 = vadd.f32 %v6521, %v6491
        %v6523 = vrot.slane %v6522, 4
        %v6524 = vadd.f32 %v6522, %v6523
        %v6525 = vrot.slane %v6524, 2
        %v6526 = vadd.f32 %v6524, %v6525
        %v6527 = vrot.slane %v6526, 1
        %v6528 = vadd.f32 %v6526, %v6527
        %v6529 = vmul.f32 %v6528, 0.00390625
        %v6530 = vsub.f32 %v6460, %v6529
        %v6531 = vsub.f32 %v6461, %v6529
        %v6532 = vsub.f32 %v6462, %v6529
        %v6533 = vsub.f32 %v6463, %v6529
        %v6534 = vsub.f32 %v6464, %v6529
        %v6535 = vsub.f32 %v6465, %v6529
        %v6536 = vsub.f32 %v6466, %v6529
        %v6537 = vsub.f32 %v6467, %v6529
        %v6538 = vsub.f32 %v6468, %v6529
        %v6539 = vsub.f32 %v6469, %v6529
        %v6540 = vsub.f32 %v6470, %v6529
        %v6541 = vsub.f32 %v6471, %v6529
        %v6542 = vsub.f32 %v6472, %v6529
        %v6543 = vsub.f32 %v6473, %v6529
        %v6544 = vsub.f32 %v6474, %v6529
        %v6545 = vsub.f32 %v6475, %v6529
        %v6546 = vsub.f32 %v6476, %v6529
        %v6547 = vsub.f32 %v6477, %v6529
        %v6548 = vsub.f32 %v6478, %v6529
        %v6549 = vsub.f32 %v6479, %v6529
        %v6550 = vsub.f32 %v6480, %v6529
        %v6551 = vsub.f32 %v6481, %v6529
        %v6552 = vsub.f32 %v6482, %v6529
        %v6553 = vsub.f32 %v6483, %v6529
        %v6554 = vsub.f32 %v6484, %v6529
        %v6555 = vsub.f32 %v6485, %v6529
        %v6556 = vsub.f32 %v6486, %v6529
        %v6557 = vsub.f32 %v6487, %v6529
        %v6558 = vsub.f32 %v6488, %v6529
        %v6559 = vsub.f32 %v6489, %v6529
        %v6560 = vsub.f32 %v6490, %v6529
        %v6561 = vsub.f32 %v6491, %v6529
        %v6562 = vmul.f32 %v6530, %v6530
        %v6563 = vmul.f32 %v6531, %v6531
        %v6564 = vmul.f32 %v6532, %v6532
        %v6565 = vmul.f32 %v6533, %v6533
        %v6566 = vmul.f32 %v6534, %v6534
        %v6567 = vmul.f32 %v6535, %v6535
        %v6568 = vmul.f32 %v6536, %v6536
        %v6569 = vmul.f32 %v6537, %v6537
        %v6570 = vmul.f32 %v6538, %v6538
        %v6571 = vmul.f32 %v6539, %v6539
        %v6572 = vmul.f32 %v6540, %v6540
        %v6573 = vmul.f32 %v6541, %v6541
        %v6574 = vmul.f32 %v6542, %v6542
        %v6575 = vmul.f32 %v6543, %v6543
        %v6576 = vmul.f32 %v6544, %v6544
        %v6577 = vmul.f32 %v6545, %v6545
        %v6578 = vmul.f32 %v6546, %v6546
        %v6579 = vmul.f32 %v6547, %v6547
        %v6580 = vmul.f32 %v6548, %v6548
        %v6581 = vmul.f32 %v6549, %v6549
        %v6582 = vmul.f32 %v6550, %v6550
        %v6583 = vmul.f32 %v6551, %v6551
        %v6584 = vmul.f32 %v6552, %v6552
        %v6585 = vmul.f32 %v6553, %v6553
        %v6586 = vmul.f32 %v6554, %v6554
        %v6587 = vmul.f32 %v6555, %v6555
        %v6588 = vmul.f32 %v6556, %v6556
        %v6589 = vmul.f32 %v6557, %v6557
        %v6590 = vmul.f32 %v6558, %v6558
        %v6591 = vmul.f32 %v6559, %v6559
        %v6592 = vmul.f32 %v6560, %v6560
        %v6593 = vmul.f32 %v6561, %v6561
        %v6594 = vadd.f32 %v6562, %v6563
        %v6595 = vadd.f32 %v6594, %v6564
        %v6596 = vadd.f32 %v6595, %v6565
        %v6597 = vadd.f32 %v6596, %v6566
        %v6598 = vadd.f32 %v6597, %v6567
        %v6599 = vadd.f32 %v6598, %v6568
        %v6600 = vadd.f32 %v6599, %v6569
        %v6601 = vadd.f32 %v6600, %v6570
        %v6602 = vadd.f32 %v6601, %v6571
        %v6603 = vadd.f32 %v6602, %v6572
        %v6604 = vadd.f32 %v6603, %v6573
        %v6605 = vadd.f32 %v6604, %v6574
        %v6606 = vadd.f32 %v6605, %v6575
        %v6607 = vadd.f32 %v6606, %v6576
        %v6608 = vadd.f32 %v6607, %v6577
        %v6609 = vadd.f32 %v6608, %v6578
        %v6610 = vadd.f32 %v6609, %v6579
        %v6611 = vadd.f32 %v6610, %v6580
        %v6612 = vadd.f32 %v6611, %v6581
        %v6613 = vadd.f32 %v6612, %v6582
        %v6614 = vadd.f32 %v6613, %v6583
        %v6615 = vadd.f32 %v6614, %v6584
        %v6616 = vadd.f32 %v6615, %v6585
        %v6617 = vadd.f32 %v6616, %v6586
        %v6618 = vadd.f32 %v6617, %v6587
        %v6619 = vadd.f32 %v6618, %v6588
        %v6620 = vadd.f32 %v6619, %v6589
        %v6621 = vadd.f32 %v6620, %v6590
        %v6622 = vadd.f32 %v6621, %v6591
        %v6623 = vadd.f32 %v6622, %v6592
        %v6624 = vadd.f32 %v6623, %v6593
        %v6625 = vrot.slane %v6624, 4
        %v6626 = vadd.f32 %v6624, %v6625
        %v6627 = vrot.slane %v6626, 2
        %v6628 = vadd.f32 %v6626, %v6627
        %v6629 = vrot.slane %v6628, 1
        %v6630 = vadd.f32 %v6628, %v6629
        %v6631 = vmul.f32 %v6630, 0.00390625
        %v6632 = vadd.f32 %v6631, 1e-05
        %v6633 = vrsqrt.pop %v6632
        %v6634 = vmul.f32 %v6530, %v6633
        %v6635 = vmul.f32 %v6531, %v6633
        %v6636 = vmul.f32 %v6532, %v6633
        %v6637 = vmul.f32 %v6533, %v6633
        %v6638 = vmul.f32 %v6534, %v6633
        %v6639 = vmul.f32 %v6535, %v6633
        %v6640 = vmul.f32 %v6536, %v6633
        %v6641 = vmul.f32 %v6537, %v6633
        %v6642 = vmul.f32 %v6538, %v6633
        %v6643 = vmul.f32 %v6539, %v6633
        %v6644 = vmul.f32 %v6540, %v6633
        %v6645 = vmul.f32 %v6541, %v6633
        %v6646 = vmul.f32 %v6542, %v6633
        %v6647 = vmul.f32 %v6543, %v6633
        %v6648 = vmul.f32 %v6544, %v6633
        %v6649 = vmul.f32 %v6545, %v6633
        %v6650 = vmul.f32 %v6546, %v6633
        %v6651 = vmul.f32 %v6547, %v6633
        %v6652 = vmul.f32 %v6548, %v6633
        %v6653 = vmul.f32 %v6549, %v6633
        %v6654 = vmul.f32 %v6550, %v6633
        %v6655 = vmul.f32 %v6551, %v6633
        %v6656 = vmul.f32 %v6552, %v6633
        %v6657 = vmul.f32 %v6553, %v6633
        %v6658 = vmul.f32 %v6554, %v6633
        %v6659 = vmul.f32 %v6555, %v6633
        %v6660 = vmul.f32 %v6556, %v6633
        %v6661 = vmul.f32 %v6557, %v6633
        %v6662 = vmul.f32 %v6558, %v6633
        %v6663 = vmul.f32 %v6559, %v6633
        %v6664 = vmul.f32 %v6560, %v6633
        %v6665 = vmul.f32 %v6561, %v6633
        %v6666 = vadd.f32 %v756, %v6634
        %v6667 = vadd.f32 %v757, %v6635
        %v6668 = vadd.f32 %v758, %v6636
        %v6669 = vadd.f32 %v759, %v6637
        %v6670 = vadd.f32 %v760, %v6638
        %v6671 = vadd.f32 %v761, %v6639
        %v6672 = vadd.f32 %v762, %v6640
        %v6673 = vadd.f32 %v763, %v6641
        %v6674 = vadd.f32 %v764, %v6642
        %v6675 = vadd.f32 %v765, %v6643
        %v6676 = vadd.f32 %v766, %v6644
        %v6677 = vadd.f32 %v767, %v6645
        %v6678 = vadd.f32 %v768, %v6646
        %v6679 = vadd.f32 %v769, %v6647
        %v6680 = vadd.f32 %v770, %v6648
        %v6681 = vadd.f32 %v771, %v6649
        %v6682 = vadd.f32 %v772, %v6650
        %v6683 = vadd.f32 %v773, %v6651
        %v6684 = vadd.f32 %v774, %v6652
        %v6685 = vadd.f32 %v775, %v6653
        %v6686 = vadd.f32 %v776, %v6654
        %v6687 = vadd.f32 %v777, %v6655
        %v6688 = vadd.f32 %v778, %v6656
        %v6689 = vadd.f32 %v779, %v6657
        %v6690 = vadd.f32 %v780, %v6658
        %v6691 = vadd.f32 %v781, %v6659
        %v6692 = vadd.f32 %v782, %v6660
        %v6693 = vadd.f32 %v783, %v6661
        %v6694 = vadd.f32 %v784, %v6662
        %v6695 = vadd.f32 %v785, %v6663
        %v6696 = vadd.f32 %v786, %v6664
        %v6697 = vadd.f32 %v787, %v6665
        %6698 = vst [vmem:[%s271] sm:$0xff] %v6666
        %6699 = vst [vmem:[%s271 + $0x8] sm:$0xff] %v6667
        %6700 = vst [vmem:[%s271 + $0x10] sm:$0xff] %v6668
        %6701 = vst [vmem:[%s271 + $0x18] sm:$0xff] %v6669
        %6702 = vst [vmem:[%s271 + $0x20] sm:$0xff] %v6670
        %6703 = vst [vmem:[%s271 + $0x28] sm:$0xff] %v6671
        %6704 = vst [vmem:[%s271 + $0x30] sm:$0xff] %v6672
        %6705 = vst [vmem:[%s271 + $0x38] sm:$0xff] %v6673
        %6706 = vst [vmem:[%s271 + $0x40] sm:$0xff] %v6674
        %6707 = vst [vmem:[%s271 + $0x48] sm:$0xff] %v6675
        %6708 = vst [vmem:[%s271 + $0x50] sm:$0xff] %v6676
        %6709 = vst [vmem:[%s271 + $0x58] sm:$0xff] %v6677
        %6710 = vst [vmem:[%s271 + $0x60] sm:$0xff] %v6678
        %6711 = vst [vmem:[%s271 + $0x68] sm:$0xff] %v6679
        %6712 = vst [vmem:[%s271 + $0x70] sm:$0xff] %v6680
        %6713 = vst [vmem:[%s271 + $0x78] sm:$0xff] %v6681
        %6714 = vst [vmem:[%s271 + $0x80] sm:$0xff] %v6682
        %6715 = vst [vmem:[%s271 + $0x88] sm:$0xff] %v6683
        %6716 = vst [vmem:[%s271 + $0x90] sm:$0xff] %v6684
        %6717 = vst [vmem:[%s271 + $0x98] sm:$0xff] %v6685
        %6718 = vst [vmem:[%s271 + $0xa0] sm:$0xff] %v6686
        %6719 = vst [vmem:[%s271 + $0xa8] sm:$0xff] %v6687
        %6720 = vst [vmem:[%s271 + $0xb0] sm:$0xff] %v6688
        %6721 = vst [vmem:[%s271 + $0xb8] sm:$0xff] %v6689
        %6722 = vst [vmem:[%s271 + $0xc0] sm:$0xff] %v6690
        %6723 = vst [vmem:[%s271 + $0xc8] sm:$0xff] %v6691
        %6724 = vst [vmem:[%s271 + $0xd0] sm:$0xff] %v6692
        %6725 = vst [vmem:[%s271 + $0xd8] sm:$0xff] %v6693
        %6726 = vst [vmem:[%s271 + $0xe0] sm:$0xff] %v6694
        %6727 = vst [vmem:[%s271 + $0xe8] sm:$0xff] %v6695
        %6728 = vst [vmem:[%s271 + $0xf0] sm:$0xff] %v6696
        %6729 = vst [vmem:[%s271 + $0xf8] sm:$0xff] %v6697
        %s6730 = sand.u32 %s141, 1
        %s6731 = scalar_lea.sflag [#allocation4], %s6730
        %s6732 = sand.u32 %s141, 1
        %s6733 = smul.addr %s6732, 256
        %s6734 = scalar_lea.vmem [#allocation8], %s6733
        // Predicated region
        $region53: #{tpu_custom_call.1} parent=39 // pred_check
          %p6735 = pneg %p151
        $region54: #{tpu_custom_call.1} parent=39 // pred_check_branch
          %6737 = sbr.rel (%p6735) target = $region56
        $region55: #{tpu_custom_call.1} parent=39 // pred_region
          %s6739 = ssub.s32 4096, 4096
          %6740 = vsyncadd %s6731, %s6739
          %s6741 = smul.addr %s23, 32
          %s6742 = smul.addr %s6741, 128
          %s6743 = scalar_lea.hbm %s5, %s6742
          %s6744 = sshll.u32 %s6734, 4
          %s6745 = int_to_ptr.vmem [resolvable:$true] %s6744
          %6750 = dma.vmem_to_hbm [thread:$0]  %s6745, 4096, %s6743, %s6731, 128, 128, 8
        $region56: #{tpu_custom_call.1} parent=39 // pred_fallthru
          _
      $region40: #{tpu_custom_call.1} parent=5 // pred_fallthru
        _
      %p6751 = scmp.le.s32.totalorder 2, %s18
      // Predicated region
      $region57: #{tpu_custom_call.1} parent=5 // pred_check
        %p6752 = pneg %p6751
      $region58: #{tpu_custom_call.1} parent=5 // pred_check_branch
        %6754 = sbr.rel (%p6752) target = $region60
      $region59: #{tpu_custom_call.1} parent=5 // pred_region
        %s6755 = ssub.s32 %s18, 2
        // Predicated region
        $region61: #{tpu_custom_call.1} parent=59 // pred_check
          %p6756 = pneg %p157
        $region62: #{tpu_custom_call.1} parent=59 // pred_check_branch
          %6758 = sbr.rel (%p6756) target = $region64
        $region63: #{tpu_custom_call.1} parent=59 // pred_region
          %s6759 = sand.u32 %s142, 1
          %s6760 = scalar_lea.sflag [#allocation4], %s6759
          %s6761 = sand.u32 %s142, 1
          %s6762 = smul.addr %s6761, 256
          %s6763 = scalar_lea.vmem [#allocation8], %s6762
          %6764 = dma.done %s6760, 4096
        $region64: #{tpu_custom_call.1} parent=59 // pred_fallthru
          _
      $region60: #{tpu_custom_call.1} parent=5 // pred_fallthru
        _
    $region6: #{tpu_custom_call.1} parent=1 // loop_footer
      %s22 = sadd.s32 1, %s18
    $region7: #{tpu_custom_call.1} parent=1 // loop_footer_branch
      %17 = sbr.rel target = $region3
    $region8: #{tpu_custom_call.1} parent=1 // loop_exit
      _
    %6765 = vsyncpa [#allocation3], 1
    %s6766 = scalar_lea.sflag [#allocation3], 1
    %6767 = vsyncpa %s6766, 1
    %6768 = vsyncpa [#allocation6], 1
    %6769 = vsyncpa [#allocation4], 1
    %s6770 = scalar_lea.sflag [#allocation4], 1
    %6771 = vsyncpa %s6770, 1

</llo_original>
